<compile_context>
chip_gen: v7x
topology: tpu7x:2x2x1
jax: 0.10.0
libtpu: 0.0.40
codegen_flags: <defaults>
</compile_context>

<pallas_src>
import jax
import jax.numpy as jnp
from jax.experimental import pallas as pl
from jax.experimental.pallas import tpu as pltpu


def _round_up(x, m):
    return (x + m - 1) // m * m


# ----------------------------------------------------------------------------
# Kernel 1: big time-parallel input projection   out = x @ w + b
# ----------------------------------------------------------------------------
def _proj_kernel(x_ref, w_ref, b_ref, o_ref):
    o_ref[...] = (
        jnp.dot(x_ref[...], w_ref[...], preferred_element_type=jnp.float32)
        + b_ref[...]
    ).astype(o_ref.dtype)


def input_projection(x, w, b):
    """x: (M, K), w: (K, Nout), b: (Nout,)  ->  (M, Nout) = x @ w + b."""
    M, K = x.shape
    Nout = w.shape[1]
    assert Nout % 128 == 0, Nout

    Kp = _round_up(K, 128)                 # lane-pad the contraction (788->896)
    if M <= 512:
        Mp = _round_up(M, 8)
        tm = Mp
    else:
        Mp = _round_up(M, 128)
        tm = 128

    xp = jnp.pad(x, ((0, Mp - M), (0, Kp - K)))
    wp = jnp.pad(w, ((0, Kp - K), (0, 0)))
    b2d = jnp.reshape(b, (1, Nout))

    out = pl.pallas_call(
        _proj_kernel,
        out_shape=jax.ShapeDtypeStruct((Mp, Nout), jnp.float32),
        grid_spec=pltpu.PrefetchScalarGridSpec(
            num_scalar_prefetch=0,
            grid=(Mp // tm,),
            in_specs=[
                pl.BlockSpec((tm, Kp), lambda i: (i, 0)),
                pl.BlockSpec((Kp, Nout), lambda i: (0, 0)),
                pl.BlockSpec((1, Nout), lambda i: (0, 0)),
            ],
            out_specs=pl.BlockSpec((tm, Nout), lambda i: (i, 0)),
        ),
        compiler_params=pltpu.CompilerParams(
            dimension_semantics=("parallel",),
            vmem_limit_bytes=32 * 1024 * 1024,
        ),
    )(xp, wp, b2d)
    return out[:M]


# ----------------------------------------------------------------------------
# Kernel 2: fused two-layer LSTM recurrence (Tc timesteps per grid step)
# ----------------------------------------------------------------------------
def _fused_lstm2_kernel(px_ref, whh1_ref, wih2_ref, whh2_ref, b2_ref, out_ref,
                        h1_scr, c1_scr, h2_scr, c2_scr):
    """
    px_ref   : (Tc, Bc, 4*H1)  precomputed layer-1 input preactivations (x@Wih1+b1)
    whh1_ref : (H1, 4*H1)      layer-1 recurrent weights, fused gate order i|f|g|o
    wih2_ref : (H1, 4*Np)      layer-2 input weights, lane-padded N -> Np
    whh2_ref : (Np, 4*Np)      layer-2 recurrent weights, lane-padded
    b2_ref   : (1, 4*Np)       layer-2 bias (ih + hh), lane-padded
    out_ref  : (Tc, Bc, Np)    layer-2 hidden states (lane-dense)
    scratch  : h1/c1 (Bc, H1), h2/c2 (Bc, Np) carried across grid steps
    """
    t_blk = pl.program_id(1)

    @pl.when(t_blk == 0)
    def _():
        h1_scr[...] = jnp.zeros_like(h1_scr)
        c1_scr[...] = jnp.zeros_like(c1_scr)
        h2_scr[...] = jnp.zeros_like(h2_scr)
        c2_scr[...] = jnp.zeros_like(c2_scr)

    Tc = px_ref.shape[0]
    H1 = whh1_ref.shape[0]
    Np = whh2_ref.shape[0]

    whh1 = whh1_ref[...]
    wih2 = wih2_ref[...]
    whh2 = whh2_ref[...]
    b2 = b2_ref[...]

    h1 = h1_scr[...]
    c1 = c1_scr[...]
    h2 = h2_scr[...]
    c2 = c2_scr[...]

    for t in range(Tc):  # static unroll over the timestep block
        # ---- layer 1: gates = preact_x[t] + h1 @ whh1 ---------------------
        g1 = px_ref[t] + jnp.dot(h1, whh1, preferred_element_type=jnp.float32)
        i1 = jax.nn.sigmoid(g1[:, 0 * H1:1 * H1])
        f1 = jax.nn.sigmoid(g1[:, 1 * H1:2 * H1])
        u1 = jnp.tanh(g1[:, 2 * H1:3 * H1])
        o1 = jax.nn.sigmoid(g1[:, 3 * H1:4 * H1])
        c1 = f1 * c1 + i1 * u1
        h1 = o1 * jnp.tanh(c1)

        # ---- layer 2 (lane-padded to Np): consumes h1 directly ------------
        g2 = (jnp.dot(h1, wih2, preferred_element_type=jnp.float32)
              + jnp.dot(h2, whh2, preferred_element_type=jnp.float32)
              + b2)
        i2 = jax.nn.sigmoid(g2[:, 0 * Np:1 * Np])
        f2 = jax.nn.sigmoid(g2[:, 1 * Np:2 * Np])
        u2 = jnp.tanh(g2[:, 2 * Np:3 * Np])
        o2 = jax.nn.sigmoid(g2[:, 3 * Np:4 * Np])
        c2 = f2 * c2 + i2 * u2
        h2 = o2 * jnp.tanh(c2)

        out_ref[t] = h2.astype(out_ref.dtype)

    h1_scr[...] = h1
    c1_scr[...] = c1
    h2_scr[...] = h2
    c2_scr[...] = c2


def fused_lstm2(preact1, whh1, wih2_p, whh2_p, b2_p, *, tc, bc=8):
    """preact1: (Tp, Bp, 4*H1) time-major layer-1 preactivations -> (Tp, Bp, Np)."""
    Tp, Bp, G1 = preact1.shape
    H1 = whh1.shape[0]
    Np = whh2_p.shape[0]
    assert G1 == 4 * H1
    assert Tp % tc == 0 and Bp % bc == 0
    n_chunks = Bp // bc

    grid_spec = pltpu.PrefetchScalarGridSpec(
        num_scalar_prefetch=0,
        grid=(n_chunks, Tp // tc),            # (batch-chunk, time-block)
        in_specs=[
            pl.BlockSpec((tc, bc, 4 * H1), lambda c, t: (t, c, 0)),
            pl.BlockSpec((H1, 4 * H1), lambda c, t: (0, 0)),
            pl.BlockSpec((H1, 4 * Np), lambda c, t: (0, 0)),
            pl.BlockSpec((Np, 4 * Np), lambda c, t: (0, 0)),
            pl.BlockSpec((1, 4 * Np), lambda c, t: (0, 0)),
        ],
        out_specs=pl.BlockSpec((tc, bc, Np), lambda c, t: (t, c, 0)),
        scratch_shapes=[
            pltpu.VMEM((bc, H1), jnp.float32),   # h1
            pltpu.VMEM((bc, H1), jnp.float32),   # c1
            pltpu.VMEM((bc, Np), jnp.float32),   # h2
            pltpu.VMEM((bc, Np), jnp.float32),   # c2
        ],
    )
    return pl.pallas_call(
        _fused_lstm2_kernel,
        out_shape=jax.ShapeDtypeStruct((Tp, Bp, Np), jnp.float32),
        grid_spec=grid_spec,
        compiler_params=pltpu.CompilerParams(
            # batch chunks are independent (v7x 2-TC split); the time axis
            # carries the recurrence and must stay sequential ("arbitrary").
            dimension_semantics=("parallel", "arbitrary"),
            vmem_limit_bytes=32 * 1024 * 1024,
        ),
    )(preact1, whh1, wih2_p, whh2_p, b2_p)


# ----------------------------------------------------------------------------
# Layer-2 lane padding (exact: padded lanes stay 0, real lanes unchanged)
# ----------------------------------------------------------------------------
def _pad_layer2_params(wih2, whh2, b2, n, np_):
    h1 = wih2.shape[0]
    wih2_p = jnp.zeros((h1, 4 * np_), jnp.float32)
    whh2_p = jnp.zeros((np_, 4 * np_), jnp.float32)
    b2_p = jnp.zeros((1, 4 * np_), jnp.float32)
    for g in range(4):
        wih2_p = wih2_p.at[:, g * np_:g * np_ + n].set(wih2[:, g * n:(g + 1) * n])
        whh2_p = whh2_p.at[:n, g * np_:g * np_ + n].set(whh2[:, g * n:(g + 1) * n])
        b2_p = b2_p.at[:, g * np_:g * np_ + n].set(b2[g * n:(g + 1) * n][None, :])
    return wih2_p, whh2_p, b2_p


# ----------------------------------------------------------------------------
# MANN forward (glue in plain JAX, heavy compute + recurrence in Pallas)
# ----------------------------------------------------------------------------
@jax.jit
def mann_forward(input_images, input_labels, params):
    """
    input_images : (B, K+1, N, 784)
    input_labels : (B, K+1, N, N)
    returns      : (B, K+1, N, N)
    """
    tasks, shots_p1, classes, dim = input_images.shape
    B = tasks
    T = shots_p1 * classes

    images = jnp.reshape(input_images, (B, T, dim))
    labels = jnp.reshape(input_labels, (B, T, classes))
    # Zero the label of the final timestep (exactly as the PyTorch code does).
    labels = jnp.concatenate(
        (labels[:, :-1, :], jnp.zeros_like(labels[:, -1:, :])), axis=1)
    inp = jnp.concatenate((images, labels), axis=2).astype(jnp.float32)

    H1 = params["whh1"].shape[0]
    N = classes
    Np = _round_up(N, 128)                 # lane-dense layer-2 width

    # ---- hoisted layer-1 input projection: one big matmul, M = B*T rows ---
    x2d = jnp.reshape(inp, (B * T, dim + classes))
    preact1 = input_projection(x2d, params["wih1"], params["b1"])  # (B*T, 4H1)

    # ---- time-major + pad batch to sublane width, T to the time block -----
    Bp = _round_up(B, 8)
    tc = min(16, _round_up(T, 8))
    Tp = _round_up(T, tc)
    preact1 = jnp.transpose(jnp.reshape(preact1, (B, T, 4 * H1)), (1, 0, 2))
    preact1 = jnp.pad(preact1, ((0, Tp - T), (0, Bp - B), (0, 0)))

    wih2_p, whh2_p, b2_p = _pad_layer2_params(
        params["wih2"], params["whh2"], params["b2"], N, Np)

    out_t = fused_lstm2(preact1, params["whh1"], wih2_p, whh2_p, b2_p,
                        tc=tc, bc=8)                       # (Tp, Bp, Np)

    out = jnp.transpose(out_t[:T, :B, :N], (1, 0, 2))      # (B, T, N)
    return jnp.reshape(out, (tasks, shots_p1, classes, classes))


# ----------------------------------------------------------------------------
# Deterministic parameter initialization (mirrors MANN.__init__), fused layout
# ----------------------------------------------------------------------------
def init_params(key, num_classes, model_size=128, input_size=784):
    d1 = num_classes + input_size
    k1, k2, k3, k4 = jax.random.split(key, 4)

    def xavier(k, fan_in, fan_out_total, shape):
        bound = (6.0 / (fan_in + fan_out_total)) ** 0.5
        return jax.random.uniform(k, shape, jnp.float32, -bound, bound)

    def hh_default(k, hidden, shape):
        # PyTorch default LSTM init (weight_hh is not re-initialized).
        bound = 1.0 / (hidden ** 0.5)
        return jax.random.uniform(k, shape, jnp.float32, -bound, bound)

    return {
        # fused gate layout along the last axis: [i | f | g | o]
        "wih1": xavier(k1, d1, 4 * model_size, (d1, 4 * model_size)),
        "whh1": hh_default(k2, model_size, (model_size, 4 * model_size)),
        "b1": jnp.zeros((4 * model_size,), jnp.float32),     # bias_ih + bias_hh
        "wih2": xavier(k3, model_size, 4 * num_classes, (model_size, 4 * num_classes)),
        "whh2": hh_default(k4, num_classes, (num_classes, 4 * num_classes)),
        "b2": jnp.zeros((4 * num_classes,), jnp.float32),
    }


# ----------------------------------------------------------------------------
# Pure-JAX reference (sanity check of kernel semantics)
# ----------------------------------------------------------------------------
def _lstm_layer_ref(x_tbd, wih, whh, b):
    T, B, _ = x_tbd.shape
    H = whh.shape[0]

    def step(carry, x_t):
        h, c = carry
        g = x_t @ wih + h @ whh + b
        i = jax.nn.sigmoid(g[:, 0 * H:1 * H])
        f = jax.nn.sigmoid(g[:, 1 * H:2 * H])
        u = jnp.tanh(g[:, 2 * H:3 * H])
        o = jax.nn.sigmoid(g[:, 3 * H:4 * H])
        c = f * c + i * u
        h = o * jnp.tanh(c)
        return (h, c), h

    init = (jnp.zeros((B, H), jnp.float32), jnp.zeros((B, H), jnp.float32))
    _, hs = jax.lax.scan(step, init, x_tbd)
    return hs


def mann_forward_ref(input_images, input_labels, params):
    tasks, shots_p1, classes, dim = input_images.shape
    T = shots_p1 * classes
    images = jnp.reshape(input_images, (tasks, T, dim))
    labels = jnp.reshape(input_labels, (tasks, T, classes))
    labels = jnp.concatenate(
        (labels[:, :-1, :], jnp.zeros_like(labels[:, -1:, :])), axis=1)
    inp = jnp.concatenate((images, labels), axis=2).astype(jnp.float32)
    inp_t = jnp.transpose(inp, (1, 0, 2))
    h1 = _lstm_layer_ref(inp_t, params["wih1"], params["whh1"], params["b1"])
    h2 = _lstm_layer_ref(h1, params["wih2"], params["whh2"], params["b2"])
    out = jnp.transpose(h2, (1, 0, 2))
    return jnp.reshape(out, (tasks, shots_p1, classes, classes))


# ----------------------------------------------------------------------------
if __name__ == "__main__":
    # Small, module-consistent shapes: B tasks, K+1 shots, N classes, 784 pixels.
    B, Kp1, N, INPUT_SIZE, MODEL_SIZE = 2, 2, 4, 784, 128

    key = jax.random.PRNGKey(0)
    k_img, k_lab, k_par = jax.random.split(key, 3)

    input_images = jax.random.normal(k_img, (B, Kp1, N, INPUT_SIZE), jnp.float32)
    label_idx = jax.random.randint(k_lab, (B, Kp1, N), 0, N)
    input_labels = jax.nn.one_hot(label_idx, N, dtype=jnp.float32)

    params = init_params(k_par, num_classes=N, model_size=MODEL_SIZE,
                         input_size=INPUT_SIZE)

    out = jax.block_until_ready(mann_forward(input_images, input_labels, params))
    assert out.shape == (B, Kp1, N, N), out.shape

    ref = jax.block_until_ready(mann_forward_ref(input_images, input_labels, params))
    err = float(jnp.max(jnp.abs(out - ref)))
    assert err < 1e-4, err

    print("KERNEL_OK")
</pallas_src>

<mosaic_0001>
module attributes {stable_mosaic.version = 11 : i64} {
  func.func @_proj_kernel(%arg0: i32, %arg1: memref<16x896xf32, #tpu.memory_space<vmem>>, %arg2: memref<896x512xf32, #tpu.memory_space<vmem>>, %arg3: memref<1x512xf32, #tpu.memory_space<vmem>>, %arg4: memref<16x512xf32, #tpu.memory_space<vmem>>) attributes {dimension_semantics = [#tpu.dimension_semantics<parallel>], iteration_bounds = array<i64: 1>, scalar_prefetch = 0 : i64, scratch_operands = 0 : i64, tpu.core_type = #tpu.core_type<tc>, window_params = [{transform_indices = @transform_0, window_bounds = array<i64: 16, 896>}, {pipeline_mode = #tpu.pipeline_mode<synchronous>, transform_indices = @transform_1, window_bounds = array<i64: 896, 512>}, {pipeline_mode = #tpu.pipeline_mode<synchronous>, transform_indices = @transform_2, window_bounds = array<i64: 1, 512>}, {transform_indices = @transform_3, window_bounds = array<i64: 16, 512>}]} {
    %c0 = arith.constant 0 : index
    %c0_0 = arith.constant 0 : index
    %0 = vector.load %arg1[%c0, %c0_0] : memref<16x896xf32, #tpu.memory_space<vmem>>, vector<16x896xf32>
    %c0_1 = arith.constant 0 : index
    %c0_2 = arith.constant 0 : index
    %1 = vector.load %arg2[%c0_1, %c0_2] : memref<896x512xf32, #tpu.memory_space<vmem>>, vector<896x512xf32>
    %cst = arith.constant dense<0.000000e+00> : vector<16x512xf32>
    %2 = tpu.matmul %0, %1, %cst {dimension_numbers = #tpu.dot_dimension_numbers<[1], [0], [0], [1], [0, 0, 1, 1], [], []>} : vector<16x896xf32>, vector<896x512xf32>, vector<16x512xf32> -> vector<16x512xf32>
    %c0_3 = arith.constant 0 : index
    %c0_4 = arith.constant 0 : index
    %3 = vector.load %arg3[%c0_3, %c0_4] : memref<1x512xf32, #tpu.memory_space<vmem>>, vector<1x512xf32>
    %4 = vector.broadcast %3 : vector<1x512xf32> to vector<16x512xf32>
    %5 = arith.addf %2, %4 : vector<16x512xf32>
    %c0_5 = arith.constant 0 : index
    %c0_6 = arith.constant 0 : index
    %6 = vector.load %arg4[%c0_5, %c0_6] : memref<16x512xf32, #tpu.memory_space<vmem>>, vector<16x512xf32>
    tpu.vector_store %arg4[%c0_5, %c0_6], %5 {strides = array<i32>} : memref<16x512xf32, #tpu.memory_space<vmem>>, vector<16x512xf32>,
    return
  }
  func.func @transform_0(%arg0: i32) -> (i32, i32) {
    %c0_i32 = arith.constant 0 : i32
    %c0_i32_0 = arith.constant 0 : i32
    return %arg0, %c0_i32 : i32, i32
  }
  func.func @transform_1(%arg0: i32) -> (i32, i32) {
    %c0_i32 = arith.constant 0 : i32
    %c0_i32_0 = arith.constant 0 : i32
    %c0_i32_1 = arith.constant 0 : i32
    return %c0_i32, %c0_i32_0 : i32, i32
  }
  func.func @transform_2(%arg0: i32) -> (i32, i32) {
    %c0_i32 = arith.constant 0 : i32
    %c0_i32_0 = arith.constant 0 : i32
    %c0_i32_1 = arith.constant 0 : i32
    return %c0_i32, %c0_i32_0 : i32, i32
  }
  func.func @transform_3(%arg0: i32) -> (i32, i32) {
    %c0_i32 = arith.constant 0 : i32
    %c0_i32_0 = arith.constant 0 : i32
    return %arg0, %c0_i32 : i32, i32
  }
}

module attributes {stable_mosaic.version = 11 : i64} {
  func.func @_fused_lstm2_kernel(%arg0: i32, %arg1: i32, %arg2: memref<8x8x512xf32, #tpu.memory_space<vmem>>, %arg3: memref<128x512xf32, #tpu.memory_space<vmem>>, %arg4: memref<128x512xf32, #tpu.memory_space<vmem>>, %arg5: memref<128x512xf32, #tpu.memory_space<vmem>>, %arg6: memref<1x512xf32, #tpu.memory_space<vmem>>, %arg7: memref<8x8x128xf32, #tpu.memory_space<vmem>>, %arg8: memref<8x128xf32, #tpu.memory_space<vmem>>, %arg9: memref<8x128xf32, #tpu.memory_space<vmem>>, %arg10: memref<8x128xf32, #tpu.memory_space<vmem>>, %arg11: memref<8x128xf32, #tpu.memory_space<vmem>>) attributes {dimension_semantics = [#tpu.dimension_semantics<parallel>, #tpu.dimension_semantics<arbitrary>], iteration_bounds = array<i64: 1, 1>, scalar_prefetch = 0 : i64, scratch_operands = 4 : i64, tpu.core_type = #tpu.core_type<tc>, window_params = [{transform_indices = @transform_0, window_bounds = array<i64: 8, 8, 512>}, {pipeline_mode = #tpu.pipeline_mode<synchronous>, transform_indices = @transform_1, window_bounds = array<i64: 128, 512>}, {pipeline_mode = #tpu.pipeline_mode<synchronous>, transform_indices = @transform_2, window_bounds = array<i64: 128, 512>}, {pipeline_mode = #tpu.pipeline_mode<synchronous>, transform_indices = @transform_3, window_bounds = array<i64: 128, 512>}, {pipeline_mode = #tpu.pipeline_mode<synchronous>, transform_indices = @transform_4, window_bounds = array<i64: 1, 512>}, {transform_indices = @transform_5, window_bounds = array<i64: 8, 8, 128>}]} {
    %c0_i32 = arith.constant 0 : i32
    %0 = arith.cmpi eq, %arg1, %c0_i32 : i32
    %1 = arith.extui %0 : i1 to i32
    %c0_i32_0 = arith.constant 0 : i32
    %2 = arith.cmpi ne, %1, %c0_i32_0 : i32
    scf.if %2 {
      %cst_136 = arith.constant 0.000000e+00 : f32
      %511 = vector.broadcast %cst_136 : f32 to vector<8x128xf32>
      %c0_137 = arith.constant 0 : index
      %c0_138 = arith.constant 0 : index
      %512 = vector.load %arg8[%c0_137, %c0_138] : memref<8x128xf32, #tpu.memory_space<vmem>>, vector<8x128xf32>
      tpu.vector_store %arg8[%c0_137, %c0_138], %511 {strides = array<i32>} : memref<8x128xf32, #tpu.memory_space<vmem>>, vector<8x128xf32>,
      %cst_139 = arith.constant 0.000000e+00 : f32
      %513 = vector.broadcast %cst_139 : f32 to vector<8x128xf32>
      %c0_140 = arith.constant 0 : index
      %c0_141 = arith.constant 0 : index
      %514 = vector.load %arg9[%c0_140, %c0_141] : memref<8x128xf32, #tpu.memory_space<vmem>>, vector<8x128xf32>
      tpu.vector_store %arg9[%c0_140, %c0_141], %513 {strides = array<i32>} : memref<8x128xf32, #tpu.memory_space<vmem>>, vector<8x128xf32>,
      %cst_142 = arith.constant 0.000000e+00 : f32
      %515 = vector.broadcast %cst_142 : f32 to vector<8x128xf32>
      %c0_143 = arith.constant 0 : index
      %c0_144 = arith.constant 0 : index
      %516 = vector.load %arg10[%c0_143, %c0_144] : memref<8x128xf32, #tpu.memory_space<vmem>>, vector<8x128xf32>
      tpu.vector_store %arg10[%c0_143, %c0_144], %515 {strides = array<i32>} : memref<8x128xf32, #tpu.memory_space<vmem>>, vector<8x128xf32>,
      %cst_145 = arith.constant 0.000000e+00 : f32
      %517 = vector.broadcast %cst_145 : f32 to vector<8x128xf32>
      %c0_146 = arith.constant 0 : index
      %c0_147 = arith.constant 0 : index
      %518 = vector.load %arg11[%c0_146, %c0_147] : memref<8x128xf32, #tpu.memory_space<vmem>>, vector<8x128xf32>
      tpu.vector_store %arg11[%c0_146, %c0_147], %517 {strides = array<i32>} : memref<8x128xf32, #tpu.memory_space<vmem>>, vector<8x128xf32>,
    } else {
    }
    %c0 = arith.constant 0 : index
    %c0_1 = arith.constant 0 : index
    %3 = vector.load %arg3[%c0, %c0_1] : memref<128x512xf32, #tpu.memory_space<vmem>>, vector<128x512xf32>
    %c0_2 = arith.constant 0 : index
    %c0_3 = arith.constant 0 : index
    %4 = vector.load %arg4[%c0_2, %c0_3] : memref<128x512xf32, #tpu.memory_space<vmem>>, vector<128x512xf32>
    %c0_4 = arith.constant 0 : index
    %c0_5 = arith.constant 0 : index
    %5 = vector.load %arg5[%c0_4, %c0_5] : memref<128x512xf32, #tpu.memory_space<vmem>>, vector<128x512xf32>
    %c0_6 = arith.constant 0 : index
    %c0_7 = arith.constant 0 : index
    %6 = vector.load %arg6[%c0_6, %c0_7] : memref<1x512xf32, #tpu.memory_space<vmem>>, vector<1x512xf32>
    %c0_8 = arith.constant 0 : index
    %c0_9 = arith.constant 0 : index
    %7 = vector.load %arg8[%c0_8, %c0_9] : memref<8x128xf32, #tpu.memory_space<vmem>>, vector<8x128xf32>
    %c0_10 = arith.constant 0 : index
    %c0_11 = arith.constant 0 : index
    %8 = vector.load %arg9[%c0_10, %c0_11] : memref<8x128xf32, #tpu.memory_space<vmem>>, vector<8x128xf32>
    %c0_12 = arith.constant 0 : index
    %c0_13 = arith.constant 0 : index
    %9 = vector.load %arg10[%c0_12, %c0_13] : memref<8x128xf32, #tpu.memory_space<vmem>>, vector<8x128xf32>
    %c0_14 = arith.constant 0 : index
    %c0_15 = arith.constant 0 : index
    %10 = vector.load %arg11[%c0_14, %c0_15] : memref<8x128xf32, #tpu.memory_space<vmem>>, vector<8x128xf32>
    %c0_16 = arith.constant 0 : index
    %c0_17 = arith.constant 0 : index
    %c0_18 = arith.constant 0 : index
    %11 = vector.load %arg2[%c0_16, %c0_17, %c0_18] : memref<8x8x512xf32, #tpu.memory_space<vmem>>, vector<1x8x512xf32>
    %12 = vector.shape_cast %11 : vector<1x8x512xf32> to vector<8x512xf32>
    %cst = arith.constant dense<0.000000e+00> : vector<8x512xf32>
    %13 = tpu.matmul %7, %3, %cst {dimension_numbers = #tpu.dot_dimension_numbers<[1], [0], [0], [1], [0, 0, 1, 1], [], []>} : vector<8x128xf32>, vector<128x512xf32>, vector<8x512xf32> -> vector<8x512xf32>
    %14 = arith.addf %12, %13 : vector<8x512xf32>
    %15 = vector.extract_strided_slice %14 {offsets = [0, 0], sizes = [8, 128], strides = [1, 1]} : vector<8x512xf32> to vector<8x128xf32>
    %16 = arith.negf %15 : vector<8x128xf32>
    %17 = math.exp %16 : vector<8x128xf32>
    %cst_19 = arith.constant 1.000000e+00 : f32
    %18 = vector.broadcast %cst_19 : f32 to vector<8x128xf32>
    %19 = arith.addf %18, %17 : vector<8x128xf32>
    %20 = arith.divf %18, %19 : vector<8x128xf32>
    %21 = vector.extract_strided_slice %14 {offsets = [0, 128], sizes = [8, 128], strides = [1, 1]} : vector<8x512xf32> to vector<8x128xf32>
    %22 = arith.negf %21 : vector<8x128xf32>
    %23 = math.exp %22 : vector<8x128xf32>
    %cst_20 = arith.constant 1.000000e+00 : f32
    %24 = vector.broadcast %cst_20 : f32 to vector<8x128xf32>
    %25 = arith.addf %24, %23 : vector<8x128xf32>
    %26 = arith.divf %24, %25 : vector<8x128xf32>
    %27 = vector.extract_strided_slice %14 {offsets = [0, 256], sizes = [8, 128], strides = [1, 1]} : vector<8x512xf32> to vector<8x128xf32>
    %28 = math.tanh %27 : vector<8x128xf32>
    %29 = vector.extract_strided_slice %14 {offsets = [0, 384], sizes = [8, 128], strides = [1, 1]} : vector<8x512xf32> to vector<8x128xf32>
    %30 = arith.negf %29 : vector<8x128xf32>
    %31 = math.exp %30 : vector<8x128xf32>
    %cst_21 = arith.constant 1.000000e+00 : f32
    %32 = vector.broadcast %cst_21 : f32 to vector<8x128xf32>
    %33 = arith.addf %32, %31 : vector<8x128xf32>
    %34 = arith.divf %32, %33 : vector<8x128xf32>
    %35 = arith.mulf %26, %8 : vector<8x128xf32>
    %36 = arith.mulf %20, %28 : vector<8x128xf32>
    %37 = arith.addf %35, %36 : vector<8x128xf32>
    %38 = math.tanh %37 : vector<8x128xf32>
    %39 = arith.mulf %34, %38 : vector<8x128xf32>
    %cst_22 = arith.constant dense<0.000000e+00> : vector<8x512xf32>
    %40 = tpu.matmul %39, %4, %cst_22 {dimension_numbers = #tpu.dot_dimension_numbers<[1], [0], [0], [1], [0, 0, 1, 1], [], []>} : vector<8x128xf32>, vector<128x512xf32>, vector<8x512xf32> -> vector<8x512xf32>
    %cst_23 = arith.constant dense<0.000000e+00> : vector<8x512xf32>
    %41 = tpu.matmul %9, %5, %cst_23 {dimension_numbers = #tpu.dot_dimension_numbers<[1], [0], [0], [1], [0, 0, 1, 1], [], []>} : vector<8x128xf32>, vector<128x512xf32>, vector<8x512xf32> -> vector<8x512xf32>
    %42 = arith.addf %40, %41 : vector<8x512xf32>
    %43 = vector.broadcast %6 : vector<1x512xf32> to vector<8x512xf32>
    %44 = arith.addf %42, %43 : vector<8x512xf32>
    %45 = vector.extract_strided_slice %44 {offsets = [0, 0], sizes = [8, 128], strides = [1, 1]} : vector<8x512xf32> to vector<8x128xf32>
    %46 = arith.negf %45 : vector<8x128xf32>
    %47 = math.exp %46 : vector<8x128xf32>
    %cst_24 = arith.constant 1.000000e+00 : f32
    %48 = vector.broadcast %cst_24 : f32 to vector<8x128xf32>
    %49 = arith.addf %48, %47 : vector<8x128xf32>
    %50 = arith.divf %48, %49 : vector<8x128xf32>
    %51 = vector.extract_strided_slice %44 {offsets = [0, 128], sizes = [8, 128], strides = [1, 1]} : vector<8x512xf32> to vector<8x128xf32>
    %52 = arith.negf %51 : vector<8x128xf32>
    %53 = math.exp %52 : vector<8x128xf32>
    %cst_25 = arith.constant 1.000000e+00 : f32
    %54 = vector.broadcast %cst_25 : f32 to vector<8x128xf32>
    %55 = arith.addf %54, %53 : vector<8x128xf32>
    %56 = arith.divf %54, %55 : vector<8x128xf32>
    %57 = vector.extract_strided_slice %44 {offsets = [0, 256], sizes = [8, 128], strides = [1, 1]} : vector<8x512xf32> to vector<8x128xf32>
    %58 = math.tanh %57 : vector<8x128xf32>
    %59 = vector.extract_strided_slice %44 {offsets = [0, 384], sizes = [8, 128], strides = [1, 1]} : vector<8x512xf32> to vector<8x128xf32>
    %60 = arith.negf %59 : vector<8x128xf32>
    %61 = math.exp %60 : vector<8x128xf32>
    %cst_26 = arith.constant 1.000000e+00 : f32
    %62 = vector.broadcast %cst_26 : f32 to vector<8x128xf32>
    %63 = arith.addf %62, %61 : vector<8x128xf32>
    %64 = arith.divf %62, %63 : vector<8x128xf32>
    %65 = arith.mulf %56, %10 : vector<8x128xf32>
    %66 = arith.mulf %50, %58 : vector<8x128xf32>
    %67 = arith.addf %65, %66 : vector<8x128xf32>
    %68 = math.tanh %67 : vector<8x128xf32>
    %69 = arith.mulf %64, %68 : vector<8x128xf32>
    %c0_27 = arith.constant 0 : index
    %c0_28 = arith.constant 0 : index
    %c0_29 = arith.constant 0 : index
    %70 = vector.load %arg7[%c0_27, %c0_28, %c0_29] : memref<8x8x128xf32, #tpu.memory_space<vmem>>, vector<1x8x128xf32>
    %71 = vector.shape_cast %70 : vector<1x8x128xf32> to vector<8x128xf32>
    %72 = vector.shape_cast %69 : vector<8x128xf32> to vector<1x8x128xf32>
    tpu.vector_store %arg7[%c0_27, %c0_28, %c0_29], %72 {strides = array<i32>} : memref<8x8x128xf32, #tpu.memory_space<vmem>>, vector<1x8x128xf32>,
    %c1 = arith.constant 1 : index
    %c0_30 = arith.constant 0 : index
    %c0_31 = arith.constant 0 : index
    %73 = vector.load %arg2[%c1, %c0_30, %c0_31] : memref<8x8x512xf32, #tpu.memory_space<vmem>>, vector<1x8x512xf32>
    %74 = vector.shape_cast %73 : vector<1x8x512xf32> to vector<8x512xf32>
    %cst_32 = arith.constant dense<0.000000e+00> : vector<8x512xf32>
    %75 = tpu.matmul %39, %3, %cst_32 {dimension_numbers = #tpu.dot_dimension_numbers<[1], [0], [0], [1], [0, 0, 1, 1], [], []>} : vector<8x128xf32>, vector<128x512xf32>, vector<8x512xf32> -> vector<8x512xf32>
    %76 = arith.addf %74, %75 : vector<8x512xf32>
    %77 = vector.extract_strided_slice %76 {offsets = [0, 0], sizes = [8, 128], strides = [1, 1]} : vector<8x512xf32> to vector<8x128xf32>
    %78 = arith.negf %77 : vector<8x128xf32>
    %79 = math.exp %78 : vector<8x128xf32>
    %cst_33 = arith.constant 1.000000e+00 : f32
    %80 = vector.broadcast %cst_33 : f32 to vector<8x128xf32>
    %81 = arith.addf %80, %79 : vector<8x128xf32>
    %82 = arith.divf %80, %81 : vector<8x128xf32>
    %83 = vector.extract_strided_slice %76 {offsets = [0, 128], sizes = [8, 128], strides = [1, 1]} : vector<8x512xf32> to vector<8x128xf32>
    %84 = arith.negf %83 : vector<8x128xf32>
    %85 = math.exp %84 : vector<8x128xf32>
    %cst_34 = arith.constant 1.000000e+00 : f32
    %86 = vector.broadcast %cst_34 : f32 to vector<8x128xf32>
    %87 = arith.addf %86, %85 : vector<8x128xf32>
    %88 = arith.divf %86, %87 : vector<8x128xf32>
    %89 = vector.extract_strided_slice %76 {offsets = [0, 256], sizes = [8, 128], strides = [1, 1]} : vector<8x512xf32> to vector<8x128xf32>
    %90 = math.tanh %89 : vector<8x128xf32>
    %91 = vector.extract_strided_slice %76 {offsets = [0, 384], sizes = [8, 128], strides = [1, 1]} : vector<8x512xf32> to vector<8x128xf32>
    %92 = arith.negf %91 : vector<8x128xf32>
    %93 = math.exp %92 : vector<8x128xf32>
    %cst_35 = arith.constant 1.000000e+00 : f32
    %94 = vector.broadcast %cst_35 : f32 to vector<8x128xf32>
    %95 = arith.addf %94, %93 : vector<8x128xf32>
    %96 = arith.divf %94, %95 : vector<8x128xf32>
    %97 = arith.mulf %88, %37 : vector<8x128xf32>
    %98 = arith.mulf %82, %90 : vector<8x128xf32>
    %99 = arith.addf %97, %98 : vector<8x128xf32>
    %100 = math.tanh %99 : vector<8x128xf32>
    %101 = arith.mulf %96, %100 : vector<8x128xf32>
    %cst_36 = arith.constant dense<0.000000e+00> : vector<8x512xf32>
    %102 = tpu.matmul %101, %4, %cst_36 {dimension_numbers = #tpu.dot_dimension_numbers<[1], [0], [0], [1], [0, 0, 1, 1], [], []>} : vector<8x128xf32>, vector<128x512xf32>, vector<8x512xf32> -> vector<8x512xf32>
    %cst_37 = arith.constant dense<0.000000e+00> : vector<8x512xf32>
    %103 = tpu.matmul %69, %5, %cst_37 {dimension_numbers = #tpu.dot_dimension_numbers<[1], [0], [0], [1], [0, 0, 1, 1], [], []>} : vector<8x128xf32>, vector<128x512xf32>, vector<8x512xf32> -> vector<8x512xf32>
    %104 = arith.addf %102, %103 : vector<8x512xf32>
    %105 = vector.broadcast %6 : vector<1x512xf32> to vector<8x512xf32>
    %106 = arith.addf %104, %105 : vector<8x512xf32>
    %107 = vector.extract_strided_slice %106 {offsets = [0, 0], sizes = [8, 128], strides = [1, 1]} : vector<8x512xf32> to vector<8x128xf32>
    %108 = arith.negf %107 : vector<8x128xf32>
    %109 = math.exp %108 : vector<8x128xf32>
    %cst_38 = arith.constant 1.000000e+00 : f32
    %110 = vector.broadcast %cst_38 : f32 to vector<8x128xf32>
    %111 = arith.addf %110, %109 : vector<8x128xf32>
    %112 = arith.divf %110, %111 : vector<8x128xf32>
    %113 = vector.extract_strided_slice %106 {offsets = [0, 128], sizes = [8, 128], strides = [1, 1]} : vector<8x512xf32> to vector<8x128xf32>
    %114 = arith.negf %113 : vector<8x128xf32>
    %115 = math.exp %114 : vector<8x128xf32>
    %cst_39 = arith.constant 1.000000e+00 : f32
    %116 = vector.broadcast %cst_39 : f32 to vector<8x128xf32>
    %117 = arith.addf %116, %115 : vector<8x128xf32>
    %118 = arith.divf %116, %117 : vector<8x128xf32>
    %119 = vector.extract_strided_slice %106 {offsets = [0, 256], sizes = [8, 128], strides = [1, 1]} : vector<8x512xf32> to vector<8x128xf32>
    %120 = math.tanh %119 : vector<8x128xf32>
    %121 = vector.extract_strided_slice %106 {offsets = [0, 384], sizes = [8, 128], strides = [1, 1]} : vector<8x512xf32> to vector<8x128xf32>
    %122 = arith.negf %121 : vector<8x128xf32>
    %123 = math.exp %122 : vector<8x128xf32>
    %cst_40 = arith.constant 1.000000e+00 : f32
    %124 = vector.broadcast %cst_40 : f32 to vector<8x128xf32>
    %125 = arith.addf %124, %123 : vector<8x128xf32>
    %126 = arith.divf %124, %125 : vector<8x128xf32>
    %127 = arith.mulf %118, %67 : vector<8x128xf32>
    %128 = arith.mulf %112, %120 : vector<8x128xf32>
    %129 = arith.addf %127, %128 : vector<8x128xf32>
    %130 = math.tanh %129 : vector<8x128xf32>
    %131 = arith.mulf %126, %130 : vector<8x128xf32>
    %c1_41 = arith.constant 1 : index
    %c0_42 = arith.constant 0 : index
    %c0_43 = arith.constant 0 : index
    %132 = vector.load %arg7[%c1_41, %c0_42, %c0_43] : memref<8x8x128xf32, #tpu.memory_space<vmem>>, vector<1x8x128xf32>
    %133 = vector.shape_cast %132 : vector<1x8x128xf32> to vector<8x128xf32>
    %134 = vector.shape_cast %131 : vector<8x128xf32> to vector<1x8x128xf32>
    tpu.vector_store %arg7[%c1_41, %c0_42, %c0_43], %134 {strides = array<i32>} : memref<8x8x128xf32, #tpu.memory_space<vmem>>, vector<1x8x128xf32>,
    %c2 = arith.constant 2 : index
    %c0_44 = arith.constant 0 : index
    %c0_45 = arith.constant 0 : index
    %135 = vector.load %arg2[%c2, %c0_44, %c0_45] : memref<8x8x512xf32, #tpu.memory_space<vmem>>, vector<1x8x512xf32>
    %136 = vector.shape_cast %135 : vector<1x8x512xf32> to vector<8x512xf32>
    %cst_46 = arith.constant dense<0.000000e+00> : vector<8x512xf32>
    %137 = tpu.matmul %101, %3, %cst_46 {dimension_numbers = #tpu.dot_dimension_numbers<[1], [0], [0], [1], [0, 0, 1, 1], [], []>} : vector<8x128xf32>, vector<128x512xf32>, vector<8x512xf32> -> vector<8x512xf32>
    %138 = arith.addf %136, %137 : vector<8x512xf32>
    %139 = vector.extract_strided_slice %138 {offsets = [0, 0], sizes = [8, 128], strides = [1, 1]} : vector<8x512xf32> to vector<8x128xf32>
    %140 = arith.negf %139 : vector<8x128xf32>
    %141 = math.exp %140 : vector<8x128xf32>
    %cst_47 = arith.constant 1.000000e+00 : f32
    %142 = vector.broadcast %cst_47 : f32 to vector<8x128xf32>
    %143 = arith.addf %142, %141 : vector<8x128xf32>
    %144 = arith.divf %142, %143 : vector<8x128xf32>
    %145 = vector.extract_strided_slice %138 {offsets = [0, 128], sizes = [8, 128], strides = [1, 1]} : vector<8x512xf32> to vector<8x128xf32>
    %146 = arith.negf %145 : vector<8x128xf32>
    %147 = math.exp %146 : vector<8x128xf32>
    %cst_48 = arith.constant 1.000000e+00 : f32
    %148 = vector.broadcast %cst_48 : f32 to vector<8x128xf32>
    %149 = arith.addf %148, %147 : vector<8x128xf32>
    %150 = arith.divf %148, %149 : vector<8x128xf32>
    %151 = vector.extract_strided_slice %138 {offsets = [0, 256], sizes = [8, 128], strides = [1, 1]} : vector<8x512xf32> to vector<8x128xf32>
    %152 = math.tanh %151 : vector<8x128xf32>
    %153 = vector.extract_strided_slice %138 {offsets = [0, 384], sizes = [8, 128], strides = [1, 1]} : vector<8x512xf32> to vector<8x128xf32>
    %154 = arith.negf %153 : vector<8x128xf32>
    %155 = math.exp %154 : vector<8x128xf32>
    %cst_49 = arith.constant 1.000000e+00 : f32
    %156 = vector.broadcast %cst_49 : f32 to vector<8x128xf32>
    %157 = arith.addf %156, %155 : vector<8x128xf32>
    %158 = arith.divf %156, %157 : vector<8x128xf32>
    %159 = arith.mulf %150, %99 : vector<8x128xf32>
    %160 = arith.mulf %144, %152 : vector<8x128xf32>
    %161 = arith.addf %159, %160 : vector<8x128xf32>
    %162 = math.tanh %161 : vector<8x128xf32>
    %163 = arith.mulf %158, %162 : vector<8x128xf32>
    %cst_50 = arith.constant dense<0.000000e+00> : vector<8x512xf32>
    %164 = tpu.matmul %163, %4, %cst_50 {dimension_numbers = #tpu.dot_dimension_numbers<[1], [0], [0], [1], [0, 0, 1, 1], [], []>} : vector<8x128xf32>, vector<128x512xf32>, vector<8x512xf32> -> vector<8x512xf32>
    %cst_51 = arith.constant dense<0.000000e+00> : vector<8x512xf32>
    %165 = tpu.matmul %131, %5, %cst_51 {dimension_numbers = #tpu.dot_dimension_numbers<[1], [0], [0], [1], [0, 0, 1, 1], [], []>} : vector<8x128xf32>, vector<128x512xf32>, vector<8x512xf32> -> vector<8x512xf32>
    %166 = arith.addf %164, %165 : vector<8x512xf32>
    %167 = vector.broadcast %6 : vector<1x512xf32> to vector<8x512xf32>
    %168 = arith.addf %166, %167 : vector<8x512xf32>
    %169 = vector.extract_strided_slice %168 {offsets = [0, 0], sizes = [8, 128], strides = [1, 1]} : vector<8x512xf32> to vector<8x128xf32>
    %170 = arith.negf %169 : vector<8x128xf32>
    %171 = math.exp %170 : vector<8x128xf32>
    %cst_52 = arith.constant 1.000000e+00 : f32
    %172 = vector.broadcast %cst_52 : f32 to vector<8x128xf32>
    %173 = arith.addf %172, %171 : vector<8x128xf32>
    %174 = arith.divf %172, %173 : vector<8x128xf32>
    %175 = vector.extract_strided_slice %168 {offsets = [0, 128], sizes = [8, 128], strides = [1, 1]} : vector<8x512xf32> to vector<8x128xf32>
    %176 = arith.negf %175 : vector<8x128xf32>
    %177 = math.exp %176 : vector<8x128xf32>
    %cst_53 = arith.constant 1.000000e+00 : f32
    %178 = vector.broadcast %cst_53 : f32 to vector<8x128xf32>
    %179 = arith.addf %178, %177 : vector<8x128xf32>
    %180 = arith.divf %178, %179 : vector<8x128xf32>
    %181 = vector.extract_strided_slice %168 {offsets = [0, 256], sizes = [8, 128], strides = [1, 1]} : vector<8x512xf32> to vector<8x128xf32>
    %182 = math.tanh %181 : vector<8x128xf32>
    %183 = vector.extract_strided_slice %168 {offsets = [0, 384], sizes = [8, 128], strides = [1, 1]} : vector<8x512xf32> to vector<8x128xf32>
    %184 = arith.negf %183 : vector<8x128xf32>
    %185 = math.exp %184 : vector<8x128xf32>
    %cst_54 = arith.constant 1.000000e+00 : f32
    %186 = vector.broadcast %cst_54 : f32 to vector<8x128xf32>
    %187 = arith.addf %186, %185 : vector<8x128xf32>
    %188 = arith.divf %186, %187 : vector<8x128xf32>
    %189 = arith.mulf %180, %129 : vector<8x128xf32>
    %190 = arith.mulf %174, %182 : vector<8x128xf32>
    %191 = arith.addf %189, %190 : vector<8x128xf32>
    %192 = math.tanh %191 : vector<8x128xf32>
    %193 = arith.mulf %188, %192 : vector<8x128xf32>
    %c2_55 = arith.constant 2 : index
    %c0_56 = arith.constant 0 : index
    %c0_57 = arith.constant 0 : index
    %194 = vector.load %arg7[%c2_55, %c0_56, %c0_57] : memref<8x8x128xf32, #tpu.memory_space<vmem>>, vector<1x8x128xf32>
    %195 = vector.shape_cast %194 : vector<1x8x128xf32> to vector<8x128xf32>
    %196 = vector.shape_cast %193 : vector<8x128xf32> to vector<1x8x128xf32>
    tpu.vector_store %arg7[%c2_55, %c0_56, %c0_57], %196 {strides = array<i32>} : memref<8x8x128xf32, #tpu.memory_space<vmem>>, vector<1x8x128xf32>,
    %c3 = arith.constant 3 : index
    %c0_58 = arith.constant 0 : index
    %c0_59 = arith.constant 0 : index
    %197 = vector.load %arg2[%c3, %c0_58, %c0_59] : memref<8x8x512xf32, #tpu.memory_space<vmem>>, vector<1x8x512xf32>
    %198 = vector.shape_cast %197 : vector<1x8x512xf32> to vector<8x512xf32>
    %cst_60 = arith.constant dense<0.000000e+00> : vector<8x512xf32>
    %199 = tpu.matmul %163, %3, %cst_60 {dimension_numbers = #tpu.dot_dimension_numbers<[1], [0], [0], [1], [0, 0, 1, 1], [], []>} : vector<8x128xf32>, vector<128x512xf32>, vector<8x512xf32> -> vector<8x512xf32>
    %200 = arith.addf %198, %199 : vector<8x512xf32>
    %201 = vector.extract_strided_slice %200 {offsets = [0, 0], sizes = [8, 128], strides = [1, 1]} : vector<8x512xf32> to vector<8x128xf32>
    %202 = arith.negf %201 : vector<8x128xf32>
    %203 = math.exp %202 : vector<8x128xf32>
    %cst_61 = arith.constant 1.000000e+00 : f32
    %204 = vector.broadcast %cst_61 : f32 to vector<8x128xf32>
    %205 = arith.addf %204, %203 : vector<8x128xf32>
    %206 = arith.divf %204, %205 : vector<8x128xf32>
    %207 = vector.extract_strided_slice %200 {offsets = [0, 128], sizes = [8, 128], strides = [1, 1]} : vector<8x512xf32> to vector<8x128xf32>
    %208 = arith.negf %207 : vector<8x128xf32>
    %209 = math.exp %208 : vector<8x128xf32>
    %cst_62 = arith.constant 1.000000e+00 : f32
    %210 = vector.broadcast %cst_62 : f32 to vector<8x128xf32>
    %211 = arith.addf %210, %209 : vector<8x128xf32>
    %212 = arith.divf %210, %211 : vector<8x128xf32>
    %213 = vector.extract_strided_slice %200 {offsets = [0, 256], sizes = [8, 128], strides = [1, 1]} : vector<8x512xf32> to vector<8x128xf32>
    %214 = math.tanh %213 : vector<8x128xf32>
    %215 = vector.extract_strided_slice %200 {offsets = [0, 384], sizes = [8, 128], strides = [1, 1]} : vector<8x512xf32> to vector<8x128xf32>
    %216 = arith.negf %215 : vector<8x128xf32>
    %217 = math.exp %216 : vector<8x128xf32>
    %cst_63 = arith.constant 1.000000e+00 : f32
    %218 = vector.broadcast %cst_63 : f32 to vector<8x128xf32>
    %219 = arith.addf %218, %217 : vector<8x128xf32>
    %220 = arith.divf %218, %219 : vector<8x128xf32>
    %221 = arith.mulf %212, %161 : vector<8x128xf32>
    %222 = arith.mulf %206, %214 : vector<8x128xf32>
    %223 = arith.addf %221, %222 : vector<8x128xf32>
    %224 = math.tanh %223 : vector<8x128xf32>
    %225 = arith.mulf %220, %224 : vector<8x128xf32>
    %cst_64 = arith.constant dense<0.000000e+00> : vector<8x512xf32>
    %226 = tpu.matmul %225, %4, %cst_64 {dimension_numbers = #tpu.dot_dimension_numbers<[1], [0], [0], [1], [0, 0, 1, 1], [], []>} : vector<8x128xf32>, vector<128x512xf32>, vector<8x512xf32> -> vector<8x512xf32>
    %cst_65 = arith.constant dense<0.000000e+00> : vector<8x512xf32>
    %227 = tpu.matmul %193, %5, %cst_65 {dimension_numbers = #tpu.dot_dimension_numbers<[1], [0], [0], [1], [0, 0, 1, 1], [], []>} : vector<8x128xf32>, vector<128x512xf32>, vector<8x512xf32> -> vector<8x512xf32>
    %228 = arith.addf %226, %227 : vector<8x512xf32>
    %229 = vector.broadcast %6 : vector<1x512xf32> to vector<8x512xf32>
    %230 = arith.addf %228, %229 : vector<8x512xf32>
    %231 = vector.extract_strided_slice %230 {offsets = [0, 0], sizes = [8, 128], strides = [1, 1]} : vector<8x512xf32> to vector<8x128xf32>
    %232 = arith.negf %231 : vector<8x128xf32>
    %233 = math.exp %232 : vector<8x128xf32>
    %cst_66 = arith.constant 1.000000e+00 : f32
    %234 = vector.broadcast %cst_66 : f32 to vector<8x128xf32>
    %235 = arith.addf %234, %233 : vector<8x128xf32>
    %236 = arith.divf %234, %235 : vector<8x128xf32>
    %237 = vector.extract_strided_slice %230 {offsets = [0, 128], sizes = [8, 128], strides = [1, 1]} : vector<8x512xf32> to vector<8x128xf32>
    %238 = arith.negf %237 : vector<8x128xf32>
    %239 = math.exp %238 : vector<8x128xf32>
    %cst_67 = arith.constant 1.000000e+00 : f32
    %240 = vector.broadcast %cst_67 : f32 to vector<8x128xf32>
    %241 = arith.addf %240, %239 : vector<8x128xf32>
    %242 = arith.divf %240, %241 : vector<8x128xf32>
    %243 = vector.extract_strided_slice %230 {offsets = [0, 256], sizes = [8, 128], strides = [1, 1]} : vector<8x512xf32> to vector<8x128xf32>
    %244 = math.tanh %243 : vector<8x128xf32>
    %245 = vector.extract_strided_slice %230 {offsets = [0, 384], sizes = [8, 128], strides = [1, 1]} : vector<8x512xf32> to vector<8x128xf32>
    %246 = arith.negf %245 : vector<8x128xf32>
    %247 = math.exp %246 : vector<8x128xf32>
    %cst_68 = arith.constant 1.000000e+00 : f32
    %248 = vector.broadcast %cst_68 : f32 to vector<8x128xf32>
    %249 = arith.addf %248, %247 : vector<8x128xf32>
    %250 = arith.divf %248, %249 : vector<8x128xf32>
    %251 = arith.mulf %242, %191 : vector<8x128xf32>
    %252 = arith.mulf %236, %244 : vector<8x128xf32>
    %253 = arith.addf %251, %252 : vector<8x128xf32>
    %254 = math.tanh %253 : vector<8x128xf32>
    %255 = arith.mulf %250, %254 : vector<8x128xf32>
    %c3_69 = arith.constant 3 : index
    %c0_70 = arith.constant 0 : index
    %c0_71 = arith.constant 0 : index
    %256 = vector.load %arg7[%c3_69, %c0_70, %c0_71] : memref<8x8x128xf32, #tpu.memory_space<vmem>>, vector<1x8x128xf32>
    %257 = vector.shape_cast %256 : vector<1x8x128xf32> to vector<8x128xf32>
    %258 = vector.shape_cast %255 : vector<8x128xf32> to vector<1x8x128xf32>
    tpu.vector_store %arg7[%c3_69, %c0_70, %c0_71], %258 {strides = array<i32>} : memref<8x8x128xf32, #tpu.memory_space<vmem>>, vector<1x8x128xf32>,
    %c4 = arith.constant 4 : index
    %c0_72 = arith.constant 0 : index
    %c0_73 = arith.constant 0 : index
    %259 = vector.load %arg2[%c4, %c0_72, %c0_73] : memref<8x8x512xf32, #tpu.memory_space<vmem>>, vector<1x8x512xf32>
    %260 = vector.shape_cast %259 : vector<1x8x512xf32> to vector<8x512xf32>
    %cst_74 = arith.constant dense<0.000000e+00> : vector<8x512xf32>
    %261 = tpu.matmul %225, %3, %cst_74 {dimension_numbers = #tpu.dot_dimension_numbers<[1], [0], [0], [1], [0, 0, 1, 1], [], []>} : vector<8x128xf32>, vector<128x512xf32>, vector<8x512xf32> -> vector<8x512xf32>
    %262 = arith.addf %260, %261 : vector<8x512xf32>
    %263 = vector.extract_strided_slice %262 {offsets = [0, 0], sizes = [8, 128], strides = [1, 1]} : vector<8x512xf32> to vector<8x128xf32>
    %264 = arith.negf %263 : vector<8x128xf32>
    %265 = math.exp %264 : vector<8x128xf32>
    %cst_75 = arith.constant 1.000000e+00 : f32
    %266 = vector.broadcast %cst_75 : f32 to vector<8x128xf32>
    %267 = arith.addf %266, %265 : vector<8x128xf32>
    %268 = arith.divf %266, %267 : vector<8x128xf32>
    %269 = vector.extract_strided_slice %262 {offsets = [0, 128], sizes = [8, 128], strides = [1, 1]} : vector<8x512xf32> to vector<8x128xf32>
    %270 = arith.negf %269 : vector<8x128xf32>
    %271 = math.exp %270 : vector<8x128xf32>
    %cst_76 = arith.constant 1.000000e+00 : f32
    %272 = vector.broadcast %cst_76 : f32 to vector<8x128xf32>
    %273 = arith.addf %272, %271 : vector<8x128xf32>
    %274 = arith.divf %272, %273 : vector<8x128xf32>
    %275 = vector.extract_strided_slice %262 {offsets = [0, 256], sizes = [8, 128], strides = [1, 1]} : vector<8x512xf32> to vector<8x128xf32>
    %276 = math.tanh %275 : vector<8x128xf32>
    %277 = vector.extract_strided_slice %262 {offsets = [0, 384], sizes = [8, 128], strides = [1, 1]} : vector<8x512xf32> to vector<8x128xf32>
    %278 = arith.negf %277 : vector<8x128xf32>
    %279 = math.exp %278 : vector<8x128xf32>
    %cst_77 = arith.constant 1.000000e+00 : f32
    %280 = vector.broadcast %cst_77 : f32 to vector<8x128xf32>
    %281 = arith.addf %280, %279 : vector<8x128xf32>
    %282 = arith.divf %280, %281 : vector<8x128xf32>
    %283 = arith.mulf %274, %223 : vector<8x128xf32>
    %284 = arith.mulf %268, %276 : vector<8x128xf32>
    %285 = arith.addf %283, %284 : vector<8x128xf32>
    %286 = math.tanh %285 : vector<8x128xf32>
    %287 = arith.mulf %282, %286 : vector<8x128xf32>
    %cst_78 = arith.constant dense<0.000000e+00> : vector<8x512xf32>
    %288 = tpu.matmul %287, %4, %cst_78 {dimension_numbers = #tpu.dot_dimension_numbers<[1], [0], [0], [1], [0, 0, 1, 1], [], []>} : vector<8x128xf32>, vector<128x512xf32>, vector<8x512xf32> -> vector<8x512xf32>
    %cst_79 = arith.constant dense<0.000000e+00> : vector<8x512xf32>
    %289 = tpu.matmul %255, %5, %cst_79 {dimension_numbers = #tpu.dot_dimension_numbers<[1], [0], [0], [1], [0, 0, 1, 1], [], []>} : vector<8x128xf32>, vector<128x512xf32>, vector<8x512xf32> -> vector<8x512xf32>
    %290 = arith.addf %288, %289 : vector<8x512xf32>
    %291 = vector.broadcast %6 : vector<1x512xf32> to vector<8x512xf32>
    %292 = arith.addf %290, %291 : vector<8x512xf32>
    %293 = vector.extract_strided_slice %292 {offsets = [0, 0], sizes = [8, 128], strides = [1, 1]} : vector<8x512xf32> to vector<8x128xf32>
    %294 = arith.negf %293 : vector<8x128xf32>
    %295 = math.exp %294 : vector<8x128xf32>
    %cst_80 = arith.constant 1.000000e+00 : f32
    %296 = vector.broadcast %cst_80 : f32 to vector<8x128xf32>
    %297 = arith.addf %296, %295 : vector<8x128xf32>
    %298 = arith.divf %296, %297 : vector<8x128xf32>
    %299 = vector.extract_strided_slice %292 {offsets = [0, 128], sizes = [8, 128], strides = [1, 1]} : vector<8x512xf32> to vector<8x128xf32>
    %300 = arith.negf %299 : vector<8x128xf32>
    %301 = math.exp %300 : vector<8x128xf32>
    %cst_81 = arith.constant 1.000000e+00 : f32
    %302 = vector.broadcast %cst_81 : f32 to vector<8x128xf32>
    %303 = arith.addf %302, %301 : vector<8x128xf32>
    %304 = arith.divf %302, %303 : vector<8x128xf32>
    %305 = vector.extract_strided_slice %292 {offsets = [0, 256], sizes = [8, 128], strides = [1, 1]} : vector<8x512xf32> to vector<8x128xf32>
    %306 = math.tanh %305 : vector<8x128xf32>
    %307 = vector.extract_strided_slice %292 {offsets = [0, 384], sizes = [8, 128], strides = [1, 1]} : vector<8x512xf32> to vector<8x128xf32>
    %308 = arith.negf %307 : vector<8x128xf32>
    %309 = math.exp %308 : vector<8x128xf32>
    %cst_82 = arith.constant 1.000000e+00 : f32
    %310 = vector.broadcast %cst_82 : f32 to vector<8x128xf32>
    %311 = arith.addf %310, %309 : vector<8x128xf32>
    %312 = arith.divf %310, %311 : vector<8x128xf32>
    %313 = arith.mulf %304, %253 : vector<8x128xf32>
    %314 = arith.mulf %298, %306 : vector<8x128xf32>
    %315 = arith.addf %313, %314 : vector<8x128xf32>
    %316 = math.tanh %315 : vector<8x128xf32>
    %317 = arith.mulf %312, %316 : vector<8x128xf32>
    %c4_83 = arith.constant 4 : index
    %c0_84 = arith.constant 0 : index
    %c0_85 = arith.constant 0 : index
    %318 = vector.load %arg7[%c4_83, %c0_84, %c0_85] : memref<8x8x128xf32, #tpu.memory_space<vmem>>, vector<1x8x128xf32>
    %319 = vector.shape_cast %318 : vector<1x8x128xf32> to vector<8x128xf32>
    %320 = vector.shape_cast %317 : vector<8x128xf32> to vector<1x8x128xf32>
    tpu.vector_store %arg7[%c4_83, %c0_84, %c0_85], %320 {strides = array<i32>} : memref<8x8x128xf32, #tpu.memory_space<vmem>>, vector<1x8x128xf32>,
    %c5 = arith.constant 5 : index
    %c0_86 = arith.constant 0 : index
    %c0_87 = arith.constant 0 : index
    %321 = vector.load %arg2[%c5, %c0_86, %c0_87] : memref<8x8x512xf32, #tpu.memory_space<vmem>>, vector<1x8x512xf32>
    %322 = vector.shape_cast %321 : vector<1x8x512xf32> to vector<8x512xf32>
    %cst_88 = arith.constant dense<0.000000e+00> : vector<8x512xf32>
    %323 = tpu.matmul %287, %3, %cst_88 {dimension_numbers = #tpu.dot_dimension_numbers<[1], [0], [0], [1], [0, 0, 1, 1], [], []>} : vector<8x128xf32>, vector<128x512xf32>, vector<8x512xf32> -> vector<8x512xf32>
    %324 = arith.addf %322, %323 : vector<8x512xf32>
    %325 = vector.extract_strided_slice %324 {offsets = [0, 0], sizes = [8, 128], strides = [1, 1]} : vector<8x512xf32> to vector<8x128xf32>
    %326 = arith.negf %325 : vector<8x128xf32>
    %327 = math.exp %326 : vector<8x128xf32>
    %cst_89 = arith.constant 1.000000e+00 : f32
    %328 = vector.broadcast %cst_89 : f32 to vector<8x128xf32>
    %329 = arith.addf %328, %327 : vector<8x128xf32>
    %330 = arith.divf %328, %329 : vector<8x128xf32>
    %331 = vector.extract_strided_slice %324 {offsets = [0, 128], sizes = [8, 128], strides = [1, 1]} : vector<8x512xf32> to vector<8x128xf32>
    %332 = arith.negf %331 : vector<8x128xf32>
    %333 = math.exp %332 : vector<8x128xf32>
    %cst_90 = arith.constant 1.000000e+00 : f32
    %334 = vector.broadcast %cst_90 : f32 to vector<8x128xf32>
    %335 = arith.addf %334, %333 : vector<8x128xf32>
    %336 = arith.divf %334, %335 : vector<8x128xf32>
    %337 = vector.extract_strided_slice %324 {offsets = [0, 256], sizes = [8, 128], strides = [1, 1]} : vector<8x512xf32> to vector<8x128xf32>
    %338 = math.tanh %337 : vector<8x128xf32>
    %339 = vector.extract_strided_slice %324 {offsets = [0, 384], sizes = [8, 128], strides = [1, 1]} : vector<8x512xf32> to vector<8x128xf32>
    %340 = arith.negf %339 : vector<8x128xf32>
    %341 = math.exp %340 : vector<8x128xf32>
    %cst_91 = arith.constant 1.000000e+00 : f32
    %342 = vector.broadcast %cst_91 : f32 to vector<8x128xf32>
    %343 = arith.addf %342, %341 : vector<8x128xf32>
    %344 = arith.divf %342, %343 : vector<8x128xf32>
    %345 = arith.mulf %336, %285 : vector<8x128xf32>
    %346 = arith.mulf %330, %338 : vector<8x128xf32>
    %347 = arith.addf %345, %346 : vector<8x128xf32>
    %348 = math.tanh %347 : vector<8x128xf32>
    %349 = arith.mulf %344, %348 : vector<8x128xf32>
    %cst_92 = arith.constant dense<0.000000e+00> : vector<8x512xf32>
    %350 = tpu.matmul %349, %4, %cst_92 {dimension_numbers = #tpu.dot_dimension_numbers<[1], [0], [0], [1], [0, 0, 1, 1], [], []>} : vector<8x128xf32>, vector<128x512xf32>, vector<8x512xf32> -> vector<8x512xf32>
    %cst_93 = arith.constant dense<0.000000e+00> : vector<8x512xf32>
    %351 = tpu.matmul %317, %5, %cst_93 {dimension_numbers = #tpu.dot_dimension_numbers<[1], [0], [0], [1], [0, 0, 1, 1], [], []>} : vector<8x128xf32>, vector<128x512xf32>, vector<8x512xf32> -> vector<8x512xf32>
    %352 = arith.addf %350, %351 : vector<8x512xf32>
    %353 = vector.broadcast %6 : vector<1x512xf32> to vector<8x512xf32>
    %354 = arith.addf %352, %353 : vector<8x512xf32>
    %355 = vector.extract_strided_slice %354 {offsets = [0, 0], sizes = [8, 128], strides = [1, 1]} : vector<8x512xf32> to vector<8x128xf32>
    %356 = arith.negf %355 : vector<8x128xf32>
    %357 = math.exp %356 : vector<8x128xf32>
    %cst_94 = arith.constant 1.000000e+00 : f32
    %358 = vector.broadcast %cst_94 : f32 to vector<8x128xf32>
    %359 = arith.addf %358, %357 : vector<8x128xf32>
    %360 = arith.divf %358, %359 : vector<8x128xf32>
    %361 = vector.extract_strided_slice %354 {offsets = [0, 128], sizes = [8, 128], strides = [1, 1]} : vector<8x512xf32> to vector<8x128xf32>
    %362 = arith.negf %361 : vector<8x128xf32>
    %363 = math.exp %362 : vector<8x128xf32>
    %cst_95 = arith.constant 1.000000e+00 : f32
    %364 = vector.broadcast %cst_95 : f32 to vector<8x128xf32>
    %365 = arith.addf %364, %363 : vector<8x128xf32>
    %366 = arith.divf %364, %365 : vector<8x128xf32>
    %367 = vector.extract_strided_slice %354 {offsets = [0, 256], sizes = [8, 128], strides = [1, 1]} : vector<8x512xf32> to vector<8x128xf32>
    %368 = math.tanh %367 : vector<8x128xf32>
    %369 = vector.extract_strided_slice %354 {offsets = [0, 384], sizes = [8, 128], strides = [1, 1]} : vector<8x512xf32> to vector<8x128xf32>
    %370 = arith.negf %369 : vector<8x128xf32>
    %371 = math.exp %370 : vector<8x128xf32>
    %cst_96 = arith.constant 1.000000e+00 : f32
    %372 = vector.broadcast %cst_96 : f32 to vector<8x128xf32>
    %373 = arith.addf %372, %371 : vector<8x128xf32>
    %374 = arith.divf %372, %373 : vector<8x128xf32>
    %375 = arith.mulf %366, %315 : vector<8x128xf32>
    %376 = arith.mulf %360, %368 : vector<8x128xf32>
    %377 = arith.addf %375, %376 : vector<8x128xf32>
    %378 = math.tanh %377 : vector<8x128xf32>
    %379 = arith.mulf %374, %378 : vector<8x128xf32>
    %c5_97 = arith.constant 5 : index
    %c0_98 = arith.constant 0 : index
    %c0_99 = arith.constant 0 : index
    %380 = vector.load %arg7[%c5_97, %c0_98, %c0_99] : memref<8x8x128xf32, #tpu.memory_space<vmem>>, vector<1x8x128xf32>
    %381 = vector.shape_cast %380 : vector<1x8x128xf32> to vector<8x128xf32>
    %382 = vector.shape_cast %379 : vector<8x128xf32> to vector<1x8x128xf32>
    tpu.vector_store %arg7[%c5_97, %c0_98, %c0_99], %382 {strides = array<i32>} : memref<8x8x128xf32, #tpu.memory_space<vmem>>, vector<1x8x128xf32>,
    %c6 = arith.constant 6 : index
    %c0_100 = arith.constant 0 : index
    %c0_101 = arith.constant 0 : index
    %383 = vector.load %arg2[%c6, %c0_100, %c0_101] : memref<8x8x512xf32, #tpu.memory_space<vmem>>, vector<1x8x512xf32>
    %384 = vector.shape_cast %383 : vector<1x8x512xf32> to vector<8x512xf32>
    %cst_102 = arith.constant dense<0.000000e+00> : vector<8x512xf32>
    %385 = tpu.matmul %349, %3, %cst_102 {dimension_numbers = #tpu.dot_dimension_numbers<[1], [0], [0], [1], [0, 0, 1, 1], [], []>} : vector<8x128xf32>, vector<128x512xf32>, vector<8x512xf32> -> vector<8x512xf32>
    %386 = arith.addf %384, %385 : vector<8x512xf32>
    %387 = vector.extract_strided_slice %386 {offsets = [0, 0], sizes = [8, 128], strides = [1, 1]} : vector<8x512xf32> to vector<8x128xf32>
    %388 = arith.negf %387 : vector<8x128xf32>
    %389 = math.exp %388 : vector<8x128xf32>
    %cst_103 = arith.constant 1.000000e+00 : f32
    %390 = vector.broadcast %cst_103 : f32 to vector<8x128xf32>
    %391 = arith.addf %390, %389 : vector<8x128xf32>
    %392 = arith.divf %390, %391 : vector<8x128xf32>
    %393 = vector.extract_strided_slice %386 {offsets = [0, 128], sizes = [8, 128], strides = [1, 1]} : vector<8x512xf32> to vector<8x128xf32>
    %394 = arith.negf %393 : vector<8x128xf32>
    %395 = math.exp %394 : vector<8x128xf32>
    %cst_104 = arith.constant 1.000000e+00 : f32
    %396 = vector.broadcast %cst_104 : f32 to vector<8x128xf32>
    %397 = arith.addf %396, %395 : vector<8x128xf32>
    %398 = arith.divf %396, %397 : vector<8x128xf32>
    %399 = vector.extract_strided_slice %386 {offsets = [0, 256], sizes = [8, 128], strides = [1, 1]} : vector<8x512xf32> to vector<8x128xf32>
    %400 = math.tanh %399 : vector<8x128xf32>
    %401 = vector.extract_strided_slice %386 {offsets = [0, 384], sizes = [8, 128], strides = [1, 1]} : vector<8x512xf32> to vector<8x128xf32>
    %402 = arith.negf %401 : vector<8x128xf32>
    %403 = math.exp %402 : vector<8x128xf32>
    %cst_105 = arith.constant 1.000000e+00 : f32
    %404 = vector.broadcast %cst_105 : f32 to vector<8x128xf32>
    %405 = arith.addf %404, %403 : vector<8x128xf32>
    %406 = arith.divf %404, %405 : vector<8x128xf32>
    %407 = arith.mulf %398, %347 : vector<8x128xf32>
    %408 = arith.mulf %392, %400 : vector<8x128xf32>
    %409 = arith.addf %407, %408 : vector<8x128xf32>
    %410 = math.tanh %409 : vector<8x128xf32>
    %411 = arith.mulf %406, %410 : vector<8x128xf32>
    %cst_106 = arith.constant dense<0.000000e+00> : vector<8x512xf32>
    %412 = tpu.matmul %411, %4, %cst_106 {dimension_numbers = #tpu.dot_dimension_numbers<[1], [0], [0], [1], [0, 0, 1, 1], [], []>} : vector<8x128xf32>, vector<128x512xf32>, vector<8x512xf32> -> vector<8x512xf32>
    %cst_107 = arith.constant dense<0.000000e+00> : vector<8x512xf32>
    %413 = tpu.matmul %379, %5, %cst_107 {dimension_numbers = #tpu.dot_dimension_numbers<[1], [0], [0], [1], [0, 0, 1, 1], [], []>} : vector<8x128xf32>, vector<128x512xf32>, vector<8x512xf32> -> vector<8x512xf32>
    %414 = arith.addf %412, %413 : vector<8x512xf32>
    %415 = vector.broadcast %6 : vector<1x512xf32> to vector<8x512xf32>
    %416 = arith.addf %414, %415 : vector<8x512xf32>
    %417 = vector.extract_strided_slice %416 {offsets = [0, 0], sizes = [8, 128], strides = [1, 1]} : vector<8x512xf32> to vector<8x128xf32>
    %418 = arith.negf %417 : vector<8x128xf32>
    %419 = math.exp %418 : vector<8x128xf32>
    %cst_108 = arith.constant 1.000000e+00 : f32
    %420 = vector.broadcast %cst_108 : f32 to vector<8x128xf32>
    %421 = arith.addf %420, %419 : vector<8x128xf32>
    %422 = arith.divf %420, %421 : vector<8x128xf32>
    %423 = vector.extract_strided_slice %416 {offsets = [0, 128], sizes = [8, 128], strides = [1, 1]} : vector<8x512xf32> to vector<8x128xf32>
    %424 = arith.negf %423 : vector<8x128xf32>
    %425 = math.exp %424 : vector<8x128xf32>
    %cst_109 = arith.constant 1.000000e+00 : f32
    %426 = vector.broadcast %cst_109 : f32 to vector<8x128xf32>
    %427 = arith.addf %426, %425 : vector<8x128xf32>
    %428 = arith.divf %426, %427 : vector<8x128xf32>
    %429 = vector.extract_strided_slice %416 {offsets = [0, 256], sizes = [8, 128], strides = [1, 1]} : vector<8x512xf32> to vector<8x128xf32>
    %430 = math.tanh %429 : vector<8x128xf32>
    %431 = vector.extract_strided_slice %416 {offsets = [0, 384], sizes = [8, 128], strides = [1, 1]} : vector<8x512xf32> to vector<8x128xf32>
    %432 = arith.negf %431 : vector<8x128xf32>
    %433 = math.exp %432 : vector<8x128xf32>
    %cst_110 = arith.constant 1.000000e+00 : f32
    %434 = vector.broadcast %cst_110 : f32 to vector<8x128xf32>
    %435 = arith.addf %434, %433 : vector<8x128xf32>
    %436 = arith.divf %434, %435 : vector<8x128xf32>
    %437 = arith.mulf %428, %377 : vector<8x128xf32>
    %438 = arith.mulf %422, %430 : vector<8x128xf32>
    %439 = arith.addf %437, %438 : vector<8x128xf32>
    %440 = math.tanh %439 : vector<8x128xf32>
    %441 = arith.mulf %436, %440 : vector<8x128xf32>
    %c6_111 = arith.constant 6 : index
    %c0_112 = arith.constant 0 : index
    %c0_113 = arith.constant 0 : index
    %442 = vector.load %arg7[%c6_111, %c0_112, %c0_113] : memref<8x8x128xf32, #tpu.memory_space<vmem>>, vector<1x8x128xf32>
    %443 = vector.shape_cast %442 : vector<1x8x128xf32> to vector<8x128xf32>
    %444 = vector.shape_cast %441 : vector<8x128xf32> to vector<1x8x128xf32>
    tpu.vector_store %arg7[%c6_111, %c0_112, %c0_113], %444 {strides = array<i32>} : memref<8x8x128xf32, #tpu.memory_space<vmem>>, vector<1x8x128xf32>,
    %c7 = arith.constant 7 : index
    %c0_114 = arith.constant 0 : index
    %c0_115 = arith.constant 0 : index
    %445 = vector.load %arg2[%c7, %c0_114, %c0_115] : memref<8x8x512xf32, #tpu.memory_space<vmem>>, vector<1x8x512xf32>
    %446 = vector.shape_cast %445 : vector<1x8x512xf32> to vector<8x512xf32>
    %cst_116 = arith.constant dense<0.000000e+00> : vector<8x512xf32>
    %447 = tpu.matmul %411, %3, %cst_116 {dimension_numbers = #tpu.dot_dimension_numbers<[1], [0], [0], [1], [0, 0, 1, 1], [], []>} : vector<8x128xf32>, vector<128x512xf32>, vector<8x512xf32> -> vector<8x512xf32>
    %448 = arith.addf %446, %447 : vector<8x512xf32>
    %449 = vector.extract_strided_slice %448 {offsets = [0, 0], sizes = [8, 128], strides = [1, 1]} : vector<8x512xf32> to vector<8x128xf32>
    %450 = arith.negf %449 : vector<8x128xf32>
    %451 = math.exp %450 : vector<8x128xf32>
    %cst_117 = arith.constant 1.000000e+00 : f32
    %452 = vector.broadcast %cst_117 : f32 to vector<8x128xf32>
    %453 = arith.addf %452, %451 : vector<8x128xf32>
    %454 = arith.divf %452, %453 : vector<8x128xf32>
    %455 = vector.extract_strided_slice %448 {offsets = [0, 128], sizes = [8, 128], strides = [1, 1]} : vector<8x512xf32> to vector<8x128xf32>
    %456 = arith.negf %455 : vector<8x128xf32>
    %457 = math.exp %456 : vector<8x128xf32>
    %cst_118 = arith.constant 1.000000e+00 : f32
    %458 = vector.broadcast %cst_118 : f32 to vector<8x128xf32>
    %459 = arith.addf %458, %457 : vector<8x128xf32>
    %460 = arith.divf %458, %459 : vector<8x128xf32>
    %461 = vector.extract_strided_slice %448 {offsets = [0, 256], sizes = [8, 128], strides = [1, 1]} : vector<8x512xf32> to vector<8x128xf32>
    %462 = math.tanh %461 : vector<8x128xf32>
    %463 = vector.extract_strided_slice %448 {offsets = [0, 384], sizes = [8, 128], strides = [1, 1]} : vector<8x512xf32> to vector<8x128xf32>
    %464 = arith.negf %463 : vector<8x128xf32>
    %465 = math.exp %464 : vector<8x128xf32>
    %cst_119 = arith.constant 1.000000e+00 : f32
    %466 = vector.broadcast %cst_119 : f32 to vector<8x128xf32>
    %467 = arith.addf %466, %465 : vector<8x128xf32>
    %468 = arith.divf %466, %467 : vector<8x128xf32>
    %469 = arith.mulf %460, %409 : vector<8x128xf32>
    %470 = arith.mulf %454, %462 : vector<8x128xf32>
    %471 = arith.addf %469, %470 : vector<8x128xf32>
    %472 = math.tanh %471 : vector<8x128xf32>
    %473 = arith.mulf %468, %472 : vector<8x128xf32>
    %cst_120 = arith.constant dense<0.000000e+00> : vector<8x512xf32>
    %474 = tpu.matmul %473, %4, %cst_120 {dimension_numbers = #tpu.dot_dimension_numbers<[1], [0], [0], [1], [0, 0, 1, 1], [], []>} : vector<8x128xf32>, vector<128x512xf32>, vector<8x512xf32> -> vector<8x512xf32>
    %cst_121 = arith.constant dense<0.000000e+00> : vector<8x512xf32>
    %475 = tpu.matmul %441, %5, %cst_121 {dimension_numbers = #tpu.dot_dimension_numbers<[1], [0], [0], [1], [0, 0, 1, 1], [], []>} : vector<8x128xf32>, vector<128x512xf32>, vector<8x512xf32> -> vector<8x512xf32>
    %476 = arith.addf %474, %475 : vector<8x512xf32>
    %477 = vector.broadcast %6 : vector<1x512xf32> to vector<8x512xf32>
    %478 = arith.addf %476, %477 : vector<8x512xf32>
    %479 = vector.extract_strided_slice %478 {offsets = [0, 0], sizes = [8, 128], strides = [1, 1]} : vector<8x512xf32> to vector<8x128xf32>
    %480 = arith.negf %479 : vector<8x128xf32>
    %481 = math.exp %480 : vector<8x128xf32>
    %cst_122 = arith.constant 1.000000e+00 : f32
    %482 = vector.broadcast %cst_122 : f32 to vector<8x128xf32>
    %483 = arith.addf %482, %481 : vector<8x128xf32>
    %484 = arith.divf %482, %483 : vector<8x128xf32>
    %485 = vector.extract_strided_slice %478 {offsets = [0, 128], sizes = [8, 128], strides = [1, 1]} : vector<8x512xf32> to vector<8x128xf32>
    %486 = arith.negf %485 : vector<8x128xf32>
    %487 = math.exp %486 : vector<8x128xf32>
    %cst_123 = arith.constant 1.000000e+00 : f32
    %488 = vector.broadcast %cst_123 : f32 to vector<8x128xf32>
    %489 = arith.addf %488, %487 : vector<8x128xf32>
    %490 = arith.divf %488, %489 : vector<8x128xf32>
    %491 = vector.extract_strided_slice %478 {offsets = [0, 256], sizes = [8, 128], strides = [1, 1]} : vector<8x512xf32> to vector<8x128xf32>
    %492 = math.tanh %491 : vector<8x128xf32>
    %493 = vector.extract_strided_slice %478 {offsets = [0, 384], sizes = [8, 128], strides = [1, 1]} : vector<8x512xf32> to vector<8x128xf32>
    %494 = arith.negf %493 : vector<8x128xf32>
    %495 = math.exp %494 : vector<8x128xf32>
    %cst_124 = arith.constant 1.000000e+00 : f32
    %496 = vector.broadcast %cst_124 : f32 to vector<8x128xf32>
    %497 = arith.addf %496, %495 : vector<8x128xf32>
    %498 = arith.divf %496, %497 : vector<8x128xf32>
    %499 = arith.mulf %490, %439 : vector<8x128xf32>
    %500 = arith.mulf %484, %492 : vector<8x128xf32>
    %501 = arith.addf %499, %500 : vector<8x128xf32>
    %502 = math.tanh %501 : vector<8x128xf32>
    %503 = arith.mulf %498, %502 : vector<8x128xf32>
    %c7_125 = arith.constant 7 : index
    %c0_126 = arith.constant 0 : index
    %c0_127 = arith.constant 0 : index
    %504 = vector.load %arg7[%c7_125, %c0_126, %c0_127] : memref<8x8x128xf32, #tpu.memory_space<vmem>>, vector<1x8x128xf32>
    %505 = vector.shape_cast %504 : vector<1x8x128xf32> to vector<8x128xf32>
    %506 = vector.shape_cast %503 : vector<8x128xf32> to vector<1x8x128xf32>
    tpu.vector_store %arg7[%c7_125, %c0_126, %c0_127], %506 {strides = array<i32>} : memref<8x8x128xf32, #tpu.memory_space<vmem>>, vector<1x8x128xf32>,
    %c0_128 = arith.constant 0 : index
    %c0_129 = arith.constant 0 : index
    %507 = vector.load %arg8[%c0_128, %c0_129] : memref<8x128xf32, #tpu.memory_space<vmem>>, vector<8x128xf32>
    tpu.vector_store %arg8[%c0_128, %c0_129], %473 {strides = array<i32>} : memref<8x128xf32, #tpu.memory_space<vmem>>, vector<8x128xf32>,
    %c0_130 = arith.constant 0 : index
    %c0_131 = arith.constant 0 : index
    %508 = vector.load %arg9[%c0_130, %c0_131] : memref<8x128xf32, #tpu.memory_space<vmem>>, vector<8x128xf32>
    tpu.vector_store %arg9[%c0_130, %c0_131], %471 {strides = array<i32>} : memref<8x128xf32, #tpu.memory_space<vmem>>, vector<8x128xf32>,
    %c0_132 = arith.constant 0 : index
    %c0_133 = arith.constant 0 : index
    %509 = vector.load %arg10[%c0_132, %c0_133] : memref<8x128xf32, #tpu.memory_space<vmem>>, vector<8x128xf32>
    tpu.vector_store %arg10[%c0_132, %c0_133], %503 {strides = array<i32>} : memref<8x128xf32, #tpu.memory_space<vmem>>, vector<8x128xf32>,
    %c0_134 = arith.constant 0 : index
    %c0_135 = arith.constant 0 : index
    %510 = vector.load %arg11[%c0_134, %c0_135] : memref<8x128xf32, #tpu.memory_space<vmem>>, vector<8x128xf32>
    tpu.vector_store %arg11[%c0_134, %c0_135], %501 {strides = array<i32>} : memref<8x128xf32, #tpu.memory_space<vmem>>, vector<8x128xf32>,
    return
  }
  func.func @transform_0(%arg0: i32, %arg1: i32) -> (i32, i32, i32) {
    %c0_i32 = arith.constant 0 : i32
    %c0_i32_0 = arith.constant 0 : i32
    return %arg1, %arg0, %c0_i32 : i32, i32, i32
  }
  func.func @transform_1(%arg0: i32, %arg1: i32) -> (i32, i32) {
    %c0_i32 = arith.constant 0 : i32
    %c0_i32_0 = arith.constant 0 : i32
    %c0_i32_1 = arith.constant 0 : i32
    return %c0_i32, %c0_i32_0 : i32, i32
  }
  func.func @transform_2(%arg0: i32, %arg1: i32) -> (i32, i32) {
    %c0_i32 = arith.constant 0 : i32
    %c0_i32_0 = arith.constant 0 : i32
    %c0_i32_1 = arith.constant 0 : i32
    return %c0_i32, %c0_i32_0 : i32, i32
  }
  func.func @transform_3(%arg0: i32, %arg1: i32) -> (i32, i32) {
    %c0_i32 = arith.constant 0 : i32
    %c0_i32_0 = arith.constant 0 : i32
    %c0_i32_1 = arith.constant 0 : i32
    return %c0_i32, %c0_i32_0 : i32, i32
  }
  func.func @transform_4(%arg0: i32, %arg1: i32) -> (i32, i32) {
    %c0_i32 = arith.constant 0 : i32
    %c0_i32_0 = arith.constant 0 : i32
    %c0_i32_1 = arith.constant 0 : i32
    return %c0_i32, %c0_i32_0 : i32, i32
  }
  func.func @transform_5(%arg0: i32, %arg1: i32) -> (i32, i32, i32) {
    %c0_i32 = arith.constant 0 : i32
    %c0_i32_0 = arith.constant 0 : i32
    return %arg1, %arg0, %c0_i32 : i32, i32, i32
  }
}

</mosaic_0001>

<llo_original>
// kernel: mann_forward.2
$region0: #{mann_forward.2}
  #allocation0 [shape = 'u32[]', space=smem, size = 0x4, offset = 0x4, fixed_abs, tag = 'smem constant byte address 0x4 - core index']
  #allocation1 [shape = 'u32[144,128]{1,0:T(1,128)}', space=vmem, size = 0x12000, scoped, tag = 'internal scratch']
  %s0 = inlined_call_operand.vmem [shape: f32[16,896], index: 0, kind: input, shape index: {}]
  %s1 = inlined_call_operand.vmem [shape: f32[896,512], index: 1, kind: input, shape index: {}]
  %s2 = inlined_call_operand.vmem [shape: f32[1,512], index: 2, kind: input, shape index: {}]
  %s3 = inlined_call_operand.vmem [shape: f32[16,512], index: 3, kind: output, shape index: {}]
  %s4 = sld [smem:[#allocation0]]
  $region22: #{mann_forward.2} parent=0
    _
  %s6 = ssub.s32 1, %s4
  %s7 = scalar_select 0, %s6, %s4
  // Predicated region
  $region2: #{mann_forward.2} parent=0 // pred_check
    _
  $region3: #{mann_forward.2} parent=0 // pred_check_branch
    %9 = sbr.rel (0) target = $region5
  $region4: #{mann_forward.2} parent=0 // pred_region
    _
  $region5: #{mann_forward.2} parent=0 // pred_fallthru
    _
  // Predicated region
  $region6: #{mann_forward.2} parent=0 // pred_check
    _
  $region7: #{mann_forward.2} parent=0 // pred_check_branch
    %11 = sbr.rel (0) target = $region9
  $region8: #{mann_forward.2} parent=0 // pred_region
    _
  $region9: #{mann_forward.2} parent=0 // pred_fallthru
    _
  // Predicated region
  $region10: #{mann_forward.2} parent=0 // pred_check
    _
  $region11: #{mann_forward.2} parent=0 // pred_check_branch
    %13 = sbr.rel (0) target = $region13
  $region12: #{mann_forward.2} parent=0 // pred_region
    _
  $region13: #{mann_forward.2} parent=0 // pred_fallthru
    _
  %v14 = vld [vmem:[%s0] sm:$0xff]
  %v15 = vld [vmem:[%s0 + $0x8] sm:$0xff]
  %v16 = vld [vmem:[%s0 + $0x10] sm:$0xff]
  %v17 = vld [vmem:[%s0 + $0x18] sm:$0xff]
  %v18 = vld [vmem:[%s0 + $0x20] sm:$0xff]
  %v19 = vld [vmem:[%s0 + $0x28] sm:$0xff]
  %v20 = vld [vmem:[%s0 + $0x30] sm:$0xff]
  %v21 = vld [vmem:[%s0 + $0x38] sm:$0xff]
  %v22 = vld [vmem:[%s0 + $0x40] sm:$0xff]
  %v23 = vld [vmem:[%s0 + $0x48] sm:$0xff]
  %v24 = vld [vmem:[%s0 + $0x50] sm:$0xff]
  %v25 = vld [vmem:[%s0 + $0x58] sm:$0xff]
  %v26 = vld [vmem:[%s0 + $0x60] sm:$0xff]
  %v27 = vld [vmem:[%s0 + $0x68] sm:$0xff]
  %v28 = vld [vmem:[%s1] sm:$0xff]
  %v29 = vld [vmem:[%s1 + $0x8] sm:$0xff]
  %v30 = vld [vmem:[%s1 + $0x10] sm:$0xff]
  %v31 = vld [vmem:[%s1 + $0x18] sm:$0xff]
  %v32 = vld [vmem:[%s1 + $0x20] sm:$0xff]
  %v33 = vld [vmem:[%s1 + $0x28] sm:$0xff]
  %v34 = vld [vmem:[%s1 + $0x30] sm:$0xff]
  %v35 = vld [vmem:[%s1 + $0x38] sm:$0xff]
  %v36 = vld [vmem:[%s1 + $0x40] sm:$0xff]
  %v37 = vld [vmem:[%s1 + $0x48] sm:$0xff]
  %v38 = vld [vmem:[%s1 + $0x50] sm:$0xff]
  %v39 = vld [vmem:[%s1 + $0x58] sm:$0xff]
  %v40 = vld [vmem:[%s1 + $0x60] sm:$0xff]
  %v41 = vld [vmem:[%s1 + $0x68] sm:$0xff]
  %v42 = vld [vmem:[%s1 + $0x70] sm:$0xff]
  %v43 = vld [vmem:[%s1 + $0x78] sm:$0xff]
  %v44 = vld [vmem:[%s1 + $0x80] sm:$0xff]
  %v45 = vld [vmem:[%s1 + $0x88] sm:$0xff]
  %v46 = vld [vmem:[%s1 + $0x90] sm:$0xff]
  %v47 = vld [vmem:[%s1 + $0x98] sm:$0xff]
  %v48 = vld [vmem:[%s1 + $0xa0] sm:$0xff]
  %v49 = vld [vmem:[%s1 + $0xa8] sm:$0xff]
  %v50 = vld [vmem:[%s1 + $0xb0] sm:$0xff]
  %v51 = vld [vmem:[%s1 + $0xb8] sm:$0xff]
  %v52 = vld [vmem:[%s1 + $0xc0] sm:$0xff]
  %v53 = vld [vmem:[%s1 + $0xc8] sm:$0xff]
  %v54 = vld [vmem:[%s1 + $0xd0] sm:$0xff]
  %v55 = vld [vmem:[%s1 + $0xd8] sm:$0xff]
  %v56 = vld [vmem:[%s1 + $0xe0] sm:$0xff]
  %v57 = vld [vmem:[%s1 + $0xe8] sm:$0xff]
  %v58 = vld [vmem:[%s1 + $0xf0] sm:$0xff]
  %v59 = vld [vmem:[%s1 + $0xf8] sm:$0xff]
  %v60 = vld [vmem:[%s1 + $0x100] sm:$0xff]
  %v61 = vld [vmem:[%s1 + $0x108] sm:$0xff]
  %v62 = vld [vmem:[%s1 + $0x110] sm:$0xff]
  %v63 = vld [vmem:[%s1 + $0x118] sm:$0xff]
  %v64 = vld [vmem:[%s1 + $0x120] sm:$0xff]
  %v65 = vld [vmem:[%s1 + $0x128] sm:$0xff]
  %v66 = vld [vmem:[%s1 + $0x130] sm:$0xff]
  %v67 = vld [vmem:[%s1 + $0x138] sm:$0xff]
  %v68 = vld [vmem:[%s1 + $0x140] sm:$0xff]
  %v69 = vld [vmem:[%s1 + $0x148] sm:$0xff]
  %v70 = vld [vmem:[%s1 + $0x150] sm:$0xff]
  %v71 = vld [vmem:[%s1 + $0x158] sm:$0xff]
  %v72 = vld [vmem:[%s1 + $0x160] sm:$0xff]
  %v73 = vld [vmem:[%s1 + $0x168] sm:$0xff]
  %v74 = vld [vmem:[%s1 + $0x170] sm:$0xff]
  %v75 = vld [vmem:[%s1 + $0x178] sm:$0xff]
  %v76 = vld [vmem:[%s1 + $0x180] sm:$0xff]
  %v77 = vld [vmem:[%s1 + $0x188] sm:$0xff]
  %v78 = vld [vmem:[%s1 + $0x190] sm:$0xff]
  %v79 = vld [vmem:[%s1 + $0x198] sm:$0xff]
  %v80 = vld [vmem:[%s1 + $0x1a0] sm:$0xff]
  %v81 = vld [vmem:[%s1 + $0x1a8] sm:$0xff]
  %v82 = vld [vmem:[%s1 + $0x1b0] sm:$0xff]
  %v83 = vld [vmem:[%s1 + $0x1b8] sm:$0xff]
  %v84 = vld [vmem:[%s1 + $0x1c0] sm:$0xff]
  %v85 = vld [vmem:[%s1 + $0x1c8] sm:$0xff]
  %v86 = vld [vmem:[%s1 + $0x1d0] sm:$0xff]
  %v87 = vld [vmem:[%s1 + $0x1d8] sm:$0xff]
  %v88 = vld [vmem:[%s1 + $0x1e0] sm:$0xff]
  %v89 = vld [vmem:[%s1 + $0x1e8] sm:$0xff]
  %v90 = vld [vmem:[%s1 + $0x1f0] sm:$0xff]
  %v91 = vld [vmem:[%s1 + $0x1f8] sm:$0xff]
  %v92 = vld [vmem:[%s1 + $0x200] sm:$0xff]
  %v93 = vld [vmem:[%s1 + $0x208] sm:$0xff]
  %v94 = vld [vmem:[%s1 + $0x210] sm:$0xff]
  %v95 = vld [vmem:[%s1 + $0x218] sm:$0xff]
  %v96 = vld [vmem:[%s1 + $0x220] sm:$0xff]
  %v97 = vld [vmem:[%s1 + $0x228] sm:$0xff]
  %v98 = vld [vmem:[%s1 + $0x230] sm:$0xff]
  %v99 = vld [vmem:[%s1 + $0x238] sm:$0xff]
  %v100 = vld [vmem:[%s1 + $0x240] sm:$0xff]
  %v101 = vld [vmem:[%s1 + $0x248] sm:$0xff]
  %v102 = vld [vmem:[%s1 + $0x250] sm:$0xff]
  %v103 = vld [vmem:[%s1 + $0x258] sm:$0xff]
  %v104 = vld [vmem:[%s1 + $0x260] sm:$0xff]
  %v105 = vld [vmem:[%s1 + $0x268] sm:$0xff]
  %v106 = vld [vmem:[%s1 + $0x270] sm:$0xff]
  %v107 = vld [vmem:[%s1 + $0x278] sm:$0xff]
  %v108 = vld [vmem:[%s1 + $0x280] sm:$0xff]
  %v109 = vld [vmem:[%s1 + $0x288] sm:$0xff]
  %v110 = vld [vmem:[%s1 + $0x290] sm:$0xff]
  %v111 = vld [vmem:[%s1 + $0x298] sm:$0xff]
  %v112 = vld [vmem:[%s1 + $0x2a0] sm:$0xff]
  %v113 = vld [vmem:[%s1 + $0x2a8] sm:$0xff]
  %v114 = vld [vmem:[%s1 + $0x2b0] sm:$0xff]
  %v115 = vld [vmem:[%s1 + $0x2b8] sm:$0xff]
  %v116 = vld [vmem:[%s1 + $0x2c0] sm:$0xff]
  %v117 = vld [vmem:[%s1 + $0x2c8] sm:$0xff]
  %v118 = vld [vmem:[%s1 + $0x2d0] sm:$0xff]
  %v119 = vld [vmem:[%s1 + $0x2d8] sm:$0xff]
  %v120 = vld [vmem:[%s1 + $0x2e0] sm:$0xff]
  %v121 = vld [vmem:[%s1 + $0x2e8] sm:$0xff]
  %v122 = vld [vmem:[%s1 + $0x2f0] sm:$0xff]
  %v123 = vld [vmem:[%s1 + $0x2f8] sm:$0xff]
  %v124 = vld [vmem:[%s1 + $0x300] sm:$0xff]
  %v125 = vld [vmem:[%s1 + $0x308] sm:$0xff]
  %v126 = vld [vmem:[%s1 + $0x310] sm:$0xff]
  %v127 = vld [vmem:[%s1 + $0x318] sm:$0xff]
  %v128 = vld [vmem:[%s1 + $0x320] sm:$0xff]
  %v129 = vld [vmem:[%s1 + $0x328] sm:$0xff]
  %v130 = vld [vmem:[%s1 + $0x330] sm:$0xff]
  %v131 = vld [vmem:[%s1 + $0x338] sm:$0xff]
  %v132 = vld [vmem:[%s1 + $0x340] sm:$0xff]
  %v133 = vld [vmem:[%s1 + $0x348] sm:$0xff]
  %v134 = vld [vmem:[%s1 + $0x350] sm:$0xff]
  %v135 = vld [vmem:[%s1 + $0x358] sm:$0xff]
  %v136 = vld [vmem:[%s1 + $0x360] sm:$0xff]
  %v137 = vld [vmem:[%s1 + $0x368] sm:$0xff]
  %v138 = vld [vmem:[%s1 + $0x370] sm:$0xff]
  %v139 = vld [vmem:[%s1 + $0x378] sm:$0xff]
  %v140 = vld [vmem:[%s1 + $0x380] sm:$0xff]
  %v141 = vld [vmem:[%s1 + $0x388] sm:$0xff]
  %v142 = vld [vmem:[%s1 + $0x390] sm:$0xff]
  %v143 = vld [vmem:[%s1 + $0x398] sm:$0xff]
  %v144 = vld [vmem:[%s1 + $0x3a0] sm:$0xff]
  %v145 = vld [vmem:[%s1 + $0x3a8] sm:$0xff]
  %v146 = vld [vmem:[%s1 + $0x3b0] sm:$0xff]
  %v147 = vld [vmem:[%s1 + $0x3b8] sm:$0xff]
  %v148 = vld [vmem:[%s1 + $0x3c0] sm:$0xff]
  %v149 = vld [vmem:[%s1 + $0x3c8] sm:$0xff]
  %v150 = vld [vmem:[%s1 + $0x3d0] sm:$0xff]
  %v151 = vld [vmem:[%s1 + $0x3d8] sm:$0xff]
  %v152 = vld [vmem:[%s1 + $0x3e0] sm:$0xff]
  %v153 = vld [vmem:[%s1 + $0x3e8] sm:$0xff]
  %v154 = vld [vmem:[%s1 + $0x3f0] sm:$0xff]
  %v155 = vld [vmem:[%s1 + $0x3f8] sm:$0xff]
  %v156 = vld [vmem:[%s1 + $0x400] sm:$0xff]
  %v157 = vld [vmem:[%s1 + $0x408] sm:$0xff]
  %v158 = vld [vmem:[%s1 + $0x410] sm:$0xff]
  %v159 = vld [vmem:[%s1 + $0x418] sm:$0xff]
  %v160 = vld [vmem:[%s1 + $0x420] sm:$0xff]
  %v161 = vld [vmem:[%s1 + $0x428] sm:$0xff]
  %v162 = vld [vmem:[%s1 + $0x430] sm:$0xff]
  %v163 = vld [vmem:[%s1 + $0x438] sm:$0xff]
  %v164 = vld [vmem:[%s1 + $0x440] sm:$0xff]
  %v165 = vld [vmem:[%s1 + $0x448] sm:$0xff]
  %v166 = vld [vmem:[%s1 + $0x450] sm:$0xff]
  %v167 = vld [vmem:[%s1 + $0x458] sm:$0xff]
  %v168 = vld [vmem:[%s1 + $0x460] sm:$0xff]
  %v169 = vld [vmem:[%s1 + $0x468] sm:$0xff]
  %v170 = vld [vmem:[%s1 + $0x470] sm:$0xff]
  %v171 = vld [vmem:[%s1 + $0x478] sm:$0xff]
  %v172 = vld [vmem:[%s1 + $0x480] sm:$0xff]
  %v173 = vld [vmem:[%s1 + $0x488] sm:$0xff]
  %v174 = vld [vmem:[%s1 + $0x490] sm:$0xff]
  %v175 = vld [vmem:[%s1 + $0x498] sm:$0xff]
  %v176 = vld [vmem:[%s1 + $0x4a0] sm:$0xff]
  %v177 = vld [vmem:[%s1 + $0x4a8] sm:$0xff]
  %v178 = vld [vmem:[%s1 + $0x4b0] sm:$0xff]
  %v179 = vld [vmem:[%s1 + $0x4b8] sm:$0xff]
  %v180 = vld [vmem:[%s1 + $0x4c0] sm:$0xff]
  %v181 = vld [vmem:[%s1 + $0x4c8] sm:$0xff]
  %v182 = vld [vmem:[%s1 + $0x4d0] sm:$0xff]
  %v183 = vld [vmem:[%s1 + $0x4d8] sm:$0xff]
  %v184 = vld [vmem:[%s1 + $0x4e0] sm:$0xff]
  %v185 = vld [vmem:[%s1 + $0x4e8] sm:$0xff]
  %v186 = vld [vmem:[%s1 + $0x4f0] sm:$0xff]
  %v187 = vld [vmem:[%s1 + $0x4f8] sm:$0xff]
  %v188 = vld [vmem:[%s1 + $0x500] sm:$0xff]
  %v189 = vld [vmem:[%s1 + $0x508] sm:$0xff]
  %v190 = vld [vmem:[%s1 + $0x510] sm:$0xff]
  %v191 = vld [vmem:[%s1 + $0x518] sm:$0xff]
  %v192 = vld [vmem:[%s1 + $0x520] sm:$0xff]
  %v193 = vld [vmem:[%s1 + $0x528] sm:$0xff]
  %v194 = vld [vmem:[%s1 + $0x530] sm:$0xff]
  %v195 = vld [vmem:[%s1 + $0x538] sm:$0xff]
  %v196 = vld [vmem:[%s1 + $0x540] sm:$0xff]
  %v197 = vld [vmem:[%s1 + $0x548] sm:$0xff]
  %v198 = vld [vmem:[%s1 + $0x550] sm:$0xff]
  %v199 = vld [vmem:[%s1 + $0x558] sm:$0xff]
  %v200 = vld [vmem:[%s1 + $0x560] sm:$0xff]
  %v201 = vld [vmem:[%s1 + $0x568] sm:$0xff]
  %v202 = vld [vmem:[%s1 + $0x570] sm:$0xff]
  %v203 = vld [vmem:[%s1 + $0x578] sm:$0xff]
  %v204 = vld [vmem:[%s1 + $0x580] sm:$0xff]
  %v205 = vld [vmem:[%s1 + $0x588] sm:$0xff]
  %v206 = vld [vmem:[%s1 + $0x590] sm:$0xff]
  %v207 = vld [vmem:[%s1 + $0x598] sm:$0xff]
  %v208 = vld [vmem:[%s1 + $0x5a0] sm:$0xff]
  %v209 = vld [vmem:[%s1 + $0x5a8] sm:$0xff]
  %v210 = vld [vmem:[%s1 + $0x5b0] sm:$0xff]
  %v211 = vld [vmem:[%s1 + $0x5b8] sm:$0xff]
  %v212 = vld [vmem:[%s1 + $0x5c0] sm:$0xff]
  %v213 = vld [vmem:[%s1 + $0x5c8] sm:$0xff]
  %v214 = vld [vmem:[%s1 + $0x5d0] sm:$0xff]
  %v215 = vld [vmem:[%s1 + $0x5d8] sm:$0xff]
  %v216 = vld [vmem:[%s1 + $0x5e0] sm:$0xff]
  %v217 = vld [vmem:[%s1 + $0x5e8] sm:$0xff]
  %v218 = vld [vmem:[%s1 + $0x5f0] sm:$0xff]
  %v219 = vld [vmem:[%s1 + $0x5f8] sm:$0xff]
  %v220 = vld [vmem:[%s1 + $0x600] sm:$0xff]
  %v221 = vld [vmem:[%s1 + $0x608] sm:$0xff]
  %v222 = vld [vmem:[%s1 + $0x610] sm:$0xff]
  %v223 = vld [vmem:[%s1 + $0x618] sm:$0xff]
  %v224 = vld [vmem:[%s1 + $0x620] sm:$0xff]
  %v225 = vld [vmem:[%s1 + $0x628] sm:$0xff]
  %v226 = vld [vmem:[%s1 + $0x630] sm:$0xff]
  %v227 = vld [vmem:[%s1 + $0x638] sm:$0xff]
  %v228 = vld [vmem:[%s1 + $0x640] sm:$0xff]
  %v229 = vld [vmem:[%s1 + $0x648] sm:$0xff]
  %v230 = vld [vmem:[%s1 + $0x650] sm:$0xff]
  %v231 = vld [vmem:[%s1 + $0x658] sm:$0xff]
  %v232 = vld [vmem:[%s1 + $0x660] sm:$0xff]
  %v233 = vld [vmem:[%s1 + $0x668] sm:$0xff]
  %v234 = vld [vmem:[%s1 + $0x670] sm:$0xff]
  %v235 = vld [vmem:[%s1 + $0x678] sm:$0xff]
  %v236 = vld [vmem:[%s1 + $0x680] sm:$0xff]
  %v237 = vld [vmem:[%s1 + $0x688] sm:$0xff]
  %v238 = vld [vmem:[%s1 + $0x690] sm:$0xff]
  %v239 = vld [vmem:[%s1 + $0x698] sm:$0xff]
  %v240 = vld [vmem:[%s1 + $0x6a0] sm:$0xff]
  %v241 = vld [vmem:[%s1 + $0x6a8] sm:$0xff]
  %v242 = vld [vmem:[%s1 + $0x6b0] sm:$0xff]
  %v243 = vld [vmem:[%s1 + $0x6b8] sm:$0xff]
  %v244 = vld [vmem:[%s1 + $0x6c0] sm:$0xff]
  %v245 = vld [vmem:[%s1 + $0x6c8] sm:$0xff]
  %v246 = vld [vmem:[%s1 + $0x6d0] sm:$0xff]
  %v247 = vld [vmem:[%s1 + $0x6d8] sm:$0xff]
  %v248 = vld [vmem:[%s1 + $0x6e0] sm:$0xff]
  %v249 = vld [vmem:[%s1 + $0x6e8] sm:$0xff]
  %v250 = vld [vmem:[%s1 + $0x6f0] sm:$0xff]
  %v251 = vld [vmem:[%s1 + $0x6f8] sm:$0xff]
  %v252 = vld [vmem:[%s1 + $0x700] sm:$0xff]
  %v253 = vld [vmem:[%s1 + $0x708] sm:$0xff]
  %v254 = vld [vmem:[%s1 + $0x710] sm:$0xff]
  %v255 = vld [vmem:[%s1 + $0x718] sm:$0xff]
  %v256 = vld [vmem:[%s1 + $0x720] sm:$0xff]
  %v257 = vld [vmem:[%s1 + $0x728] sm:$0xff]
  %v258 = vld [vmem:[%s1 + $0x730] sm:$0xff]
  %v259 = vld [vmem:[%s1 + $0x738] sm:$0xff]
  %v260 = vld [vmem:[%s1 + $0x740] sm:$0xff]
  %v261 = vld [vmem:[%s1 + $0x748] sm:$0xff]
  %v262 = vld [vmem:[%s1 + $0x750] sm:$0xff]
  %v263 = vld [vmem:[%s1 + $0x758] sm:$0xff]
  %v264 = vld [vmem:[%s1 + $0x760] sm:$0xff]
  %v265 = vld [vmem:[%s1 + $0x768] sm:$0xff]
  %v266 = vld [vmem:[%s1 + $0x770] sm:$0xff]
  %v267 = vld [vmem:[%s1 + $0x778] sm:$0xff]
  %v268 = vld [vmem:[%s1 + $0x780] sm:$0xff]
  %v269 = vld [vmem:[%s1 + $0x788] sm:$0xff]
  %v270 = vld [vmem:[%s1 + $0x790] sm:$0xff]
  %v271 = vld [vmem:[%s1 + $0x798] sm:$0xff]
  %v272 = vld [vmem:[%s1 + $0x7a0] sm:$0xff]
  %v273 = vld [vmem:[%s1 + $0x7a8] sm:$0xff]
  %v274 = vld [vmem:[%s1 + $0x7b0] sm:$0xff]
  %v275 = vld [vmem:[%s1 + $0x7b8] sm:$0xff]
  %v276 = vld [vmem:[%s1 + $0x7c0] sm:$0xff]
  %v277 = vld [vmem:[%s1 + $0x7c8] sm:$0xff]
  %v278 = vld [vmem:[%s1 + $0x7d0] sm:$0xff]
  %v279 = vld [vmem:[%s1 + $0x7d8] sm:$0xff]
  %v280 = vld [vmem:[%s1 + $0x7e0] sm:$0xff]
  %v281 = vld [vmem:[%s1 + $0x7e8] sm:$0xff]
  %v282 = vld [vmem:[%s1 + $0x7f0] sm:$0xff]
  %v283 = vld [vmem:[%s1 + $0x7f8] sm:$0xff]
  %v284 = vld [vmem:[%s1 + $0x800] sm:$0xff]
  %v285 = vld [vmem:[%s1 + $0x808] sm:$0xff]
  %v286 = vld [vmem:[%s1 + $0x810] sm:$0xff]
  %v287 = vld [vmem:[%s1 + $0x818] sm:$0xff]
  %v288 = vld [vmem:[%s1 + $0x820] sm:$0xff]
  %v289 = vld [vmem:[%s1 + $0x828] sm:$0xff]
  %v290 = vld [vmem:[%s1 + $0x830] sm:$0xff]
  %v291 = vld [vmem:[%s1 + $0x838] sm:$0xff]
  %v292 = vld [vmem:[%s1 + $0x840] sm:$0xff]
  %v293 = vld [vmem:[%s1 + $0x848] sm:$0xff]
  %v294 = vld [vmem:[%s1 + $0x850] sm:$0xff]
  %v295 = vld [vmem:[%s1 + $0x858] sm:$0xff]
  %v296 = vld [vmem:[%s1 + $0x860] sm:$0xff]
  %v297 = vld [vmem:[%s1 + $0x868] sm:$0xff]
  %v298 = vld [vmem:[%s1 + $0x870] sm:$0xff]
  %v299 = vld [vmem:[%s1 + $0x878] sm:$0xff]
  %v300 = vld [vmem:[%s1 + $0x880] sm:$0xff]
  %v301 = vld [vmem:[%s1 + $0x888] sm:$0xff]
  %v302 = vld [vmem:[%s1 + $0x890] sm:$0xff]
  %v303 = vld [vmem:[%s1 + $0x898] sm:$0xff]
  %v304 = vld [vmem:[%s1 + $0x8a0] sm:$0xff]
  %v305 = vld [vmem:[%s1 + $0x8a8] sm:$0xff]
  %v306 = vld [vmem:[%s1 + $0x8b0] sm:$0xff]
  %v307 = vld [vmem:[%s1 + $0x8b8] sm:$0xff]
  %v308 = vld [vmem:[%s1 + $0x8c0] sm:$0xff]
  %v309 = vld [vmem:[%s1 + $0x8c8] sm:$0xff]
  %v310 = vld [vmem:[%s1 + $0x8d0] sm:$0xff]
  %v311 = vld [vmem:[%s1 + $0x8d8] sm:$0xff]
  %v312 = vld [vmem:[%s1 + $0x8e0] sm:$0xff]
  %v313 = vld [vmem:[%s1 + $0x8e8] sm:$0xff]
  %v314 = vld [vmem:[%s1 + $0x8f0] sm:$0xff]
  %v315 = vld [vmem:[%s1 + $0x8f8] sm:$0xff]
  %v316 = vld [vmem:[%s1 + $0x900] sm:$0xff]
  %v317 = vld [vmem:[%s1 + $0x908] sm:$0xff]
  %v318 = vld [vmem:[%s1 + $0x910] sm:$0xff]
  %v319 = vld [vmem:[%s1 + $0x918] sm:$0xff]
  %v320 = vld [vmem:[%s1 + $0x920] sm:$0xff]
  %v321 = vld [vmem:[%s1 + $0x928] sm:$0xff]
  %v322 = vld [vmem:[%s1 + $0x930] sm:$0xff]
  %v323 = vld [vmem:[%s1 + $0x938] sm:$0xff]
  %v324 = vld [vmem:[%s1 + $0x940] sm:$0xff]
  %v325 = vld [vmem:[%s1 + $0x948] sm:$0xff]
  %v326 = vld [vmem:[%s1 + $0x950] sm:$0xff]
  %v327 = vld [vmem:[%s1 + $0x958] sm:$0xff]
  %v328 = vld [vmem:[%s1 + $0x960] sm:$0xff]
  %v329 = vld [vmem:[%s1 + $0x968] sm:$0xff]
  %v330 = vld [vmem:[%s1 + $0x970] sm:$0xff]
  %v331 = vld [vmem:[%s1 + $0x978] sm:$0xff]
  %v332 = vld [vmem:[%s1 + $0x980] sm:$0xff]
  %v333 = vld [vmem:[%s1 + $0x988] sm:$0xff]
  %v334 = vld [vmem:[%s1 + $0x990] sm:$0xff]
  %v335 = vld [vmem:[%s1 + $0x998] sm:$0xff]
  %v336 = vld [vmem:[%s1 + $0x9a0] sm:$0xff]
  %v337 = vld [vmem:[%s1 + $0x9a8] sm:$0xff]
  %v338 = vld [vmem:[%s1 + $0x9b0] sm:$0xff]
  %v339 = vld [vmem:[%s1 + $0x9b8] sm:$0xff]
  %v340 = vld [vmem:[%s1 + $0x9c0] sm:$0xff]
  %v341 = vld [vmem:[%s1 + $0x9c8] sm:$0xff]
  %v342 = vld [vmem:[%s1 + $0x9d0] sm:$0xff]
  %v343 = vld [vmem:[%s1 + $0x9d8] sm:$0xff]
  %v344 = vld [vmem:[%s1 + $0x9e0] sm:$0xff]
  %v345 = vld [vmem:[%s1 + $0x9e8] sm:$0xff]
  %v346 = vld [vmem:[%s1 + $0x9f0] sm:$0xff]
  %v347 = vld [vmem:[%s1 + $0x9f8] sm:$0xff]
  %v348 = vld [vmem:[%s1 + $0xa00] sm:$0xff]
  %v349 = vld [vmem:[%s1 + $0xa08] sm:$0xff]
  %v350 = vld [vmem:[%s1 + $0xa10] sm:$0xff]
  %v351 = vld [vmem:[%s1 + $0xa18] sm:$0xff]
  %v352 = vld [vmem:[%s1 + $0xa20] sm:$0xff]
  %v353 = vld [vmem:[%s1 + $0xa28] sm:$0xff]
  %v354 = vld [vmem:[%s1 + $0xa30] sm:$0xff]
  %v355 = vld [vmem:[%s1 + $0xa38] sm:$0xff]
  %v356 = vld [vmem:[%s1 + $0xa40] sm:$0xff]
  %v357 = vld [vmem:[%s1 + $0xa48] sm:$0xff]
  %v358 = vld [vmem:[%s1 + $0xa50] sm:$0xff]
  %v359 = vld [vmem:[%s1 + $0xa58] sm:$0xff]
  %v360 = vld [vmem:[%s1 + $0xa60] sm:$0xff]
  %v361 = vld [vmem:[%s1 + $0xa68] sm:$0xff]
  %v362 = vld [vmem:[%s1 + $0xa70] sm:$0xff]
  %v363 = vld [vmem:[%s1 + $0xa78] sm:$0xff]
  %v364 = vld [vmem:[%s1 + $0xa80] sm:$0xff]
  %v365 = vld [vmem:[%s1 + $0xa88] sm:$0xff]
  %v366 = vld [vmem:[%s1 + $0xa90] sm:$0xff]
  %v367 = vld [vmem:[%s1 + $0xa98] sm:$0xff]
  %v368 = vld [vmem:[%s1 + $0xaa0] sm:$0xff]
  %v369 = vld [vmem:[%s1 + $0xaa8] sm:$0xff]
  %v370 = vld [vmem:[%s1 + $0xab0] sm:$0xff]
  %v371 = vld [vmem:[%s1 + $0xab8] sm:$0xff]
  %v372 = vld [vmem:[%s1 + $0xac0] sm:$0xff]
  %v373 = vld [vmem:[%s1 + $0xac8] sm:$0xff]
  %v374 = vld [vmem:[%s1 + $0xad0] sm:$0xff]
  %v375 = vld [vmem:[%s1 + $0xad8] sm:$0xff]
  %v376 = vld [vmem:[%s1 + $0xae0] sm:$0xff]
  %v377 = vld [vmem:[%s1 + $0xae8] sm:$0xff]
  %v378 = vld [vmem:[%s1 + $0xaf0] sm:$0xff]
  %v379 = vld [vmem:[%s1 + $0xaf8] sm:$0xff]
  %v380 = vld [vmem:[%s1 + $0xb00] sm:$0xff]
  %v381 = vld [vmem:[%s1 + $0xb08] sm:$0xff]
  %v382 = vld [vmem:[%s1 + $0xb10] sm:$0xff]
  %v383 = vld [vmem:[%s1 + $0xb18] sm:$0xff]
  %v384 = vld [vmem:[%s1 + $0xb20] sm:$0xff]
  %v385 = vld [vmem:[%s1 + $0xb28] sm:$0xff]
  %v386 = vld [vmem:[%s1 + $0xb30] sm:$0xff]
  %v387 = vld [vmem:[%s1 + $0xb38] sm:$0xff]
  %v388 = vld [vmem:[%s1 + $0xb40] sm:$0xff]
  %v389 = vld [vmem:[%s1 + $0xb48] sm:$0xff]
  %v390 = vld [vmem:[%s1 + $0xb50] sm:$0xff]
  %v391 = vld [vmem:[%s1 + $0xb58] sm:$0xff]
  %v392 = vld [vmem:[%s1 + $0xb60] sm:$0xff]
  %v393 = vld [vmem:[%s1 + $0xb68] sm:$0xff]
  %v394 = vld [vmem:[%s1 + $0xb70] sm:$0xff]
  %v395 = vld [vmem:[%s1 + $0xb78] sm:$0xff]
  %v396 = vld [vmem:[%s1 + $0xb80] sm:$0xff]
  %v397 = vld [vmem:[%s1 + $0xb88] sm:$0xff]
  %v398 = vld [vmem:[%s1 + $0xb90] sm:$0xff]
  %v399 = vld [vmem:[%s1 + $0xb98] sm:$0xff]
  %v400 = vld [vmem:[%s1 + $0xba0] sm:$0xff]
  %v401 = vld [vmem:[%s1 + $0xba8] sm:$0xff]
  %v402 = vld [vmem:[%s1 + $0xbb0] sm:$0xff]
  %v403 = vld [vmem:[%s1 + $0xbb8] sm:$0xff]
  %v404 = vld [vmem:[%s1 + $0xbc0] sm:$0xff]
  %v405 = vld [vmem:[%s1 + $0xbc8] sm:$0xff]
  %v406 = vld [vmem:[%s1 + $0xbd0] sm:$0xff]
  %v407 = vld [vmem:[%s1 + $0xbd8] sm:$0xff]
  %v408 = vld [vmem:[%s1 + $0xbe0] sm:$0xff]
  %v409 = vld [vmem:[%s1 + $0xbe8] sm:$0xff]
  %v410 = vld [vmem:[%s1 + $0xbf0] sm:$0xff]
  %v411 = vld [vmem:[%s1 + $0xbf8] sm:$0xff]
  %v412 = vld [vmem:[%s1 + $0xc00] sm:$0xff]
  %v413 = vld [vmem:[%s1 + $0xc08] sm:$0xff]
  %v414 = vld [vmem:[%s1 + $0xc10] sm:$0xff]
  %v415 = vld [vmem:[%s1 + $0xc18] sm:$0xff]
  %v416 = vld [vmem:[%s1 + $0xc20] sm:$0xff]
  %v417 = vld [vmem:[%s1 + $0xc28] sm:$0xff]
  %v418 = vld [vmem:[%s1 + $0xc30] sm:$0xff]
  %v419 = vld [vmem:[%s1 + $0xc38] sm:$0xff]
  %v420 = vld [vmem:[%s1 + $0xc40] sm:$0xff]
  %v421 = vld [vmem:[%s1 + $0xc48] sm:$0xff]
  %v422 = vld [vmem:[%s1 + $0xc50] sm:$0xff]
  %v423 = vld [vmem:[%s1 + $0xc58] sm:$0xff]
  %v424 = vld [vmem:[%s1 + $0xc60] sm:$0xff]
  %v425 = vld [vmem:[%s1 + $0xc68] sm:$0xff]
  %v426 = vld [vmem:[%s1 + $0xc70] sm:$0xff]
  %v427 = vld [vmem:[%s1 + $0xc78] sm:$0xff]
  %v428 = vld [vmem:[%s1 + $0xc80] sm:$0xff]
  %v429 = vld [vmem:[%s1 + $0xc88] sm:$0xff]
  %v430 = vld [vmem:[%s1 + $0xc90] sm:$0xff]
  %v431 = vld [vmem:[%s1 + $0xc98] sm:$0xff]
  %v432 = vld [vmem:[%s1 + $0xca0] sm:$0xff]
  %v433 = vld [vmem:[%s1 + $0xca8] sm:$0xff]
  %v434 = vld [vmem:[%s1 + $0xcb0] sm:$0xff]
  %v435 = vld [vmem:[%s1 + $0xcb8] sm:$0xff]
  %v436 = vld [vmem:[%s1 + $0xcc0] sm:$0xff]
  %v437 = vld [vmem:[%s1 + $0xcc8] sm:$0xff]
  %v438 = vld [vmem:[%s1 + $0xcd0] sm:$0xff]
  %v439 = vld [vmem:[%s1 + $0xcd8] sm:$0xff]
  %v440 = vld [vmem:[%s1 + $0xce0] sm:$0xff]
  %v441 = vld [vmem:[%s1 + $0xce8] sm:$0xff]
  %v442 = vld [vmem:[%s1 + $0xcf0] sm:$0xff]
  %v443 = vld [vmem:[%s1 + $0xcf8] sm:$0xff]
  %v444 = vld [vmem:[%s1 + $0xd00] sm:$0xff]
  %v445 = vld [vmem:[%s1 + $0xd08] sm:$0xff]
  %v446 = vld [vmem:[%s1 + $0xd10] sm:$0xff]
  %v447 = vld [vmem:[%s1 + $0xd18] sm:$0xff]
  %v448 = vld [vmem:[%s1 + $0xd20] sm:$0xff]
  %v449 = vld [vmem:[%s1 + $0xd28] sm:$0xff]
  %v450 = vld [vmem:[%s1 + $0xd30] sm:$0xff]
  %v451 = vld [vmem:[%s1 + $0xd38] sm:$0xff]
  %v452 = vld [vmem:[%s1 + $0xd40] sm:$0xff]
  %v453 = vld [vmem:[%s1 + $0xd48] sm:$0xff]
  %v454 = vld [vmem:[%s1 + $0xd50] sm:$0xff]
  %v455 = vld [vmem:[%s1 + $0xd58] sm:$0xff]
  %v456 = vld [vmem:[%s1 + $0xd60] sm:$0xff]
  %v457 = vld [vmem:[%s1 + $0xd68] sm:$0xff]
  %v458 = vld [vmem:[%s1 + $0xd70] sm:$0xff]
  %v459 = vld [vmem:[%s1 + $0xd78] sm:$0xff]
  %v460 = vld [vmem:[%s1 + $0xd80] sm:$0xff]
  %v461 = vld [vmem:[%s1 + $0xd88] sm:$0xff]
  %v462 = vld [vmem:[%s1 + $0xd90] sm:$0xff]
  %v463 = vld [vmem:[%s1 + $0xd98] sm:$0xff]
  %v464 = vld [vmem:[%s1 + $0xda0] sm:$0xff]
  %v465 = vld [vmem:[%s1 + $0xda8] sm:$0xff]
  %v466 = vld [vmem:[%s1 + $0xdb0] sm:$0xff]
  %v467 = vld [vmem:[%s1 + $0xdb8] sm:$0xff]
  %v468 = vld [vmem:[%s1 + $0xdc0] sm:$0xff]
  %v469 = vld [vmem:[%s1 + $0xdc8] sm:$0xff]
  %v470 = vld [vmem:[%s1 + $0xdd0] sm:$0xff]
  %v471 = vld [vmem:[%s1 + $0xdd8] sm:$0xff]
  %v472 = vld [vmem:[%s1 + $0xde0] sm:$0xff]
  %v473 = vld [vmem:[%s1 + $0xde8] sm:$0xff]
  %v474 = vld [vmem:[%s1 + $0xdf0] sm:$0xff]
  %v475 = vld [vmem:[%s1 + $0xdf8] sm:$0xff]
  %v476 = vld [vmem:[%s2] sm:$0xf]
  %v478 = vlaneseq
  %v479 = vshrl.u32 %v478, 7
  %v480 = vsub.s32 0, %v479
  %v481 = vrot.slane %v476, %v480
  %v482 = vlaneseq
  %v483 = vshrl.u32 %v482, 7
  %v484 = vsub.s32 1, %v483
  %v485 = vrot.slane %v476, %v484
  %v486 = vlaneseq
  %v487 = vshrl.u32 %v486, 7
  %v488 = vsub.s32 2, %v487
  %v489 = vrot.slane %v476, %v488
  %v490 = vlaneseq
  %v491 = vshrl.u32 %v490, 7
  %v492 = vsub.s32 3, %v491
  %v493 = vrot.slane %v476, %v492
  %498 = vmatprep.subr.mxu0 %v29
  %499 = vmatpush1.msra.mxu0 %v28
  %500 = vmatprep.subr.mxu0 %v33
  %501 = vmatpush1.msra.mxu0 %v32
  %502 = vmatprep.subr.mxu0 %v37
  %503 = vmatpush1.msra.mxu0 %v36
  %504 = vmatprep.subr.mxu0 %v41
  %505 = vmatpush1.msra.mxu0 %v40
  %506 = vmatprep.subr.mxu0 %v45
  %507 = vmatpush1.msra.mxu0 %v44
  %508 = vmatprep.subr.mxu0 %v49
  %509 = vmatpush1.msra.mxu0 %v48
  %510 = vmatprep.subr.mxu0 %v53
  %511 = vmatpush1.msra.mxu0 %v52
  %512 = vmatprep.subr.mxu0 %v57
  %513 = vmatpush1.msra.mxu0 %v56
  %514 = vmatprep.subr.mxu0 %v61
  %515 = vmatpush1.msra.mxu0 %v60
  %516 = vmatprep.subr.mxu0 %v65
  %517 = vmatpush1.msra.mxu0 %v64
  %518 = vmatprep.subr.mxu0 %v69
  %519 = vmatpush1.msra.mxu0 %v68
  %520 = vmatprep.subr.mxu0 %v73
  %521 = vmatpush1.msra.mxu0 %v72
  %522 = vmatprep.subr.mxu0 %v77
  %523 = vmatpush1.msra.mxu0 %v76
  %524 = vmatprep.subr.mxu0 %v81
  %525 = vmatpush1.msra.mxu0 %v80
  %526 = vmatprep.subr.mxu0 %v85
  %527 = vmatpush1.msra.mxu0 %v84
  %528 = vmatprep.subr.mxu0 %v89
  %529 = vmatpush1.msra.mxu0 %v88
  %530 = vmatprep.subr.mxu0 %v93
  %531 = vmatpush1.msra.mxu0 %v92
  %532 = vmatprep.subr.mxu0 %v97
  %533 = vmatpush1.msra.mxu0 %v96
  %534 = vmatprep.subr.mxu0 %v101
  %535 = vmatpush1.msra.mxu0 %v100
  %536 = vmatprep.subr.mxu0 %v105
  %537 = vmatpush1.msra.mxu0 %v104
  %538 = vmatprep.subr.mxu0 %v109
  %539 = vmatpush1.msra.mxu0 %v108
  %540 = vmatprep.subr.mxu0 %v113
  %541 = vmatpush1.msra.mxu0 %v112
  %542 = vmatprep.subr.mxu0 %v117
  %543 = vmatpush1.msra.mxu0 %v116
  %544 = vmatprep.subr.mxu0 %v121
  %545 = vmatpush1.msra.mxu0 %v120
  %546 = vmatprep.subr.mxu0 %v125
  %547 = vmatpush1.msra.mxu0 %v124
  %548 = vmatprep.subr.mxu0 %v129
  %549 = vmatpush1.msra.mxu0 %v128
  %550 = vmatprep.subr.mxu0 %v133
  %551 = vmatpush1.msra.mxu0 %v132
  %552 = vmatprep.subr.mxu0 %v137
  %553 = vmatpush1.msra.mxu0 %v136
  %554 = vmatprep.subr.mxu0 %v141
  %555 = vmatpush1.msra.mxu0 %v140
  %556 = vmatprep.subr.mxu0 %v145
  %557 = vmatpush1.msra.mxu0 %v144
  %558 = vmatprep.subr.mxu0 %v149
  %559 = vmatpush1.msra.mxu0 %v148
  %560 = vmatprep.subr.mxu0 %v153
  %561 = vmatpush1.msra.mxu0 %v152
  %562 = vmatprep.mubr.f32.mxu0 %v15
  %563 = vmatmul.mubr.f32.gmra.mrb[0].mxu0 %v14
  %v564 = vpop.f32.mrb[0].mxu0
  %v565 = vadd.f32 %v481, %v564
  %v566 = vpop.f32.mrb[0].mxu0
  %v567 = vadd.f32 %v485, %v566
  %568 = vmatprep.mubr.f32.mxu0 %v22
  %569 = vmatmul.mubr.f32.gmra.mrb[0].mxu0 %v21
  %v570 = vpop.f32.mrb[0].mxu0
  %v571 = vadd.f32 %v481, %v570
  %v572 = vpop.f32.mrb[0].mxu0
  %v573 = vadd.f32 %v485, %v572
  %574 = vdwg.mxu0
  %575 = vmatprep.subr.mxu0 %v157
  %576 = vmatpush1.msra.mxu0 %v156
  %577 = vmatprep.subr.mxu0 %v161
  %578 = vmatpush1.msra.mxu0 %v160
  %579 = vmatprep.subr.mxu0 %v165
  %580 = vmatpush1.msra.mxu0 %v164
  %581 = vmatprep.subr.mxu0 %v169
  %582 = vmatpush1.msra.mxu0 %v168
  %583 = vmatprep.subr.mxu0 %v173
  %584 = vmatpush1.msra.mxu0 %v172
  %585 = vmatprep.subr.mxu0 %v177
  %586 = vmatpush1.msra.mxu0 %v176
  %587 = vmatprep.subr.mxu0 %v181
  %588 = vmatpush1.msra.mxu0 %v180
  %589 = vmatprep.subr.mxu0 %v185
  %590 = vmatpush1.msra.mxu0 %v184
  %591 = vmatprep.subr.mxu0 %v189
  %592 = vmatpush1.msra.mxu0 %v188
  %593 = vmatprep.subr.mxu0 %v193
  %594 = vmatpush1.msra.mxu0 %v192
  %595 = vmatprep.subr.mxu0 %v197
  %596 = vmatpush1.msra.mxu0 %v196
  %597 = vmatprep.subr.mxu0 %v201
  %598 = vmatpush1.msra.mxu0 %v200
  %599 = vmatprep.subr.mxu0 %v205
  %600 = vmatpush1.msra.mxu0 %v204
  %601 = vmatprep.subr.mxu0 %v209
  %602 = vmatpush1.msra.mxu0 %v208
  %603 = vmatprep.subr.mxu0 %v213
  %604 = vmatpush1.msra.mxu0 %v212
  %605 = vmatprep.subr.mxu0 %v217
  %606 = vmatpush1.msra.mxu0 %v216
  %607 = vmatprep.subr.mxu0 %v221
  %608 = vmatpush1.msra.mxu0 %v220
  %609 = vmatprep.subr.mxu0 %v225
  %610 = vmatpush1.msra.mxu0 %v224
  %611 = vmatprep.subr.mxu0 %v229
  %612 = vmatpush1.msra.mxu0 %v228
  %613 = vmatprep.subr.mxu0 %v233
  %614 = vmatpush1.msra.mxu0 %v232
  %615 = vmatprep.subr.mxu0 %v237
  %616 = vmatpush1.msra.mxu0 %v236
  %617 = vmatprep.subr.mxu0 %v241
  %618 = vmatpush1.msra.mxu0 %v240
  %619 = vmatprep.subr.mxu0 %v245
  %620 = vmatpush1.msra.mxu0 %v244
  %621 = vmatprep.subr.mxu0 %v249
  %622 = vmatpush1.msra.mxu0 %v248
  %623 = vmatprep.subr.mxu0 %v253
  %624 = vmatpush1.msra.mxu0 %v252
  %625 = vmatprep.subr.mxu0 %v257
  %626 = vmatpush1.msra.mxu0 %v256
  %627 = vmatprep.subr.mxu0 %v261
  %628 = vmatpush1.msra.mxu0 %v260
  %629 = vmatprep.subr.mxu0 %v265
  %630 = vmatpush1.msra.mxu0 %v264
  %631 = vmatprep.subr.mxu0 %v269
  %632 = vmatpush1.msra.mxu0 %v268
  %633 = vmatprep.subr.mxu0 %v273
  %634 = vmatpush1.msra.mxu0 %v272
  %635 = vmatprep.subr.mxu0 %v277
  %636 = vmatpush1.msra.mxu0 %v276
  %637 = vmatprep.subr.mxu0 %v281
  %638 = vmatpush1.msra.mxu0 %v280
  %639 = vmatprep.mubr.f32.mxu0 %v17
  %640 = vmatmul.mubr.f32.gmra.mrb[0].mxu0 %v16
  %v641 = vpop.f32.mrb[0].mxu0
  %v642 = vadd.f32 %v565, %v641
  %v643 = vpop.f32.mrb[0].mxu0
  %v644 = vadd.f32 %v567, %v643
  %645 = vmatprep.mubr.f32.mxu0 %v24
  %646 = vmatmul.mubr.f32.gmra.mrb[0].mxu0 %v23
  %v647 = vpop.f32.mrb[0].mxu0
  %v648 = vadd.f32 %v571, %v647
  %v649 = vpop.f32.mrb[0].mxu0
  %v650 = vadd.f32 %v573, %v649
  %651 = vdwg.mxu0
  %652 = vmatprep.subr.mxu0 %v285
  %653 = vmatpush1.msra.mxu0 %v284
  %654 = vmatprep.subr.mxu0 %v289
  %655 = vmatpush1.msra.mxu0 %v288
  %656 = vmatprep.subr.mxu0 %v293
  %657 = vmatpush1.msra.mxu0 %v292
  %658 = vmatprep.subr.mxu0 %v297
  %659 = vmatpush1.msra.mxu0 %v296
  %660 = vmatprep.subr.mxu0 %v301
  %661 = vmatpush1.msra.mxu0 %v300
  %662 = vmatprep.subr.mxu0 %v305
  %663 = vmatpush1.msra.mxu0 %v304
  %664 = vmatprep.subr.mxu0 %v309
  %665 = vmatpush1.msra.mxu0 %v308
  %666 = vmatprep.subr.mxu0 %v313
  %667 = vmatpush1.msra.mxu0 %v312
  %668 = vmatprep.subr.mxu0 %v317
  %669 = vmatpush1.msra.mxu0 %v316
  %670 = vmatprep.subr.mxu0 %v321
  %671 = vmatpush1.msra.mxu0 %v320
  %672 = vmatprep.subr.mxu0 %v325
  %673 = vmatpush1.msra.mxu0 %v324
  %674 = vmatprep.subr.mxu0 %v329
  %675 = vmatpush1.msra.mxu0 %v328
  %676 = vmatprep.subr.mxu0 %v333
  %677 = vmatpush1.msra.mxu0 %v332
  %678 = vmatprep.subr.mxu0 %v337
  %679 = vmatpush1.msra.mxu0 %v336
  %680 = vmatprep.subr.mxu0 %v341
  %681 = vmatpush1.msra.mxu0 %v340
  %682 = vmatprep.subr.mxu0 %v345
  %683 = vmatpush1.msra.mxu0 %v344
  %684 = vmatprep.subr.mxu0 %v349
  %685 = vmatpush1.msra.mxu0 %v348
  %686 = vmatprep.subr.mxu0 %v353
  %687 = vmatpush1.msra.mxu0 %v352
  %688 = vmatprep.subr.mxu0 %v357
  %689 = vmatpush1.msra.mxu0 %v356
  %690 = vmatprep.subr.mxu0 %v361
  %691 = vmatpush1.msra.mxu0 %v360
  %692 = vmatprep.subr.mxu0 %v365
  %693 = vmatpush1.msra.mxu0 %v364
  %694 = vmatprep.subr.mxu0 %v369
  %695 = vmatpush1.msra.mxu0 %v368
  %696 = vmatprep.subr.mxu0 %v373
  %697 = vmatpush1.msra.mxu0 %v372
  %698 = vmatprep.subr.mxu0 %v377
  %699 = vmatpush1.msra.mxu0 %v376
  %700 = vmatprep.subr.mxu0 %v381
  %701 = vmatpush1.msra.mxu0 %v380
  %702 = vmatprep.subr.mxu0 %v385
  %703 = vmatpush1.msra.mxu0 %v384
  %704 = vmatprep.subr.mxu0 %v389
  %705 = vmatpush1.msra.mxu0 %v388
  %706 = vmatprep.subr.mxu0 %v393
  %707 = vmatpush1.msra.mxu0 %v392
  %708 = vmatprep.subr.mxu0 %v397
  %709 = vmatpush1.msra.mxu0 %v396
  %710 = vmatprep.subr.mxu0 %v401
  %711 = vmatpush1.msra.mxu0 %v400
  %712 = vmatprep.subr.mxu0 %v405
  %713 = vmatpush1.msra.mxu0 %v404
  %714 = vmatprep.subr.mxu0 %v409
  %715 = vmatpush1.msra.mxu0 %v408
  %716 = vmatprep.mubr.f32.mxu0 %v19
  %717 = vmatmul.mubr.f32.gmra.mrb[0].mxu0 %v18
  %v718 = vpop.f32.mrb[0].mxu0
  %v719 = vadd.f32 %v642, %v718
  %v720 = vpop.f32.mrb[0].mxu0
  %v721 = vadd.f32 %v644, %v720
  %722 = vmatprep.mubr.f32.mxu0 %v26
  %723 = vmatmul.mubr.f32.gmra.mrb[0].mxu0 %v25
  %v724 = vpop.f32.mrb[0].mxu0
  %v725 = vadd.f32 %v648, %v724
  %v726 = vpop.f32.mrb[0].mxu0
  %v727 = vadd.f32 %v650, %v726
  %728 = vdwg.mxu0
  %729 = vmatprep.subr.mxu0 %v413
  %730 = vmatpush1.msra.mxu0 %v412
  %731 = vmatprep.subr.mxu0 %v417
  %732 = vmatpush1.msra.mxu0 %v416
  %733 = vmatprep.subr.mxu0 %v421
  %734 = vmatpush1.msra.mxu0 %v420
  %735 = vmatprep.subr.mxu0 %v425
  %736 = vmatpush1.msra.mxu0 %v424
  %737 = vmatprep.subr.mxu0 %v429
  %738 = vmatpush1.msra.mxu0 %v428
  %739 = vmatprep.subr.mxu0 %v433
  %740 = vmatpush1.msra.mxu0 %v432
  %741 = vmatprep.subr.mxu0 %v437
  %742 = vmatpush1.msra.mxu0 %v436
  %743 = vmatprep.subr.mxu0 %v441
  %744 = vmatpush1.msra.mxu0 %v440
  %745 = vmatprep.subr.mxu0 %v445
  %746 = vmatpush1.msra.mxu0 %v444
  %747 = vmatprep.subr.mxu0 %v449
  %748 = vmatpush1.msra.mxu0 %v448
  %749 = vmatprep.subr.mxu0 %v453
  %750 = vmatpush1.msra.mxu0 %v452
  %751 = vmatprep.subr.mxu0 %v457
  %752 = vmatpush1.msra.mxu0 %v456
  %753 = vmatprep.subr.mxu0 %v461
  %754 = vmatpush1.msra.mxu0 %v460
  %755 = vmatprep.subr.mxu0 %v465
  %756 = vmatpush1.msra.mxu0 %v464
  %757 = vmatprep.subr.mxu0 %v469
  %758 = vmatpush1.msra.mxu0 %v468
  %759 = vmatprep.subr.mxu0 %v473
  %760 = vmatpush1.msra.mxu0 %v472
  %761 = vmatprep.subr.mxu0 0.0
  %762 = vmatpush1.msra.mxu0 0.0
  %763 = vmatprep.subr.mxu0 0.0
  %764 = vmatpush1.msra.mxu0 0.0
  %765 = vmatprep.subr.mxu0 0.0
  %766 = vmatpush1.msra.mxu0 0.0
  %767 = vmatprep.subr.mxu0 0.0
  %768 = vmatpush1.msra.mxu0 0.0
  %769 = vmatprep.subr.mxu0 0.0
  %770 = vmatpush1.msra.mxu0 0.0
  %771 = vmatprep.subr.mxu0 0.0
  %772 = vmatpush1.msra.mxu0 0.0
  %773 = vmatprep.subr.mxu0 0.0
  %774 = vmatpush1.msra.mxu0 0.0
  %775 = vmatprep.subr.mxu0 0.0
  %776 = vmatpush1.msra.mxu0 0.0
  %777 = vmatprep.subr.mxu0 0.0
  %778 = vmatpush1.msra.mxu0 0.0
  %779 = vmatprep.subr.mxu0 0.0
  %780 = vmatpush1.msra.mxu0 0.0
  %781 = vmatprep.subr.mxu0 0.0
  %782 = vmatpush1.msra.mxu0 0.0
  %783 = vmatprep.subr.mxu0 0.0
  %784 = vmatpush1.msra.mxu0 0.0
  %785 = vmatprep.subr.mxu0 0.0
  %786 = vmatpush1.msra.mxu0 0.0
  %787 = vmatprep.subr.mxu0 0.0
  %788 = vmatpush1.msra.mxu0 0.0
  %789 = vmatprep.subr.mxu0 0.0
  %790 = vmatpush1.msra.mxu0 0.0
  %791 = vmatprep.subr.mxu0 0.0
  %792 = vmatpush1.msra.mxu0 0.0
  %793 = vmatprep.mubr.f32.mxu0 0.0
  %794 = vmatmul.mubr.f32.gmra.mrb[0].mxu0 %v20
  %v795 = vpop.f32.mrb[0].mxu0
  %v796 = vadd.f32 %v719, %v795
  %v797 = vpop.f32.mrb[0].mxu0
  %v798 = vadd.f32 %v721, %v797
  %799 = vmatprep.mubr.f32.mxu0 0.0
  %800 = vmatmul.mubr.f32.gmra.mrb[0].mxu0 %v27
  %v801 = vpop.f32.mrb[0].mxu0
  %v802 = vadd.f32 %v725, %v801
  %v803 = vpop.f32.mrb[0].mxu0
  %v804 = vadd.f32 %v727, %v803
  %805 = vdwg.mxu0
  %806 = vmatprep.subr.mxu0 %v31
  %807 = vmatpush1.msra.mxu0 %v30
  %808 = vmatprep.subr.mxu0 %v35
  %809 = vmatpush1.msra.mxu0 %v34
  %810 = vmatprep.subr.mxu0 %v39
  %811 = vmatpush1.msra.mxu0 %v38
  %812 = vmatprep.subr.mxu0 %v43
  %813 = vmatpush1.msra.mxu0 %v42
  %814 = vmatprep.subr.mxu0 %v47
  %815 = vmatpush1.msra.mxu0 %v46
  %816 = vmatprep.subr.mxu0 %v51
  %817 = vmatpush1.msra.mxu0 %v50
  %818 = vmatprep.subr.mxu0 %v55
  %819 = vmatpush1.msra.mxu0 %v54
  %820 = vmatprep.subr.mxu0 %v59
  %821 = vmatpush1.msra.mxu0 %v58
  %822 = vmatprep.subr.mxu0 %v63
  %823 = vmatpush1.msra.mxu0 %v62
  %824 = vmatprep.subr.mxu0 %v67
  %825 = vmatpush1.msra.mxu0 %v66
  %826 = vmatprep.subr.mxu0 %v71
  %827 = vmatpush1.msra.mxu0 %v70
  %828 = vmatprep.subr.mxu0 %v75
  %829 = vmatpush1.msra.mxu0 %v74
  %830 = vmatprep.subr.mxu0 %v79
  %831 = vmatpush1.msra.mxu0 %v78
  %832 = vmatprep.subr.mxu0 %v83
  %833 = vmatpush1.msra.mxu0 %v82
  %834 = vmatprep.subr.mxu0 %v87
  %835 = vmatpush1.msra.mxu0 %v86
  %836 = vmatprep.subr.mxu0 %v91
  %837 = vmatpush1.msra.mxu0 %v90
  %838 = vmatprep.subr.mxu0 %v95
  %839 = vmatpush1.msra.mxu0 %v94
  %840 = vmatprep.subr.mxu0 %v99
  %841 = vmatpush1.msra.mxu0 %v98
  %842 = vmatprep.subr.mxu0 %v103
  %843 = vmatpush1.msra.mxu0 %v102
  %844 = vmatprep.subr.mxu0 %v107
  %845 = vmatpush1.msra.mxu0 %v106
  %846 = vmatprep.subr.mxu0 %v111
  %847 = vmatpush1.msra.mxu0 %v110
  %848 = vmatprep.subr.mxu0 %v115
  %849 = vmatpush1.msra.mxu0 %v114
  %850 = vmatprep.subr.mxu0 %v119
  %851 = vmatpush1.msra.mxu0 %v118
  %852 = vmatprep.subr.mxu0 %v123
  %853 = vmatpush1.msra.mxu0 %v122
  %854 = vmatprep.subr.mxu0 %v127
  %855 = vmatpush1.msra.mxu0 %v126
  %856 = vmatprep.subr.mxu0 %v131
  %857 = vmatpush1.msra.mxu0 %v130
  %858 = vmatprep.subr.mxu0 %v135
  %859 = vmatpush1.msra.mxu0 %v134
  %860 = vmatprep.subr.mxu0 %v139
  %861 = vmatpush1.msra.mxu0 %v138
  %862 = vmatprep.subr.mxu0 %v143
  %863 = vmatpush1.msra.mxu0 %v142
  %864 = vmatprep.subr.mxu0 %v147
  %865 = vmatpush1.msra.mxu0 %v146
  %866 = vmatprep.subr.mxu0 %v151
  %867 = vmatpush1.msra.mxu0 %v150
  %868 = vmatprep.subr.mxu0 %v155
  %869 = vmatpush1.msra.mxu0 %v154
  %870 = vmatprep.mubr.f32.mxu0 %v15
  %871 = vmatmul.mubr.f32.gmra.mrb[0].mxu0 %v14
  %v872 = vpop.f32.mrb[0].mxu0
  %v873 = vadd.f32 %v489, %v872
  %v874 = vpop.f32.mrb[0].mxu0
  %v875 = vadd.f32 %v493, %v874
  %876 = vmatprep.mubr.f32.mxu0 %v22
  %877 = vmatmul.mubr.f32.gmra.mrb[0].mxu0 %v21
  %v878 = vpop.f32.mrb[0].mxu0
  %v879 = vadd.f32 %v489, %v878
  %v880 = vpop.f32.mrb[0].mxu0
  %v881 = vadd.f32 %v493, %v880
  %882 = vdwg.mxu0
  %883 = vmatprep.subr.mxu0 %v159
  %884 = vmatpush1.msra.mxu0 %v158
  %885 = vmatprep.subr.mxu0 %v163
  %886 = vmatpush1.msra.mxu0 %v162
  %887 = vmatprep.subr.mxu0 %v167
  %888 = vmatpush1.msra.mxu0 %v166
  %889 = vmatprep.subr.mxu0 %v171
  %890 = vmatpush1.msra.mxu0 %v170
  %891 = vmatprep.subr.mxu0 %v175
  %892 = vmatpush1.msra.mxu0 %v174
  %893 = vmatprep.subr.mxu0 %v179
  %894 = vmatpush1.msra.mxu0 %v178
  %895 = vmatprep.subr.mxu0 %v183
  %896 = vmatpush1.msra.mxu0 %v182
  %897 = vmatprep.subr.mxu0 %v187
  %898 = vmatpush1.msra.mxu0 %v186
  %899 = vmatprep.subr.mxu0 %v191
  %900 = vmatpush1.msra.mxu0 %v190
  %901 = vmatprep.subr.mxu0 %v195
  %902 = vmatpush1.msra.mxu0 %v194
  %903 = vmatprep.subr.mxu0 %v199
  %904 = vmatpush1.msra.mxu0 %v198
  %905 = vmatprep.subr.mxu0 %v203
  %906 = vmatpush1.msra.mxu0 %v202
  %907 = vmatprep.subr.mxu0 %v207
  %908 = vmatpush1.msra.mxu0 %v206
  %909 = vmatprep.subr.mxu0 %v211
  %910 = vmatpush1.msra.mxu0 %v210
  %911 = vmatprep.subr.mxu0 %v215
  %912 = vmatpush1.msra.mxu0 %v214
  %913 = vmatprep.subr.mxu0 %v219
  %914 = vmatpush1.msra.mxu0 %v218
  %915 = vmatprep.subr.mxu0 %v223
  %916 = vmatpush1.msra.mxu0 %v222
  %917 = vmatprep.subr.mxu0 %v227
  %918 = vmatpush1.msra.mxu0 %v226
  %919 = vmatprep.subr.mxu0 %v231
  %920 = vmatpush1.msra.mxu0 %v230
  %921 = vmatprep.subr.mxu0 %v235
  %922 = vmatpush1.msra.mxu0 %v234
  %923 = vmatprep.subr.mxu0 %v239
  %924 = vmatpush1.msra.mxu0 %v238
  %925 = vmatprep.subr.mxu0 %v243
  %926 = vmatpush1.msra.mxu0 %v242
  %927 = vmatprep.subr.mxu0 %v247
  %928 = vmatpush1.msra.mxu0 %v246
  %929 = vmatprep.subr.mxu0 %v251
  %930 = vmatpush1.msra.mxu0 %v250
  %931 = vmatprep.subr.mxu0 %v255
  %932 = vmatpush1.msra.mxu0 %v254
  %933 = vmatprep.subr.mxu0 %v259
  %934 = vmatpush1.msra.mxu0 %v258
  %935 = vmatprep.subr.mxu0 %v263
  %936 = vmatpush1.msra.mxu0 %v262
  %937 = vmatprep.subr.mxu0 %v267
  %938 = vmatpush1.msra.mxu0 %v266
  %939 = vmatprep.subr.mxu0 %v271
  %940 = vmatpush1.msra.mxu0 %v270
  %941 = vmatprep.subr.mxu0 %v275
  %942 = vmatpush1.msra.mxu0 %v274
  %943 = vmatprep.subr.mxu0 %v279
  %944 = vmatpush1.msra.mxu0 %v278
  %945 = vmatprep.subr.mxu0 %v283
  %946 = vmatpush1.msra.mxu0 %v282
  %947 = vmatprep.mubr.f32.mxu0 %v17
  %948 = vmatmul.mubr.f32.gmra.mrb[0].mxu0 %v16
  %v949 = vpop.f32.mrb[0].mxu0
  %v950 = vadd.f32 %v873, %v949
  %v951 = vpop.f32.mrb[0].mxu0
  %v952 = vadd.f32 %v875, %v951
  %953 = vmatprep.mubr.f32.mxu0 %v24
  %954 = vmatmul.mubr.f32.gmra.mrb[0].mxu0 %v23
  %v955 = vpop.f32.mrb[0].mxu0
  %v956 = vadd.f32 %v879, %v955
  %v957 = vpop.f32.mrb[0].mxu0
  %v958 = vadd.f32 %v881, %v957
  %959 = vdwg.mxu0
  %960 = vmatprep.subr.mxu0 %v287
  %961 = vmatpush1.msra.mxu0 %v286
  %962 = vmatprep.subr.mxu0 %v291
  %963 = vmatpush1.msra.mxu0 %v290
  %964 = vmatprep.subr.mxu0 %v295
  %965 = vmatpush1.msra.mxu0 %v294
  %966 = vmatprep.subr.mxu0 %v299
  %967 = vmatpush1.msra.mxu0 %v298
  %968 = vmatprep.subr.mxu0 %v303
  %969 = vmatpush1.msra.mxu0 %v302
  %970 = vmatprep.subr.mxu0 %v307
  %971 = vmatpush1.msra.mxu0 %v306
  %972 = vmatprep.subr.mxu0 %v311
  %973 = vmatpush1.msra.mxu0 %v310
  %974 = vmatprep.subr.mxu0 %v315
  %975 = vmatpush1.msra.mxu0 %v314
  %976 = vmatprep.subr.mxu0 %v319
  %977 = vmatpush1.msra.mxu0 %v318
  %978 = vmatprep.subr.mxu0 %v323
  %979 = vmatpush1.msra.mxu0 %v322
  %980 = vmatprep.subr.mxu0 %v327
  %981 = vmatpush1.msra.mxu0 %v326
  %982 = vmatprep.subr.mxu0 %v331
  %983 = vmatpush1.msra.mxu0 %v330
  %984 = vmatprep.subr.mxu0 %v335
  %985 = vmatpush1.msra.mxu0 %v334
  %986 = vmatprep.subr.mxu0 %v339
  %987 = vmatpush1.msra.mxu0 %v338
  %988 = vmatprep.subr.mxu0 %v343
  %989 = vmatpush1.msra.mxu0 %v342
  %990 = vmatprep.subr.mxu0 %v347
  %991 = vmatpush1.msra.mxu0 %v346
  %992 = vmatprep.subr.mxu0 %v351
  %993 = vmatpush1.msra.mxu0 %v350
  %994 = vmatprep.subr.mxu0 %v355
  %995 = vmatpush1.msra.mxu0 %v354
  %996 = vmatprep.subr.mxu0 %v359
  %997 = vmatpush1.msra.mxu0 %v358
  %998 = vmatprep.subr.mxu0 %v363
  %999 = vmatpush1.msra.mxu0 %v362
  %1000 = vmatprep.subr.mxu0 %v367
  %1001 = vmatpush1.msra.mxu0 %v366
  %1002 = vmatprep.subr.mxu0 %v371
  %1003 = vmatpush1.msra.mxu0 %v370
  %1004 = vmatprep.subr.mxu0 %v375
  %1005 = vmatpush1.msra.mxu0 %v374
  %1006 = vmatprep.subr.mxu0 %v379
  %1007 = vmatpush1.msra.mxu0 %v378
  %1008 = vmatprep.subr.mxu0 %v383
  %1009 = vmatpush1.msra.mxu0 %v382
  %1010 = vmatprep.subr.mxu0 %v387
  %1011 = vmatpush1.msra.mxu0 %v386
  %1012 = vmatprep.subr.mxu0 %v391
  %1013 = vmatpush1.msra.mxu0 %v390
  %1014 = vmatprep.subr.mxu0 %v395
  %1015 = vmatpush1.msra.mxu0 %v394
  %1016 = vmatprep.subr.mxu0 %v399
  %1017 = vmatpush1.msra.mxu0 %v398
  %1018 = vmatprep.subr.mxu0 %v403
  %1019 = vmatpush1.msra.mxu0 %v402
  %1020 = vmatprep.subr.mxu0 %v407
  %1021 = vmatpush1.msra.mxu0 %v406
  %1022 = vmatprep.subr.mxu0 %v411
  %1023 = vmatpush1.msra.mxu0 %v410
  %1024 = vmatprep.mubr.f32.mxu0 %v19
  %1025 = vmatmul.mubr.f32.gmra.mrb[0].mxu0 %v18
  %v1026 = vpop.f32.mrb[0].mxu0
  %v1027 = vadd.f32 %v950, %v1026
  %v1028 = vpop.f32.mrb[0].mxu0
  %v1029 = vadd.f32 %v952, %v1028
  %1030 = vmatprep.mubr.f32.mxu0 %v26
  %1031 = vmatmul.mubr.f32.gmra.mrb[0].mxu0 %v25
  %v1032 = vpop.f32.mrb[0].mxu0
  %v1033 = vadd.f32 %v956, %v1032
  %v1034 = vpop.f32.mrb[0].mxu0
  %v1035 = vadd.f32 %v958, %v1034
  %1036 = vdwg.mxu0
  %1037 = vmatprep.subr.mxu0 %v415
  %1038 = vmatpush1.msra.mxu0 %v414
  %1039 = vmatprep.subr.mxu0 %v419
  %1040 = vmatpush1.msra.mxu0 %v418
  %1041 = vmatprep.subr.mxu0 %v423
  %1042 = vmatpush1.msra.mxu0 %v422
  %1043 = vmatprep.subr.mxu0 %v427
  %1044 = vmatpush1.msra.mxu0 %v426
  %1045 = vmatprep.subr.mxu0 %v431
  %1046 = vmatpush1.msra.mxu0 %v430
  %1047 = vmatprep.subr.mxu0 %v435
  %1048 = vmatpush1.msra.mxu0 %v434
  %1049 = vmatprep.subr.mxu0 %v439
  %1050 = vmatpush1.msra.mxu0 %v438
  %1051 = vmatprep.subr.mxu0 %v443
  %1052 = vmatpush1.msra.mxu0 %v442
  %1053 = vmatprep.subr.mxu0 %v447
  %1054 = vmatpush1.msra.mxu0 %v446
  %1055 = vmatprep.subr.mxu0 %v451
  %1056 = vmatpush1.msra.mxu0 %v450
  %1057 = vmatprep.subr.mxu0 %v455
  %1058 = vmatpush1.msra.mxu0 %v454
  %1059 = vmatprep.subr.mxu0 %v459
  %1060 = vmatpush1.msra.mxu0 %v458
  %1061 = vmatprep.subr.mxu0 %v463
  %1062 = vmatpush1.msra.mxu0 %v462
  %1063 = vmatprep.subr.mxu0 %v467
  %1064 = vmatpush1.msra.mxu0 %v466
  %1065 = vmatprep.subr.mxu0 %v471
  %1066 = vmatpush1.msra.mxu0 %v470
  %1067 = vmatprep.subr.mxu0 %v475
  %1068 = vmatpush1.msra.mxu0 %v474
  %1069 = vmatprep.subr.mxu0 0.0
  %1070 = vmatpush1.msra.mxu0 0.0
  %1071 = vmatprep.subr.mxu0 0.0
  %1072 = vmatpush1.msra.mxu0 0.0
  %1073 = vmatprep.subr.mxu0 0.0
  %1074 = vmatpush1.msra.mxu0 0.0
  %1075 = vmatprep.subr.mxu0 0.0
  %1076 = vmatpush1.msra.mxu0 0.0
  %1077 = vmatprep.subr.mxu0 0.0
  %1078 = vmatpush1.msra.mxu0 0.0
  %1079 = vmatprep.subr.mxu0 0.0
  %1080 = vmatpush1.msra.mxu0 0.0
  %1081 = vmatprep.subr.mxu0 0.0
  %1082 = vmatpush1.msra.mxu0 0.0
  %1083 = vmatprep.subr.mxu0 0.0
  %1084 = vmatpush1.msra.mxu0 0.0
  %1085 = vmatprep.subr.mxu0 0.0
  %1086 = vmatpush1.msra.mxu0 0.0
  %1087 = vmatprep.subr.mxu0 0.0
  %1088 = vmatpush1.msra.mxu0 0.0
  %1089 = vmatprep.subr.mxu0 0.0
  %1090 = vmatpush1.msra.mxu0 0.0
  %1091 = vmatprep.subr.mxu0 0.0
  %1092 = vmatpush1.msra.mxu0 0.0
  %1093 = vmatprep.subr.mxu0 0.0
  %1094 = vmatpush1.msra.mxu0 0.0
  %1095 = vmatprep.subr.mxu0 0.0
  %1096 = vmatpush1.msra.mxu0 0.0
  %1097 = vmatprep.subr.mxu0 0.0
  %1098 = vmatpush1.msra.mxu0 0.0
  %1099 = vmatprep.subr.mxu0 0.0
  %1100 = vmatpush1.msra.mxu0 0.0
  %1101 = vmatprep.mubr.f32.mxu0 0.0
  %1102 = vmatmul.mubr.f32.gmra.mrb[0].mxu0 %v20
  %v1103 = vpop.f32.mrb[0].mxu0
  %v1104 = vadd.f32 %v1027, %v1103
  %v1105 = vpop.f32.mrb[0].mxu0
  %v1106 = vadd.f32 %v1029, %v1105
  %1107 = vmatprep.mubr.f32.mxu0 0.0
  %1108 = vmatmul.mubr.f32.gmra.mrb[0].mxu0 %v27
  %v1109 = vpop.f32.mrb[0].mxu0
  %v1110 = vadd.f32 %v1033, %v1109
  %v1111 = vpop.f32.mrb[0].mxu0
  %v1112 = vadd.f32 %v1035, %v1111
  %1113 = vdwg.mxu0
  %1114 = vst [vmem:[%s3] sm:$0xff] %v796
  %1115 = vst [vmem:[%s3 + $0x8] sm:$0xff] %v798
  %1116 = vst [vmem:[%s3 + $0x10] sm:$0xff] %v1104
  %1117 = vst [vmem:[%s3 + $0x18] sm:$0xff] %v1106
  %1118 = vst [vmem:[%s3 + $0x20] sm:$0xff] %v802
  %1119 = vst [vmem:[%s3 + $0x28] sm:$0xff] %v804
  %1120 = vst [vmem:[%s3 + $0x30] sm:$0xff] %v1110
  %1121 = vst [vmem:[%s3 + $0x38] sm:$0xff] %v1112
  // Predicated region
  $region14: #{mann_forward.2} parent=0 // pred_check
    _
  $region15: #{mann_forward.2} parent=0 // pred_check_branch
    %1123 = sbr.rel (0) target = $region17
  $region16: #{mann_forward.2} parent=0 // pred_region
    _
  $region17: #{mann_forward.2} parent=0 // pred_fallthru
    _
  // Predicated region
  $region18: #{mann_forward.2} parent=0 // pred_check
    _
  $region19: #{mann_forward.2} parent=0 // pred_check_branch
    %1125 = sbr.rel (0) target = $region21
  $region20: #{mann_forward.2} parent=0 // pred_region
    _
  $region21: #{mann_forward.2} parent=0 // pred_fallthru
    _

// kernel: mann_forward.3
$region0: #{mann_forward.3}
  #allocation0 [shape = 'u32[]', space=smem, size = 0x4, offset = 0x4, fixed_abs, tag = 'smem constant byte address 0x4 - core index']
  #allocation1 [shape = 'u32[144,128]{1,0:T(1,128)}', space=vmem, size = 0x12000, scoped, tag = 'internal scratch']
  #allocation2 [shape = 'f32[8,128]{1,0:T(8,128)}', space=vmem, size = 0x1000, scoped, tag = 'scratch operand']
  #allocation3 [shape = 'f32[8,128]{1,0:T(8,128)}', space=vmem, size = 0x1000, scoped, tag = 'scratch operand']
  #allocation4 [shape = 'f32[8,128]{1,0:T(8,128)}', space=vmem, size = 0x1000, scoped, tag = 'scratch operand']
  #allocation5 [shape = 'f32[8,128]{1,0:T(8,128)}', space=vmem, size = 0x1000, scoped, tag = 'scratch operand']
  %s0 = inlined_call_operand.vmem [shape: f32[8,8,512], index: 0, kind: input, shape index: {}]
  %s1 = inlined_call_operand.vmem [shape: f32[128,512], index: 1, kind: input, shape index: {}]
  %s2 = inlined_call_operand.vmem [shape: f32[128,512], index: 2, kind: input, shape index: {}]
  %s3 = inlined_call_operand.vmem [shape: f32[128,512], index: 3, kind: input, shape index: {}]
  %s4 = inlined_call_operand.vmem [shape: f32[1,512], index: 4, kind: input, shape index: {}]
  %s5 = inlined_call_operand.vmem [shape: f32[8,8,128], index: 5, kind: output, shape index: {}]
  %s6 = sld [smem:[#allocation0]]
  $region34: #{mann_forward.3} parent=0
    _
  %s8 = ssub.s32 1, %s6
  %s9 = scalar_select 0, %s8, %s6
  // Predicated region
  $region2: #{mann_forward.3} parent=0 // pred_check
    _
  $region3: #{mann_forward.3} parent=0 // pred_check_branch
    %11 = sbr.rel (0) target = $region5
  $region4: #{mann_forward.3} parent=0 // pred_region
    _
  $region5: #{mann_forward.3} parent=0 // pred_fallthru
    _
  // Predicated region
  $region6: #{mann_forward.3} parent=0 // pred_check
    _
  $region7: #{mann_forward.3} parent=0 // pred_check_branch
    %13 = sbr.rel (0) target = $region9
  $region8: #{mann_forward.3} parent=0 // pred_region
    _
  $region9: #{mann_forward.3} parent=0 // pred_fallthru
    _
  // Predicated region
  $region10: #{mann_forward.3} parent=0 // pred_check
    _
  $region11: #{mann_forward.3} parent=0 // pred_check_branch
    %15 = sbr.rel (0) target = $region13
  $region12: #{mann_forward.3} parent=0 // pred_region
    _
  $region13: #{mann_forward.3} parent=0 // pred_fallthru
    _
  // Predicated region
  $region14: #{mann_forward.3} parent=0 // pred_check
    _
  $region15: #{mann_forward.3} parent=0 // pred_check_branch
    %17 = sbr.rel (0) target = $region17
  $region16: #{mann_forward.3} parent=0 // pred_region
    _
  $region17: #{mann_forward.3} parent=0 // pred_fallthru
    _
  // Predicated region
  $region18: #{mann_forward.3} parent=0 // pred_check
    _
  $region19: #{mann_forward.3} parent=0 // pred_check_branch
    %19 = sbr.rel (0) target = $region21
  $region20: #{mann_forward.3} parent=0 // pred_region
    _
  $region21: #{mann_forward.3} parent=0 // pred_fallthru
    _
  %p20 = scmp.eq.s32.totalorder 0, 0
  // Predicated region
  $region22: #{mann_forward.3} parent=0 // pred_check
    %p21 = pneg %p20
  $region23: #{mann_forward.3} parent=0 // pred_check_branch
    %23 = sbr.rel (%p21) target = $region25
  $region24: #{mann_forward.3} parent=0 // pred_region
    %24 = vst [vmem:[#allocation2] sm:$0xff] 0.0
    %25 = vst [vmem:[#allocation3] sm:$0xff] 0.0
    %26 = vst [vmem:[#allocation4] sm:$0xff] 0.0
    %27 = vst [vmem:[#allocation5] sm:$0xff] 0.0
  $region25: #{mann_forward.3} parent=0 // pred_fallthru
    _
  %v28 = vld [vmem:[%s1] sm:$0xff]
  %v29 = vld [vmem:[%s1 + $0x8] sm:$0xff]
  %v30 = vld [vmem:[%s1 + $0x10] sm:$0xff]
  %v31 = vld [vmem:[%s1 + $0x18] sm:$0xff]
  %v32 = vld [vmem:[%s1 + $0x20] sm:$0xff]
  %v33 = vld [vmem:[%s1 + $0x28] sm:$0xff]
  %v34 = vld [vmem:[%s1 + $0x30] sm:$0xff]
  %v35 = vld [vmem:[%s1 + $0x38] sm:$0xff]
  %v36 = vld [vmem:[%s1 + $0x40] sm:$0xff]
  %v37 = vld [vmem:[%s1 + $0x48] sm:$0xff]
  %v38 = vld [vmem:[%s1 + $0x50] sm:$0xff]
  %v39 = vld [vmem:[%s1 + $0x58] sm:$0xff]
  %v40 = vld [vmem:[%s1 + $0x60] sm:$0xff]
  %v41 = vld [vmem:[%s1 + $0x68] sm:$0xff]
  %v42 = vld [vmem:[%s1 + $0x70] sm:$0xff]
  %v43 = vld [vmem:[%s1 + $0x78] sm:$0xff]
  %v44 = vld [vmem:[%s1 + $0x80] sm:$0xff]
  %v45 = vld [vmem:[%s1 + $0x88] sm:$0xff]
  %v46 = vld [vmem:[%s1 + $0x90] sm:$0xff]
  %v47 = vld [vmem:[%s1 + $0x98] sm:$0xff]
  %v48 = vld [vmem:[%s1 + $0xa0] sm:$0xff]
  %v49 = vld [vmem:[%s1 + $0xa8] sm:$0xff]
  %v50 = vld [vmem:[%s1 + $0xb0] sm:$0xff]
  %v51 = vld [vmem:[%s1 + $0xb8] sm:$0xff]
  %v52 = vld [vmem:[%s1 + $0xc0] sm:$0xff]
  %v53 = vld [vmem:[%s1 + $0xc8] sm:$0xff]
  %v54 = vld [vmem:[%s1 + $0xd0] sm:$0xff]
  %v55 = vld [vmem:[%s1 + $0xd8] sm:$0xff]
  %v56 = vld [vmem:[%s1 + $0xe0] sm:$0xff]
  %v57 = vld [vmem:[%s1 + $0xe8] sm:$0xff]
  %v58 = vld [vmem:[%s1 + $0xf0] sm:$0xff]
  %v59 = vld [vmem:[%s1 + $0xf8] sm:$0xff]
  %v60 = vld [vmem:[%s1 + $0x100] sm:$0xff]
  %v61 = vld [vmem:[%s1 + $0x108] sm:$0xff]
  %v62 = vld [vmem:[%s1 + $0x110] sm:$0xff]
  %v63 = vld [vmem:[%s1 + $0x118] sm:$0xff]
  %v64 = vld [vmem:[%s1 + $0x120] sm:$0xff]
  %v65 = vld [vmem:[%s1 + $0x128] sm:$0xff]
  %v66 = vld [vmem:[%s1 + $0x130] sm:$0xff]
  %v67 = vld [vmem:[%s1 + $0x138] sm:$0xff]
  %v68 = vld [vmem:[%s1 + $0x140] sm:$0xff]
  %v69 = vld [vmem:[%s1 + $0x148] sm:$0xff]
  %v70 = vld [vmem:[%s1 + $0x150] sm:$0xff]
  %v71 = vld [vmem:[%s1 + $0x158] sm:$0xff]
  %v72 = vld [vmem:[%s1 + $0x160] sm:$0xff]
  %v73 = vld [vmem:[%s1 + $0x168] sm:$0xff]
  %v74 = vld [vmem:[%s1 + $0x170] sm:$0xff]
  %v75 = vld [vmem:[%s1 + $0x178] sm:$0xff]
  %v76 = vld [vmem:[%s1 + $0x180] sm:$0xff]
  %v77 = vld [vmem:[%s1 + $0x188] sm:$0xff]
  %v78 = vld [vmem:[%s1 + $0x190] sm:$0xff]
  %v79 = vld [vmem:[%s1 + $0x198] sm:$0xff]
  %v80 = vld [vmem:[%s1 + $0x1a0] sm:$0xff]
  %v81 = vld [vmem:[%s1 + $0x1a8] sm:$0xff]
  %v82 = vld [vmem:[%s1 + $0x1b0] sm:$0xff]
  %v83 = vld [vmem:[%s1 + $0x1b8] sm:$0xff]
  %v84 = vld [vmem:[%s1 + $0x1c0] sm:$0xff]
  %v85 = vld [vmem:[%s1 + $0x1c8] sm:$0xff]
  %v86 = vld [vmem:[%s1 + $0x1d0] sm:$0xff]
  %v87 = vld [vmem:[%s1 + $0x1d8] sm:$0xff]
  %v88 = vld [vmem:[%s1 + $0x1e0] sm:$0xff]
  %v89 = vld [vmem:[%s1 + $0x1e8] sm:$0xff]
  %v90 = vld [vmem:[%s1 + $0x1f0] sm:$0xff]
  %v91 = vld [vmem:[%s1 + $0x1f8] sm:$0xff]
  %v92 = vld [vmem:[%s2] sm:$0xff]
  %v93 = vld [vmem:[%s2 + $0x8] sm:$0xff]
  %v94 = vld [vmem:[%s2 + $0x10] sm:$0xff]
  %v95 = vld [vmem:[%s2 + $0x18] sm:$0xff]
  %v96 = vld [vmem:[%s2 + $0x20] sm:$0xff]
  %v97 = vld [vmem:[%s2 + $0x28] sm:$0xff]
  %v98 = vld [vmem:[%s2 + $0x30] sm:$0xff]
  %v99 = vld [vmem:[%s2 + $0x38] sm:$0xff]
  %v100 = vld [vmem:[%s2 + $0x40] sm:$0xff]
  %v101 = vld [vmem:[%s2 + $0x48] sm:$0xff]
  %v102 = vld [vmem:[%s2 + $0x50] sm:$0xff]
  %v103 = vld [vmem:[%s2 + $0x58] sm:$0xff]
  %v104 = vld [vmem:[%s2 + $0x60] sm:$0xff]
  %v105 = vld [vmem:[%s2 + $0x68] sm:$0xff]
  %v106 = vld [vmem:[%s2 + $0x70] sm:$0xff]
  %v107 = vld [vmem:[%s2 + $0x78] sm:$0xff]
  %v108 = vld [vmem:[%s2 + $0x80] sm:$0xff]
  %v109 = vld [vmem:[%s2 + $0x88] sm:$0xff]
  %v110 = vld [vmem:[%s2 + $0x90] sm:$0xff]
  %v111 = vld [vmem:[%s2 + $0x98] sm:$0xff]
  %v112 = vld [vmem:[%s2 + $0xa0] sm:$0xff]
  %v113 = vld [vmem:[%s2 + $0xa8] sm:$0xff]
  %v114 = vld [vmem:[%s2 + $0xb0] sm:$0xff]
  %v115 = vld [vmem:[%s2 + $0xb8] sm:$0xff]
  %v116 = vld [vmem:[%s2 + $0xc0] sm:$0xff]
  %v117 = vld [vmem:[%s2 + $0xc8] sm:$0xff]
  %v118 = vld [vmem:[%s2 + $0xd0] sm:$0xff]
  %v119 = vld [vmem:[%s2 + $0xd8] sm:$0xff]
  %v120 = vld [vmem:[%s2 + $0xe0] sm:$0xff]
  %v121 = vld [vmem:[%s2 + $0xe8] sm:$0xff]
  %v122 = vld [vmem:[%s2 + $0xf0] sm:$0xff]
  %v123 = vld [vmem:[%s2 + $0xf8] sm:$0xff]
  %v124 = vld [vmem:[%s2 + $0x100] sm:$0xff]
  %v125 = vld [vmem:[%s2 + $0x108] sm:$0xff]
  %v126 = vld [vmem:[%s2 + $0x110] sm:$0xff]
  %v127 = vld [vmem:[%s2 + $0x118] sm:$0xff]
  %v128 = vld [vmem:[%s2 + $0x120] sm:$0xff]
  %v129 = vld [vmem:[%s2 + $0x128] sm:$0xff]
  %v130 = vld [vmem:[%s2 + $0x130] sm:$0xff]
  %v131 = vld [vmem:[%s2 + $0x138] sm:$0xff]
  %v132 = vld [vmem:[%s2 + $0x140] sm:$0xff]
  %v133 = vld [vmem:[%s2 + $0x148] sm:$0xff]
  %v134 = vld [vmem:[%s2 + $0x150] sm:$0xff]
  %v135 = vld [vmem:[%s2 + $0x158] sm:$0xff]
  %v136 = vld [vmem:[%s2 + $0x160] sm:$0xff]
  %v137 = vld [vmem:[%s2 + $0x168] sm:$0xff]
  %v138 = vld [vmem:[%s2 + $0x170] sm:$0xff]
  %v139 = vld [vmem:[%s2 + $0x178] sm:$0xff]
  %v140 = vld [vmem:[%s2 + $0x180] sm:$0xff]
  %v141 = vld [vmem:[%s2 + $0x188] sm:$0xff]
  %v142 = vld [vmem:[%s2 + $0x190] sm:$0xff]
  %v143 = vld [vmem:[%s2 + $0x198] sm:$0xff]
  %v144 = vld [vmem:[%s2 + $0x1a0] sm:$0xff]
  %v145 = vld [vmem:[%s2 + $0x1a8] sm:$0xff]
  %v146 = vld [vmem:[%s2 + $0x1b0] sm:$0xff]
  %v147 = vld [vmem:[%s2 + $0x1b8] sm:$0xff]
  %v148 = vld [vmem:[%s2 + $0x1c0] sm:$0xff]
  %v149 = vld [vmem:[%s2 + $0x1c8] sm:$0xff]
  %v150 = vld [vmem:[%s2 + $0x1d0] sm:$0xff]
  %v151 = vld [vmem:[%s2 + $0x1d8] sm:$0xff]
  %v152 = vld [vmem:[%s2 + $0x1e0] sm:$0xff]
  %v153 = vld [vmem:[%s2 + $0x1e8] sm:$0xff]
  %v154 = vld [vmem:[%s2 + $0x1f0] sm:$0xff]
  %v155 = vld [vmem:[%s2 + $0x1f8] sm:$0xff]
  %v156 = vld [vmem:[%s3] sm:$0xff]
  %v157 = vld [vmem:[%s3 + $0x8] sm:$0xff]
  %v158 = vld [vmem:[%s3 + $0x10] sm:$0xff]
  %v159 = vld [vmem:[%s3 + $0x18] sm:$0xff]
  %v160 = vld [vmem:[%s3 + $0x20] sm:$0xff]
  %v161 = vld [vmem:[%s3 + $0x28] sm:$0xff]
  %v162 = vld [vmem:[%s3 + $0x30] sm:$0xff]
  %v163 = vld [vmem:[%s3 + $0x38] sm:$0xff]
  %v164 = vld [vmem:[%s3 + $0x40] sm:$0xff]
  %v165 = vld [vmem:[%s3 + $0x48] sm:$0xff]
  %v166 = vld [vmem:[%s3 + $0x50] sm:$0xff]
  %v167 = vld [vmem:[%s3 + $0x58] sm:$0xff]
  %v168 = vld [vmem:[%s3 + $0x60] sm:$0xff]
  %v169 = vld [vmem:[%s3 + $0x68] sm:$0xff]
  %v170 = vld [vmem:[%s3 + $0x70] sm:$0xff]
  %v171 = vld [vmem:[%s3 + $0x78] sm:$0xff]
  %v172 = vld [vmem:[%s3 + $0x80] sm:$0xff]
  %v173 = vld [vmem:[%s3 + $0x88] sm:$0xff]
  %v174 = vld [vmem:[%s3 + $0x90] sm:$0xff]
  %v175 = vld [vmem:[%s3 + $0x98] sm:$0xff]
  %v176 = vld [vmem:[%s3 + $0xa0] sm:$0xff]
  %v177 = vld [vmem:[%s3 + $0xa8] sm:$0xff]
  %v178 = vld [vmem:[%s3 + $0xb0] sm:$0xff]
  %v179 = vld [vmem:[%s3 + $0xb8] sm:$0xff]
  %v180 = vld [vmem:[%s3 + $0xc0] sm:$0xff]
  %v181 = vld [vmem:[%s3 + $0xc8] sm:$0xff]
  %v182 = vld [vmem:[%s3 + $0xd0] sm:$0xff]
  %v183 = vld [vmem:[%s3 + $0xd8] sm:$0xff]
  %v184 = vld [vmem:[%s3 + $0xe0] sm:$0xff]
  %v185 = vld [vmem:[%s3 + $0xe8] sm:$0xff]
  %v186 = vld [vmem:[%s3 + $0xf0] sm:$0xff]
  %v187 = vld [vmem:[%s3 + $0xf8] sm:$0xff]
  %v188 = vld [vmem:[%s3 + $0x100] sm:$0xff]
  %v189 = vld [vmem:[%s3 + $0x108] sm:$0xff]
  %v190 = vld [vmem:[%s3 + $0x110] sm:$0xff]
  %v191 = vld [vmem:[%s3 + $0x118] sm:$0xff]
  %v192 = vld [vmem:[%s3 + $0x120] sm:$0xff]
  %v193 = vld [vmem:[%s3 + $0x128] sm:$0xff]
  %v194 = vld [vmem:[%s3 + $0x130] sm:$0xff]
  %v195 = vld [vmem:[%s3 + $0x138] sm:$0xff]
  %v196 = vld [vmem:[%s3 + $0x140] sm:$0xff]
  %v197 = vld [vmem:[%s3 + $0x148] sm:$0xff]
  %v198 = vld [vmem:[%s3 + $0x150] sm:$0xff]
  %v199 = vld [vmem:[%s3 + $0x158] sm:$0xff]
  %v200 = vld [vmem:[%s3 + $0x160] sm:$0xff]
  %v201 = vld [vmem:[%s3 + $0x168] sm:$0xff]
  %v202 = vld [vmem:[%s3 + $0x170] sm:$0xff]
  %v203 = vld [vmem:[%s3 + $0x178] sm:$0xff]
  %v204 = vld [vmem:[%s3 + $0x180] sm:$0xff]
  %v205 = vld [vmem:[%s3 + $0x188] sm:$0xff]
  %v206 = vld [vmem:[%s3 + $0x190] sm:$0xff]
  %v207 = vld [vmem:[%s3 + $0x198] sm:$0xff]
  %v208 = vld [vmem:[%s3 + $0x1a0] sm:$0xff]
  %v209 = vld [vmem:[%s3 + $0x1a8] sm:$0xff]
  %v210 = vld [vmem:[%s3 + $0x1b0] sm:$0xff]
  %v211 = vld [vmem:[%s3 + $0x1b8] sm:$0xff]
  %v212 = vld [vmem:[%s3 + $0x1c0] sm:$0xff]
  %v213 = vld [vmem:[%s3 + $0x1c8] sm:$0xff]
  %v214 = vld [vmem:[%s3 + $0x1d0] sm:$0xff]
  %v215 = vld [vmem:[%s3 + $0x1d8] sm:$0xff]
  %v216 = vld [vmem:[%s3 + $0x1e0] sm:$0xff]
  %v217 = vld [vmem:[%s3 + $0x1e8] sm:$0xff]
  %v218 = vld [vmem:[%s3 + $0x1f0] sm:$0xff]
  %v219 = vld [vmem:[%s3 + $0x1f8] sm:$0xff]
  %v220 = vld [vmem:[%s4] sm:$0xf]
  %v221 = vld [vmem:[#allocation2] sm:$0xff]
  %v222 = vld [vmem:[#allocation3] sm:$0xff]
  %v223 = vld [vmem:[#allocation4] sm:$0xff]
  %v224 = vld [vmem:[#allocation5] sm:$0xff]
  %v225 = vld [vmem:[%s0] sm:$0xff]
  %v226 = vld [vmem:[%s0 + $0x8] sm:$0xff]
  %v227 = vld [vmem:[%s0 + $0x10] sm:$0xff]
  %v228 = vld [vmem:[%s0 + $0x18] sm:$0xff]
  %229 = vmatprep.subr.mxu0 %v29
  %230 = vmatpush1.msra.mxu0 %v28
  %231 = vmatprep.subr.mxu0 %v33
  %232 = vmatpush1.msra.mxu0 %v32
  %233 = vmatprep.subr.mxu0 %v37
  %234 = vmatpush1.msra.mxu0 %v36
  %235 = vmatprep.subr.mxu0 %v41
  %236 = vmatpush1.msra.mxu0 %v40
  %237 = vmatprep.subr.mxu0 %v45
  %238 = vmatpush1.msra.mxu0 %v44
  %239 = vmatprep.subr.mxu0 %v49
  %240 = vmatpush1.msra.mxu0 %v48
  %241 = vmatprep.subr.mxu0 %v53
  %242 = vmatpush1.msra.mxu0 %v52
  %243 = vmatprep.subr.mxu0 %v57
  %244 = vmatpush1.msra.mxu0 %v56
  %245 = vmatprep.subr.mxu0 %v61
  %246 = vmatpush1.msra.mxu0 %v60
  %247 = vmatprep.subr.mxu0 %v65
  %248 = vmatpush1.msra.mxu0 %v64
  %249 = vmatprep.subr.mxu0 %v69
  %250 = vmatpush1.msra.mxu0 %v68
  %251 = vmatprep.subr.mxu0 %v73
  %252 = vmatpush1.msra.mxu0 %v72
  %253 = vmatprep.subr.mxu0 %v77
  %254 = vmatpush1.msra.mxu0 %v76
  %255 = vmatprep.subr.mxu0 %v81
  %256 = vmatpush1.msra.mxu0 %v80
  %257 = vmatprep.subr.mxu0 %v85
  %258 = vmatpush1.msra.mxu0 %v84
  %259 = vmatprep.subr.mxu0 %v89
  %260 = vmatpush1.msra.mxu0 %v88
  %261 = vmatprep.subr.mxu0 0.0
  %262 = vmatpush1.msra.mxu0 0.0
  %263 = vmatprep.subr.mxu0 0.0
  %264 = vmatpush1.msra.mxu0 0.0
  %265 = vmatprep.subr.mxu0 0.0
  %266 = vmatpush1.msra.mxu0 0.0
  %267 = vmatprep.subr.mxu0 0.0
  %268 = vmatpush1.msra.mxu0 0.0
  %269 = vmatprep.subr.mxu0 0.0
  %270 = vmatpush1.msra.mxu0 0.0
  %271 = vmatprep.subr.mxu0 0.0
  %272 = vmatpush1.msra.mxu0 0.0
  %273 = vmatprep.subr.mxu0 0.0
  %274 = vmatpush1.msra.mxu0 0.0
  %275 = vmatprep.subr.mxu0 0.0
  %276 = vmatpush1.msra.mxu0 0.0
  %277 = vmatprep.subr.mxu0 0.0
  %278 = vmatpush1.msra.mxu0 0.0
  %279 = vmatprep.subr.mxu0 0.0
  %280 = vmatpush1.msra.mxu0 0.0
  %281 = vmatprep.subr.mxu0 0.0
  %282 = vmatpush1.msra.mxu0 0.0
  %283 = vmatprep.subr.mxu0 0.0
  %284 = vmatpush1.msra.mxu0 0.0
  %285 = vmatprep.subr.mxu0 0.0
  %286 = vmatpush1.msra.mxu0 0.0
  %287 = vmatprep.subr.mxu0 0.0
  %288 = vmatpush1.msra.mxu0 0.0
  %289 = vmatprep.subr.mxu0 0.0
  %290 = vmatpush1.msra.mxu0 0.0
  %291 = vmatprep.subr.mxu0 0.0
  %292 = vmatpush1.msra.mxu0 0.0
  %293 = vmatprep.mubr.f32.mxu0 0.0
  %294 = vmatmul.mubr.f32.gmra.mrb[0].mxu0 %v221
  %v295 = vpop.f32.mrb[0].mxu0
  %v296 = vadd.f32 0.0, %v295
  %v297 = vpop.f32.mrb[0].mxu0
  %v298 = vadd.f32 0.0, %v297
  %299 = vdwg.mxu0
  %300 = vmatprep.subr.mxu0 %v31
  %301 = vmatpush1.msra.mxu0 %v30
  %302 = vmatprep.subr.mxu0 %v35
  %303 = vmatpush1.msra.mxu0 %v34
  %304 = vmatprep.subr.mxu0 %v39
  %305 = vmatpush1.msra.mxu0 %v38
  %306 = vmatprep.subr.mxu0 %v43
  %307 = vmatpush1.msra.mxu0 %v42
  %308 = vmatprep.subr.mxu0 %v47
  %309 = vmatpush1.msra.mxu0 %v46
  %310 = vmatprep.subr.mxu0 %v51
  %311 = vmatpush1.msra.mxu0 %v50
  %312 = vmatprep.subr.mxu0 %v55
  %313 = vmatpush1.msra.mxu0 %v54
  %314 = vmatprep.subr.mxu0 %v59
  %315 = vmatpush1.msra.mxu0 %v58
  %316 = vmatprep.subr.mxu0 %v63
  %317 = vmatpush1.msra.mxu0 %v62
  %318 = vmatprep.subr.mxu0 %v67
  %319 = vmatpush1.msra.mxu0 %v66
  %320 = vmatprep.subr.mxu0 %v71
  %321 = vmatpush1.msra.mxu0 %v70
  %322 = vmatprep.subr.mxu0 %v75
  %323 = vmatpush1.msra.mxu0 %v74
  %324 = vmatprep.subr.mxu0 %v79
  %325 = vmatpush1.msra.mxu0 %v78
  %326 = vmatprep.subr.mxu0 %v83
  %327 = vmatpush1.msra.mxu0 %v82
  %328 = vmatprep.subr.mxu0 %v87
  %329 = vmatpush1.msra.mxu0 %v86
  %330 = vmatprep.subr.mxu0 %v91
  %331 = vmatpush1.msra.mxu0 %v90
  %332 = vmatprep.subr.mxu0 0.0
  %333 = vmatpush1.msra.mxu0 0.0
  %334 = vmatprep.subr.mxu0 0.0
  %335 = vmatpush1.msra.mxu0 0.0
  %336 = vmatprep.subr.mxu0 0.0
  %337 = vmatpush1.msra.mxu0 0.0
  %338 = vmatprep.subr.mxu0 0.0
  %339 = vmatpush1.msra.mxu0 0.0
  %340 = vmatprep.subr.mxu0 0.0
  %341 = vmatpush1.msra.mxu0 0.0
  %342 = vmatprep.subr.mxu0 0.0
  %343 = vmatpush1.msra.mxu0 0.0
  %344 = vmatprep.subr.mxu0 0.0
  %345 = vmatpush1.msra.mxu0 0.0
  %346 = vmatprep.subr.mxu0 0.0
  %347 = vmatpush1.msra.mxu0 0.0
  %348 = vmatprep.subr.mxu0 0.0
  %349 = vmatpush1.msra.mxu0 0.0
  %350 = vmatprep.subr.mxu0 0.0
  %351 = vmatpush1.msra.mxu0 0.0
  %352 = vmatprep.subr.mxu0 0.0
  %353 = vmatpush1.msra.mxu0 0.0
  %354 = vmatprep.subr.mxu0 0.0
  %355 = vmatpush1.msra.mxu0 0.0
  %356 = vmatprep.subr.mxu0 0.0
  %357 = vmatpush1.msra.mxu0 0.0
  %358 = vmatprep.subr.mxu0 0.0
  %359 = vmatpush1.msra.mxu0 0.0
  %360 = vmatprep.subr.mxu0 0.0
  %361 = vmatpush1.msra.mxu0 0.0
  %362 = vmatprep.subr.mxu0 0.0
  %363 = vmatpush1.msra.mxu0 0.0
  %364 = vmatprep.mubr.f32.mxu0 0.0
  %365 = vmatmul.mubr.f32.gmra.mrb[0].mxu0 %v221
  %v366 = vpop.f32.mrb[0].mxu0
  %v367 = vadd.f32 0.0, %v366
  %v368 = vpop.f32.mrb[0].mxu0
  %v369 = vadd.f32 0.0, %v368
  %370 = vdwg.mxu0
  %v371 = vadd.f32 %v225, %v296
  %v372 = vadd.f32 %v226, %v298
  %v373 = vadd.f32 %v227, %v367
  %v374 = vadd.f32 %v228, %v369
  %v375 = vxor.u32 %v371, 2147483648
  %v376 = vmul.f32 %v375, 1.442695
  %v377 = vpow.pop %v376
  %v378 = vadd.f32 %v377, 1.0
  %v379 = vrcp.pop %v378
  %v380 = vmul.f32 1.0, %v379
  %v381 = vxor.u32 %v372, 2147483648
  %v382 = vmul.f32 %v381, 1.442695
  %v383 = vpow.pop %v382
  %v384 = vadd.f32 %v383, 1.0
  %v385 = vrcp.pop %v384
  %v386 = vmul.f32 1.0, %v385
  %v387 = vtanh.pop %v373
  %v388 = vxor.u32 %v374, 2147483648
  %v389 = vmul.f32 %v388, 1.442695
  %v390 = vpow.pop %v389
  %v391 = vadd.f32 %v390, 1.0
  %v392 = vrcp.pop %v391
  %v393 = vmul.f32 1.0, %v392
  %v394 = vmul.f32 %v386, %v222
  %v395 = vmul.f32 %v380, %v387
  %v396 = vadd.f32 %v394, %v395
  %v397 = vtanh.pop %v396
  %v398 = vmul.f32 %v393, %v397
  %399 = vmatprep.subr.mxu0 %v157
  %400 = vmatpush1.msra.mxu0 %v156
  %401 = vmatprep.subr.mxu0 %v161
  %402 = vmatpush1.msra.mxu0 %v160
  %403 = vmatprep.subr.mxu0 %v165
  %404 = vmatpush1.msra.mxu0 %v164
  %405 = vmatprep.subr.mxu0 %v169
  %406 = vmatpush1.msra.mxu0 %v168
  %407 = vmatprep.subr.mxu0 %v173
  %408 = vmatpush1.msra.mxu0 %v172
  %409 = vmatprep.subr.mxu0 %v177
  %410 = vmatpush1.msra.mxu0 %v176
  %411 = vmatprep.subr.mxu0 %v181
  %412 = vmatpush1.msra.mxu0 %v180
  %413 = vmatprep.subr.mxu0 %v185
  %414 = vmatpush1.msra.mxu0 %v184
  %415 = vmatprep.subr.mxu0 %v189
  %416 = vmatpush1.msra.mxu0 %v188
  %417 = vmatprep.subr.mxu0 %v193
  %418 = vmatpush1.msra.mxu0 %v192
  %419 = vmatprep.subr.mxu0 %v197
  %420 = vmatpush1.msra.mxu0 %v196
  %421 = vmatprep.subr.mxu0 %v201
  %422 = vmatpush1.msra.mxu0 %v200
  %423 = vmatprep.subr.mxu0 %v205
  %424 = vmatpush1.msra.mxu0 %v204
  %425 = vmatprep.subr.mxu0 %v209
  %426 = vmatpush1.msra.mxu0 %v208
  %427 = vmatprep.subr.mxu0 %v213
  %428 = vmatpush1.msra.mxu0 %v212
  %429 = vmatprep.subr.mxu0 %v217
  %430 = vmatpush1.msra.mxu0 %v216
  %431 = vmatprep.subr.mxu0 0.0
  %432 = vmatpush1.msra.mxu0 0.0
  %433 = vmatprep.subr.mxu0 0.0
  %434 = vmatpush1.msra.mxu0 0.0
  %435 = vmatprep.subr.mxu0 0.0
  %436 = vmatpush1.msra.mxu0 0.0
  %437 = vmatprep.subr.mxu0 0.0
  %438 = vmatpush1.msra.mxu0 0.0
  %439 = vmatprep.subr.mxu0 0.0
  %440 = vmatpush1.msra.mxu0 0.0
  %441 = vmatprep.subr.mxu0 0.0
  %442 = vmatpush1.msra.mxu0 0.0
  %443 = vmatprep.subr.mxu0 0.0
  %444 = vmatpush1.msra.mxu0 0.0
  %445 = vmatprep.subr.mxu0 0.0
  %446 = vmatpush1.msra.mxu0 0.0
  %447 = vmatprep.subr.mxu0 0.0
  %448 = vmatpush1.msra.mxu0 0.0
  %449 = vmatprep.subr.mxu0 0.0
  %450 = vmatpush1.msra.mxu0 0.0
  %451 = vmatprep.subr.mxu0 0.0
  %452 = vmatpush1.msra.mxu0 0.0
  %453 = vmatprep.subr.mxu0 0.0
  %454 = vmatpush1.msra.mxu0 0.0
  %455 = vmatprep.subr.mxu0 0.0
  %456 = vmatpush1.msra.mxu0 0.0
  %457 = vmatprep.subr.mxu0 0.0
  %458 = vmatpush1.msra.mxu0 0.0
  %459 = vmatprep.subr.mxu0 0.0
  %460 = vmatpush1.msra.mxu0 0.0
  %461 = vmatprep.subr.mxu0 0.0
  %462 = vmatpush1.msra.mxu0 0.0
  %463 = vmatprep.mubr.f32.mxu0 0.0
  %464 = vmatmul.mubr.f32.gmra.mrb[0].mxu0 %v223
  %v465 = vpop.f32.mrb[0].mxu0
  %v466 = vadd.f32 0.0, %v465
  %v467 = vpop.f32.mrb[0].mxu0
  %v468 = vadd.f32 0.0, %v467
  %469 = vdwg.mxu0
  %470 = vmatprep.subr.mxu0 %v159
  %471 = vmatpush1.msra.mxu0 %v158
  %472 = vmatprep.subr.mxu0 %v163
  %473 = vmatpush1.msra.mxu0 %v162
  %474 = vmatprep.subr.mxu0 %v167
  %475 = vmatpush1.msra.mxu0 %v166
  %476 = vmatprep.subr.mxu0 %v171
  %477 = vmatpush1.msra.mxu0 %v170
  %478 = vmatprep.subr.mxu0 %v175
  %479 = vmatpush1.msra.mxu0 %v174
  %480 = vmatprep.subr.mxu0 %v179
  %481 = vmatpush1.msra.mxu0 %v178
  %482 = vmatprep.subr.mxu0 %v183
  %483 = vmatpush1.msra.mxu0 %v182
  %484 = vmatprep.subr.mxu0 %v187
  %485 = vmatpush1.msra.mxu0 %v186
  %486 = vmatprep.subr.mxu0 %v191
  %487 = vmatpush1.msra.mxu0 %v190
  %488 = vmatprep.subr.mxu0 %v195
  %489 = vmatpush1.msra.mxu0 %v194
  %490 = vmatprep.subr.mxu0 %v199
  %491 = vmatpush1.msra.mxu0 %v198
  %492 = vmatprep.subr.mxu0 %v203
  %493 = vmatpush1.msra.mxu0 %v202
  %494 = vmatprep.subr.mxu0 %v207
  %495 = vmatpush1.msra.mxu0 %v206
  %496 = vmatprep.subr.mxu0 %v211
  %497 = vmatpush1.msra.mxu0 %v210
  %498 = vmatprep.subr.mxu0 %v215
  %499 = vmatpush1.msra.mxu0 %v214
  %500 = vmatprep.subr.mxu0 %v219
  %501 = vmatpush1.msra.mxu0 %v218
  %502 = vmatprep.subr.mxu0 0.0
  %503 = vmatpush1.msra.mxu0 0.0
  %504 = vmatprep.subr.mxu0 0.0
  %505 = vmatpush1.msra.mxu0 0.0
  %506 = vmatprep.subr.mxu0 0.0
  %507 = vmatpush1.msra.mxu0 0.0
  %508 = vmatprep.subr.mxu0 0.0
  %509 = vmatpush1.msra.mxu0 0.0
  %510 = vmatprep.subr.mxu0 0.0
  %511 = vmatpush1.msra.mxu0 0.0
  %512 = vmatprep.subr.mxu0 0.0
  %513 = vmatpush1.msra.mxu0 0.0
  %514 = vmatprep.subr.mxu0 0.0
  %515 = vmatpush1.msra.mxu0 0.0
  %516 = vmatprep.subr.mxu0 0.0
  %517 = vmatpush1.msra.mxu0 0.0
  %518 = vmatprep.subr.mxu0 0.0
  %519 = vmatpush1.msra.mxu0 0.0
  %520 = vmatprep.subr.mxu0 0.0
  %521 = vmatpush1.msra.mxu0 0.0
  %522 = vmatprep.subr.mxu0 0.0
  %523 = vmatpush1.msra.mxu0 0.0
  %524 = vmatprep.subr.mxu0 0.0
  %525 = vmatpush1.msra.mxu0 0.0
  %526 = vmatprep.subr.mxu0 0.0
  %527 = vmatpush1.msra.mxu0 0.0
  %528 = vmatprep.subr.mxu0 0.0
  %529 = vmatpush1.msra.mxu0 0.0
  %530 = vmatprep.subr.mxu0 0.0
  %531 = vmatpush1.msra.mxu0 0.0
  %532 = vmatprep.subr.mxu0 0.0
  %533 = vmatpush1.msra.mxu0 0.0
  %534 = vmatprep.mubr.f32.mxu0 0.0
  %535 = vmatmul.mubr.f32.gmra.mrb[0].mxu0 %v223
  %v536 = vpop.f32.mrb[0].mxu0
  %v537 = vadd.f32 0.0, %v536
  %v538 = vpop.f32.mrb[0].mxu0
  %v539 = vadd.f32 0.0, %v538
  %540 = vdwg.mxu0
  %541 = vmatprep.subr.mxu0 %v93
  %542 = vmatpush1.msra.mxu0 %v92
  %543 = vmatprep.subr.mxu0 %v97
  %544 = vmatpush1.msra.mxu0 %v96
  %545 = vmatprep.subr.mxu0 %v101
  %546 = vmatpush1.msra.mxu0 %v100
  %547 = vmatprep.subr.mxu0 %v105
  %548 = vmatpush1.msra.mxu0 %v104
  %549 = vmatprep.subr.mxu0 %v109
  %550 = vmatpush1.msra.mxu0 %v108
  %551 = vmatprep.subr.mxu0 %v113
  %552 = vmatpush1.msra.mxu0 %v112
  %553 = vmatprep.subr.mxu0 %v117
  %554 = vmatpush1.msra.mxu0 %v116
  %555 = vmatprep.subr.mxu0 %v121
  %556 = vmatpush1.msra.mxu0 %v120
  %557 = vmatprep.subr.mxu0 %v125
  %558 = vmatpush1.msra.mxu0 %v124
  %559 = vmatprep.subr.mxu0 %v129
  %560 = vmatpush1.msra.mxu0 %v128
  %561 = vmatprep.subr.mxu0 %v133
  %562 = vmatpush1.msra.mxu0 %v132
  %563 = vmatprep.subr.mxu0 %v137
  %564 = vmatpush1.msra.mxu0 %v136
  %565 = vmatprep.subr.mxu0 %v141
  %566 = vmatpush1.msra.mxu0 %v140
  %567 = vmatprep.subr.mxu0 %v145
  %568 = vmatpush1.msra.mxu0 %v144
  %569 = vmatprep.subr.mxu0 %v149
  %570 = vmatpush1.msra.mxu0 %v148
  %571 = vmatprep.subr.mxu0 %v153
  %572 = vmatpush1.msra.mxu0 %v152
  %573 = vmatprep.subr.mxu0 0.0
  %574 = vmatpush1.msra.mxu0 0.0
  %575 = vmatprep.subr.mxu0 0.0
  %576 = vmatpush1.msra.mxu0 0.0
  %577 = vmatprep.subr.mxu0 0.0
  %578 = vmatpush1.msra.mxu0 0.0
  %579 = vmatprep.subr.mxu0 0.0
  %580 = vmatpush1.msra.mxu0 0.0
  %581 = vmatprep.subr.mxu0 0.0
  %582 = vmatpush1.msra.mxu0 0.0
  %583 = vmatprep.subr.mxu0 0.0
  %584 = vmatpush1.msra.mxu0 0.0
  %585 = vmatprep.subr.mxu0 0.0
  %586 = vmatpush1.msra.mxu0 0.0
  %587 = vmatprep.subr.mxu0 0.0
  %588 = vmatpush1.msra.mxu0 0.0
  %589 = vmatprep.subr.mxu0 0.0
  %590 = vmatpush1.msra.mxu0 0.0
  %591 = vmatprep.subr.mxu0 0.0
  %592 = vmatpush1.msra.mxu0 0.0
  %593 = vmatprep.subr.mxu0 0.0
  %594 = vmatpush1.msra.mxu0 0.0
  %595 = vmatprep.subr.mxu0 0.0
  %596 = vmatpush1.msra.mxu0 0.0
  %597 = vmatprep.subr.mxu0 0.0
  %598 = vmatpush1.msra.mxu0 0.0
  %599 = vmatprep.subr.mxu0 0.0
  %600 = vmatpush1.msra.mxu0 0.0
  %601 = vmatprep.subr.mxu0 0.0
  %602 = vmatpush1.msra.mxu0 0.0
  %603 = vmatprep.subr.mxu0 0.0
  %604 = vmatpush1.msra.mxu0 0.0
  %605 = vmatprep.mubr.f32.mxu0 0.0
  %606 = vmatmul.mubr.f32.gmra.mrb[0].mxu0 %v398
  %v607 = vpop.f32.mrb[0].mxu0
  %v608 = vadd.f32 %v466, %v607
  %v609 = vpop.f32.mrb[0].mxu0
  %v610 = vadd.f32 %v468, %v609
  %611 = vdwg.mxu0
  %612 = vmatprep.subr.mxu0 %v95
  %613 = vmatpush1.msra.mxu0 %v94
  %614 = vmatprep.subr.mxu0 %v99
  %615 = vmatpush1.msra.mxu0 %v98
  %616 = vmatprep.subr.mxu0 %v103
  %617 = vmatpush1.msra.mxu0 %v102
  %618 = vmatprep.subr.mxu0 %v107
  %619 = vmatpush1.msra.mxu0 %v106
  %620 = vmatprep.subr.mxu0 %v111
  %621 = vmatpush1.msra.mxu0 %v110
  %622 = vmatprep.subr.mxu0 %v115
  %623 = vmatpush1.msra.mxu0 %v114
  %624 = vmatprep.subr.mxu0 %v119
  %625 = vmatpush1.msra.mxu0 %v118
  %626 = vmatprep.subr.mxu0 %v123
  %627 = vmatpush1.msra.mxu0 %v122
  %628 = vmatprep.subr.mxu0 %v127
  %629 = vmatpush1.msra.mxu0 %v126
  %630 = vmatprep.subr.mxu0 %v131
  %631 = vmatpush1.msra.mxu0 %v130
  %632 = vmatprep.subr.mxu0 %v135
  %633 = vmatpush1.msra.mxu0 %v134
  %634 = vmatprep.subr.mxu0 %v139
  %635 = vmatpush1.msra.mxu0 %v138
  %636 = vmatprep.subr.mxu0 %v143
  %637 = vmatpush1.msra.mxu0 %v142
  %638 = vmatprep.subr.mxu0 %v147
  %639 = vmatpush1.msra.mxu0 %v146
  %640 = vmatprep.subr.mxu0 %v151
  %641 = vmatpush1.msra.mxu0 %v150
  %642 = vmatprep.subr.mxu0 %v155
  %643 = vmatpush1.msra.mxu0 %v154
  %644 = vmatprep.subr.mxu0 0.0
  %645 = vmatpush1.msra.mxu0 0.0
  %646 = vmatprep.subr.mxu0 0.0
  %647 = vmatpush1.msra.mxu0 0.0
  %648 = vmatprep.subr.mxu0 0.0
  %649 = vmatpush1.msra.mxu0 0.0
  %650 = vmatprep.subr.mxu0 0.0
  %651 = vmatpush1.msra.mxu0 0.0
  %652 = vmatprep.subr.mxu0 0.0
  %653 = vmatpush1.msra.mxu0 0.0
  %654 = vmatprep.subr.mxu0 0.0
  %655 = vmatpush1.msra.mxu0 0.0
  %656 = vmatprep.subr.mxu0 0.0
  %657 = vmatpush1.msra.mxu0 0.0
  %658 = vmatprep.subr.mxu0 0.0
  %659 = vmatpush1.msra.mxu0 0.0
  %660 = vmatprep.subr.mxu0 0.0
  %661 = vmatpush1.msra.mxu0 0.0
  %662 = vmatprep.subr.mxu0 0.0
  %663 = vmatpush1.msra.mxu0 0.0
  %664 = vmatprep.subr.mxu0 0.0
  %665 = vmatpush1.msra.mxu0 0.0
  %666 = vmatprep.subr.mxu0 0.0
  %667 = vmatpush1.msra.mxu0 0.0
  %668 = vmatprep.subr.mxu0 0.0
  %669 = vmatpush1.msra.mxu0 0.0
  %670 = vmatprep.subr.mxu0 0.0
  %671 = vmatpush1.msra.mxu0 0.0
  %672 = vmatprep.subr.mxu0 0.0
  %673 = vmatpush1.msra.mxu0 0.0
  %674 = vmatprep.subr.mxu0 0.0
  %675 = vmatpush1.msra.mxu0 0.0
  %676 = vmatprep.mubr.f32.mxu0 0.0
  %677 = vmatmul.mubr.f32.gmra.mrb[0].mxu0 %v398
  %v678 = vpop.f32.mrb[0].mxu0
  %v679 = vadd.f32 %v537, %v678
  %v680 = vpop.f32.mrb[0].mxu0
  %v681 = vadd.f32 %v539, %v680
  %682 = vdwg.mxu0
  %v684 = vlaneseq
  %v685 = vshrl.u32 %v684, 7
  %v686 = vsub.s32 0, %v685
  %v687 = vrot.slane %v220, %v686
  %v688 = vlaneseq
  %v689 = vshrl.u32 %v688, 7
  %v690 = vsub.s32 1, %v689
  %v691 = vrot.slane %v220, %v690
  %v692 = vlaneseq
  %v693 = vshrl.u32 %v692, 7
  %v694 = vsub.s32 2, %v693
  %v695 = vrot.slane %v220, %v694
  %v696 = vlaneseq
  %v697 = vshrl.u32 %v696, 7
  %v698 = vsub.s32 3, %v697
  %v699 = vrot.slane %v220, %v698
  %v704 = vadd.f32 %v608, %v687
  %v705 = vadd.f32 %v610, %v691
  %v706 = vadd.f32 %v679, %v695
  %v707 = vadd.f32 %v681, %v699
  %v708 = vxor.u32 %v704, 2147483648
  %v709 = vmul.f32 %v708, 1.442695
  %v710 = vpow.pop %v709
  %v711 = vadd.f32 %v710, 1.0
  %v712 = vrcp.pop %v711
  %v713 = vmul.f32 1.0, %v712
  %v714 = vxor.u32 %v705, 2147483648
  %v715 = vmul.f32 %v714, 1.442695
  %v716 = vpow.pop %v715
  %v717 = vadd.f32 %v716, 1.0
  %v718 = vrcp.pop %v717
  %v719 = vmul.f32 1.0, %v718
  %v720 = vtanh.pop %v706
  %v721 = vxor.u32 %v707, 2147483648
  %v722 = vmul.f32 %v721, 1.442695
  %v723 = vpow.pop %v722
  %v724 = vadd.f32 %v723, 1.0
  %v725 = vrcp.pop %v724
  %v726 = vmul.f32 1.0, %v725
  %v727 = vmul.f32 %v719, %v224
  %v728 = vmul.f32 %v713, %v720
  %v729 = vadd.f32 %v727, %v728
  %v730 = vtanh.pop %v729
  %v731 = vmul.f32 %v726, %v730
  %732 = vst [vmem:[%s5] sm:$0xff] %v731
  %s733 = scalar_lea.vmem %s0, 32
  %v734 = vld [vmem:[%s733] sm:$0xff]
  %v735 = vld [vmem:[%s733 + $0x8] sm:$0xff]
  %v736 = vld [vmem:[%s733 + $0x10] sm:$0xff]
  %v737 = vld [vmem:[%s733 + $0x18] sm:$0xff]
  %738 = vmatprep.subr.mxu0 %v29
  %739 = vmatpush1.msra.mxu0 %v28
  %740 = vmatprep.subr.mxu0 %v33
  %741 = vmatpush1.msra.mxu0 %v32
  %742 = vmatprep.subr.mxu0 %v37
  %743 = vmatpush1.msra.mxu0 %v36
  %744 = vmatprep.subr.mxu0 %v41
  %745 = vmatpush1.msra.mxu0 %v40
  %746 = vmatprep.subr.mxu0 %v45
  %747 = vmatpush1.msra.mxu0 %v44
  %748 = vmatprep.subr.mxu0 %v49
  %749 = vmatpush1.msra.mxu0 %v48
  %750 = vmatprep.subr.mxu0 %v53
  %751 = vmatpush1.msra.mxu0 %v52
  %752 = vmatprep.subr.mxu0 %v57
  %753 = vmatpush1.msra.mxu0 %v56
  %754 = vmatprep.subr.mxu0 %v61
  %755 = vmatpush1.msra.mxu0 %v60
  %756 = vmatprep.subr.mxu0 %v65
  %757 = vmatpush1.msra.mxu0 %v64
  %758 = vmatprep.subr.mxu0 %v69
  %759 = vmatpush1.msra.mxu0 %v68
  %760 = vmatprep.subr.mxu0 %v73
  %761 = vmatpush1.msra.mxu0 %v72
  %762 = vmatprep.subr.mxu0 %v77
  %763 = vmatpush1.msra.mxu0 %v76
  %764 = vmatprep.subr.mxu0 %v81
  %765 = vmatpush1.msra.mxu0 %v80
  %766 = vmatprep.subr.mxu0 %v85
  %767 = vmatpush1.msra.mxu0 %v84
  %768 = vmatprep.subr.mxu0 %v89
  %769 = vmatpush1.msra.mxu0 %v88
  %770 = vmatprep.subr.mxu0 0.0
  %771 = vmatpush1.msra.mxu0 0.0
  %772 = vmatprep.subr.mxu0 0.0
  %773 = vmatpush1.msra.mxu0 0.0
  %774 = vmatprep.subr.mxu0 0.0
  %775 = vmatpush1.msra.mxu0 0.0
  %776 = vmatprep.subr.mxu0 0.0
  %777 = vmatpush1.msra.mxu0 0.0
  %778 = vmatprep.subr.mxu0 0.0
  %779 = vmatpush1.msra.mxu0 0.0
  %780 = vmatprep.subr.mxu0 0.0
  %781 = vmatpush1.msra.mxu0 0.0
  %782 = vmatprep.subr.mxu0 0.0
  %783 = vmatpush1.msra.mxu0 0.0
  %784 = vmatprep.subr.mxu0 0.0
  %785 = vmatpush1.msra.mxu0 0.0
  %786 = vmatprep.subr.mxu0 0.0
  %787 = vmatpush1.msra.mxu0 0.0
  %788 = vmatprep.subr.mxu0 0.0
  %789 = vmatpush1.msra.mxu0 0.0
  %790 = vmatprep.subr.mxu0 0.0
  %791 = vmatpush1.msra.mxu0 0.0
  %792 = vmatprep.subr.mxu0 0.0
  %793 = vmatpush1.msra.mxu0 0.0
  %794 = vmatprep.subr.mxu0 0.0
  %795 = vmatpush1.msra.mxu0 0.0
  %796 = vmatprep.subr.mxu0 0.0
  %797 = vmatpush1.msra.mxu0 0.0
  %798 = vmatprep.subr.mxu0 0.0
  %799 = vmatpush1.msra.mxu0 0.0
  %800 = vmatprep.subr.mxu0 0.0
  %801 = vmatpush1.msra.mxu0 0.0
  %802 = vmatprep.mubr.f32.mxu0 0.0
  %803 = vmatmul.mubr.f32.gmra.mrb[0].mxu0 %v398
  %v804 = vpop.f32.mrb[0].mxu0
  %v805 = vadd.f32 0.0, %v804
  %v806 = vpop.f32.mrb[0].mxu0
  %v807 = vadd.f32 0.0, %v806
  %808 = vdwg.mxu0
  %809 = vmatprep.subr.mxu0 %v31
  %810 = vmatpush1.msra.mxu0 %v30
  %811 = vmatprep.subr.mxu0 %v35
  %812 = vmatpush1.msra.mxu0 %v34
  %813 = vmatprep.subr.mxu0 %v39
  %814 = vmatpush1.msra.mxu0 %v38
  %815 = vmatprep.subr.mxu0 %v43
  %816 = vmatpush1.msra.mxu0 %v42
  %817 = vmatprep.subr.mxu0 %v47
  %818 = vmatpush1.msra.mxu0 %v46
  %819 = vmatprep.subr.mxu0 %v51
  %820 = vmatpush1.msra.mxu0 %v50
  %821 = vmatprep.subr.mxu0 %v55
  %822 = vmatpush1.msra.mxu0 %v54
  %823 = vmatprep.subr.mxu0 %v59
  %824 = vmatpush1.msra.mxu0 %v58
  %825 = vmatprep.subr.mxu0 %v63
  %826 = vmatpush1.msra.mxu0 %v62
  %827 = vmatprep.subr.mxu0 %v67
  %828 = vmatpush1.msra.mxu0 %v66
  %829 = vmatprep.subr.mxu0 %v71
  %830 = vmatpush1.msra.mxu0 %v70
  %831 = vmatprep.subr.mxu0 %v75
  %832 = vmatpush1.msra.mxu0 %v74
  %833 = vmatprep.subr.mxu0 %v79
  %834 = vmatpush1.msra.mxu0 %v78
  %835 = vmatprep.subr.mxu0 %v83
  %836 = vmatpush1.msra.mxu0 %v82
  %837 = vmatprep.subr.mxu0 %v87
  %838 = vmatpush1.msra.mxu0 %v86
  %839 = vmatprep.subr.mxu0 %v91
  %840 = vmatpush1.msra.mxu0 %v90
  %841 = vmatprep.subr.mxu0 0.0
  %842 = vmatpush1.msra.mxu0 0.0
  %843 = vmatprep.subr.mxu0 0.0
  %844 = vmatpush1.msra.mxu0 0.0
  %845 = vmatprep.subr.mxu0 0.0
  %846 = vmatpush1.msra.mxu0 0.0
  %847 = vmatprep.subr.mxu0 0.0
  %848 = vmatpush1.msra.mxu0 0.0
  %849 = vmatprep.subr.mxu0 0.0
  %850 = vmatpush1.msra.mxu0 0.0
  %851 = vmatprep.subr.mxu0 0.0
  %852 = vmatpush1.msra.mxu0 0.0
  %853 = vmatprep.subr.mxu0 0.0
  %854 = vmatpush1.msra.mxu0 0.0
  %855 = vmatprep.subr.mxu0 0.0
  %856 = vmatpush1.msra.mxu0 0.0
  %857 = vmatprep.subr.mxu0 0.0
  %858 = vmatpush1.msra.mxu0 0.0
  %859 = vmatprep.subr.mxu0 0.0
  %860 = vmatpush1.msra.mxu0 0.0
  %861 = vmatprep.subr.mxu0 0.0
  %862 = vmatpush1.msra.mxu0 0.0
  %863 = vmatprep.subr.mxu0 0.0
  %864 = vmatpush1.msra.mxu0 0.0
  %865 = vmatprep.subr.mxu0 0.0
  %866 = vmatpush1.msra.mxu0 0.0
  %867 = vmatprep.subr.mxu0 0.0
  %868 = vmatpush1.msra.mxu0 0.0
  %869 = vmatprep.subr.mxu0 0.0
  %870 = vmatpush1.msra.mxu0 0.0
  %871 = vmatprep.subr.mxu0 0.0
  %872 = vmatpush1.msra.mxu0 0.0
  %873 = vmatprep.mubr.f32.mxu0 0.0
  %874 = vmatmul.mubr.f32.gmra.mrb[0].mxu0 %v398
  %v875 = vpop.f32.mrb[0].mxu0
  %v876 = vadd.f32 0.0, %v875
  %v877 = vpop.f32.mrb[0].mxu0
  %v878 = vadd.f32 0.0, %v877
  %879 = vdwg.mxu0
  %v880 = vadd.f32 %v734, %v805
  %v881 = vadd.f32 %v735, %v807
  %v882 = vadd.f32 %v736, %v876
  %v883 = vadd.f32 %v737, %v878
  %v884 = vxor.u32 %v880, 2147483648
  %v885 = vmul.f32 %v884, 1.442695
  %v886 = vpow.pop %v885
  %v887 = vadd.f32 %v886, 1.0
  %v888 = vrcp.pop %v887
  %v889 = vmul.f32 1.0, %v888
  %v890 = vxor.u32 %v881, 2147483648
  %v891 = vmul.f32 %v890, 1.442695
  %v892 = vpow.pop %v891
  %v893 = vadd.f32 %v892, 1.0
  %v894 = vrcp.pop %v893
  %v895 = vmul.f32 1.0, %v894
  %v896 = vtanh.pop %v882
  %v897 = vxor.u32 %v883, 2147483648
  %v898 = vmul.f32 %v897, 1.442695
  %v899 = vpow.pop %v898
  %v900 = vadd.f32 %v899, 1.0
  %v901 = vrcp.pop %v900
  %v902 = vmul.f32 1.0, %v901
  %v903 = vmul.f32 %v895, %v396
  %v904 = vmul.f32 %v889, %v896
  %v905 = vadd.f32 %v903, %v904
  %v906 = vtanh.pop %v905
  %v907 = vmul.f32 %v902, %v906
  %908 = vmatprep.subr.mxu0 %v157
  %909 = vmatpush1.msra.mxu0 %v156
  %910 = vmatprep.subr.mxu0 %v161
  %911 = vmatpush1.msra.mxu0 %v160
  %912 = vmatprep.subr.mxu0 %v165
  %913 = vmatpush1.msra.mxu0 %v164
  %914 = vmatprep.subr.mxu0 %v169
  %915 = vmatpush1.msra.mxu0 %v168
  %916 = vmatprep.subr.mxu0 %v173
  %917 = vmatpush1.msra.mxu0 %v172
  %918 = vmatprep.subr.mxu0 %v177
  %919 = vmatpush1.msra.mxu0 %v176
  %920 = vmatprep.subr.mxu0 %v181
  %921 = vmatpush1.msra.mxu0 %v180
  %922 = vmatprep.subr.mxu0 %v185
  %923 = vmatpush1.msra.mxu0 %v184
  %924 = vmatprep.subr.mxu0 %v189
  %925 = vmatpush1.msra.mxu0 %v188
  %926 = vmatprep.subr.mxu0 %v193
  %927 = vmatpush1.msra.mxu0 %v192
  %928 = vmatprep.subr.mxu0 %v197
  %929 = vmatpush1.msra.mxu0 %v196
  %930 = vmatprep.subr.mxu0 %v201
  %931 = vmatpush1.msra.mxu0 %v200
  %932 = vmatprep.subr.mxu0 %v205
  %933 = vmatpush1.msra.mxu0 %v204
  %934 = vmatprep.subr.mxu0 %v209
  %935 = vmatpush1.msra.mxu0 %v208
  %936 = vmatprep.subr.mxu0 %v213
  %937 = vmatpush1.msra.mxu0 %v212
  %938 = vmatprep.subr.mxu0 %v217
  %939 = vmatpush1.msra.mxu0 %v216
  %940 = vmatprep.subr.mxu0 0.0
  %941 = vmatpush1.msra.mxu0 0.0
  %942 = vmatprep.subr.mxu0 0.0
  %943 = vmatpush1.msra.mxu0 0.0
  %944 = vmatprep.subr.mxu0 0.0
  %945 = vmatpush1.msra.mxu0 0.0
  %946 = vmatprep.subr.mxu0 0.0
  %947 = vmatpush1.msra.mxu0 0.0
  %948 = vmatprep.subr.mxu0 0.0
  %949 = vmatpush1.msra.mxu0 0.0
  %950 = vmatprep.subr.mxu0 0.0
  %951 = vmatpush1.msra.mxu0 0.0
  %952 = vmatprep.subr.mxu0 0.0
  %953 = vmatpush1.msra.mxu0 0.0
  %954 = vmatprep.subr.mxu0 0.0
  %955 = vmatpush1.msra.mxu0 0.0
  %956 = vmatprep.subr.mxu0 0.0
  %957 = vmatpush1.msra.mxu0 0.0
  %958 = vmatprep.subr.mxu0 0.0
  %959 = vmatpush1.msra.mxu0 0.0
  %960 = vmatprep.subr.mxu0 0.0
  %961 = vmatpush1.msra.mxu0 0.0
  %962 = vmatprep.subr.mxu0 0.0
  %963 = vmatpush1.msra.mxu0 0.0
  %964 = vmatprep.subr.mxu0 0.0
  %965 = vmatpush1.msra.mxu0 0.0
  %966 = vmatprep.subr.mxu0 0.0
  %967 = vmatpush1.msra.mxu0 0.0
  %968 = vmatprep.subr.mxu0 0.0
  %969 = vmatpush1.msra.mxu0 0.0
  %970 = vmatprep.subr.mxu0 0.0
  %971 = vmatpush1.msra.mxu0 0.0
  %972 = vmatprep.mubr.f32.mxu0 0.0
  %973 = vmatmul.mubr.f32.gmra.mrb[0].mxu0 %v731
  %v974 = vpop.f32.mrb[0].mxu0
  %v975 = vadd.f32 0.0, %v974
  %v976 = vpop.f32.mrb[0].mxu0
  %v977 = vadd.f32 0.0, %v976
  %978 = vdwg.mxu0
  %979 = vmatprep.subr.mxu0 %v159
  %980 = vmatpush1.msra.mxu0 %v158
  %981 = vmatprep.subr.mxu0 %v163
  %982 = vmatpush1.msra.mxu0 %v162
  %983 = vmatprep.subr.mxu0 %v167
  %984 = vmatpush1.msra.mxu0 %v166
  %985 = vmatprep.subr.mxu0 %v171
  %986 = vmatpush1.msra.mxu0 %v170
  %987 = vmatprep.subr.mxu0 %v175
  %988 = vmatpush1.msra.mxu0 %v174
  %989 = vmatprep.subr.mxu0 %v179
  %990 = vmatpush1.msra.mxu0 %v178
  %991 = vmatprep.subr.mxu0 %v183
  %992 = vmatpush1.msra.mxu0 %v182
  %993 = vmatprep.subr.mxu0 %v187
  %994 = vmatpush1.msra.mxu0 %v186
  %995 = vmatprep.subr.mxu0 %v191
  %996 = vmatpush1.msra.mxu0 %v190
  %997 = vmatprep.subr.mxu0 %v195
  %998 = vmatpush1.msra.mxu0 %v194
  %999 = vmatprep.subr.mxu0 %v199
  %1000 = vmatpush1.msra.mxu0 %v198
  %1001 = vmatprep.subr.mxu0 %v203
  %1002 = vmatpush1.msra.mxu0 %v202
  %1003 = vmatprep.subr.mxu0 %v207
  %1004 = vmatpush1.msra.mxu0 %v206
  %1005 = vmatprep.subr.mxu0 %v211
  %1006 = vmatpush1.msra.mxu0 %v210
  %1007 = vmatprep.subr.mxu0 %v215
  %1008 = vmatpush1.msra.mxu0 %v214
  %1009 = vmatprep.subr.mxu0 %v219
  %1010 = vmatpush1.msra.mxu0 %v218
  %1011 = vmatprep.subr.mxu0 0.0
  %1012 = vmatpush1.msra.mxu0 0.0
  %1013 = vmatprep.subr.mxu0 0.0
  %1014 = vmatpush1.msra.mxu0 0.0
  %1015 = vmatprep.subr.mxu0 0.0
  %1016 = vmatpush1.msra.mxu0 0.0
  %1017 = vmatprep.subr.mxu0 0.0
  %1018 = vmatpush1.msra.mxu0 0.0
  %1019 = vmatprep.subr.mxu0 0.0
  %1020 = vmatpush1.msra.mxu0 0.0
  %1021 = vmatprep.subr.mxu0 0.0
  %1022 = vmatpush1.msra.mxu0 0.0
  %1023 = vmatprep.subr.mxu0 0.0
  %1024 = vmatpush1.msra.mxu0 0.0
  %1025 = vmatprep.subr.mxu0 0.0
  %1026 = vmatpush1.msra.mxu0 0.0
  %1027 = vmatprep.subr.mxu0 0.0
  %1028 = vmatpush1.msra.mxu0 0.0
  %1029 = vmatprep.subr.mxu0 0.0
  %1030 = vmatpush1.msra.mxu0 0.0
  %1031 = vmatprep.subr.mxu0 0.0
  %1032 = vmatpush1.msra.mxu0 0.0
  %1033 = vmatprep.subr.mxu0 0.0
  %1034 = vmatpush1.msra.mxu0 0.0
  %1035 = vmatprep.subr.mxu0 0.0
  %1036 = vmatpush1.msra.mxu0 0.0
  %1037 = vmatprep.subr.mxu0 0.0
  %1038 = vmatpush1.msra.mxu0 0.0
  %1039 = vmatprep.subr.mxu0 0.0
  %1040 = vmatpush1.msra.mxu0 0.0
  %1041 = vmatprep.subr.mxu0 0.0
  %1042 = vmatpush1.msra.mxu0 0.0
  %1043 = vmatprep.mubr.f32.mxu0 0.0
  %1044 = vmatmul.mubr.f32.gmra.mrb[0].mxu0 %v731
  %v1045 = vpop.f32.mrb[0].mxu0
  %v1046 = vadd.f32 0.0, %v1045
  %v1047 = vpop.f32.mrb[0].mxu0
  %v1048 = vadd.f32 0.0, %v1047
  %1049 = vdwg.mxu0
  %1050 = vmatprep.subr.mxu0 %v93
  %1051 = vmatpush1.msra.mxu0 %v92
  %1052 = vmatprep.subr.mxu0 %v97
  %1053 = vmatpush1.msra.mxu0 %v96
  %1054 = vmatprep.subr.mxu0 %v101
  %1055 = vmatpush1.msra.mxu0 %v100
  %1056 = vmatprep.subr.mxu0 %v105
  %1057 = vmatpush1.msra.mxu0 %v104
  %1058 = vmatprep.subr.mxu0 %v109
  %1059 = vmatpush1.msra.mxu0 %v108
  %1060 = vmatprep.subr.mxu0 %v113
  %1061 = vmatpush1.msra.mxu0 %v112
  %1062 = vmatprep.subr.mxu0 %v117
  %1063 = vmatpush1.msra.mxu0 %v116
  %1064 = vmatprep.subr.mxu0 %v121
  %1065 = vmatpush1.msra.mxu0 %v120
  %1066 = vmatprep.subr.mxu0 %v125
  %1067 = vmatpush1.msra.mxu0 %v124
  %1068 = vmatprep.subr.mxu0 %v129
  %1069 = vmatpush1.msra.mxu0 %v128
  %1070 = vmatprep.subr.mxu0 %v133
  %1071 = vmatpush1.msra.mxu0 %v132
  %1072 = vmatprep.subr.mxu0 %v137
  %1073 = vmatpush1.msra.mxu0 %v136
  %1074 = vmatprep.subr.mxu0 %v141
  %1075 = vmatpush1.msra.mxu0 %v140
  %1076 = vmatprep.subr.mxu0 %v145
  %1077 = vmatpush1.msra.mxu0 %v144
  %1078 = vmatprep.subr.mxu0 %v149
  %1079 = vmatpush1.msra.mxu0 %v148
  %1080 = vmatprep.subr.mxu0 %v153
  %1081 = vmatpush1.msra.mxu0 %v152
  %1082 = vmatprep.subr.mxu0 0.0
  %1083 = vmatpush1.msra.mxu0 0.0
  %1084 = vmatprep.subr.mxu0 0.0
  %1085 = vmatpush1.msra.mxu0 0.0
  %1086 = vmatprep.subr.mxu0 0.0
  %1087 = vmatpush1.msra.mxu0 0.0
  %1088 = vmatprep.subr.mxu0 0.0
  %1089 = vmatpush1.msra.mxu0 0.0
  %1090 = vmatprep.subr.mxu0 0.0
  %1091 = vmatpush1.msra.mxu0 0.0
  %1092 = vmatprep.subr.mxu0 0.0
  %1093 = vmatpush1.msra.mxu0 0.0
  %1094 = vmatprep.subr.mxu0 0.0
  %1095 = vmatpush1.msra.mxu0 0.0
  %1096 = vmatprep.subr.mxu0 0.0
  %1097 = vmatpush1.msra.mxu0 0.0
  %1098 = vmatprep.subr.mxu0 0.0
  %1099 = vmatpush1.msra.mxu0 0.0
  %1100 = vmatprep.subr.mxu0 0.0
  %1101 = vmatpush1.msra.mxu0 0.0
  %1102 = vmatprep.subr.mxu0 0.0
  %1103 = vmatpush1.msra.mxu0 0.0
  %1104 = vmatprep.subr.mxu0 0.0
  %1105 = vmatpush1.msra.mxu0 0.0
  %1106 = vmatprep.subr.mxu0 0.0
  %1107 = vmatpush1.msra.mxu0 0.0
  %1108 = vmatprep.subr.mxu0 0.0
  %1109 = vmatpush1.msra.mxu0 0.0
  %1110 = vmatprep.subr.mxu0 0.0
  %1111 = vmatpush1.msra.mxu0 0.0
  %1112 = vmatprep.subr.mxu0 0.0
  %1113 = vmatpush1.msra.mxu0 0.0
  %1114 = vmatprep.mubr.f32.mxu0 0.0
  %1115 = vmatmul.mubr.f32.gmra.mrb[0].mxu0 %v907
  %v1116 = vpop.f32.mrb[0].mxu0
  %v1117 = vadd.f32 %v975, %v1116
  %v1118 = vpop.f32.mrb[0].mxu0
  %v1119 = vadd.f32 %v977, %v1118
  %1120 = vdwg.mxu0
  %1121 = vmatprep.subr.mxu0 %v95
  %1122 = vmatpush1.msra.mxu0 %v94
  %1123 = vmatprep.subr.mxu0 %v99
  %1124 = vmatpush1.msra.mxu0 %v98
  %1125 = vmatprep.subr.mxu0 %v103
  %1126 = vmatpush1.msra.mxu0 %v102
  %1127 = vmatprep.subr.mxu0 %v107
  %1128 = vmatpush1.msra.mxu0 %v106
  %1129 = vmatprep.subr.mxu0 %v111
  %1130 = vmatpush1.msra.mxu0 %v110
  %1131 = vmatprep.subr.mxu0 %v115
  %1132 = vmatpush1.msra.mxu0 %v114
  %1133 = vmatprep.subr.mxu0 %v119
  %1134 = vmatpush1.msra.mxu0 %v118
  %1135 = vmatprep.subr.mxu0 %v123
  %1136 = vmatpush1.msra.mxu0 %v122
  %1137 = vmatprep.subr.mxu0 %v127
  %1138 = vmatpush1.msra.mxu0 %v126
  %1139 = vmatprep.subr.mxu0 %v131
  %1140 = vmatpush1.msra.mxu0 %v130
  %1141 = vmatprep.subr.mxu0 %v135
  %1142 = vmatpush1.msra.mxu0 %v134
  %1143 = vmatprep.subr.mxu0 %v139
  %1144 = vmatpush1.msra.mxu0 %v138
  %1145 = vmatprep.subr.mxu0 %v143
  %1146 = vmatpush1.msra.mxu0 %v142
  %1147 = vmatprep.subr.mxu0 %v147
  %1148 = vmatpush1.msra.mxu0 %v146
  %1149 = vmatprep.subr.mxu0 %v151
  %1150 = vmatpush1.msra.mxu0 %v150
  %1151 = vmatprep.subr.mxu0 %v155
  %1152 = vmatpush1.msra.mxu0 %v154
  %1153 = vmatprep.subr.mxu0 0.0
  %1154 = vmatpush1.msra.mxu0 0.0
  %1155 = vmatprep.subr.mxu0 0.0
  %1156 = vmatpush1.msra.mxu0 0.0
  %1157 = vmatprep.subr.mxu0 0.0
  %1158 = vmatpush1.msra.mxu0 0.0
  %1159 = vmatprep.subr.mxu0 0.0
  %1160 = vmatpush1.msra.mxu0 0.0
  %1161 = vmatprep.subr.mxu0 0.0
  %1162 = vmatpush1.msra.mxu0 0.0
  %1163 = vmatprep.subr.mxu0 0.0
  %1164 = vmatpush1.msra.mxu0 0.0
  %1165 = vmatprep.subr.mxu0 0.0
  %1166 = vmatpush1.msra.mxu0 0.0
  %1167 = vmatprep.subr.mxu0 0.0
  %1168 = vmatpush1.msra.mxu0 0.0
  %1169 = vmatprep.subr.mxu0 0.0
  %1170 = vmatpush1.msra.mxu0 0.0
  %1171 = vmatprep.subr.mxu0 0.0
  %1172 = vmatpush1.msra.mxu0 0.0
  %1173 = vmatprep.subr.mxu0 0.0
  %1174 = vmatpush1.msra.mxu0 0.0
  %1175 = vmatprep.subr.mxu0 0.0
  %1176 = vmatpush1.msra.mxu0 0.0
  %1177 = vmatprep.subr.mxu0 0.0
  %1178 = vmatpush1.msra.mxu0 0.0
  %1179 = vmatprep.subr.mxu0 0.0
  %1180 = vmatpush1.msra.mxu0 0.0
  %1181 = vmatprep.subr.mxu0 0.0
  %1182 = vmatpush1.msra.mxu0 0.0
  %1183 = vmatprep.subr.mxu0 0.0
  %1184 = vmatpush1.msra.mxu0 0.0
  %1185 = vmatprep.mubr.f32.mxu0 0.0
  %1186 = vmatmul.mubr.f32.gmra.mrb[0].mxu0 %v907
  %v1187 = vpop.f32.mrb[0].mxu0
  %v1188 = vadd.f32 %v1046, %v1187
  %v1189 = vpop.f32.mrb[0].mxu0
  %v1190 = vadd.f32 %v1048, %v1189
  %1191 = vdwg.mxu0
  %v1192 = vadd.f32 %v1117, %v687
  %v1193 = vadd.f32 %v1119, %v691
  %v1194 = vadd.f32 %v1188, %v695
  %v1195 = vadd.f32 %v1190, %v699
  %v1196 = vxor.u32 %v1192, 2147483648
  %v1197 = vmul.f32 %v1196, 1.442695
  %v1198 = vpow.pop %v1197
  %v1199 = vadd.f32 %v1198, 1.0
  %v1200 = vrcp.pop %v1199
  %v1201 = vmul.f32 1.0, %v1200
  %v1202 = vxor.u32 %v1193, 2147483648
  %v1203 = vmul.f32 %v1202, 1.442695
  %v1204 = vpow.pop %v1203
  %v1205 = vadd.f32 %v1204, 1.0
  %v1206 = vrcp.pop %v1205
  %v1207 = vmul.f32 1.0, %v1206
  %v1208 = vtanh.pop %v1194
  %v1209 = vxor.u32 %v1195, 2147483648
  %v1210 = vmul.f32 %v1209, 1.442695
  %v1211 = vpow.pop %v1210
  %v1212 = vadd.f32 %v1211, 1.0
  %v1213 = vrcp.pop %v1212
  %v1214 = vmul.f32 1.0, %v1213
  %v1215 = vmul.f32 %v1207, %v729
  %v1216 = vmul.f32 %v1201, %v1208
  %v1217 = vadd.f32 %v1215, %v1216
  %v1218 = vtanh.pop %v1217
  %v1219 = vmul.f32 %v1214, %v1218
  %s1220 = scalar_lea.vmem %s5, 8
  %1221 = vst [vmem:[%s1220] sm:$0xff] %v1219
  %s1222 = scalar_lea.vmem %s0, 64
  %v1223 = vld [vmem:[%s1222] sm:$0xff]
  %v1224 = vld [vmem:[%s1222 + $0x8] sm:$0xff]
  %v1225 = vld [vmem:[%s1222 + $0x10] sm:$0xff]
  %v1226 = vld [vmem:[%s1222 + $0x18] sm:$0xff]
  %1227 = vmatprep.subr.mxu0 %v29
  %1228 = vmatpush1.msra.mxu0 %v28
  %1229 = vmatprep.subr.mxu0 %v33
  %1230 = vmatpush1.msra.mxu0 %v32
  %1231 = vmatprep.subr.mxu0 %v37
  %1232 = vmatpush1.msra.mxu0 %v36
  %1233 = vmatprep.subr.mxu0 %v41
  %1234 = vmatpush1.msra.mxu0 %v40
  %1235 = vmatprep.subr.mxu0 %v45
  %1236 = vmatpush1.msra.mxu0 %v44
  %1237 = vmatprep.subr.mxu0 %v49
  %1238 = vmatpush1.msra.mxu0 %v48
  %1239 = vmatprep.subr.mxu0 %v53
  %1240 = vmatpush1.msra.mxu0 %v52
  %1241 = vmatprep.subr.mxu0 %v57
  %1242 = vmatpush1.msra.mxu0 %v56
  %1243 = vmatprep.subr.mxu0 %v61
  %1244 = vmatpush1.msra.mxu0 %v60
  %1245 = vmatprep.subr.mxu0 %v65
  %1246 = vmatpush1.msra.mxu0 %v64
  %1247 = vmatprep.subr.mxu0 %v69
  %1248 = vmatpush1.msra.mxu0 %v68
  %1249 = vmatprep.subr.mxu0 %v73
  %1250 = vmatpush1.msra.mxu0 %v72
  %1251 = vmatprep.subr.mxu0 %v77
  %1252 = vmatpush1.msra.mxu0 %v76
  %1253 = vmatprep.subr.mxu0 %v81
  %1254 = vmatpush1.msra.mxu0 %v80
  %1255 = vmatprep.subr.mxu0 %v85
  %1256 = vmatpush1.msra.mxu0 %v84
  %1257 = vmatprep.subr.mxu0 %v89
  %1258 = vmatpush1.msra.mxu0 %v88
  %1259 = vmatprep.subr.mxu0 0.0
  %1260 = vmatpush1.msra.mxu0 0.0
  %1261 = vmatprep.subr.mxu0 0.0
  %1262 = vmatpush1.msra.mxu0 0.0
  %1263 = vmatprep.subr.mxu0 0.0
  %1264 = vmatpush1.msra.mxu0 0.0
  %1265 = vmatprep.subr.mxu0 0.0
  %1266 = vmatpush1.msra.mxu0 0.0
  %1267 = vmatprep.subr.mxu0 0.0
  %1268 = vmatpush1.msra.mxu0 0.0
  %1269 = vmatprep.subr.mxu0 0.0
  %1270 = vmatpush1.msra.mxu0 0.0
  %1271 = vmatprep.subr.mxu0 0.0
  %1272 = vmatpush1.msra.mxu0 0.0
  %1273 = vmatprep.subr.mxu0 0.0
  %1274 = vmatpush1.msra.mxu0 0.0
  %1275 = vmatprep.subr.mxu0 0.0
  %1276 = vmatpush1.msra.mxu0 0.0
  %1277 = vmatprep.subr.mxu0 0.0
  %1278 = vmatpush1.msra.mxu0 0.0
  %1279 = vmatprep.subr.mxu0 0.0
  %1280 = vmatpush1.msra.mxu0 0.0
  %1281 = vmatprep.subr.mxu0 0.0
  %1282 = vmatpush1.msra.mxu0 0.0
  %1283 = vmatprep.subr.mxu0 0.0
  %1284 = vmatpush1.msra.mxu0 0.0
  %1285 = vmatprep.subr.mxu0 0.0
  %1286 = vmatpush1.msra.mxu0 0.0
  %1287 = vmatprep.subr.mxu0 0.0
  %1288 = vmatpush1.msra.mxu0 0.0
  %1289 = vmatprep.subr.mxu0 0.0
  %1290 = vmatpush1.msra.mxu0 0.0
  %1291 = vmatprep.mubr.f32.mxu0 0.0
  %1292 = vmatmul.mubr.f32.gmra.mrb[0].mxu0 %v907
  %v1293 = vpop.f32.mrb[0].mxu0
  %v1294 = vadd.f32 0.0, %v1293
  %v1295 = vpop.f32.mrb[0].mxu0
  %v1296 = vadd.f32 0.0, %v1295
  %1297 = vdwg.mxu0
  %1298 = vmatprep.subr.mxu0 %v31
  %1299 = vmatpush1.msra.mxu0 %v30
  %1300 = vmatprep.subr.mxu0 %v35
  %1301 = vmatpush1.msra.mxu0 %v34
  %1302 = vmatprep.subr.mxu0 %v39
  %1303 = vmatpush1.msra.mxu0 %v38
  %1304 = vmatprep.subr.mxu0 %v43
  %1305 = vmatpush1.msra.mxu0 %v42
  %1306 = vmatprep.subr.mxu0 %v47
  %1307 = vmatpush1.msra.mxu0 %v46
  %1308 = vmatprep.subr.mxu0 %v51
  %1309 = vmatpush1.msra.mxu0 %v50
  %1310 = vmatprep.subr.mxu0 %v55
  %1311 = vmatpush1.msra.mxu0 %v54
  %1312 = vmatprep.subr.mxu0 %v59
  %1313 = vmatpush1.msra.mxu0 %v58
  %1314 = vmatprep.subr.mxu0 %v63
  %1315 = vmatpush1.msra.mxu0 %v62
  %1316 = vmatprep.subr.mxu0 %v67
  %1317 = vmatpush1.msra.mxu0 %v66
  %1318 = vmatprep.subr.mxu0 %v71
  %1319 = vmatpush1.msra.mxu0 %v70
  %1320 = vmatprep.subr.mxu0 %v75
  %1321 = vmatpush1.msra.mxu0 %v74
  %1322 = vmatprep.subr.mxu0 %v79
  %1323 = vmatpush1.msra.mxu0 %v78
  %1324 = vmatprep.subr.mxu0 %v83
  %1325 = vmatpush1.msra.mxu0 %v82
  %1326 = vmatprep.subr.mxu0 %v87
  %1327 = vmatpush1.msra.mxu0 %v86
  %1328 = vmatprep.subr.mxu0 %v91
  %1329 = vmatpush1.msra.mxu0 %v90
  %1330 = vmatprep.subr.mxu0 0.0
  %1331 = vmatpush1.msra.mxu0 0.0
  %1332 = vmatprep.subr.mxu0 0.0
  %1333 = vmatpush1.msra.mxu0 0.0
  %1334 = vmatprep.subr.mxu0 0.0
  %1335 = vmatpush1.msra.mxu0 0.0
  %1336 = vmatprep.subr.mxu0 0.0
  %1337 = vmatpush1.msra.mxu0 0.0
  %1338 = vmatprep.subr.mxu0 0.0
  %1339 = vmatpush1.msra.mxu0 0.0
  %1340 = vmatprep.subr.mxu0 0.0
  %1341 = vmatpush1.msra.mxu0 0.0
  %1342 = vmatprep.subr.mxu0 0.0
  %1343 = vmatpush1.msra.mxu0 0.0
  %1344 = vmatprep.subr.mxu0 0.0
  %1345 = vmatpush1.msra.mxu0 0.0
  %1346 = vmatprep.subr.mxu0 0.0
  %1347 = vmatpush1.msra.mxu0 0.0
  %1348 = vmatprep.subr.mxu0 0.0
  %1349 = vmatpush1.msra.mxu0 0.0
  %1350 = vmatprep.subr.mxu0 0.0
  %1351 = vmatpush1.msra.mxu0 0.0
  %1352 = vmatprep.subr.mxu0 0.0
  %1353 = vmatpush1.msra.mxu0 0.0
  %1354 = vmatprep.subr.mxu0 0.0
  %1355 = vmatpush1.msra.mxu0 0.0
  %1356 = vmatprep.subr.mxu0 0.0
  %1357 = vmatpush1.msra.mxu0 0.0
  %1358 = vmatprep.subr.mxu0 0.0
  %1359 = vmatpush1.msra.mxu0 0.0
  %1360 = vmatprep.subr.mxu0 0.0
  %1361 = vmatpush1.msra.mxu0 0.0
  %1362 = vmatprep.mubr.f32.mxu0 0.0
  %1363 = vmatmul.mubr.f32.gmra.mrb[0].mxu0 %v907
  %v1364 = vpop.f32.mrb[0].mxu0
  %v1365 = vadd.f32 0.0, %v1364
  %v1366 = vpop.f32.mrb[0].mxu0
  %v1367 = vadd.f32 0.0, %v1366
  %1368 = vdwg.mxu0
  %v1369 = vadd.f32 %v1223, %v1294
  %v1370 = vadd.f32 %v1224, %v1296
  %v1371 = vadd.f32 %v1225, %v1365
  %v1372 = vadd.f32 %v1226, %v1367
  %v1373 = vxor.u32 %v1369, 2147483648
  %v1374 = vmul.f32 %v1373, 1.442695
  %v1375 = vpow.pop %v1374
  %v1376 = vadd.f32 %v1375, 1.0
  %v1377 = vrcp.pop %v1376
  %v1378 = vmul.f32 1.0, %v1377
  %v1379 = vxor.u32 %v1370, 2147483648
  %v1380 = vmul.f32 %v1379, 1.442695
  %v1381 = vpow.pop %v1380
  %v1382 = vadd.f32 %v1381, 1.0
  %v1383 = vrcp.pop %v1382
  %v1384 = vmul.f32 1.0, %v1383
  %v1385 = vtanh.pop %v1371
  %v1386 = vxor.u32 %v1372, 2147483648
  %v1387 = vmul.f32 %v1386, 1.442695
  %v1388 = vpow.pop %v1387
  %v1389 = vadd.f32 %v1388, 1.0
  %v1390 = vrcp.pop %v1389
  %v1391 = vmul.f32 1.0, %v1390
  %v1392 = vmul.f32 %v1384, %v905
  %v1393 = vmul.f32 %v1378, %v1385
  %v1394 = vadd.f32 %v1392, %v1393
  %v1395 = vtanh.pop %v1394
  %v1396 = vmul.f32 %v1391, %v1395
  %1397 = vmatprep.subr.mxu0 %v157
  %1398 = vmatpush1.msra.mxu0 %v156
  %1399 = vmatprep.subr.mxu0 %v161
  %1400 = vmatpush1.msra.mxu0 %v160
  %1401 = vmatprep.subr.mxu0 %v165
  %1402 = vmatpush1.msra.mxu0 %v164
  %1403 = vmatprep.subr.mxu0 %v169
  %1404 = vmatpush1.msra.mxu0 %v168
  %1405 = vmatprep.subr.mxu0 %v173
  %1406 = vmatpush1.msra.mxu0 %v172
  %1407 = vmatprep.subr.mxu0 %v177
  %1408 = vmatpush1.msra.mxu0 %v176
  %1409 = vmatprep.subr.mxu0 %v181
  %1410 = vmatpush1.msra.mxu0 %v180
  %1411 = vmatprep.subr.mxu0 %v185
  %1412 = vmatpush1.msra.mxu0 %v184
  %1413 = vmatprep.subr.mxu0 %v189
  %1414 = vmatpush1.msra.mxu0 %v188
  %1415 = vmatprep.subr.mxu0 %v193
  %1416 = vmatpush1.msra.mxu0 %v192
  %1417 = vmatprep.subr.mxu0 %v197
  %1418 = vmatpush1.msra.mxu0 %v196
  %1419 = vmatprep.subr.mxu0 %v201
  %1420 = vmatpush1.msra.mxu0 %v200
  %1421 = vmatprep.subr.mxu0 %v205
  %1422 = vmatpush1.msra.mxu0 %v204
  %1423 = vmatprep.subr.mxu0 %v209
  %1424 = vmatpush1.msra.mxu0 %v208
  %1425 = vmatprep.subr.mxu0 %v213
  %1426 = vmatpush1.msra.mxu0 %v212
  %1427 = vmatprep.subr.mxu0 %v217
  %1428 = vmatpush1.msra.mxu0 %v216
  %1429 = vmatprep.subr.mxu0 0.0
  %1430 = vmatpush1.msra.mxu0 0.0
  %1431 = vmatprep.subr.mxu0 0.0
  %1432 = vmatpush1.msra.mxu0 0.0
  %1433 = vmatprep.subr.mxu0 0.0
  %1434 = vmatpush1.msra.mxu0 0.0
  %1435 = vmatprep.subr.mxu0 0.0
  %1436 = vmatpush1.msra.mxu0 0.0
  %1437 = vmatprep.subr.mxu0 0.0
  %1438 = vmatpush1.msra.mxu0 0.0
  %1439 = vmatprep.subr.mxu0 0.0
  %1440 = vmatpush1.msra.mxu0 0.0
  %1441 = vmatprep.subr.mxu0 0.0
  %1442 = vmatpush1.msra.mxu0 0.0
  %1443 = vmatprep.subr.mxu0 0.0
  %1444 = vmatpush1.msra.mxu0 0.0
  %1445 = vmatprep.subr.mxu0 0.0
  %1446 = vmatpush1.msra.mxu0 0.0
  %1447 = vmatprep.subr.mxu0 0.0
  %1448 = vmatpush1.msra.mxu0 0.0
  %1449 = vmatprep.subr.mxu0 0.0
  %1450 = vmatpush1.msra.mxu0 0.0
  %1451 = vmatprep.subr.mxu0 0.0
  %1452 = vmatpush1.msra.mxu0 0.0
  %1453 = vmatprep.subr.mxu0 0.0
  %1454 = vmatpush1.msra.mxu0 0.0
  %1455 = vmatprep.subr.mxu0 0.0
  %1456 = vmatpush1.msra.mxu0 0.0
  %1457 = vmatprep.subr.mxu0 0.0
  %1458 = vmatpush1.msra.mxu0 0.0
  %1459 = vmatprep.subr.mxu0 0.0
  %1460 = vmatpush1.msra.mxu0 0.0
  %1461 = vmatprep.mubr.f32.mxu0 0.0
  %1462 = vmatmul.mubr.f32.gmra.mrb[0].mxu0 %v1219
  %v1463 = vpop.f32.mrb[0].mxu0
  %v1464 = vadd.f32 0.0, %v1463
  %v1465 = vpop.f32.mrb[0].mxu0
  %v1466 = vadd.f32 0.0, %v1465
  %1467 = vdwg.mxu0
  %1468 = vmatprep.subr.mxu0 %v159
  %1469 = vmatpush1.msra.mxu0 %v158
  %1470 = vmatprep.subr.mxu0 %v163
  %1471 = vmatpush1.msra.mxu0 %v162
  %1472 = vmatprep.subr.mxu0 %v167
  %1473 = vmatpush1.msra.mxu0 %v166
  %1474 = vmatprep.subr.mxu0 %v171
  %1475 = vmatpush1.msra.mxu0 %v170
  %1476 = vmatprep.subr.mxu0 %v175
  %1477 = vmatpush1.msra.mxu0 %v174
  %1478 = vmatprep.subr.mxu0 %v179
  %1479 = vmatpush1.msra.mxu0 %v178
  %1480 = vmatprep.subr.mxu0 %v183
  %1481 = vmatpush1.msra.mxu0 %v182
  %1482 = vmatprep.subr.mxu0 %v187
  %1483 = vmatpush1.msra.mxu0 %v186
  %1484 = vmatprep.subr.mxu0 %v191
  %1485 = vmatpush1.msra.mxu0 %v190
  %1486 = vmatprep.subr.mxu0 %v195
  %1487 = vmatpush1.msra.mxu0 %v194
  %1488 = vmatprep.subr.mxu0 %v199
  %1489 = vmatpush1.msra.mxu0 %v198
  %1490 = vmatprep.subr.mxu0 %v203
  %1491 = vmatpush1.msra.mxu0 %v202
  %1492 = vmatprep.subr.mxu0 %v207
  %1493 = vmatpush1.msra.mxu0 %v206
  %1494 = vmatprep.subr.mxu0 %v211
  %1495 = vmatpush1.msra.mxu0 %v210
  %1496 = vmatprep.subr.mxu0 %v215
  %1497 = vmatpush1.msra.mxu0 %v214
  %1498 = vmatprep.subr.mxu0 %v219
  %1499 = vmatpush1.msra.mxu0 %v218
  %1500 = vmatprep.subr.mxu0 0.0
  %1501 = vmatpush1.msra.mxu0 0.0
  %1502 = vmatprep.subr.mxu0 0.0
  %1503 = vmatpush1.msra.mxu0 0.0
  %1504 = vmatprep.subr.mxu0 0.0
  %1505 = vmatpush1.msra.mxu0 0.0
  %1506 = vmatprep.subr.mxu0 0.0
  %1507 = vmatpush1.msra.mxu0 0.0
  %1508 = vmatprep.subr.mxu0 0.0
  %1509 = vmatpush1.msra.mxu0 0.0
  %1510 = vmatprep.subr.mxu0 0.0
  %1511 = vmatpush1.msra.mxu0 0.0
  %1512 = vmatprep.subr.mxu0 0.0
  %1513 = vmatpush1.msra.mxu0 0.0
  %1514 = vmatprep.subr.mxu0 0.0
  %1515 = vmatpush1.msra.mxu0 0.0
  %1516 = vmatprep.subr.mxu0 0.0
  %1517 = vmatpush1.msra.mxu0 0.0
  %1518 = vmatprep.subr.mxu0 0.0
  %1519 = vmatpush1.msra.mxu0 0.0
  %1520 = vmatprep.subr.mxu0 0.0
  %1521 = vmatpush1.msra.mxu0 0.0
  %1522 = vmatprep.subr.mxu0 0.0
  %1523 = vmatpush1.msra.mxu0 0.0
  %1524 = vmatprep.subr.mxu0 0.0
  %1525 = vmatpush1.msra.mxu0 0.0
  %1526 = vmatprep.subr.mxu0 0.0
  %1527 = vmatpush1.msra.mxu0 0.0
  %1528 = vmatprep.subr.mxu0 0.0
  %1529 = vmatpush1.msra.mxu0 0.0
  %1530 = vmatprep.subr.mxu0 0.0
  %1531 = vmatpush1.msra.mxu0 0.0
  %1532 = vmatprep.mubr.f32.mxu0 0.0
  %1533 = vmatmul.mubr.f32.gmra.mrb[0].mxu0 %v1219
  %v1534 = vpop.f32.mrb[0].mxu0
  %v1535 = vadd.f32 0.0, %v1534
  %v1536 = vpop.f32.mrb[0].mxu0
  %v1537 = vadd.f32 0.0, %v1536
  %1538 = vdwg.mxu0
  %1539 = vmatprep.subr.mxu0 %v93
  %1540 = vmatpush1.msra.mxu0 %v92
  %1541 = vmatprep.subr.mxu0 %v97
  %1542 = vmatpush1.msra.mxu0 %v96
  %1543 = vmatprep.subr.mxu0 %v101
  %1544 = vmatpush1.msra.mxu0 %v100
  %1545 = vmatprep.subr.mxu0 %v105
  %1546 = vmatpush1.msra.mxu0 %v104
  %1547 = vmatprep.subr.mxu0 %v109
  %1548 = vmatpush1.msra.mxu0 %v108
  %1549 = vmatprep.subr.mxu0 %v113
  %1550 = vmatpush1.msra.mxu0 %v112
  %1551 = vmatprep.subr.mxu0 %v117
  %1552 = vmatpush1.msra.mxu0 %v116
  %1553 = vmatprep.subr.mxu0 %v121
  %1554 = vmatpush1.msra.mxu0 %v120
  %1555 = vmatprep.subr.mxu0 %v125
  %1556 = vmatpush1.msra.mxu0 %v124
  %1557 = vmatprep.subr.mxu0 %v129
  %1558 = vmatpush1.msra.mxu0 %v128
  %1559 = vmatprep.subr.mxu0 %v133
  %1560 = vmatpush1.msra.mxu0 %v132
  %1561 = vmatprep.subr.mxu0 %v137
  %1562 = vmatpush1.msra.mxu0 %v136
  %1563 = vmatprep.subr.mxu0 %v141
  %1564 = vmatpush1.msra.mxu0 %v140
  %1565 = vmatprep.subr.mxu0 %v145
  %1566 = vmatpush1.msra.mxu0 %v144
  %1567 = vmatprep.subr.mxu0 %v149
  %1568 = vmatpush1.msra.mxu0 %v148
  %1569 = vmatprep.subr.mxu0 %v153
  %1570 = vmatpush1.msra.mxu0 %v152
  %1571 = vmatprep.subr.mxu0 0.0
  %1572 = vmatpush1.msra.mxu0 0.0
  %1573 = vmatprep.subr.mxu0 0.0
  %1574 = vmatpush1.msra.mxu0 0.0
  %1575 = vmatprep.subr.mxu0 0.0
  %1576 = vmatpush1.msra.mxu0 0.0
  %1577 = vmatprep.subr.mxu0 0.0
  %1578 = vmatpush1.msra.mxu0 0.0
  %1579 = vmatprep.subr.mxu0 0.0
  %1580 = vmatpush1.msra.mxu0 0.0
  %1581 = vmatprep.subr.mxu0 0.0
  %1582 = vmatpush1.msra.mxu0 0.0
  %1583 = vmatprep.subr.mxu0 0.0
  %1584 = vmatpush1.msra.mxu0 0.0
  %1585 = vmatprep.subr.mxu0 0.0
  %1586 = vmatpush1.msra.mxu0 0.0
  %1587 = vmatprep.subr.mxu0 0.0
  %1588 = vmatpush1.msra.mxu0 0.0
  %1589 = vmatprep.subr.mxu0 0.0
  %1590 = vmatpush1.msra.mxu0 0.0
  %1591 = vmatprep.subr.mxu0 0.0
  %1592 = vmatpush1.msra.mxu0 0.0
  %1593 = vmatprep.subr.mxu0 0.0
  %1594 = vmatpush1.msra.mxu0 0.0
  %1595 = vmatprep.subr.mxu0 0.0
  %1596 = vmatpush1.msra.mxu0 0.0
  %1597 = vmatprep.subr.mxu0 0.0
  %1598 = vmatpush1.msra.mxu0 0.0
  %1599 = vmatprep.subr.mxu0 0.0
  %1600 = vmatpush1.msra.mxu0 0.0
  %1601 = vmatprep.subr.mxu0 0.0
  %1602 = vmatpush1.msra.mxu0 0.0
  %1603 = vmatprep.mubr.f32.mxu0 0.0
  %1604 = vmatmul.mubr.f32.gmra.mrb[0].mxu0 %v1396
  %v1605 = vpop.f32.mrb[0].mxu0
  %v1606 = vadd.f32 %v1464, %v1605
  %v1607 = vpop.f32.mrb[0].mxu0
  %v1608 = vadd.f32 %v1466, %v1607
  %1609 = vdwg.mxu0
  %1610 = vmatprep.subr.mxu0 %v95
  %1611 = vmatpush1.msra.mxu0 %v94
  %1612 = vmatprep.subr.mxu0 %v99
  %1613 = vmatpush1.msra.mxu0 %v98
  %1614 = vmatprep.subr.mxu0 %v103
  %1615 = vmatpush1.msra.mxu0 %v102
  %1616 = vmatprep.subr.mxu0 %v107
  %1617 = vmatpush1.msra.mxu0 %v106
  %1618 = vmatprep.subr.mxu0 %v111
  %1619 = vmatpush1.msra.mxu0 %v110
  %1620 = vmatprep.subr.mxu0 %v115
  %1621 = vmatpush1.msra.mxu0 %v114
  %1622 = vmatprep.subr.mxu0 %v119
  %1623 = vmatpush1.msra.mxu0 %v118
  %1624 = vmatprep.subr.mxu0 %v123
  %1625 = vmatpush1.msra.mxu0 %v122
  %1626 = vmatprep.subr.mxu0 %v127
  %1627 = vmatpush1.msra.mxu0 %v126
  %1628 = vmatprep.subr.mxu0 %v131
  %1629 = vmatpush1.msra.mxu0 %v130
  %1630 = vmatprep.subr.mxu0 %v135
  %1631 = vmatpush1.msra.mxu0 %v134
  %1632 = vmatprep.subr.mxu0 %v139
  %1633 = vmatpush1.msra.mxu0 %v138
  %1634 = vmatprep.subr.mxu0 %v143
  %1635 = vmatpush1.msra.mxu0 %v142
  %1636 = vmatprep.subr.mxu0 %v147
  %1637 = vmatpush1.msra.mxu0 %v146
  %1638 = vmatprep.subr.mxu0 %v151
  %1639 = vmatpush1.msra.mxu0 %v150
  %1640 = vmatprep.subr.mxu0 %v155
  %1641 = vmatpush1.msra.mxu0 %v154
  %1642 = vmatprep.subr.mxu0 0.0
  %1643 = vmatpush1.msra.mxu0 0.0
  %1644 = vmatprep.subr.mxu0 0.0
  %1645 = vmatpush1.msra.mxu0 0.0
  %1646 = vmatprep.subr.mxu0 0.0
  %1647 = vmatpush1.msra.mxu0 0.0
  %1648 = vmatprep.subr.mxu0 0.0
  %1649 = vmatpush1.msra.mxu0 0.0
  %1650 = vmatprep.subr.mxu0 0.0
  %1651 = vmatpush1.msra.mxu0 0.0
  %1652 = vmatprep.subr.mxu0 0.0
  %1653 = vmatpush1.msra.mxu0 0.0
  %1654 = vmatprep.subr.mxu0 0.0
  %1655 = vmatpush1.msra.mxu0 0.0
  %1656 = vmatprep.subr.mxu0 0.0
  %1657 = vmatpush1.msra.mxu0 0.0
  %1658 = vmatprep.subr.mxu0 0.0
  %1659 = vmatpush1.msra.mxu0 0.0
  %1660 = vmatprep.subr.mxu0 0.0
  %1661 = vmatpush1.msra.mxu0 0.0
  %1662 = vmatprep.subr.mxu0 0.0
  %1663 = vmatpush1.msra.mxu0 0.0
  %1664 = vmatprep.subr.mxu0 0.0
  %1665 = vmatpush1.msra.mxu0 0.0
  %1666 = vmatprep.subr.mxu0 0.0
  %1667 = vmatpush1.msra.mxu0 0.0
  %1668 = vmatprep.subr.mxu0 0.0
  %1669 = vmatpush1.msra.mxu0 0.0
  %1670 = vmatprep.subr.mxu0 0.0
  %1671 = vmatpush1.msra.mxu0 0.0
  %1672 = vmatprep.subr.mxu0 0.0
  %1673 = vmatpush1.msra.mxu0 0.0
  %1674 = vmatprep.mubr.f32.mxu0 0.0
  %1675 = vmatmul.mubr.f32.gmra.mrb[0].mxu0 %v1396
  %v1676 = vpop.f32.mrb[0].mxu0
  %v1677 = vadd.f32 %v1535, %v1676
  %v1678 = vpop.f32.mrb[0].mxu0
  %v1679 = vadd.f32 %v1537, %v1678
  %1680 = vdwg.mxu0
  %v1681 = vadd.f32 %v1606, %v687
  %v1682 = vadd.f32 %v1608, %v691
  %v1683 = vadd.f32 %v1677, %v695
  %v1684 = vadd.f32 %v1679, %v699
  %v1685 = vxor.u32 %v1681, 2147483648
  %v1686 = vmul.f32 %v1685, 1.442695
  %v1687 = vpow.pop %v1686
  %v1688 = vadd.f32 %v1687, 1.0
  %v1689 = vrcp.pop %v1688
  %v1690 = vmul.f32 1.0, %v1689
  %v1691 = vxor.u32 %v1682, 2147483648
  %v1692 = vmul.f32 %v1691, 1.442695
  %v1693 = vpow.pop %v1692
  %v1694 = vadd.f32 %v1693, 1.0
  %v1695 = vrcp.pop %v1694
  %v1696 = vmul.f32 1.0, %v1695
  %v1697 = vtanh.pop %v1683
  %v1698 = vxor.u32 %v1684, 2147483648
  %v1699 = vmul.f32 %v1698, 1.442695
  %v1700 = vpow.pop %v1699
  %v1701 = vadd.f32 %v1700, 1.0
  %v1702 = vrcp.pop %v1701
  %v1703 = vmul.f32 1.0, %v1702
  %v1704 = vmul.f32 %v1696, %v1217
  %v1705 = vmul.f32 %v1690, %v1697
  %v1706 = vadd.f32 %v1704, %v1705
  %v1707 = vtanh.pop %v1706
  %v1708 = vmul.f32 %v1703, %v1707
  %s1709 = scalar_lea.vmem %s5, 16
  %1710 = vst [vmem:[%s1709] sm:$0xff] %v1708
  %s1711 = scalar_lea.vmem %s0, 96
  %v1712 = vld [vmem:[%s1711] sm:$0xff]
  %v1713 = vld [vmem:[%s1711 + $0x8] sm:$0xff]
  %v1714 = vld [vmem:[%s1711 + $0x10] sm:$0xff]
  %v1715 = vld [vmem:[%s1711 + $0x18] sm:$0xff]
  %1716 = vmatprep.subr.mxu0 %v29
  %1717 = vmatpush1.msra.mxu0 %v28
  %1718 = vmatprep.subr.mxu0 %v33
  %1719 = vmatpush1.msra.mxu0 %v32
  %1720 = vmatprep.subr.mxu0 %v37
  %1721 = vmatpush1.msra.mxu0 %v36
  %1722 = vmatprep.subr.mxu0 %v41
  %1723 = vmatpush1.msra.mxu0 %v40
  %1724 = vmatprep.subr.mxu0 %v45
  %1725 = vmatpush1.msra.mxu0 %v44
  %1726 = vmatprep.subr.mxu0 %v49
  %1727 = vmatpush1.msra.mxu0 %v48
  %1728 = vmatprep.subr.mxu0 %v53
  %1729 = vmatpush1.msra.mxu0 %v52
  %1730 = vmatprep.subr.mxu0 %v57
  %1731 = vmatpush1.msra.mxu0 %v56
  %1732 = vmatprep.subr.mxu0 %v61
  %1733 = vmatpush1.msra.mxu0 %v60
  %1734 = vmatprep.subr.mxu0 %v65
  %1735 = vmatpush1.msra.mxu0 %v64
  %1736 = vmatprep.subr.mxu0 %v69
  %1737 = vmatpush1.msra.mxu0 %v68
  %1738 = vmatprep.subr.mxu0 %v73
  %1739 = vmatpush1.msra.mxu0 %v72
  %1740 = vmatprep.subr.mxu0 %v77
  %1741 = vmatpush1.msra.mxu0 %v76
  %1742 = vmatprep.subr.mxu0 %v81
  %1743 = vmatpush1.msra.mxu0 %v80
  %1744 = vmatprep.subr.mxu0 %v85
  %1745 = vmatpush1.msra.mxu0 %v84
  %1746 = vmatprep.subr.mxu0 %v89
  %1747 = vmatpush1.msra.mxu0 %v88
  %1748 = vmatprep.subr.mxu0 0.0
  %1749 = vmatpush1.msra.mxu0 0.0
  %1750 = vmatprep.subr.mxu0 0.0
  %1751 = vmatpush1.msra.mxu0 0.0
  %1752 = vmatprep.subr.mxu0 0.0
  %1753 = vmatpush1.msra.mxu0 0.0
  %1754 = vmatprep.subr.mxu0 0.0
  %1755 = vmatpush1.msra.mxu0 0.0
  %1756 = vmatprep.subr.mxu0 0.0
  %1757 = vmatpush1.msra.mxu0 0.0
  %1758 = vmatprep.subr.mxu0 0.0
  %1759 = vmatpush1.msra.mxu0 0.0
  %1760 = vmatprep.subr.mxu0 0.0
  %1761 = vmatpush1.msra.mxu0 0.0
  %1762 = vmatprep.subr.mxu0 0.0
  %1763 = vmatpush1.msra.mxu0 0.0
  %1764 = vmatprep.subr.mxu0 0.0
  %1765 = vmatpush1.msra.mxu0 0.0
  %1766 = vmatprep.subr.mxu0 0.0
  %1767 = vmatpush1.msra.mxu0 0.0
  %1768 = vmatprep.subr.mxu0 0.0
  %1769 = vmatpush1.msra.mxu0 0.0
  %1770 = vmatprep.subr.mxu0 0.0
  %1771 = vmatpush1.msra.mxu0 0.0
  %1772 = vmatprep.subr.mxu0 0.0
  %1773 = vmatpush1.msra.mxu0 0.0
  %1774 = vmatprep.subr.mxu0 0.0
  %1775 = vmatpush1.msra.mxu0 0.0
  %1776 = vmatprep.subr.mxu0 0.0
  %1777 = vmatpush1.msra.mxu0 0.0
  %1778 = vmatprep.subr.mxu0 0.0
  %1779 = vmatpush1.msra.mxu0 0.0
  %1780 = vmatprep.mubr.f32.mxu0 0.0
  %1781 = vmatmul.mubr.f32.gmra.mrb[0].mxu0 %v1396
  %v1782 = vpop.f32.mrb[0].mxu0
  %v1783 = vadd.f32 0.0, %v1782
  %v1784 = vpop.f32.mrb[0].mxu0
  %v1785 = vadd.f32 0.0, %v1784
  %1786 = vdwg.mxu0
  %1787 = vmatprep.subr.mxu0 %v31
  %1788 = vmatpush1.msra.mxu0 %v30
  %1789 = vmatprep.subr.mxu0 %v35
  %1790 = vmatpush1.msra.mxu0 %v34
  %1791 = vmatprep.subr.mxu0 %v39
  %1792 = vmatpush1.msra.mxu0 %v38
  %1793 = vmatprep.subr.mxu0 %v43
  %1794 = vmatpush1.msra.mxu0 %v42
  %1795 = vmatprep.subr.mxu0 %v47
  %1796 = vmatpush1.msra.mxu0 %v46
  %1797 = vmatprep.subr.mxu0 %v51
  %1798 = vmatpush1.msra.mxu0 %v50
  %1799 = vmatprep.subr.mxu0 %v55
  %1800 = vmatpush1.msra.mxu0 %v54
  %1801 = vmatprep.subr.mxu0 %v59
  %1802 = vmatpush1.msra.mxu0 %v58
  %1803 = vmatprep.subr.mxu0 %v63
  %1804 = vmatpush1.msra.mxu0 %v62
  %1805 = vmatprep.subr.mxu0 %v67
  %1806 = vmatpush1.msra.mxu0 %v66
  %1807 = vmatprep.subr.mxu0 %v71
  %1808 = vmatpush1.msra.mxu0 %v70
  %1809 = vmatprep.subr.mxu0 %v75
  %1810 = vmatpush1.msra.mxu0 %v74
  %1811 = vmatprep.subr.mxu0 %v79
  %1812 = vmatpush1.msra.mxu0 %v78
  %1813 = vmatprep.subr.mxu0 %v83
  %1814 = vmatpush1.msra.mxu0 %v82
  %1815 = vmatprep.subr.mxu0 %v87
  %1816 = vmatpush1.msra.mxu0 %v86
  %1817 = vmatprep.subr.mxu0 %v91
  %1818 = vmatpush1.msra.mxu0 %v90
  %1819 = vmatprep.subr.mxu0 0.0
  %1820 = vmatpush1.msra.mxu0 0.0
  %1821 = vmatprep.subr.mxu0 0.0
  %1822 = vmatpush1.msra.mxu0 0.0
  %1823 = vmatprep.subr.mxu0 0.0
  %1824 = vmatpush1.msra.mxu0 0.0
  %1825 = vmatprep.subr.mxu0 0.0
  %1826 = vmatpush1.msra.mxu0 0.0
  %1827 = vmatprep.subr.mxu0 0.0
  %1828 = vmatpush1.msra.mxu0 0.0
  %1829 = vmatprep.subr.mxu0 0.0
  %1830 = vmatpush1.msra.mxu0 0.0
  %1831 = vmatprep.subr.mxu0 0.0
  %1832 = vmatpush1.msra.mxu0 0.0
  %1833 = vmatprep.subr.mxu0 0.0
  %1834 = vmatpush1.msra.mxu0 0.0
  %1835 = vmatprep.subr.mxu0 0.0
  %1836 = vmatpush1.msra.mxu0 0.0
  %1837 = vmatprep.subr.mxu0 0.0
  %1838 = vmatpush1.msra.mxu0 0.0
  %1839 = vmatprep.subr.mxu0 0.0
  %1840 = vmatpush1.msra.mxu0 0.0
  %1841 = vmatprep.subr.mxu0 0.0
  %1842 = vmatpush1.msra.mxu0 0.0
  %1843 = vmatprep.subr.mxu0 0.0
  %1844 = vmatpush1.msra.mxu0 0.0
  %1845 = vmatprep.subr.mxu0 0.0
  %1846 = vmatpush1.msra.mxu0 0.0
  %1847 = vmatprep.subr.mxu0 0.0
  %1848 = vmatpush1.msra.mxu0 0.0
  %1849 = vmatprep.subr.mxu0 0.0
  %1850 = vmatpush1.msra.mxu0 0.0
  %1851 = vmatprep.mubr.f32.mxu0 0.0
  %1852 = vmatmul.mubr.f32.gmra.mrb[0].mxu0 %v1396
  %v1853 = vpop.f32.mrb[0].mxu0
  %v1854 = vadd.f32 0.0, %v1853
  %v1855 = vpop.f32.mrb[0].mxu0
  %v1856 = vadd.f32 0.0, %v1855
  %1857 = vdwg.mxu0
  %v1858 = vadd.f32 %v1712, %v1783
  %v1859 = vadd.f32 %v1713, %v1785
  %v1860 = vadd.f32 %v1714, %v1854
  %v1861 = vadd.f32 %v1715, %v1856
  %v1862 = vxor.u32 %v1858, 2147483648
  %v1863 = vmul.f32 %v1862, 1.442695
  %v1864 = vpow.pop %v1863
  %v1865 = vadd.f32 %v1864, 1.0
  %v1866 = vrcp.pop %v1865
  %v1867 = vmul.f32 1.0, %v1866
  %v1868 = vxor.u32 %v1859, 2147483648
  %v1869 = vmul.f32 %v1868, 1.442695
  %v1870 = vpow.pop %v1869
  %v1871 = vadd.f32 %v1870, 1.0
  %v1872 = vrcp.pop %v1871
  %v1873 = vmul.f32 1.0, %v1872
  %v1874 = vtanh.pop %v1860
  %v1875 = vxor.u32 %v1861, 2147483648
  %v1876 = vmul.f32 %v1875, 1.442695
  %v1877 = vpow.pop %v1876
  %v1878 = vadd.f32 %v1877, 1.0
  %v1879 = vrcp.pop %v1878
  %v1880 = vmul.f32 1.0, %v1879
  %v1881 = vmul.f32 %v1873, %v1394
  %v1882 = vmul.f32 %v1867, %v1874
  %v1883 = vadd.f32 %v1881, %v1882
  %v1884 = vtanh.pop %v1883
  %v1885 = vmul.f32 %v1880, %v1884
  %1886 = vmatprep.subr.mxu0 %v157
  %1887 = vmatpush1.msra.mxu0 %v156
  %1888 = vmatprep.subr.mxu0 %v161
  %1889 = vmatpush1.msra.mxu0 %v160
  %1890 = vmatprep.subr.mxu0 %v165
  %1891 = vmatpush1.msra.mxu0 %v164
  %1892 = vmatprep.subr.mxu0 %v169
  %1893 = vmatpush1.msra.mxu0 %v168
  %1894 = vmatprep.subr.mxu0 %v173
  %1895 = vmatpush1.msra.mxu0 %v172
  %1896 = vmatprep.subr.mxu0 %v177
  %1897 = vmatpush1.msra.mxu0 %v176
  %1898 = vmatprep.subr.mxu0 %v181
  %1899 = vmatpush1.msra.mxu0 %v180
  %1900 = vmatprep.subr.mxu0 %v185
  %1901 = vmatpush1.msra.mxu0 %v184
  %1902 = vmatprep.subr.mxu0 %v189
  %1903 = vmatpush1.msra.mxu0 %v188
  %1904 = vmatprep.subr.mxu0 %v193
  %1905 = vmatpush1.msra.mxu0 %v192
  %1906 = vmatprep.subr.mxu0 %v197
  %1907 = vmatpush1.msra.mxu0 %v196
  %1908 = vmatprep.subr.mxu0 %v201
  %1909 = vmatpush1.msra.mxu0 %v200
  %1910 = vmatprep.subr.mxu0 %v205
  %1911 = vmatpush1.msra.mxu0 %v204
  %1912 = vmatprep.subr.mxu0 %v209
  %1913 = vmatpush1.msra.mxu0 %v208
  %1914 = vmatprep.subr.mxu0 %v213
  %1915 = vmatpush1.msra.mxu0 %v212
  %1916 = vmatprep.subr.mxu0 %v217
  %1917 = vmatpush1.msra.mxu0 %v216
  %1918 = vmatprep.subr.mxu0 0.0
  %1919 = vmatpush1.msra.mxu0 0.0
  %1920 = vmatprep.subr.mxu0 0.0
  %1921 = vmatpush1.msra.mxu0 0.0
  %1922 = vmatprep.subr.mxu0 0.0
  %1923 = vmatpush1.msra.mxu0 0.0
  %1924 = vmatprep.subr.mxu0 0.0
  %1925 = vmatpush1.msra.mxu0 0.0
  %1926 = vmatprep.subr.mxu0 0.0
  %1927 = vmatpush1.msra.mxu0 0.0
  %1928 = vmatprep.subr.mxu0 0.0
  %1929 = vmatpush1.msra.mxu0 0.0
  %1930 = vmatprep.subr.mxu0 0.0
  %1931 = vmatpush1.msra.mxu0 0.0
  %1932 = vmatprep.subr.mxu0 0.0
  %1933 = vmatpush1.msra.mxu0 0.0
  %1934 = vmatprep.subr.mxu0 0.0
  %1935 = vmatpush1.msra.mxu0 0.0
  %1936 = vmatprep.subr.mxu0 0.0
  %1937 = vmatpush1.msra.mxu0 0.0
  %1938 = vmatprep.subr.mxu0 0.0
  %1939 = vmatpush1.msra.mxu0 0.0
  %1940 = vmatprep.subr.mxu0 0.0
  %1941 = vmatpush1.msra.mxu0 0.0
  %1942 = vmatprep.subr.mxu0 0.0
  %1943 = vmatpush1.msra.mxu0 0.0
  %1944 = vmatprep.subr.mxu0 0.0
  %1945 = vmatpush1.msra.mxu0 0.0
  %1946 = vmatprep.subr.mxu0 0.0
  %1947 = vmatpush1.msra.mxu0 0.0
  %1948 = vmatprep.subr.mxu0 0.0
  %1949 = vmatpush1.msra.mxu0 0.0
  %1950 = vmatprep.mubr.f32.mxu0 0.0
  %1951 = vmatmul.mubr.f32.gmra.mrb[0].mxu0 %v1708
  %v1952 = vpop.f32.mrb[0].mxu0
  %v1953 = vadd.f32 0.0, %v1952
  %v1954 = vpop.f32.mrb[0].mxu0
  %v1955 = vadd.f32 0.0, %v1954
  %1956 = vdwg.mxu0
  %1957 = vmatprep.subr.mxu0 %v159
  %1958 = vmatpush1.msra.mxu0 %v158
  %1959 = vmatprep.subr.mxu0 %v163
  %1960 = vmatpush1.msra.mxu0 %v162
  %1961 = vmatprep.subr.mxu0 %v167
  %1962 = vmatpush1.msra.mxu0 %v166
  %1963 = vmatprep.subr.mxu0 %v171
  %1964 = vmatpush1.msra.mxu0 %v170
  %1965 = vmatprep.subr.mxu0 %v175
  %1966 = vmatpush1.msra.mxu0 %v174
  %1967 = vmatprep.subr.mxu0 %v179
  %1968 = vmatpush1.msra.mxu0 %v178
  %1969 = vmatprep.subr.mxu0 %v183
  %1970 = vmatpush1.msra.mxu0 %v182
  %1971 = vmatprep.subr.mxu0 %v187
  %1972 = vmatpush1.msra.mxu0 %v186
  %1973 = vmatprep.subr.mxu0 %v191
  %1974 = vmatpush1.msra.mxu0 %v190
  %1975 = vmatprep.subr.mxu0 %v195
  %1976 = vmatpush1.msra.mxu0 %v194
  %1977 = vmatprep.subr.mxu0 %v199
  %1978 = vmatpush1.msra.mxu0 %v198
  %1979 = vmatprep.subr.mxu0 %v203
  %1980 = vmatpush1.msra.mxu0 %v202
  %1981 = vmatprep.subr.mxu0 %v207
  %1982 = vmatpush1.msra.mxu0 %v206
  %1983 = vmatprep.subr.mxu0 %v211
  %1984 = vmatpush1.msra.mxu0 %v210
  %1985 = vmatprep.subr.mxu0 %v215
  %1986 = vmatpush1.msra.mxu0 %v214
  %1987 = vmatprep.subr.mxu0 %v219
  %1988 = vmatpush1.msra.mxu0 %v218
  %1989 = vmatprep.subr.mxu0 0.0
  %1990 = vmatpush1.msra.mxu0 0.0
  %1991 = vmatprep.subr.mxu0 0.0
  %1992 = vmatpush1.msra.mxu0 0.0
  %1993 = vmatprep.subr.mxu0 0.0
  %1994 = vmatpush1.msra.mxu0 0.0
  %1995 = vmatprep.subr.mxu0 0.0
  %1996 = vmatpush1.msra.mxu0 0.0
  %1997 = vmatprep.subr.mxu0 0.0
  %1998 = vmatpush1.msra.mxu0 0.0
  %1999 = vmatprep.subr.mxu0 0.0
  %2000 = vmatpush1.msra.mxu0 0.0
  %2001 = vmatprep.subr.mxu0 0.0
  %2002 = vmatpush1.msra.mxu0 0.0
  %2003 = vmatprep.subr.mxu0 0.0
  %2004 = vmatpush1.msra.mxu0 0.0
  %2005 = vmatprep.subr.mxu0 0.0
  %2006 = vmatpush1.msra.mxu0 0.0
  %2007 = vmatprep.subr.mxu0 0.0
  %2008 = vmatpush1.msra.mxu0 0.0
  %2009 = vmatprep.subr.mxu0 0.0
  %2010 = vmatpush1.msra.mxu0 0.0
  %2011 = vmatprep.subr.mxu0 0.0
  %2012 = vmatpush1.msra.mxu0 0.0
  %2013 = vmatprep.subr.mxu0 0.0
  %2014 = vmatpush1.msra.mxu0 0.0
  %2015 = vmatprep.subr.mxu0 0.0
  %2016 = vmatpush1.msra.mxu0 0.0
  %2017 = vmatprep.subr.mxu0 0.0
  %2018 = vmatpush1.msra.mxu0 0.0
  %2019 = vmatprep.subr.mxu0 0.0
  %2020 = vmatpush1.msra.mxu0 0.0
  %2021 = vmatprep.mubr.f32.mxu0 0.0
  %2022 = vmatmul.mubr.f32.gmra.mrb[0].mxu0 %v1708
  %v2023 = vpop.f32.mrb[0].mxu0
  %v2024 = vadd.f32 0.0, %v2023
  %v2025 = vpop.f32.mrb[0].mxu0
  %v2026 = vadd.f32 0.0, %v2025
  %2027 = vdwg.mxu0
  %2028 = vmatprep.subr.mxu0 %v93
  %2029 = vmatpush1.msra.mxu0 %v92
  %2030 = vmatprep.subr.mxu0 %v97
  %2031 = vmatpush1.msra.mxu0 %v96
  %2032 = vmatprep.subr.mxu0 %v101
  %2033 = vmatpush1.msra.mxu0 %v100
  %2034 = vmatprep.subr.mxu0 %v105
  %2035 = vmatpush1.msra.mxu0 %v104
  %2036 = vmatprep.subr.mxu0 %v109
  %2037 = vmatpush1.msra.mxu0 %v108
  %2038 = vmatprep.subr.mxu0 %v113
  %2039 = vmatpush1.msra.mxu0 %v112
  %2040 = vmatprep.subr.mxu0 %v117
  %2041 = vmatpush1.msra.mxu0 %v116
  %2042 = vmatprep.subr.mxu0 %v121
  %2043 = vmatpush1.msra.mxu0 %v120
  %2044 = vmatprep.subr.mxu0 %v125
  %2045 = vmatpush1.msra.mxu0 %v124
  %2046 = vmatprep.subr.mxu0 %v129
  %2047 = vmatpush1.msra.mxu0 %v128
  %2048 = vmatprep.subr.mxu0 %v133
  %2049 = vmatpush1.msra.mxu0 %v132
  %2050 = vmatprep.subr.mxu0 %v137
  %2051 = vmatpush1.msra.mxu0 %v136
  %2052 = vmatprep.subr.mxu0 %v141
  %2053 = vmatpush1.msra.mxu0 %v140
  %2054 = vmatprep.subr.mxu0 %v145
  %2055 = vmatpush1.msra.mxu0 %v144
  %2056 = vmatprep.subr.mxu0 %v149
  %2057 = vmatpush1.msra.mxu0 %v148
  %2058 = vmatprep.subr.mxu0 %v153
  %2059 = vmatpush1.msra.mxu0 %v152
  %2060 = vmatprep.subr.mxu0 0.0
  %2061 = vmatpush1.msra.mxu0 0.0
  %2062 = vmatprep.subr.mxu0 0.0
  %2063 = vmatpush1.msra.mxu0 0.0
  %2064 = vmatprep.subr.mxu0 0.0
  %2065 = vmatpush1.msra.mxu0 0.0
  %2066 = vmatprep.subr.mxu0 0.0
  %2067 = vmatpush1.msra.mxu0 0.0
  %2068 = vmatprep.subr.mxu0 0.0
  %2069 = vmatpush1.msra.mxu0 0.0
  %2070 = vmatprep.subr.mxu0 0.0
  %2071 = vmatpush1.msra.mxu0 0.0
  %2072 = vmatprep.subr.mxu0 0.0
  %2073 = vmatpush1.msra.mxu0 0.0
  %2074 = vmatprep.subr.mxu0 0.0
  %2075 = vmatpush1.msra.mxu0 0.0
  %2076 = vmatprep.subr.mxu0 0.0
  %2077 = vmatpush1.msra.mxu0 0.0
  %2078 = vmatprep.subr.mxu0 0.0
  %2079 = vmatpush1.msra.mxu0 0.0
  %2080 = vmatprep.subr.mxu0 0.0
  %2081 = vmatpush1.msra.mxu0 0.0
  %2082 = vmatprep.subr.mxu0 0.0
  %2083 = vmatpush1.msra.mxu0 0.0
  %2084 = vmatprep.subr.mxu0 0.0
  %2085 = vmatpush1.msra.mxu0 0.0
  %2086 = vmatprep.subr.mxu0 0.0
  %2087 = vmatpush1.msra.mxu0 0.0
  %2088 = vmatprep.subr.mxu0 0.0
  %2089 = vmatpush1.msra.mxu0 0.0
  %2090 = vmatprep.subr.mxu0 0.0
  %2091 = vmatpush1.msra.mxu0 0.0
  %2092 = vmatprep.mubr.f32.mxu0 0.0
  %2093 = vmatmul.mubr.f32.gmra.mrb[0].mxu0 %v1885
  %v2094 = vpop.f32.mrb[0].mxu0
  %v2095 = vadd.f32 %v1953, %v2094
  %v2096 = vpop.f32.mrb[0].mxu0
  %v2097 = vadd.f32 %v1955, %v2096
  %2098 = vdwg.mxu0
  %2099 = vmatprep.subr.mxu0 %v95
  %2100 = vmatpush1.msra.mxu0 %v94
  %2101 = vmatprep.subr.mxu0 %v99
  %2102 = vmatpush1.msra.mxu0 %v98
  %2103 = vmatprep.subr.mxu0 %v103
  %2104 = vmatpush1.msra.mxu0 %v102
  %2105 = vmatprep.subr.mxu0 %v107
  %2106 = vmatpush1.msra.mxu0 %v106
  %2107 = vmatprep.subr.mxu0 %v111
  %2108 = vmatpush1.msra.mxu0 %v110
  %2109 = vmatprep.subr.mxu0 %v115
  %2110 = vmatpush1.msra.mxu0 %v114
  %2111 = vmatprep.subr.mxu0 %v119
  %2112 = vmatpush1.msra.mxu0 %v118
  %2113 = vmatprep.subr.mxu0 %v123
  %2114 = vmatpush1.msra.mxu0 %v122
  %2115 = vmatprep.subr.mxu0 %v127
  %2116 = vmatpush1.msra.mxu0 %v126
  %2117 = vmatprep.subr.mxu0 %v131
  %2118 = vmatpush1.msra.mxu0 %v130
  %2119 = vmatprep.subr.mxu0 %v135
  %2120 = vmatpush1.msra.mxu0 %v134
  %2121 = vmatprep.subr.mxu0 %v139
  %2122 = vmatpush1.msra.mxu0 %v138
  %2123 = vmatprep.subr.mxu0 %v143
  %2124 = vmatpush1.msra.mxu0 %v142
  %2125 = vmatprep.subr.mxu0 %v147
  %2126 = vmatpush1.msra.mxu0 %v146
  %2127 = vmatprep.subr.mxu0 %v151
  %2128 = vmatpush1.msra.mxu0 %v150
  %2129 = vmatprep.subr.mxu0 %v155
  %2130 = vmatpush1.msra.mxu0 %v154
  %2131 = vmatprep.subr.mxu0 0.0
  %2132 = vmatpush1.msra.mxu0 0.0
  %2133 = vmatprep.subr.mxu0 0.0
  %2134 = vmatpush1.msra.mxu0 0.0
  %2135 = vmatprep.subr.mxu0 0.0
  %2136 = vmatpush1.msra.mxu0 0.0
  %2137 = vmatprep.subr.mxu0 0.0
  %2138 = vmatpush1.msra.mxu0 0.0
  %2139 = vmatprep.subr.mxu0 0.0
  %2140 = vmatpush1.msra.mxu0 0.0
  %2141 = vmatprep.subr.mxu0 0.0
  %2142 = vmatpush1.msra.mxu0 0.0
  %2143 = vmatprep.subr.mxu0 0.0
  %2144 = vmatpush1.msra.mxu0 0.0
  %2145 = vmatprep.subr.mxu0 0.0
  %2146 = vmatpush1.msra.mxu0 0.0
  %2147 = vmatprep.subr.mxu0 0.0
  %2148 = vmatpush1.msra.mxu0 0.0
  %2149 = vmatprep.subr.mxu0 0.0
  %2150 = vmatpush1.msra.mxu0 0.0
  %2151 = vmatprep.subr.mxu0 0.0
  %2152 = vmatpush1.msra.mxu0 0.0
  %2153 = vmatprep.subr.mxu0 0.0
  %2154 = vmatpush1.msra.mxu0 0.0
  %2155 = vmatprep.subr.mxu0 0.0
  %2156 = vmatpush1.msra.mxu0 0.0
  %2157 = vmatprep.subr.mxu0 0.0
  %2158 = vmatpush1.msra.mxu0 0.0
  %2159 = vmatprep.subr.mxu0 0.0
  %2160 = vmatpush1.msra.mxu0 0.0
  %2161 = vmatprep.subr.mxu0 0.0
  %2162 = vmatpush1.msra.mxu0 0.0
  %2163 = vmatprep.mubr.f32.mxu0 0.0
  %2164 = vmatmul.mubr.f32.gmra.mrb[0].mxu0 %v1885
  %v2165 = vpop.f32.mrb[0].mxu0
  %v2166 = vadd.f32 %v2024, %v2165
  %v2167 = vpop.f32.mrb[0].mxu0
  %v2168 = vadd.f32 %v2026, %v2167
  %2169 = vdwg.mxu0
  %v2170 = vadd.f32 %v2095, %v687
  %v2171 = vadd.f32 %v2097, %v691
  %v2172 = vadd.f32 %v2166, %v695
  %v2173 = vadd.f32 %v2168, %v699
  %v2174 = vxor.u32 %v2170, 2147483648
  %v2175 = vmul.f32 %v2174, 1.442695
  %v2176 = vpow.pop %v2175
  %v2177 = vadd.f32 %v2176, 1.0
  %v2178 = vrcp.pop %v2177
  %v2179 = vmul.f32 1.0, %v2178
  %v2180 = vxor.u32 %v2171, 2147483648
  %v2181 = vmul.f32 %v2180, 1.442695
  %v2182 = vpow.pop %v2181
  %v2183 = vadd.f32 %v2182, 1.0
  %v2184 = vrcp.pop %v2183
  %v2185 = vmul.f32 1.0, %v2184
  %v2186 = vtanh.pop %v2172
  %v2187 = vxor.u32 %v2173, 2147483648
  %v2188 = vmul.f32 %v2187, 1.442695
  %v2189 = vpow.pop %v2188
  %v2190 = vadd.f32 %v2189, 1.0
  %v2191 = vrcp.pop %v2190
  %v2192 = vmul.f32 1.0, %v2191
  %v2193 = vmul.f32 %v2185, %v1706
  %v2194 = vmul.f32 %v2179, %v2186
  %v2195 = vadd.f32 %v2193, %v2194
  %v2196 = vtanh.pop %v2195
  %v2197 = vmul.f32 %v2192, %v2196
  %s2198 = scalar_lea.vmem %s5, 24
  %2199 = vst [vmem:[%s2198] sm:$0xff] %v2197
  %s2200 = scalar_lea.vmem %s0, 128
  %v2201 = vld [vmem:[%s2200] sm:$0xff]
  %v2202 = vld [vmem:[%s2200 + $0x8] sm:$0xff]
  %v2203 = vld [vmem:[%s2200 + $0x10] sm:$0xff]
  %v2204 = vld [vmem:[%s2200 + $0x18] sm:$0xff]
  %2205 = vmatprep.subr.mxu0 %v29
  %2206 = vmatpush1.msra.mxu0 %v28
  %2207 = vmatprep.subr.mxu0 %v33
  %2208 = vmatpush1.msra.mxu0 %v32
  %2209 = vmatprep.subr.mxu0 %v37
  %2210 = vmatpush1.msra.mxu0 %v36
  %2211 = vmatprep.subr.mxu0 %v41
  %2212 = vmatpush1.msra.mxu0 %v40
  %2213 = vmatprep.subr.mxu0 %v45
  %2214 = vmatpush1.msra.mxu0 %v44
  %2215 = vmatprep.subr.mxu0 %v49
  %2216 = vmatpush1.msra.mxu0 %v48
  %2217 = vmatprep.subr.mxu0 %v53
  %2218 = vmatpush1.msra.mxu0 %v52
  %2219 = vmatprep.subr.mxu0 %v57
  %2220 = vmatpush1.msra.mxu0 %v56
  %2221 = vmatprep.subr.mxu0 %v61
  %2222 = vmatpush1.msra.mxu0 %v60
  %2223 = vmatprep.subr.mxu0 %v65
  %2224 = vmatpush1.msra.mxu0 %v64
  %2225 = vmatprep.subr.mxu0 %v69
  %2226 = vmatpush1.msra.mxu0 %v68
  %2227 = vmatprep.subr.mxu0 %v73
  %2228 = vmatpush1.msra.mxu0 %v72
  %2229 = vmatprep.subr.mxu0 %v77
  %2230 = vmatpush1.msra.mxu0 %v76
  %2231 = vmatprep.subr.mxu0 %v81
  %2232 = vmatpush1.msra.mxu0 %v80
  %2233 = vmatprep.subr.mxu0 %v85
  %2234 = vmatpush1.msra.mxu0 %v84
  %2235 = vmatprep.subr.mxu0 %v89
  %2236 = vmatpush1.msra.mxu0 %v88
  %2237 = vmatprep.subr.mxu0 0.0
  %2238 = vmatpush1.msra.mxu0 0.0
  %2239 = vmatprep.subr.mxu0 0.0
  %2240 = vmatpush1.msra.mxu0 0.0
  %2241 = vmatprep.subr.mxu0 0.0
  %2242 = vmatpush1.msra.mxu0 0.0
  %2243 = vmatprep.subr.mxu0 0.0
  %2244 = vmatpush1.msra.mxu0 0.0
  %2245 = vmatprep.subr.mxu0 0.0
  %2246 = vmatpush1.msra.mxu0 0.0
  %2247 = vmatprep.subr.mxu0 0.0
  %2248 = vmatpush1.msra.mxu0 0.0
  %2249 = vmatprep.subr.mxu0 0.0
  %2250 = vmatpush1.msra.mxu0 0.0
  %2251 = vmatprep.subr.mxu0 0.0
  %2252 = vmatpush1.msra.mxu0 0.0
  %2253 = vmatprep.subr.mxu0 0.0
  %2254 = vmatpush1.msra.mxu0 0.0
  %2255 = vmatprep.subr.mxu0 0.0
  %2256 = vmatpush1.msra.mxu0 0.0
  %2257 = vmatprep.subr.mxu0 0.0
  %2258 = vmatpush1.msra.mxu0 0.0
  %2259 = vmatprep.subr.mxu0 0.0
  %2260 = vmatpush1.msra.mxu0 0.0
  %2261 = vmatprep.subr.mxu0 0.0
  %2262 = vmatpush1.msra.mxu0 0.0
  %2263 = vmatprep.subr.mxu0 0.0
  %2264 = vmatpush1.msra.mxu0 0.0
  %2265 = vmatprep.subr.mxu0 0.0
  %2266 = vmatpush1.msra.mxu0 0.0
  %2267 = vmatprep.subr.mxu0 0.0
  %2268 = vmatpush1.msra.mxu0 0.0
  %2269 = vmatprep.mubr.f32.mxu0 0.0
  %2270 = vmatmul.mubr.f32.gmra.mrb[0].mxu0 %v1885
  %v2271 = vpop.f32.mrb[0].mxu0
  %v2272 = vadd.f32 0.0, %v2271
  %v2273 = vpop.f32.mrb[0].mxu0
  %v2274 = vadd.f32 0.0, %v2273
  %2275 = vdwg.mxu0
  %2276 = vmatprep.subr.mxu0 %v31
  %2277 = vmatpush1.msra.mxu0 %v30
  %2278 = vmatprep.subr.mxu0 %v35
  %2279 = vmatpush1.msra.mxu0 %v34
  %2280 = vmatprep.subr.mxu0 %v39
  %2281 = vmatpush1.msra.mxu0 %v38
  %2282 = vmatprep.subr.mxu0 %v43
  %2283 = vmatpush1.msra.mxu0 %v42
  %2284 = vmatprep.subr.mxu0 %v47
  %2285 = vmatpush1.msra.mxu0 %v46
  %2286 = vmatprep.subr.mxu0 %v51
  %2287 = vmatpush1.msra.mxu0 %v50
  %2288 = vmatprep.subr.mxu0 %v55
  %2289 = vmatpush1.msra.mxu0 %v54
  %2290 = vmatprep.subr.mxu0 %v59
  %2291 = vmatpush1.msra.mxu0 %v58
  %2292 = vmatprep.subr.mxu0 %v63
  %2293 = vmatpush1.msra.mxu0 %v62
  %2294 = vmatprep.subr.mxu0 %v67
  %2295 = vmatpush1.msra.mxu0 %v66
  %2296 = vmatprep.subr.mxu0 %v71
  %2297 = vmatpush1.msra.mxu0 %v70
  %2298 = vmatprep.subr.mxu0 %v75
  %2299 = vmatpush1.msra.mxu0 %v74
  %2300 = vmatprep.subr.mxu0 %v79
  %2301 = vmatpush1.msra.mxu0 %v78
  %2302 = vmatprep.subr.mxu0 %v83
  %2303 = vmatpush1.msra.mxu0 %v82
  %2304 = vmatprep.subr.mxu0 %v87
  %2305 = vmatpush1.msra.mxu0 %v86
  %2306 = vmatprep.subr.mxu0 %v91
  %2307 = vmatpush1.msra.mxu0 %v90
  %2308 = vmatprep.subr.mxu0 0.0
  %2309 = vmatpush1.msra.mxu0 0.0
  %2310 = vmatprep.subr.mxu0 0.0
  %2311 = vmatpush1.msra.mxu0 0.0
  %2312 = vmatprep.subr.mxu0 0.0
  %2313 = vmatpush1.msra.mxu0 0.0
  %2314 = vmatprep.subr.mxu0 0.0
  %2315 = vmatpush1.msra.mxu0 0.0
  %2316 = vmatprep.subr.mxu0 0.0
  %2317 = vmatpush1.msra.mxu0 0.0
  %2318 = vmatprep.subr.mxu0 0.0
  %2319 = vmatpush1.msra.mxu0 0.0
  %2320 = vmatprep.subr.mxu0 0.0
  %2321 = vmatpush1.msra.mxu0 0.0
  %2322 = vmatprep.subr.mxu0 0.0
  %2323 = vmatpush1.msra.mxu0 0.0
  %2324 = vmatprep.subr.mxu0 0.0
  %2325 = vmatpush1.msra.mxu0 0.0
  %2326 = vmatprep.subr.mxu0 0.0
  %2327 = vmatpush1.msra.mxu0 0.0
  %2328 = vmatprep.subr.mxu0 0.0
  %2329 = vmatpush1.msra.mxu0 0.0
  %2330 = vmatprep.subr.mxu0 0.0
  %2331 = vmatpush1.msra.mxu0 0.0
  %2332 = vmatprep.subr.mxu0 0.0
  %2333 = vmatpush1.msra.mxu0 0.0
  %2334 = vmatprep.subr.mxu0 0.0
  %2335 = vmatpush1.msra.mxu0 0.0
  %2336 = vmatprep.subr.mxu0 0.0
  %2337 = vmatpush1.msra.mxu0 0.0
  %2338 = vmatprep.subr.mxu0 0.0
  %2339 = vmatpush1.msra.mxu0 0.0
  %2340 = vmatprep.mubr.f32.mxu0 0.0
  %2341 = vmatmul.mubr.f32.gmra.mrb[0].mxu0 %v1885
  %v2342 = vpop.f32.mrb[0].mxu0
  %v2343 = vadd.f32 0.0, %v2342
  %v2344 = vpop.f32.mrb[0].mxu0
  %v2345 = vadd.f32 0.0, %v2344
  %2346 = vdwg.mxu0
  %v2347 = vadd.f32 %v2201, %v2272
  %v2348 = vadd.f32 %v2202, %v2274
  %v2349 = vadd.f32 %v2203, %v2343
  %v2350 = vadd.f32 %v2204, %v2345
  %v2351 = vxor.u32 %v2347, 2147483648
  %v2352 = vmul.f32 %v2351, 1.442695
  %v2353 = vpow.pop %v2352
  %v2354 = vadd.f32 %v2353, 1.0
  %v2355 = vrcp.pop %v2354
  %v2356 = vmul.f32 1.0, %v2355
  %v2357 = vxor.u32 %v2348, 2147483648
  %v2358 = vmul.f32 %v2357, 1.442695
  %v2359 = vpow.pop %v2358
  %v2360 = vadd.f32 %v2359, 1.0
  %v2361 = vrcp.pop %v2360
  %v2362 = vmul.f32 1.0, %v2361
  %v2363 = vtanh.pop %v2349
  %v2364 = vxor.u32 %v2350, 2147483648
  %v2365 = vmul.f32 %v2364, 1.442695
  %v2366 = vpow.pop %v2365
  %v2367 = vadd.f32 %v2366, 1.0
  %v2368 = vrcp.pop %v2367
  %v2369 = vmul.f32 1.0, %v2368
  %v2370 = vmul.f32 %v2362, %v1883
  %v2371 = vmul.f32 %v2356, %v2363
  %v2372 = vadd.f32 %v2370, %v2371
  %v2373 = vtanh.pop %v2372
  %v2374 = vmul.f32 %v2369, %v2373
  %2375 = vmatprep.subr.mxu0 %v157
  %2376 = vmatpush1.msra.mxu0 %v156
  %2377 = vmatprep.subr.mxu0 %v161
  %2378 = vmatpush1.msra.mxu0 %v160
  %2379 = vmatprep.subr.mxu0 %v165
  %2380 = vmatpush1.msra.mxu0 %v164
  %2381 = vmatprep.subr.mxu0 %v169
  %2382 = vmatpush1.msra.mxu0 %v168
  %2383 = vmatprep.subr.mxu0 %v173
  %2384 = vmatpush1.msra.mxu0 %v172
  %2385 = vmatprep.subr.mxu0 %v177
  %2386 = vmatpush1.msra.mxu0 %v176
  %2387 = vmatprep.subr.mxu0 %v181
  %2388 = vmatpush1.msra.mxu0 %v180
  %2389 = vmatprep.subr.mxu0 %v185
  %2390 = vmatpush1.msra.mxu0 %v184
  %2391 = vmatprep.subr.mxu0 %v189
  %2392 = vmatpush1.msra.mxu0 %v188
  %2393 = vmatprep.subr.mxu0 %v193
  %2394 = vmatpush1.msra.mxu0 %v192
  %2395 = vmatprep.subr.mxu0 %v197
  %2396 = vmatpush1.msra.mxu0 %v196
  %2397 = vmatprep.subr.mxu0 %v201
  %2398 = vmatpush1.msra.mxu0 %v200
  %2399 = vmatprep.subr.mxu0 %v205
  %2400 = vmatpush1.msra.mxu0 %v204
  %2401 = vmatprep.subr.mxu0 %v209
  %2402 = vmatpush1.msra.mxu0 %v208
  %2403 = vmatprep.subr.mxu0 %v213
  %2404 = vmatpush1.msra.mxu0 %v212
  %2405 = vmatprep.subr.mxu0 %v217
  %2406 = vmatpush1.msra.mxu0 %v216
  %2407 = vmatprep.subr.mxu0 0.0
  %2408 = vmatpush1.msra.mxu0 0.0
  %2409 = vmatprep.subr.mxu0 0.0
  %2410 = vmatpush1.msra.mxu0 0.0
  %2411 = vmatprep.subr.mxu0 0.0
  %2412 = vmatpush1.msra.mxu0 0.0
  %2413 = vmatprep.subr.mxu0 0.0
  %2414 = vmatpush1.msra.mxu0 0.0
  %2415 = vmatprep.subr.mxu0 0.0
  %2416 = vmatpush1.msra.mxu0 0.0
  %2417 = vmatprep.subr.mxu0 0.0
  %2418 = vmatpush1.msra.mxu0 0.0
  %2419 = vmatprep.subr.mxu0 0.0
  %2420 = vmatpush1.msra.mxu0 0.0
  %2421 = vmatprep.subr.mxu0 0.0
  %2422 = vmatpush1.msra.mxu0 0.0
  %2423 = vmatprep.subr.mxu0 0.0
  %2424 = vmatpush1.msra.mxu0 0.0
  %2425 = vmatprep.subr.mxu0 0.0
  %2426 = vmatpush1.msra.mxu0 0.0
  %2427 = vmatprep.subr.mxu0 0.0
  %2428 = vmatpush1.msra.mxu0 0.0
  %2429 = vmatprep.subr.mxu0 0.0
  %2430 = vmatpush1.msra.mxu0 0.0
  %2431 = vmatprep.subr.mxu0 0.0
  %2432 = vmatpush1.msra.mxu0 0.0
  %2433 = vmatprep.subr.mxu0 0.0
  %2434 = vmatpush1.msra.mxu0 0.0
  %2435 = vmatprep.subr.mxu0 0.0
  %2436 = vmatpush1.msra.mxu0 0.0
  %2437 = vmatprep.subr.mxu0 0.0
  %2438 = vmatpush1.msra.mxu0 0.0
  %2439 = vmatprep.mubr.f32.mxu0 0.0
  %2440 = vmatmul.mubr.f32.gmra.mrb[0].mxu0 %v2197
  %v2441 = vpop.f32.mrb[0].mxu0
  %v2442 = vadd.f32 0.0, %v2441
  %v2443 = vpop.f32.mrb[0].mxu0
  %v2444 = vadd.f32 0.0, %v2443
  %2445 = vdwg.mxu0
  %2446 = vmatprep.subr.mxu0 %v159
  %2447 = vmatpush1.msra.mxu0 %v158
  %2448 = vmatprep.subr.mxu0 %v163
  %2449 = vmatpush1.msra.mxu0 %v162
  %2450 = vmatprep.subr.mxu0 %v167
  %2451 = vmatpush1.msra.mxu0 %v166
  %2452 = vmatprep.subr.mxu0 %v171
  %2453 = vmatpush1.msra.mxu0 %v170
  %2454 = vmatprep.subr.mxu0 %v175
  %2455 = vmatpush1.msra.mxu0 %v174
  %2456 = vmatprep.subr.mxu0 %v179
  %2457 = vmatpush1.msra.mxu0 %v178
  %2458 = vmatprep.subr.mxu0 %v183
  %2459 = vmatpush1.msra.mxu0 %v182
  %2460 = vmatprep.subr.mxu0 %v187
  %2461 = vmatpush1.msra.mxu0 %v186
  %2462 = vmatprep.subr.mxu0 %v191
  %2463 = vmatpush1.msra.mxu0 %v190
  %2464 = vmatprep.subr.mxu0 %v195
  %2465 = vmatpush1.msra.mxu0 %v194
  %2466 = vmatprep.subr.mxu0 %v199
  %2467 = vmatpush1.msra.mxu0 %v198
  %2468 = vmatprep.subr.mxu0 %v203
  %2469 = vmatpush1.msra.mxu0 %v202
  %2470 = vmatprep.subr.mxu0 %v207
  %2471 = vmatpush1.msra.mxu0 %v206
  %2472 = vmatprep.subr.mxu0 %v211
  %2473 = vmatpush1.msra.mxu0 %v210
  %2474 = vmatprep.subr.mxu0 %v215
  %2475 = vmatpush1.msra.mxu0 %v214
  %2476 = vmatprep.subr.mxu0 %v219
  %2477 = vmatpush1.msra.mxu0 %v218
  %2478 = vmatprep.subr.mxu0 0.0
  %2479 = vmatpush1.msra.mxu0 0.0
  %2480 = vmatprep.subr.mxu0 0.0
  %2481 = vmatpush1.msra.mxu0 0.0
  %2482 = vmatprep.subr.mxu0 0.0
  %2483 = vmatpush1.msra.mxu0 0.0
  %2484 = vmatprep.subr.mxu0 0.0
  %2485 = vmatpush1.msra.mxu0 0.0
  %2486 = vmatprep.subr.mxu0 0.0
  %2487 = vmatpush1.msra.mxu0 0.0
  %2488 = vmatprep.subr.mxu0 0.0
  %2489 = vmatpush1.msra.mxu0 0.0
  %2490 = vmatprep.subr.mxu0 0.0
  %2491 = vmatpush1.msra.mxu0 0.0
  %2492 = vmatprep.subr.mxu0 0.0
  %2493 = vmatpush1.msra.mxu0 0.0
  %2494 = vmatprep.subr.mxu0 0.0
  %2495 = vmatpush1.msra.mxu0 0.0
  %2496 = vmatprep.subr.mxu0 0.0
  %2497 = vmatpush1.msra.mxu0 0.0
  %2498 = vmatprep.subr.mxu0 0.0
  %2499 = vmatpush1.msra.mxu0 0.0
  %2500 = vmatprep.subr.mxu0 0.0
  %2501 = vmatpush1.msra.mxu0 0.0
  %2502 = vmatprep.subr.mxu0 0.0
  %2503 = vmatpush1.msra.mxu0 0.0
  %2504 = vmatprep.subr.mxu0 0.0
  %2505 = vmatpush1.msra.mxu0 0.0
  %2506 = vmatprep.subr.mxu0 0.0
  %2507 = vmatpush1.msra.mxu0 0.0
  %2508 = vmatprep.subr.mxu0 0.0
  %2509 = vmatpush1.msra.mxu0 0.0
  %2510 = vmatprep.mubr.f32.mxu0 0.0
  %2511 = vmatmul.mubr.f32.gmra.mrb[0].mxu0 %v2197
  %v2512 = vpop.f32.mrb[0].mxu0
  %v2513 = vadd.f32 0.0, %v2512
  %v2514 = vpop.f32.mrb[0].mxu0
  %v2515 = vadd.f32 0.0, %v2514
  %2516 = vdwg.mxu0
  %2517 = vmatprep.subr.mxu0 %v93
  %2518 = vmatpush1.msra.mxu0 %v92
  %2519 = vmatprep.subr.mxu0 %v97
  %2520 = vmatpush1.msra.mxu0 %v96
  %2521 = vmatprep.subr.mxu0 %v101
  %2522 = vmatpush1.msra.mxu0 %v100
  %2523 = vmatprep.subr.mxu0 %v105
  %2524 = vmatpush1.msra.mxu0 %v104
  %2525 = vmatprep.subr.mxu0 %v109
  %2526 = vmatpush1.msra.mxu0 %v108
  %2527 = vmatprep.subr.mxu0 %v113
  %2528 = vmatpush1.msra.mxu0 %v112
  %2529 = vmatprep.subr.mxu0 %v117
  %2530 = vmatpush1.msra.mxu0 %v116
  %2531 = vmatprep.subr.mxu0 %v121
  %2532 = vmatpush1.msra.mxu0 %v120
  %2533 = vmatprep.subr.mxu0 %v125
  %2534 = vmatpush1.msra.mxu0 %v124
  %2535 = vmatprep.subr.mxu0 %v129
  %2536 = vmatpush1.msra.mxu0 %v128
  %2537 = vmatprep.subr.mxu0 %v133
  %2538 = vmatpush1.msra.mxu0 %v132
  %2539 = vmatprep.subr.mxu0 %v137
  %2540 = vmatpush1.msra.mxu0 %v136
  %2541 = vmatprep.subr.mxu0 %v141
  %2542 = vmatpush1.msra.mxu0 %v140
  %2543 = vmatprep.subr.mxu0 %v145
  %2544 = vmatpush1.msra.mxu0 %v144
  %2545 = vmatprep.subr.mxu0 %v149
  %2546 = vmatpush1.msra.mxu0 %v148
  %2547 = vmatprep.subr.mxu0 %v153
  %2548 = vmatpush1.msra.mxu0 %v152
  %2549 = vmatprep.subr.mxu0 0.0
  %2550 = vmatpush1.msra.mxu0 0.0
  %2551 = vmatprep.subr.mxu0 0.0
  %2552 = vmatpush1.msra.mxu0 0.0
  %2553 = vmatprep.subr.mxu0 0.0
  %2554 = vmatpush1.msra.mxu0 0.0
  %2555 = vmatprep.subr.mxu0 0.0
  %2556 = vmatpush1.msra.mxu0 0.0
  %2557 = vmatprep.subr.mxu0 0.0
  %2558 = vmatpush1.msra.mxu0 0.0
  %2559 = vmatprep.subr.mxu0 0.0
  %2560 = vmatpush1.msra.mxu0 0.0
  %2561 = vmatprep.subr.mxu0 0.0
  %2562 = vmatpush1.msra.mxu0 0.0
  %2563 = vmatprep.subr.mxu0 0.0
  %2564 = vmatpush1.msra.mxu0 0.0
  %2565 = vmatprep.subr.mxu0 0.0
  %2566 = vmatpush1.msra.mxu0 0.0
  %2567 = vmatprep.subr.mxu0 0.0
  %2568 = vmatpush1.msra.mxu0 0.0
  %2569 = vmatprep.subr.mxu0 0.0
  %2570 = vmatpush1.msra.mxu0 0.0
  %2571 = vmatprep.subr.mxu0 0.0
  %2572 = vmatpush1.msra.mxu0 0.0
  %2573 = vmatprep.subr.mxu0 0.0
  %2574 = vmatpush1.msra.mxu0 0.0
  %2575 = vmatprep.subr.mxu0 0.0
  %2576 = vmatpush1.msra.mxu0 0.0
  %2577 = vmatprep.subr.mxu0 0.0
  %2578 = vmatpush1.msra.mxu0 0.0
  %2579 = vmatprep.subr.mxu0 0.0
  %2580 = vmatpush1.msra.mxu0 0.0
  %2581 = vmatprep.mubr.f32.mxu0 0.0
  %2582 = vmatmul.mubr.f32.gmra.mrb[0].mxu0 %v2374
  %v2583 = vpop.f32.mrb[0].mxu0
  %v2584 = vadd.f32 %v2442, %v2583
  %v2585 = vpop.f32.mrb[0].mxu0
  %v2586 = vadd.f32 %v2444, %v2585
  %2587 = vdwg.mxu0
  %2588 = vmatprep.subr.mxu0 %v95
  %2589 = vmatpush1.msra.mxu0 %v94
  %2590 = vmatprep.subr.mxu0 %v99
  %2591 = vmatpush1.msra.mxu0 %v98
  %2592 = vmatprep.subr.mxu0 %v103
  %2593 = vmatpush1.msra.mxu0 %v102
  %2594 = vmatprep.subr.mxu0 %v107
  %2595 = vmatpush1.msra.mxu0 %v106
  %2596 = vmatprep.subr.mxu0 %v111
  %2597 = vmatpush1.msra.mxu0 %v110
  %2598 = vmatprep.subr.mxu0 %v115
  %2599 = vmatpush1.msra.mxu0 %v114
  %2600 = vmatprep.subr.mxu0 %v119
  %2601 = vmatpush1.msra.mxu0 %v118
  %2602 = vmatprep.subr.mxu0 %v123
  %2603 = vmatpush1.msra.mxu0 %v122
  %2604 = vmatprep.subr.mxu0 %v127
  %2605 = vmatpush1.msra.mxu0 %v126
  %2606 = vmatprep.subr.mxu0 %v131
  %2607 = vmatpush1.msra.mxu0 %v130
  %2608 = vmatprep.subr.mxu0 %v135
  %2609 = vmatpush1.msra.mxu0 %v134
  %2610 = vmatprep.subr.mxu0 %v139
  %2611 = vmatpush1.msra.mxu0 %v138
  %2612 = vmatprep.subr.mxu0 %v143
  %2613 = vmatpush1.msra.mxu0 %v142
  %2614 = vmatprep.subr.mxu0 %v147
  %2615 = vmatpush1.msra.mxu0 %v146
  %2616 = vmatprep.subr.mxu0 %v151
  %2617 = vmatpush1.msra.mxu0 %v150
  %2618 = vmatprep.subr.mxu0 %v155
  %2619 = vmatpush1.msra.mxu0 %v154
  %2620 = vmatprep.subr.mxu0 0.0
  %2621 = vmatpush1.msra.mxu0 0.0
  %2622 = vmatprep.subr.mxu0 0.0
  %2623 = vmatpush1.msra.mxu0 0.0
  %2624 = vmatprep.subr.mxu0 0.0
  %2625 = vmatpush1.msra.mxu0 0.0
  %2626 = vmatprep.subr.mxu0 0.0
  %2627 = vmatpush1.msra.mxu0 0.0
  %2628 = vmatprep.subr.mxu0 0.0
  %2629 = vmatpush1.msra.mxu0 0.0
  %2630 = vmatprep.subr.mxu0 0.0
  %2631 = vmatpush1.msra.mxu0 0.0
  %2632 = vmatprep.subr.mxu0 0.0
  %2633 = vmatpush1.msra.mxu0 0.0
  %2634 = vmatprep.subr.mxu0 0.0
  %2635 = vmatpush1.msra.mxu0 0.0
  %2636 = vmatprep.subr.mxu0 0.0
  %2637 = vmatpush1.msra.mxu0 0.0
  %2638 = vmatprep.subr.mxu0 0.0
  %2639 = vmatpush1.msra.mxu0 0.0
  %2640 = vmatprep.subr.mxu0 0.0
  %2641 = vmatpush1.msra.mxu0 0.0
  %2642 = vmatprep.subr.mxu0 0.0
  %2643 = vmatpush1.msra.mxu0 0.0
  %2644 = vmatprep.subr.mxu0 0.0
  %2645 = vmatpush1.msra.mxu0 0.0
  %2646 = vmatprep.subr.mxu0 0.0
  %2647 = vmatpush1.msra.mxu0 0.0
  %2648 = vmatprep.subr.mxu0 0.0
  %2649 = vmatpush1.msra.mxu0 0.0
  %2650 = vmatprep.subr.mxu0 0.0
  %2651 = vmatpush1.msra.mxu0 0.0
  %2652 = vmatprep.mubr.f32.mxu0 0.0
  %2653 = vmatmul.mubr.f32.gmra.mrb[0].mxu0 %v2374
  %v2654 = vpop.f32.mrb[0].mxu0
  %v2655 = vadd.f32 %v2513, %v2654
  %v2656 = vpop.f32.mrb[0].mxu0
  %v2657 = vadd.f32 %v2515, %v2656
  %2658 = vdwg.mxu0
  %v2659 = vadd.f32 %v2584, %v687
  %v2660 = vadd.f32 %v2586, %v691
  %v2661 = vadd.f32 %v2655, %v695
  %v2662 = vadd.f32 %v2657, %v699
  %v2663 = vxor.u32 %v2659, 2147483648
  %v2664 = vmul.f32 %v2663, 1.442695
  %v2665 = vpow.pop %v2664
  %v2666 = vadd.f32 %v2665, 1.0
  %v2667 = vrcp.pop %v2666
  %v2668 = vmul.f32 1.0, %v2667
  %v2669 = vxor.u32 %v2660, 2147483648
  %v2670 = vmul.f32 %v2669, 1.442695
  %v2671 = vpow.pop %v2670
  %v2672 = vadd.f32 %v2671, 1.0
  %v2673 = vrcp.pop %v2672
  %v2674 = vmul.f32 1.0, %v2673
  %v2675 = vtanh.pop %v2661
  %v2676 = vxor.u32 %v2662, 2147483648
  %v2677 = vmul.f32 %v2676, 1.442695
  %v2678 = vpow.pop %v2677
  %v2679 = vadd.f32 %v2678, 1.0
  %v2680 = vrcp.pop %v2679
  %v2681 = vmul.f32 1.0, %v2680
  %v2682 = vmul.f32 %v2674, %v2195
  %v2683 = vmul.f32 %v2668, %v2675
  %v2684 = vadd.f32 %v2682, %v2683
  %v2685 = vtanh.pop %v2684
  %v2686 = vmul.f32 %v2681, %v2685
  %s2687 = scalar_lea.vmem %s5, 32
  %2688 = vst [vmem:[%s2687] sm:$0xff] %v2686
  %s2689 = scalar_lea.vmem %s0, 160
  %v2690 = vld [vmem:[%s2689] sm:$0xff]
  %v2691 = vld [vmem:[%s2689 + $0x8] sm:$0xff]
  %v2692 = vld [vmem:[%s2689 + $0x10] sm:$0xff]
  %v2693 = vld [vmem:[%s2689 + $0x18] sm:$0xff]
  %2694 = vmatprep.subr.mxu0 %v29
  %2695 = vmatpush1.msra.mxu0 %v28
  %2696 = vmatprep.subr.mxu0 %v33
  %2697 = vmatpush1.msra.mxu0 %v32
  %2698 = vmatprep.subr.mxu0 %v37
  %2699 = vmatpush1.msra.mxu0 %v36
  %2700 = vmatprep.subr.mxu0 %v41
  %2701 = vmatpush1.msra.mxu0 %v40
  %2702 = vmatprep.subr.mxu0 %v45
  %2703 = vmatpush1.msra.mxu0 %v44
  %2704 = vmatprep.subr.mxu0 %v49
  %2705 = vmatpush1.msra.mxu0 %v48
  %2706 = vmatprep.subr.mxu0 %v53
  %2707 = vmatpush1.msra.mxu0 %v52
  %2708 = vmatprep.subr.mxu0 %v57
  %2709 = vmatpush1.msra.mxu0 %v56
  %2710 = vmatprep.subr.mxu0 %v61
  %2711 = vmatpush1.msra.mxu0 %v60
  %2712 = vmatprep.subr.mxu0 %v65
  %2713 = vmatpush1.msra.mxu0 %v64
  %2714 = vmatprep.subr.mxu0 %v69
  %2715 = vmatpush1.msra.mxu0 %v68
  %2716 = vmatprep.subr.mxu0 %v73
  %2717 = vmatpush1.msra.mxu0 %v72
  %2718 = vmatprep.subr.mxu0 %v77
  %2719 = vmatpush1.msra.mxu0 %v76
  %2720 = vmatprep.subr.mxu0 %v81
  %2721 = vmatpush1.msra.mxu0 %v80
  %2722 = vmatprep.subr.mxu0 %v85
  %2723 = vmatpush1.msra.mxu0 %v84
  %2724 = vmatprep.subr.mxu0 %v89
  %2725 = vmatpush1.msra.mxu0 %v88
  %2726 = vmatprep.subr.mxu0 0.0
  %2727 = vmatpush1.msra.mxu0 0.0
  %2728 = vmatprep.subr.mxu0 0.0
  %2729 = vmatpush1.msra.mxu0 0.0
  %2730 = vmatprep.subr.mxu0 0.0
  %2731 = vmatpush1.msra.mxu0 0.0
  %2732 = vmatprep.subr.mxu0 0.0
  %2733 = vmatpush1.msra.mxu0 0.0
  %2734 = vmatprep.subr.mxu0 0.0
  %2735 = vmatpush1.msra.mxu0 0.0
  %2736 = vmatprep.subr.mxu0 0.0
  %2737 = vmatpush1.msra.mxu0 0.0
  %2738 = vmatprep.subr.mxu0 0.0
  %2739 = vmatpush1.msra.mxu0 0.0
  %2740 = vmatprep.subr.mxu0 0.0
  %2741 = vmatpush1.msra.mxu0 0.0
  %2742 = vmatprep.subr.mxu0 0.0
  %2743 = vmatpush1.msra.mxu0 0.0
  %2744 = vmatprep.subr.mxu0 0.0
  %2745 = vmatpush1.msra.mxu0 0.0
  %2746 = vmatprep.subr.mxu0 0.0
  %2747 = vmatpush1.msra.mxu0 0.0
  %2748 = vmatprep.subr.mxu0 0.0
  %2749 = vmatpush1.msra.mxu0 0.0
  %2750 = vmatprep.subr.mxu0 0.0
  %2751 = vmatpush1.msra.mxu0 0.0
  %2752 = vmatprep.subr.mxu0 0.0
  %2753 = vmatpush1.msra.mxu0 0.0
  %2754 = vmatprep.subr.mxu0 0.0
  %2755 = vmatpush1.msra.mxu0 0.0
  %2756 = vmatprep.subr.mxu0 0.0
  %2757 = vmatpush1.msra.mxu0 0.0
  %2758 = vmatprep.mubr.f32.mxu0 0.0
  %2759 = vmatmul.mubr.f32.gmra.mrb[0].mxu0 %v2374
  %v2760 = vpop.f32.mrb[0].mxu0
  %v2761 = vadd.f32 0.0, %v2760
  %v2762 = vpop.f32.mrb[0].mxu0
  %v2763 = vadd.f32 0.0, %v2762
  %2764 = vdwg.mxu0
  %2765 = vmatprep.subr.mxu0 %v31
  %2766 = vmatpush1.msra.mxu0 %v30
  %2767 = vmatprep.subr.mxu0 %v35
  %2768 = vmatpush1.msra.mxu0 %v34
  %2769 = vmatprep.subr.mxu0 %v39
  %2770 = vmatpush1.msra.mxu0 %v38
  %2771 = vmatprep.subr.mxu0 %v43
  %2772 = vmatpush1.msra.mxu0 %v42
  %2773 = vmatprep.subr.mxu0 %v47
  %2774 = vmatpush1.msra.mxu0 %v46
  %2775 = vmatprep.subr.mxu0 %v51
  %2776 = vmatpush1.msra.mxu0 %v50
  %2777 = vmatprep.subr.mxu0 %v55
  %2778 = vmatpush1.msra.mxu0 %v54
  %2779 = vmatprep.subr.mxu0 %v59
  %2780 = vmatpush1.msra.mxu0 %v58
  %2781 = vmatprep.subr.mxu0 %v63
  %2782 = vmatpush1.msra.mxu0 %v62
  %2783 = vmatprep.subr.mxu0 %v67
  %2784 = vmatpush1.msra.mxu0 %v66
  %2785 = vmatprep.subr.mxu0 %v71
  %2786 = vmatpush1.msra.mxu0 %v70
  %2787 = vmatprep.subr.mxu0 %v75
  %2788 = vmatpush1.msra.mxu0 %v74
  %2789 = vmatprep.subr.mxu0 %v79
  %2790 = vmatpush1.msra.mxu0 %v78
  %2791 = vmatprep.subr.mxu0 %v83
  %2792 = vmatpush1.msra.mxu0 %v82
  %2793 = vmatprep.subr.mxu0 %v87
  %2794 = vmatpush1.msra.mxu0 %v86
  %2795 = vmatprep.subr.mxu0 %v91
  %2796 = vmatpush1.msra.mxu0 %v90
  %2797 = vmatprep.subr.mxu0 0.0
  %2798 = vmatpush1.msra.mxu0 0.0
  %2799 = vmatprep.subr.mxu0 0.0
  %2800 = vmatpush1.msra.mxu0 0.0
  %2801 = vmatprep.subr.mxu0 0.0
  %2802 = vmatpush1.msra.mxu0 0.0
  %2803 = vmatprep.subr.mxu0 0.0
  %2804 = vmatpush1.msra.mxu0 0.0
  %2805 = vmatprep.subr.mxu0 0.0
  %2806 = vmatpush1.msra.mxu0 0.0
  %2807 = vmatprep.subr.mxu0 0.0
  %2808 = vmatpush1.msra.mxu0 0.0
  %2809 = vmatprep.subr.mxu0 0.0
  %2810 = vmatpush1.msra.mxu0 0.0
  %2811 = vmatprep.subr.mxu0 0.0
  %2812 = vmatpush1.msra.mxu0 0.0
  %2813 = vmatprep.subr.mxu0 0.0
  %2814 = vmatpush1.msra.mxu0 0.0
  %2815 = vmatprep.subr.mxu0 0.0
  %2816 = vmatpush1.msra.mxu0 0.0
  %2817 = vmatprep.subr.mxu0 0.0
  %2818 = vmatpush1.msra.mxu0 0.0
  %2819 = vmatprep.subr.mxu0 0.0
  %2820 = vmatpush1.msra.mxu0 0.0
  %2821 = vmatprep.subr.mxu0 0.0
  %2822 = vmatpush1.msra.mxu0 0.0
  %2823 = vmatprep.subr.mxu0 0.0
  %2824 = vmatpush1.msra.mxu0 0.0
  %2825 = vmatprep.subr.mxu0 0.0
  %2826 = vmatpush1.msra.mxu0 0.0
  %2827 = vmatprep.subr.mxu0 0.0
  %2828 = vmatpush1.msra.mxu0 0.0
  %2829 = vmatprep.mubr.f32.mxu0 0.0
  %2830 = vmatmul.mubr.f32.gmra.mrb[0].mxu0 %v2374
  %v2831 = vpop.f32.mrb[0].mxu0
  %v2832 = vadd.f32 0.0, %v2831
  %v2833 = vpop.f32.mrb[0].mxu0
  %v2834 = vadd.f32 0.0, %v2833
  %2835 = vdwg.mxu0
  %v2836 = vadd.f32 %v2690, %v2761
  %v2837 = vadd.f32 %v2691, %v2763
  %v2838 = vadd.f32 %v2692, %v2832
  %v2839 = vadd.f32 %v2693, %v2834
  %v2840 = vxor.u32 %v2836, 2147483648
  %v2841 = vmul.f32 %v2840, 1.442695
  %v2842 = vpow.pop %v2841
  %v2843 = vadd.f32 %v2842, 1.0
  %v2844 = vrcp.pop %v2843
  %v2845 = vmul.f32 1.0, %v2844
  %v2846 = vxor.u32 %v2837, 2147483648
  %v2847 = vmul.f32 %v2846, 1.442695
  %v2848 = vpow.pop %v2847
  %v2849 = vadd.f32 %v2848, 1.0
  %v2850 = vrcp.pop %v2849
  %v2851 = vmul.f32 1.0, %v2850
  %v2852 = vtanh.pop %v2838
  %v2853 = vxor.u32 %v2839, 2147483648
  %v2854 = vmul.f32 %v2853, 1.442695
  %v2855 = vpow.pop %v2854
  %v2856 = vadd.f32 %v2855, 1.0
  %v2857 = vrcp.pop %v2856
  %v2858 = vmul.f32 1.0, %v2857
  %v2859 = vmul.f32 %v2851, %v2372
  %v2860 = vmul.f32 %v2845, %v2852
  %v2861 = vadd.f32 %v2859, %v2860
  %v2862 = vtanh.pop %v2861
  %v2863 = vmul.f32 %v2858, %v2862
  %2864 = vmatprep.subr.mxu0 %v157
  %2865 = vmatpush1.msra.mxu0 %v156
  %2866 = vmatprep.subr.mxu0 %v161
  %2867 = vmatpush1.msra.mxu0 %v160
  %2868 = vmatprep.subr.mxu0 %v165
  %2869 = vmatpush1.msra.mxu0 %v164
  %2870 = vmatprep.subr.mxu0 %v169
  %2871 = vmatpush1.msra.mxu0 %v168
  %2872 = vmatprep.subr.mxu0 %v173
  %2873 = vmatpush1.msra.mxu0 %v172
  %2874 = vmatprep.subr.mxu0 %v177
  %2875 = vmatpush1.msra.mxu0 %v176
  %2876 = vmatprep.subr.mxu0 %v181
  %2877 = vmatpush1.msra.mxu0 %v180
  %2878 = vmatprep.subr.mxu0 %v185
  %2879 = vmatpush1.msra.mxu0 %v184
  %2880 = vmatprep.subr.mxu0 %v189
  %2881 = vmatpush1.msra.mxu0 %v188
  %2882 = vmatprep.subr.mxu0 %v193
  %2883 = vmatpush1.msra.mxu0 %v192
  %2884 = vmatprep.subr.mxu0 %v197
  %2885 = vmatpush1.msra.mxu0 %v196
  %2886 = vmatprep.subr.mxu0 %v201
  %2887 = vmatpush1.msra.mxu0 %v200
  %2888 = vmatprep.subr.mxu0 %v205
  %2889 = vmatpush1.msra.mxu0 %v204
  %2890 = vmatprep.subr.mxu0 %v209
  %2891 = vmatpush1.msra.mxu0 %v208
  %2892 = vmatprep.subr.mxu0 %v213
  %2893 = vmatpush1.msra.mxu0 %v212
  %2894 = vmatprep.subr.mxu0 %v217
  %2895 = vmatpush1.msra.mxu0 %v216
  %2896 = vmatprep.subr.mxu0 0.0
  %2897 = vmatpush1.msra.mxu0 0.0
  %2898 = vmatprep.subr.mxu0 0.0
  %2899 = vmatpush1.msra.mxu0 0.0
  %2900 = vmatprep.subr.mxu0 0.0
  %2901 = vmatpush1.msra.mxu0 0.0
  %2902 = vmatprep.subr.mxu0 0.0
  %2903 = vmatpush1.msra.mxu0 0.0
  %2904 = vmatprep.subr.mxu0 0.0
  %2905 = vmatpush1.msra.mxu0 0.0
  %2906 = vmatprep.subr.mxu0 0.0
  %2907 = vmatpush1.msra.mxu0 0.0
  %2908 = vmatprep.subr.mxu0 0.0
  %2909 = vmatpush1.msra.mxu0 0.0
  %2910 = vmatprep.subr.mxu0 0.0
  %2911 = vmatpush1.msra.mxu0 0.0
  %2912 = vmatprep.subr.mxu0 0.0
  %2913 = vmatpush1.msra.mxu0 0.0
  %2914 = vmatprep.subr.mxu0 0.0
  %2915 = vmatpush1.msra.mxu0 0.0
  %2916 = vmatprep.subr.mxu0 0.0
  %2917 = vmatpush1.msra.mxu0 0.0
  %2918 = vmatprep.subr.mxu0 0.0
  %2919 = vmatpush1.msra.mxu0 0.0
  %2920 = vmatprep.subr.mxu0 0.0
  %2921 = vmatpush1.msra.mxu0 0.0
  %2922 = vmatprep.subr.mxu0 0.0
  %2923 = vmatpush1.msra.mxu0 0.0
  %2924 = vmatprep.subr.mxu0 0.0
  %2925 = vmatpush1.msra.mxu0 0.0
  %2926 = vmatprep.subr.mxu0 0.0
  %2927 = vmatpush1.msra.mxu0 0.0
  %2928 = vmatprep.mubr.f32.mxu0 0.0
  %2929 = vmatmul.mubr.f32.gmra.mrb[0].mxu0 %v2686
  %v2930 = vpop.f32.mrb[0].mxu0
  %v2931 = vadd.f32 0.0, %v2930
  %v2932 = vpop.f32.mrb[0].mxu0
  %v2933 = vadd.f32 0.0, %v2932
  %2934 = vdwg.mxu0
  %2935 = vmatprep.subr.mxu0 %v159
  %2936 = vmatpush1.msra.mxu0 %v158
  %2937 = vmatprep.subr.mxu0 %v163
  %2938 = vmatpush1.msra.mxu0 %v162
  %2939 = vmatprep.subr.mxu0 %v167
  %2940 = vmatpush1.msra.mxu0 %v166
  %2941 = vmatprep.subr.mxu0 %v171
  %2942 = vmatpush1.msra.mxu0 %v170
  %2943 = vmatprep.subr.mxu0 %v175
  %2944 = vmatpush1.msra.mxu0 %v174
  %2945 = vmatprep.subr.mxu0 %v179
  %2946 = vmatpush1.msra.mxu0 %v178
  %2947 = vmatprep.subr.mxu0 %v183
  %2948 = vmatpush1.msra.mxu0 %v182
  %2949 = vmatprep.subr.mxu0 %v187
  %2950 = vmatpush1.msra.mxu0 %v186
  %2951 = vmatprep.subr.mxu0 %v191
  %2952 = vmatpush1.msra.mxu0 %v190
  %2953 = vmatprep.subr.mxu0 %v195
  %2954 = vmatpush1.msra.mxu0 %v194
  %2955 = vmatprep.subr.mxu0 %v199
  %2956 = vmatpush1.msra.mxu0 %v198
  %2957 = vmatprep.subr.mxu0 %v203
  %2958 = vmatpush1.msra.mxu0 %v202
  %2959 = vmatprep.subr.mxu0 %v207
  %2960 = vmatpush1.msra.mxu0 %v206
  %2961 = vmatprep.subr.mxu0 %v211
  %2962 = vmatpush1.msra.mxu0 %v210
  %2963 = vmatprep.subr.mxu0 %v215
  %2964 = vmatpush1.msra.mxu0 %v214
  %2965 = vmatprep.subr.mxu0 %v219
  %2966 = vmatpush1.msra.mxu0 %v218
  %2967 = vmatprep.subr.mxu0 0.0
  %2968 = vmatpush1.msra.mxu0 0.0
  %2969 = vmatprep.subr.mxu0 0.0
  %2970 = vmatpush1.msra.mxu0 0.0
  %2971 = vmatprep.subr.mxu0 0.0
  %2972 = vmatpush1.msra.mxu0 0.0
  %2973 = vmatprep.subr.mxu0 0.0
  %2974 = vmatpush1.msra.mxu0 0.0
  %2975 = vmatprep.subr.mxu0 0.0
  %2976 = vmatpush1.msra.mxu0 0.0
  %2977 = vmatprep.subr.mxu0 0.0
  %2978 = vmatpush1.msra.mxu0 0.0
  %2979 = vmatprep.subr.mxu0 0.0
  %2980 = vmatpush1.msra.mxu0 0.0
  %2981 = vmatprep.subr.mxu0 0.0
  %2982 = vmatpush1.msra.mxu0 0.0
  %2983 = vmatprep.subr.mxu0 0.0
  %2984 = vmatpush1.msra.mxu0 0.0
  %2985 = vmatprep.subr.mxu0 0.0
  %2986 = vmatpush1.msra.mxu0 0.0
  %2987 = vmatprep.subr.mxu0 0.0
  %2988 = vmatpush1.msra.mxu0 0.0
  %2989 = vmatprep.subr.mxu0 0.0
  %2990 = vmatpush1.msra.mxu0 0.0
  %2991 = vmatprep.subr.mxu0 0.0
  %2992 = vmatpush1.msra.mxu0 0.0
  %2993 = vmatprep.subr.mxu0 0.0
  %2994 = vmatpush1.msra.mxu0 0.0
  %2995 = vmatprep.subr.mxu0 0.0
  %2996 = vmatpush1.msra.mxu0 0.0
  %2997 = vmatprep.subr.mxu0 0.0
  %2998 = vmatpush1.msra.mxu0 0.0
  %2999 = vmatprep.mubr.f32.mxu0 0.0
  %3000 = vmatmul.mubr.f32.gmra.mrb[0].mxu0 %v2686
  %v3001 = vpop.f32.mrb[0].mxu0
  %v3002 = vadd.f32 0.0, %v3001
  %v3003 = vpop.f32.mrb[0].mxu0
  %v3004 = vadd.f32 0.0, %v3003
  %3005 = vdwg.mxu0
  %3006 = vmatprep.subr.mxu0 %v93
  %3007 = vmatpush1.msra.mxu0 %v92
  %3008 = vmatprep.subr.mxu0 %v97
  %3009 = vmatpush1.msra.mxu0 %v96
  %3010 = vmatprep.subr.mxu0 %v101
  %3011 = vmatpush1.msra.mxu0 %v100
  %3012 = vmatprep.subr.mxu0 %v105
  %3013 = vmatpush1.msra.mxu0 %v104
  %3014 = vmatprep.subr.mxu0 %v109
  %3015 = vmatpush1.msra.mxu0 %v108
  %3016 = vmatprep.subr.mxu0 %v113
  %3017 = vmatpush1.msra.mxu0 %v112
  %3018 = vmatprep.subr.mxu0 %v117
  %3019 = vmatpush1.msra.mxu0 %v116
  %3020 = vmatprep.subr.mxu0 %v121
  %3021 = vmatpush1.msra.mxu0 %v120
  %3022 = vmatprep.subr.mxu0 %v125
  %3023 = vmatpush1.msra.mxu0 %v124
  %3024 = vmatprep.subr.mxu0 %v129
  %3025 = vmatpush1.msra.mxu0 %v128
  %3026 = vmatprep.subr.mxu0 %v133
  %3027 = vmatpush1.msra.mxu0 %v132
  %3028 = vmatprep.subr.mxu0 %v137
  %3029 = vmatpush1.msra.mxu0 %v136
  %3030 = vmatprep.subr.mxu0 %v141
  %3031 = vmatpush1.msra.mxu0 %v140
  %3032 = vmatprep.subr.mxu0 %v145
  %3033 = vmatpush1.msra.mxu0 %v144
  %3034 = vmatprep.subr.mxu0 %v149
  %3035 = vmatpush1.msra.mxu0 %v148
  %3036 = vmatprep.subr.mxu0 %v153
  %3037 = vmatpush1.msra.mxu0 %v152
  %3038 = vmatprep.subr.mxu0 0.0
  %3039 = vmatpush1.msra.mxu0 0.0
  %3040 = vmatprep.subr.mxu0 0.0
  %3041 = vmatpush1.msra.mxu0 0.0
  %3042 = vmatprep.subr.mxu0 0.0
  %3043 = vmatpush1.msra.mxu0 0.0
  %3044 = vmatprep.subr.mxu0 0.0
  %3045 = vmatpush1.msra.mxu0 0.0
  %3046 = vmatprep.subr.mxu0 0.0
  %3047 = vmatpush1.msra.mxu0 0.0
  %3048 = vmatprep.subr.mxu0 0.0
  %3049 = vmatpush1.msra.mxu0 0.0
  %3050 = vmatprep.subr.mxu0 0.0
  %3051 = vmatpush1.msra.mxu0 0.0
  %3052 = vmatprep.subr.mxu0 0.0
  %3053 = vmatpush1.msra.mxu0 0.0
  %3054 = vmatprep.subr.mxu0 0.0
  %3055 = vmatpush1.msra.mxu0 0.0
  %3056 = vmatprep.subr.mxu0 0.0
  %3057 = vmatpush1.msra.mxu0 0.0
  %3058 = vmatprep.subr.mxu0 0.0
  %3059 = vmatpush1.msra.mxu0 0.0
  %3060 = vmatprep.subr.mxu0 0.0
  %3061 = vmatpush1.msra.mxu0 0.0
  %3062 = vmatprep.subr.mxu0 0.0
  %3063 = vmatpush1.msra.mxu0 0.0
  %3064 = vmatprep.subr.mxu0 0.0
  %3065 = vmatpush1.msra.mxu0 0.0
  %3066 = vmatprep.subr.mxu0 0.0
  %3067 = vmatpush1.msra.mxu0 0.0
  %3068 = vmatprep.subr.mxu0 0.0
  %3069 = vmatpush1.msra.mxu0 0.0
  %3070 = vmatprep.mubr.f32.mxu0 0.0
  %3071 = vmatmul.mubr.f32.gmra.mrb[0].mxu0 %v2863
  %v3072 = vpop.f32.mrb[0].mxu0
  %v3073 = vadd.f32 %v2931, %v3072
  %v3074 = vpop.f32.mrb[0].mxu0
  %v3075 = vadd.f32 %v2933, %v3074
  %3076 = vdwg.mxu0
  %3077 = vmatprep.subr.mxu0 %v95
  %3078 = vmatpush1.msra.mxu0 %v94
  %3079 = vmatprep.subr.mxu0 %v99
  %3080 = vmatpush1.msra.mxu0 %v98
  %3081 = vmatprep.subr.mxu0 %v103
  %3082 = vmatpush1.msra.mxu0 %v102
  %3083 = vmatprep.subr.mxu0 %v107
  %3084 = vmatpush1.msra.mxu0 %v106
  %3085 = vmatprep.subr.mxu0 %v111
  %3086 = vmatpush1.msra.mxu0 %v110
  %3087 = vmatprep.subr.mxu0 %v115
  %3088 = vmatpush1.msra.mxu0 %v114
  %3089 = vmatprep.subr.mxu0 %v119
  %3090 = vmatpush1.msra.mxu0 %v118
  %3091 = vmatprep.subr.mxu0 %v123
  %3092 = vmatpush1.msra.mxu0 %v122
  %3093 = vmatprep.subr.mxu0 %v127
  %3094 = vmatpush1.msra.mxu0 %v126
  %3095 = vmatprep.subr.mxu0 %v131
  %3096 = vmatpush1.msra.mxu0 %v130
  %3097 = vmatprep.subr.mxu0 %v135
  %3098 = vmatpush1.msra.mxu0 %v134
  %3099 = vmatprep.subr.mxu0 %v139
  %3100 = vmatpush1.msra.mxu0 %v138
  %3101 = vmatprep.subr.mxu0 %v143
  %3102 = vmatpush1.msra.mxu0 %v142
  %3103 = vmatprep.subr.mxu0 %v147
  %3104 = vmatpush1.msra.mxu0 %v146
  %3105 = vmatprep.subr.mxu0 %v151
  %3106 = vmatpush1.msra.mxu0 %v150
  %3107 = vmatprep.subr.mxu0 %v155
  %3108 = vmatpush1.msra.mxu0 %v154
  %3109 = vmatprep.subr.mxu0 0.0
  %3110 = vmatpush1.msra.mxu0 0.0
  %3111 = vmatprep.subr.mxu0 0.0
  %3112 = vmatpush1.msra.mxu0 0.0
  %3113 = vmatprep.subr.mxu0 0.0
  %3114 = vmatpush1.msra.mxu0 0.0
  %3115 = vmatprep.subr.mxu0 0.0
  %3116 = vmatpush1.msra.mxu0 0.0
  %3117 = vmatprep.subr.mxu0 0.0
  %3118 = vmatpush1.msra.mxu0 0.0
  %3119 = vmatprep.subr.mxu0 0.0
  %3120 = vmatpush1.msra.mxu0 0.0
  %3121 = vmatprep.subr.mxu0 0.0
  %3122 = vmatpush1.msra.mxu0 0.0
  %3123 = vmatprep.subr.mxu0 0.0
  %3124 = vmatpush1.msra.mxu0 0.0
  %3125 = vmatprep.subr.mxu0 0.0
  %3126 = vmatpush1.msra.mxu0 0.0
  %3127 = vmatprep.subr.mxu0 0.0
  %3128 = vmatpush1.msra.mxu0 0.0
  %3129 = vmatprep.subr.mxu0 0.0
  %3130 = vmatpush1.msra.mxu0 0.0
  %3131 = vmatprep.subr.mxu0 0.0
  %3132 = vmatpush1.msra.mxu0 0.0
  %3133 = vmatprep.subr.mxu0 0.0
  %3134 = vmatpush1.msra.mxu0 0.0
  %3135 = vmatprep.subr.mxu0 0.0
  %3136 = vmatpush1.msra.mxu0 0.0
  %3137 = vmatprep.subr.mxu0 0.0
  %3138 = vmatpush1.msra.mxu0 0.0
  %3139 = vmatprep.subr.mxu0 0.0
  %3140 = vmatpush1.msra.mxu0 0.0
  %3141 = vmatprep.mubr.f32.mxu0 0.0
  %3142 = vmatmul.mubr.f32.gmra.mrb[0].mxu0 %v2863
  %v3143 = vpop.f32.mrb[0].mxu0
  %v3144 = vadd.f32 %v3002, %v3143
  %v3145 = vpop.f32.mrb[0].mxu0
  %v3146 = vadd.f32 %v3004, %v3145
  %3147 = vdwg.mxu0
  %v3148 = vadd.f32 %v3073, %v687
  %v3149 = vadd.f32 %v3075, %v691
  %v3150 = vadd.f32 %v3144, %v695
  %v3151 = vadd.f32 %v3146, %v699
  %v3152 = vxor.u32 %v3148, 2147483648
  %v3153 = vmul.f32 %v3152, 1.442695
  %v3154 = vpow.pop %v3153
  %v3155 = vadd.f32 %v3154, 1.0
  %v3156 = vrcp.pop %v3155
  %v3157 = vmul.f32 1.0, %v3156
  %v3158 = vxor.u32 %v3149, 2147483648
  %v3159 = vmul.f32 %v3158, 1.442695
  %v3160 = vpow.pop %v3159
  %v3161 = vadd.f32 %v3160, 1.0
  %v3162 = vrcp.pop %v3161
  %v3163 = vmul.f32 1.0, %v3162
  %v3164 = vtanh.pop %v3150
  %v3165 = vxor.u32 %v3151, 2147483648
  %v3166 = vmul.f32 %v3165, 1.442695
  %v3167 = vpow.pop %v3166
  %v3168 = vadd.f32 %v3167, 1.0
  %v3169 = vrcp.pop %v3168
  %v3170 = vmul.f32 1.0, %v3169
  %v3171 = vmul.f32 %v3163, %v2684
  %v3172 = vmul.f32 %v3157, %v3164
  %v3173 = vadd.f32 %v3171, %v3172
  %v3174 = vtanh.pop %v3173
  %v3175 = vmul.f32 %v3170, %v3174
  %s3176 = scalar_lea.vmem %s5, 40
  %3177 = vst [vmem:[%s3176] sm:$0xff] %v3175
  %s3178 = scalar_lea.vmem %s0, 192
  %v3179 = vld [vmem:[%s3178] sm:$0xff]
  %v3180 = vld [vmem:[%s3178 + $0x8] sm:$0xff]
  %v3181 = vld [vmem:[%s3178 + $0x10] sm:$0xff]
  %v3182 = vld [vmem:[%s3178 + $0x18] sm:$0xff]
  %3183 = vmatprep.subr.mxu0 %v29
  %3184 = vmatpush1.msra.mxu0 %v28
  %3185 = vmatprep.subr.mxu0 %v33
  %3186 = vmatpush1.msra.mxu0 %v32
  %3187 = vmatprep.subr.mxu0 %v37
  %3188 = vmatpush1.msra.mxu0 %v36
  %3189 = vmatprep.subr.mxu0 %v41
  %3190 = vmatpush1.msra.mxu0 %v40
  %3191 = vmatprep.subr.mxu0 %v45
  %3192 = vmatpush1.msra.mxu0 %v44
  %3193 = vmatprep.subr.mxu0 %v49
  %3194 = vmatpush1.msra.mxu0 %v48
  %3195 = vmatprep.subr.mxu0 %v53
  %3196 = vmatpush1.msra.mxu0 %v52
  %3197 = vmatprep.subr.mxu0 %v57
  %3198 = vmatpush1.msra.mxu0 %v56
  %3199 = vmatprep.subr.mxu0 %v61
  %3200 = vmatpush1.msra.mxu0 %v60
  %3201 = vmatprep.subr.mxu0 %v65
  %3202 = vmatpush1.msra.mxu0 %v64
  %3203 = vmatprep.subr.mxu0 %v69
  %3204 = vmatpush1.msra.mxu0 %v68
  %3205 = vmatprep.subr.mxu0 %v73
  %3206 = vmatpush1.msra.mxu0 %v72
  %3207 = vmatprep.subr.mxu0 %v77
  %3208 = vmatpush1.msra.mxu0 %v76
  %3209 = vmatprep.subr.mxu0 %v81
  %3210 = vmatpush1.msra.mxu0 %v80
  %3211 = vmatprep.subr.mxu0 %v85
  %3212 = vmatpush1.msra.mxu0 %v84
  %3213 = vmatprep.subr.mxu0 %v89
  %3214 = vmatpush1.msra.mxu0 %v88
  %3215 = vmatprep.subr.mxu0 0.0
  %3216 = vmatpush1.msra.mxu0 0.0
  %3217 = vmatprep.subr.mxu0 0.0
  %3218 = vmatpush1.msra.mxu0 0.0
  %3219 = vmatprep.subr.mxu0 0.0
  %3220 = vmatpush1.msra.mxu0 0.0
  %3221 = vmatprep.subr.mxu0 0.0
  %3222 = vmatpush1.msra.mxu0 0.0
  %3223 = vmatprep.subr.mxu0 0.0
  %3224 = vmatpush1.msra.mxu0 0.0
  %3225 = vmatprep.subr.mxu0 0.0
  %3226 = vmatpush1.msra.mxu0 0.0
  %3227 = vmatprep.subr.mxu0 0.0
  %3228 = vmatpush1.msra.mxu0 0.0
  %3229 = vmatprep.subr.mxu0 0.0
  %3230 = vmatpush1.msra.mxu0 0.0
  %3231 = vmatprep.subr.mxu0 0.0
  %3232 = vmatpush1.msra.mxu0 0.0
  %3233 = vmatprep.subr.mxu0 0.0
  %3234 = vmatpush1.msra.mxu0 0.0
  %3235 = vmatprep.subr.mxu0 0.0
  %3236 = vmatpush1.msra.mxu0 0.0
  %3237 = vmatprep.subr.mxu0 0.0
  %3238 = vmatpush1.msra.mxu0 0.0
  %3239 = vmatprep.subr.mxu0 0.0
  %3240 = vmatpush1.msra.mxu0 0.0
  %3241 = vmatprep.subr.mxu0 0.0
  %3242 = vmatpush1.msra.mxu0 0.0
  %3243 = vmatprep.subr.mxu0 0.0
  %3244 = vmatpush1.msra.mxu0 0.0
  %3245 = vmatprep.subr.mxu0 0.0
  %3246 = vmatpush1.msra.mxu0 0.0
  %3247 = vmatprep.mubr.f32.mxu0 0.0
  %3248 = vmatmul.mubr.f32.gmra.mrb[0].mxu0 %v2863
  %v3249 = vpop.f32.mrb[0].mxu0
  %v3250 = vadd.f32 0.0, %v3249
  %v3251 = vpop.f32.mrb[0].mxu0
  %v3252 = vadd.f32 0.0, %v3251
  %3253 = vdwg.mxu0
  %3254 = vmatprep.subr.mxu0 %v31
  %3255 = vmatpush1.msra.mxu0 %v30
  %3256 = vmatprep.subr.mxu0 %v35
  %3257 = vmatpush1.msra.mxu0 %v34
  %3258 = vmatprep.subr.mxu0 %v39
  %3259 = vmatpush1.msra.mxu0 %v38
  %3260 = vmatprep.subr.mxu0 %v43
  %3261 = vmatpush1.msra.mxu0 %v42
  %3262 = vmatprep.subr.mxu0 %v47
  %3263 = vmatpush1.msra.mxu0 %v46
  %3264 = vmatprep.subr.mxu0 %v51
  %3265 = vmatpush1.msra.mxu0 %v50
  %3266 = vmatprep.subr.mxu0 %v55
  %3267 = vmatpush1.msra.mxu0 %v54
  %3268 = vmatprep.subr.mxu0 %v59
  %3269 = vmatpush1.msra.mxu0 %v58
  %3270 = vmatprep.subr.mxu0 %v63
  %3271 = vmatpush1.msra.mxu0 %v62
  %3272 = vmatprep.subr.mxu0 %v67
  %3273 = vmatpush1.msra.mxu0 %v66
  %3274 = vmatprep.subr.mxu0 %v71
  %3275 = vmatpush1.msra.mxu0 %v70
  %3276 = vmatprep.subr.mxu0 %v75
  %3277 = vmatpush1.msra.mxu0 %v74
  %3278 = vmatprep.subr.mxu0 %v79
  %3279 = vmatpush1.msra.mxu0 %v78
  %3280 = vmatprep.subr.mxu0 %v83
  %3281 = vmatpush1.msra.mxu0 %v82
  %3282 = vmatprep.subr.mxu0 %v87
  %3283 = vmatpush1.msra.mxu0 %v86
  %3284 = vmatprep.subr.mxu0 %v91
  %3285 = vmatpush1.msra.mxu0 %v90
  %3286 = vmatprep.subr.mxu0 0.0
  %3287 = vmatpush1.msra.mxu0 0.0
  %3288 = vmatprep.subr.mxu0 0.0
  %3289 = vmatpush1.msra.mxu0 0.0
  %3290 = vmatprep.subr.mxu0 0.0
  %3291 = vmatpush1.msra.mxu0 0.0
  %3292 = vmatprep.subr.mxu0 0.0
  %3293 = vmatpush1.msra.mxu0 0.0
  %3294 = vmatprep.subr.mxu0 0.0
  %3295 = vmatpush1.msra.mxu0 0.0
  %3296 = vmatprep.subr.mxu0 0.0
  %3297 = vmatpush1.msra.mxu0 0.0
  %3298 = vmatprep.subr.mxu0 0.0
  %3299 = vmatpush1.msra.mxu0 0.0
  %3300 = vmatprep.subr.mxu0 0.0
  %3301 = vmatpush1.msra.mxu0 0.0
  %3302 = vmatprep.subr.mxu0 0.0
  %3303 = vmatpush1.msra.mxu0 0.0
  %3304 = vmatprep.subr.mxu0 0.0
  %3305 = vmatpush1.msra.mxu0 0.0
  %3306 = vmatprep.subr.mxu0 0.0
  %3307 = vmatpush1.msra.mxu0 0.0
  %3308 = vmatprep.subr.mxu0 0.0
  %3309 = vmatpush1.msra.mxu0 0.0
  %3310 = vmatprep.subr.mxu0 0.0
  %3311 = vmatpush1.msra.mxu0 0.0
  %3312 = vmatprep.subr.mxu0 0.0
  %3313 = vmatpush1.msra.mxu0 0.0
  %3314 = vmatprep.subr.mxu0 0.0
  %3315 = vmatpush1.msra.mxu0 0.0
  %3316 = vmatprep.subr.mxu0 0.0
  %3317 = vmatpush1.msra.mxu0 0.0
  %3318 = vmatprep.mubr.f32.mxu0 0.0
  %3319 = vmatmul.mubr.f32.gmra.mrb[0].mxu0 %v2863
  %v3320 = vpop.f32.mrb[0].mxu0
  %v3321 = vadd.f32 0.0, %v3320
  %v3322 = vpop.f32.mrb[0].mxu0
  %v3323 = vadd.f32 0.0, %v3322
  %3324 = vdwg.mxu0
  %v3325 = vadd.f32 %v3179, %v3250
  %v3326 = vadd.f32 %v3180, %v3252
  %v3327 = vadd.f32 %v3181, %v3321
  %v3328 = vadd.f32 %v3182, %v3323
  %v3329 = vxor.u32 %v3325, 2147483648
  %v3330 = vmul.f32 %v3329, 1.442695
  %v3331 = vpow.pop %v3330
  %v3332 = vadd.f32 %v3331, 1.0
  %v3333 = vrcp.pop %v3332
  %v3334 = vmul.f32 1.0, %v3333
  %v3335 = vxor.u32 %v3326, 2147483648
  %v3336 = vmul.f32 %v3335, 1.442695
  %v3337 = vpow.pop %v3336
  %v3338 = vadd.f32 %v3337, 1.0
  %v3339 = vrcp.pop %v3338
  %v3340 = vmul.f32 1.0, %v3339
  %v3341 = vtanh.pop %v3327
  %v3342 = vxor.u32 %v3328, 2147483648
  %v3343 = vmul.f32 %v3342, 1.442695
  %v3344 = vpow.pop %v3343
  %v3345 = vadd.f32 %v3344, 1.0
  %v3346 = vrcp.pop %v3345
  %v3347 = vmul.f32 1.0, %v3346
  %v3348 = vmul.f32 %v3340, %v2861
  %v3349 = vmul.f32 %v3334, %v3341
  %v3350 = vadd.f32 %v3348, %v3349
  %v3351 = vtanh.pop %v3350
  %v3352 = vmul.f32 %v3347, %v3351
  %3353 = vmatprep.subr.mxu0 %v157
  %3354 = vmatpush1.msra.mxu0 %v156
  %3355 = vmatprep.subr.mxu0 %v161
  %3356 = vmatpush1.msra.mxu0 %v160
  %3357 = vmatprep.subr.mxu0 %v165
  %3358 = vmatpush1.msra.mxu0 %v164
  %3359 = vmatprep.subr.mxu0 %v169
  %3360 = vmatpush1.msra.mxu0 %v168
  %3361 = vmatprep.subr.mxu0 %v173
  %3362 = vmatpush1.msra.mxu0 %v172
  %3363 = vmatprep.subr.mxu0 %v177
  %3364 = vmatpush1.msra.mxu0 %v176
  %3365 = vmatprep.subr.mxu0 %v181
  %3366 = vmatpush1.msra.mxu0 %v180
  %3367 = vmatprep.subr.mxu0 %v185
  %3368 = vmatpush1.msra.mxu0 %v184
  %3369 = vmatprep.subr.mxu0 %v189
  %3370 = vmatpush1.msra.mxu0 %v188
  %3371 = vmatprep.subr.mxu0 %v193
  %3372 = vmatpush1.msra.mxu0 %v192
  %3373 = vmatprep.subr.mxu0 %v197
  %3374 = vmatpush1.msra.mxu0 %v196
  %3375 = vmatprep.subr.mxu0 %v201
  %3376 = vmatpush1.msra.mxu0 %v200
  %3377 = vmatprep.subr.mxu0 %v205
  %3378 = vmatpush1.msra.mxu0 %v204
  %3379 = vmatprep.subr.mxu0 %v209
  %3380 = vmatpush1.msra.mxu0 %v208
  %3381 = vmatprep.subr.mxu0 %v213
  %3382 = vmatpush1.msra.mxu0 %v212
  %3383 = vmatprep.subr.mxu0 %v217
  %3384 = vmatpush1.msra.mxu0 %v216
  %3385 = vmatprep.subr.mxu0 0.0
  %3386 = vmatpush1.msra.mxu0 0.0
  %3387 = vmatprep.subr.mxu0 0.0
  %3388 = vmatpush1.msra.mxu0 0.0
  %3389 = vmatprep.subr.mxu0 0.0
  %3390 = vmatpush1.msra.mxu0 0.0
  %3391 = vmatprep.subr.mxu0 0.0
  %3392 = vmatpush1.msra.mxu0 0.0
  %3393 = vmatprep.subr.mxu0 0.0
  %3394 = vmatpush1.msra.mxu0 0.0
  %3395 = vmatprep.subr.mxu0 0.0
  %3396 = vmatpush1.msra.mxu0 0.0
  %3397 = vmatprep.subr.mxu0 0.0
  %3398 = vmatpush1.msra.mxu0 0.0
  %3399 = vmatprep.subr.mxu0 0.0
  %3400 = vmatpush1.msra.mxu0 0.0
  %3401 = vmatprep.subr.mxu0 0.0
  %3402 = vmatpush1.msra.mxu0 0.0
  %3403 = vmatprep.subr.mxu0 0.0
  %3404 = vmatpush1.msra.mxu0 0.0
  %3405 = vmatprep.subr.mxu0 0.0
  %3406 = vmatpush1.msra.mxu0 0.0
  %3407 = vmatprep.subr.mxu0 0.0
  %3408 = vmatpush1.msra.mxu0 0.0
  %3409 = vmatprep.subr.mxu0 0.0
  %3410 = vmatpush1.msra.mxu0 0.0
  %3411 = vmatprep.subr.mxu0 0.0
  %3412 = vmatpush1.msra.mxu0 0.0
  %3413 = vmatprep.subr.mxu0 0.0
  %3414 = vmatpush1.msra.mxu0 0.0
  %3415 = vmatprep.subr.mxu0 0.0
  %3416 = vmatpush1.msra.mxu0 0.0
  %3417 = vmatprep.mubr.f32.mxu0 0.0
  %3418 = vmatmul.mubr.f32.gmra.mrb[0].mxu0 %v3175
  %v3419 = vpop.f32.mrb[0].mxu0
  %v3420 = vadd.f32 0.0, %v3419
  %v3421 = vpop.f32.mrb[0].mxu0
  %v3422 = vadd.f32 0.0, %v3421
  %3423 = vdwg.mxu0
  %3424 = vmatprep.subr.mxu0 %v159
  %3425 = vmatpush1.msra.mxu0 %v158
  %3426 = vmatprep.subr.mxu0 %v163
  %3427 = vmatpush1.msra.mxu0 %v162
  %3428 = vmatprep.subr.mxu0 %v167
  %3429 = vmatpush1.msra.mxu0 %v166
  %3430 = vmatprep.subr.mxu0 %v171
  %3431 = vmatpush1.msra.mxu0 %v170
  %3432 = vmatprep.subr.mxu0 %v175
  %3433 = vmatpush1.msra.mxu0 %v174
  %3434 = vmatprep.subr.mxu0 %v179
  %3435 = vmatpush1.msra.mxu0 %v178
  %3436 = vmatprep.subr.mxu0 %v183
  %3437 = vmatpush1.msra.mxu0 %v182
  %3438 = vmatprep.subr.mxu0 %v187
  %3439 = vmatpush1.msra.mxu0 %v186
  %3440 = vmatprep.subr.mxu0 %v191
  %3441 = vmatpush1.msra.mxu0 %v190
  %3442 = vmatprep.subr.mxu0 %v195
  %3443 = vmatpush1.msra.mxu0 %v194
  %3444 = vmatprep.subr.mxu0 %v199
  %3445 = vmatpush1.msra.mxu0 %v198
  %3446 = vmatprep.subr.mxu0 %v203
  %3447 = vmatpush1.msra.mxu0 %v202
  %3448 = vmatprep.subr.mxu0 %v207
  %3449 = vmatpush1.msra.mxu0 %v206
  %3450 = vmatprep.subr.mxu0 %v211
  %3451 = vmatpush1.msra.mxu0 %v210
  %3452 = vmatprep.subr.mxu0 %v215
  %3453 = vmatpush1.msra.mxu0 %v214
  %3454 = vmatprep.subr.mxu0 %v219
  %3455 = vmatpush1.msra.mxu0 %v218
  %3456 = vmatprep.subr.mxu0 0.0
  %3457 = vmatpush1.msra.mxu0 0.0
  %3458 = vmatprep.subr.mxu0 0.0
  %3459 = vmatpush1.msra.mxu0 0.0
  %3460 = vmatprep.subr.mxu0 0.0
  %3461 = vmatpush1.msra.mxu0 0.0
  %3462 = vmatprep.subr.mxu0 0.0
  %3463 = vmatpush1.msra.mxu0 0.0
  %3464 = vmatprep.subr.mxu0 0.0
  %3465 = vmatpush1.msra.mxu0 0.0
  %3466 = vmatprep.subr.mxu0 0.0
  %3467 = vmatpush1.msra.mxu0 0.0
  %3468 = vmatprep.subr.mxu0 0.0
  %3469 = vmatpush1.msra.mxu0 0.0
  %3470 = vmatprep.subr.mxu0 0.0
  %3471 = vmatpush1.msra.mxu0 0.0
  %3472 = vmatprep.subr.mxu0 0.0
  %3473 = vmatpush1.msra.mxu0 0.0
  %3474 = vmatprep.subr.mxu0 0.0
  %3475 = vmatpush1.msra.mxu0 0.0
  %3476 = vmatprep.subr.mxu0 0.0
  %3477 = vmatpush1.msra.mxu0 0.0
  %3478 = vmatprep.subr.mxu0 0.0
  %3479 = vmatpush1.msra.mxu0 0.0
  %3480 = vmatprep.subr.mxu0 0.0
  %3481 = vmatpush1.msra.mxu0 0.0
  %3482 = vmatprep.subr.mxu0 0.0
  %3483 = vmatpush1.msra.mxu0 0.0
  %3484 = vmatprep.subr.mxu0 0.0
  %3485 = vmatpush1.msra.mxu0 0.0
  %3486 = vmatprep.subr.mxu0 0.0
  %3487 = vmatpush1.msra.mxu0 0.0
  %3488 = vmatprep.mubr.f32.mxu0 0.0
  %3489 = vmatmul.mubr.f32.gmra.mrb[0].mxu0 %v3175
  %v3490 = vpop.f32.mrb[0].mxu0
  %v3491 = vadd.f32 0.0, %v3490
  %v3492 = vpop.f32.mrb[0].mxu0
  %v3493 = vadd.f32 0.0, %v3492
  %3494 = vdwg.mxu0
  %3495 = vmatprep.subr.mxu0 %v93
  %3496 = vmatpush1.msra.mxu0 %v92
  %3497 = vmatprep.subr.mxu0 %v97
  %3498 = vmatpush1.msra.mxu0 %v96
  %3499 = vmatprep.subr.mxu0 %v101
  %3500 = vmatpush1.msra.mxu0 %v100
  %3501 = vmatprep.subr.mxu0 %v105
  %3502 = vmatpush1.msra.mxu0 %v104
  %3503 = vmatprep.subr.mxu0 %v109
  %3504 = vmatpush1.msra.mxu0 %v108
  %3505 = vmatprep.subr.mxu0 %v113
  %3506 = vmatpush1.msra.mxu0 %v112
  %3507 = vmatprep.subr.mxu0 %v117
  %3508 = vmatpush1.msra.mxu0 %v116
  %3509 = vmatprep.subr.mxu0 %v121
  %3510 = vmatpush1.msra.mxu0 %v120
  %3511 = vmatprep.subr.mxu0 %v125
  %3512 = vmatpush1.msra.mxu0 %v124
  %3513 = vmatprep.subr.mxu0 %v129
  %3514 = vmatpush1.msra.mxu0 %v128
  %3515 = vmatprep.subr.mxu0 %v133
  %3516 = vmatpush1.msra.mxu0 %v132
  %3517 = vmatprep.subr.mxu0 %v137
  %3518 = vmatpush1.msra.mxu0 %v136
  %3519 = vmatprep.subr.mxu0 %v141
  %3520 = vmatpush1.msra.mxu0 %v140
  %3521 = vmatprep.subr.mxu0 %v145
  %3522 = vmatpush1.msra.mxu0 %v144
  %3523 = vmatprep.subr.mxu0 %v149
  %3524 = vmatpush1.msra.mxu0 %v148
  %3525 = vmatprep.subr.mxu0 %v153
  %3526 = vmatpush1.msra.mxu0 %v152
  %3527 = vmatprep.subr.mxu0 0.0
  %3528 = vmatpush1.msra.mxu0 0.0
  %3529 = vmatprep.subr.mxu0 0.0
  %3530 = vmatpush1.msra.mxu0 0.0
  %3531 = vmatprep.subr.mxu0 0.0
  %3532 = vmatpush1.msra.mxu0 0.0
  %3533 = vmatprep.subr.mxu0 0.0
  %3534 = vmatpush1.msra.mxu0 0.0
  %3535 = vmatprep.subr.mxu0 0.0
  %3536 = vmatpush1.msra.mxu0 0.0
  %3537 = vmatprep.subr.mxu0 0.0
  %3538 = vmatpush1.msra.mxu0 0.0
  %3539 = vmatprep.subr.mxu0 0.0
  %3540 = vmatpush1.msra.mxu0 0.0
  %3541 = vmatprep.subr.mxu0 0.0
  %3542 = vmatpush1.msra.mxu0 0.0
  %3543 = vmatprep.subr.mxu0 0.0
  %3544 = vmatpush1.msra.mxu0 0.0
  %3545 = vmatprep.subr.mxu0 0.0
  %3546 = vmatpush1.msra.mxu0 0.0
  %3547 = vmatprep.subr.mxu0 0.0
  %3548 = vmatpush1.msra.mxu0 0.0
  %3549 = vmatprep.subr.mxu0 0.0
  %3550 = vmatpush1.msra.mxu0 0.0
  %3551 = vmatprep.subr.mxu0 0.0
  %3552 = vmatpush1.msra.mxu0 0.0
  %3553 = vmatprep.subr.mxu0 0.0
  %3554 = vmatpush1.msra.mxu0 0.0
  %3555 = vmatprep.subr.mxu0 0.0
  %3556 = vmatpush1.msra.mxu0 0.0
  %3557 = vmatprep.subr.mxu0 0.0
  %3558 = vmatpush1.msra.mxu0 0.0
  %3559 = vmatprep.mubr.f32.mxu0 0.0
  %3560 = vmatmul.mubr.f32.gmra.mrb[0].mxu0 %v3352
  %v3561 = vpop.f32.mrb[0].mxu0
  %v3562 = vadd.f32 %v3420, %v3561
  %v3563 = vpop.f32.mrb[0].mxu0
  %v3564 = vadd.f32 %v3422, %v3563
  %3565 = vdwg.mxu0
  %3566 = vmatprep.subr.mxu0 %v95
  %3567 = vmatpush1.msra.mxu0 %v94
  %3568 = vmatprep.subr.mxu0 %v99
  %3569 = vmatpush1.msra.mxu0 %v98
  %3570 = vmatprep.subr.mxu0 %v103
  %3571 = vmatpush1.msra.mxu0 %v102
  %3572 = vmatprep.subr.mxu0 %v107
  %3573 = vmatpush1.msra.mxu0 %v106
  %3574 = vmatprep.subr.mxu0 %v111
  %3575 = vmatpush1.msra.mxu0 %v110
  %3576 = vmatprep.subr.mxu0 %v115
  %3577 = vmatpush1.msra.mxu0 %v114
  %3578 = vmatprep.subr.mxu0 %v119
  %3579 = vmatpush1.msra.mxu0 %v118
  %3580 = vmatprep.subr.mxu0 %v123
  %3581 = vmatpush1.msra.mxu0 %v122
  %3582 = vmatprep.subr.mxu0 %v127
  %3583 = vmatpush1.msra.mxu0 %v126
  %3584 = vmatprep.subr.mxu0 %v131
  %3585 = vmatpush1.msra.mxu0 %v130
  %3586 = vmatprep.subr.mxu0 %v135
  %3587 = vmatpush1.msra.mxu0 %v134
  %3588 = vmatprep.subr.mxu0 %v139
  %3589 = vmatpush1.msra.mxu0 %v138
  %3590 = vmatprep.subr.mxu0 %v143
  %3591 = vmatpush1.msra.mxu0 %v142
  %3592 = vmatprep.subr.mxu0 %v147
  %3593 = vmatpush1.msra.mxu0 %v146
  %3594 = vmatprep.subr.mxu0 %v151
  %3595 = vmatpush1.msra.mxu0 %v150
  %3596 = vmatprep.subr.mxu0 %v155
  %3597 = vmatpush1.msra.mxu0 %v154
  %3598 = vmatprep.subr.mxu0 0.0
  %3599 = vmatpush1.msra.mxu0 0.0
  %3600 = vmatprep.subr.mxu0 0.0
  %3601 = vmatpush1.msra.mxu0 0.0
  %3602 = vmatprep.subr.mxu0 0.0
  %3603 = vmatpush1.msra.mxu0 0.0
  %3604 = vmatprep.subr.mxu0 0.0
  %3605 = vmatpush1.msra.mxu0 0.0
  %3606 = vmatprep.subr.mxu0 0.0
  %3607 = vmatpush1.msra.mxu0 0.0
  %3608 = vmatprep.subr.mxu0 0.0
  %3609 = vmatpush1.msra.mxu0 0.0
  %3610 = vmatprep.subr.mxu0 0.0
  %3611 = vmatpush1.msra.mxu0 0.0
  %3612 = vmatprep.subr.mxu0 0.0
  %3613 = vmatpush1.msra.mxu0 0.0
  %3614 = vmatprep.subr.mxu0 0.0
  %3615 = vmatpush1.msra.mxu0 0.0
  %3616 = vmatprep.subr.mxu0 0.0
  %3617 = vmatpush1.msra.mxu0 0.0
  %3618 = vmatprep.subr.mxu0 0.0
  %3619 = vmatpush1.msra.mxu0 0.0
  %3620 = vmatprep.subr.mxu0 0.0
  %3621 = vmatpush1.msra.mxu0 0.0
  %3622 = vmatprep.subr.mxu0 0.0
  %3623 = vmatpush1.msra.mxu0 0.0
  %3624 = vmatprep.subr.mxu0 0.0
  %3625 = vmatpush1.msra.mxu0 0.0
  %3626 = vmatprep.subr.mxu0 0.0
  %3627 = vmatpush1.msra.mxu0 0.0
  %3628 = vmatprep.subr.mxu0 0.0
  %3629 = vmatpush1.msra.mxu0 0.0
  %3630 = vmatprep.mubr.f32.mxu0 0.0
  %3631 = vmatmul.mubr.f32.gmra.mrb[0].mxu0 %v3352
  %v3632 = vpop.f32.mrb[0].mxu0
  %v3633 = vadd.f32 %v3491, %v3632
  %v3634 = vpop.f32.mrb[0].mxu0
  %v3635 = vadd.f32 %v3493, %v3634
  %3636 = vdwg.mxu0
  %v3637 = vadd.f32 %v3562, %v687
  %v3638 = vadd.f32 %v3564, %v691
  %v3639 = vadd.f32 %v3633, %v695
  %v3640 = vadd.f32 %v3635, %v699
  %v3641 = vxor.u32 %v3637, 2147483648
  %v3642 = vmul.f32 %v3641, 1.442695
  %v3643 = vpow.pop %v3642
  %v3644 = vadd.f32 %v3643, 1.0
  %v3645 = vrcp.pop %v3644
  %v3646 = vmul.f32 1.0, %v3645
  %v3647 = vxor.u32 %v3638, 2147483648
  %v3648 = vmul.f32 %v3647, 1.442695
  %v3649 = vpow.pop %v3648
  %v3650 = vadd.f32 %v3649, 1.0
  %v3651 = vrcp.pop %v3650
  %v3652 = vmul.f32 1.0, %v3651
  %v3653 = vtanh.pop %v3639
  %v3654 = vxor.u32 %v3640, 2147483648
  %v3655 = vmul.f32 %v3654, 1.442695
  %v3656 = vpow.pop %v3655
  %v3657 = vadd.f32 %v3656, 1.0
  %v3658 = vrcp.pop %v3657
  %v3659 = vmul.f32 1.0, %v3658
  %v3660 = vmul.f32 %v3652, %v3173
  %v3661 = vmul.f32 %v3646, %v3653
  %v3662 = vadd.f32 %v3660, %v3661
  %v3663 = vtanh.pop %v3662
  %v3664 = vmul.f32 %v3659, %v3663
  %s3665 = scalar_lea.vmem %s5, 48
  %3666 = vst [vmem:[%s3665] sm:$0xff] %v3664
  %s3667 = scalar_lea.vmem %s0, 224
  %v3668 = vld [vmem:[%s3667] sm:$0xff]
  %v3669 = vld [vmem:[%s3667 + $0x8] sm:$0xff]
  %v3670 = vld [vmem:[%s3667 + $0x10] sm:$0xff]
  %v3671 = vld [vmem:[%s3667 + $0x18] sm:$0xff]
  %3672 = vmatprep.subr.mxu0 %v29
  %3673 = vmatpush1.msra.mxu0 %v28
  %3674 = vmatprep.subr.mxu0 %v33
  %3675 = vmatpush1.msra.mxu0 %v32
  %3676 = vmatprep.subr.mxu0 %v37
  %3677 = vmatpush1.msra.mxu0 %v36
  %3678 = vmatprep.subr.mxu0 %v41
  %3679 = vmatpush1.msra.mxu0 %v40
  %3680 = vmatprep.subr.mxu0 %v45
  %3681 = vmatpush1.msra.mxu0 %v44
  %3682 = vmatprep.subr.mxu0 %v49
  %3683 = vmatpush1.msra.mxu0 %v48
  %3684 = vmatprep.subr.mxu0 %v53
  %3685 = vmatpush1.msra.mxu0 %v52
  %3686 = vmatprep.subr.mxu0 %v57
  %3687 = vmatpush1.msra.mxu0 %v56
  %3688 = vmatprep.subr.mxu0 %v61
  %3689 = vmatpush1.msra.mxu0 %v60
  %3690 = vmatprep.subr.mxu0 %v65
  %3691 = vmatpush1.msra.mxu0 %v64
  %3692 = vmatprep.subr.mxu0 %v69
  %3693 = vmatpush1.msra.mxu0 %v68
  %3694 = vmatprep.subr.mxu0 %v73
  %3695 = vmatpush1.msra.mxu0 %v72
  %3696 = vmatprep.subr.mxu0 %v77
  %3697 = vmatpush1.msra.mxu0 %v76
  %3698 = vmatprep.subr.mxu0 %v81
  %3699 = vmatpush1.msra.mxu0 %v80
  %3700 = vmatprep.subr.mxu0 %v85
  %3701 = vmatpush1.msra.mxu0 %v84
  %3702 = vmatprep.subr.mxu0 %v89
  %3703 = vmatpush1.msra.mxu0 %v88
  %3704 = vmatprep.subr.mxu0 0.0
  %3705 = vmatpush1.msra.mxu0 0.0
  %3706 = vmatprep.subr.mxu0 0.0
  %3707 = vmatpush1.msra.mxu0 0.0
  %3708 = vmatprep.subr.mxu0 0.0
  %3709 = vmatpush1.msra.mxu0 0.0
  %3710 = vmatprep.subr.mxu0 0.0
  %3711 = vmatpush1.msra.mxu0 0.0
  %3712 = vmatprep.subr.mxu0 0.0
  %3713 = vmatpush1.msra.mxu0 0.0
  %3714 = vmatprep.subr.mxu0 0.0
  %3715 = vmatpush1.msra.mxu0 0.0
  %3716 = vmatprep.subr.mxu0 0.0
  %3717 = vmatpush1.msra.mxu0 0.0
  %3718 = vmatprep.subr.mxu0 0.0
  %3719 = vmatpush1.msra.mxu0 0.0
  %3720 = vmatprep.subr.mxu0 0.0
  %3721 = vmatpush1.msra.mxu0 0.0
  %3722 = vmatprep.subr.mxu0 0.0
  %3723 = vmatpush1.msra.mxu0 0.0
  %3724 = vmatprep.subr.mxu0 0.0
  %3725 = vmatpush1.msra.mxu0 0.0
  %3726 = vmatprep.subr.mxu0 0.0
  %3727 = vmatpush1.msra.mxu0 0.0
  %3728 = vmatprep.subr.mxu0 0.0
  %3729 = vmatpush1.msra.mxu0 0.0
  %3730 = vmatprep.subr.mxu0 0.0
  %3731 = vmatpush1.msra.mxu0 0.0
  %3732 = vmatprep.subr.mxu0 0.0
  %3733 = vmatpush1.msra.mxu0 0.0
  %3734 = vmatprep.subr.mxu0 0.0
  %3735 = vmatpush1.msra.mxu0 0.0
  %3736 = vmatprep.mubr.f32.mxu0 0.0
  %3737 = vmatmul.mubr.f32.gmra.mrb[0].mxu0 %v3352
  %v3738 = vpop.f32.mrb[0].mxu0
  %v3739 = vadd.f32 0.0, %v3738
  %v3740 = vpop.f32.mrb[0].mxu0
  %v3741 = vadd.f32 0.0, %v3740
  %3742 = vdwg.mxu0
  %3743 = vmatprep.subr.mxu0 %v31
  %3744 = vmatpush1.msra.mxu0 %v30
  %3745 = vmatprep.subr.mxu0 %v35
  %3746 = vmatpush1.msra.mxu0 %v34
  %3747 = vmatprep.subr.mxu0 %v39
  %3748 = vmatpush1.msra.mxu0 %v38
  %3749 = vmatprep.subr.mxu0 %v43
  %3750 = vmatpush1.msra.mxu0 %v42
  %3751 = vmatprep.subr.mxu0 %v47
  %3752 = vmatpush1.msra.mxu0 %v46
  %3753 = vmatprep.subr.mxu0 %v51
  %3754 = vmatpush1.msra.mxu0 %v50
  %3755 = vmatprep.subr.mxu0 %v55
  %3756 = vmatpush1.msra.mxu0 %v54
  %3757 = vmatprep.subr.mxu0 %v59
  %3758 = vmatpush1.msra.mxu0 %v58
  %3759 = vmatprep.subr.mxu0 %v63
  %3760 = vmatpush1.msra.mxu0 %v62
  %3761 = vmatprep.subr.mxu0 %v67
  %3762 = vmatpush1.msra.mxu0 %v66
  %3763 = vmatprep.subr.mxu0 %v71
  %3764 = vmatpush1.msra.mxu0 %v70
  %3765 = vmatprep.subr.mxu0 %v75
  %3766 = vmatpush1.msra.mxu0 %v74
  %3767 = vmatprep.subr.mxu0 %v79
  %3768 = vmatpush1.msra.mxu0 %v78
  %3769 = vmatprep.subr.mxu0 %v83
  %3770 = vmatpush1.msra.mxu0 %v82
  %3771 = vmatprep.subr.mxu0 %v87
  %3772 = vmatpush1.msra.mxu0 %v86
  %3773 = vmatprep.subr.mxu0 %v91
  %3774 = vmatpush1.msra.mxu0 %v90
  %3775 = vmatprep.subr.mxu0 0.0
  %3776 = vmatpush1.msra.mxu0 0.0
  %3777 = vmatprep.subr.mxu0 0.0
  %3778 = vmatpush1.msra.mxu0 0.0
  %3779 = vmatprep.subr.mxu0 0.0
  %3780 = vmatpush1.msra.mxu0 0.0
  %3781 = vmatprep.subr.mxu0 0.0
  %3782 = vmatpush1.msra.mxu0 0.0
  %3783 = vmatprep.subr.mxu0 0.0
  %3784 = vmatpush1.msra.mxu0 0.0
  %3785 = vmatprep.subr.mxu0 0.0
  %3786 = vmatpush1.msra.mxu0 0.0
  %3787 = vmatprep.subr.mxu0 0.0
  %3788 = vmatpush1.msra.mxu0 0.0
  %3789 = vmatprep.subr.mxu0 0.0
  %3790 = vmatpush1.msra.mxu0 0.0
  %3791 = vmatprep.subr.mxu0 0.0
  %3792 = vmatpush1.msra.mxu0 0.0
  %3793 = vmatprep.subr.mxu0 0.0
  %3794 = vmatpush1.msra.mxu0 0.0
  %3795 = vmatprep.subr.mxu0 0.0
  %3796 = vmatpush1.msra.mxu0 0.0
  %3797 = vmatprep.subr.mxu0 0.0
  %3798 = vmatpush1.msra.mxu0 0.0
  %3799 = vmatprep.subr.mxu0 0.0
  %3800 = vmatpush1.msra.mxu0 0.0
  %3801 = vmatprep.subr.mxu0 0.0
  %3802 = vmatpush1.msra.mxu0 0.0
  %3803 = vmatprep.subr.mxu0 0.0
  %3804 = vmatpush1.msra.mxu0 0.0
  %3805 = vmatprep.subr.mxu0 0.0
  %3806 = vmatpush1.msra.mxu0 0.0
  %3807 = vmatprep.mubr.f32.mxu0 0.0
  %3808 = vmatmul.mubr.f32.gmra.mrb[0].mxu0 %v3352
  %v3809 = vpop.f32.mrb[0].mxu0
  %v3810 = vadd.f32 0.0, %v3809
  %v3811 = vpop.f32.mrb[0].mxu0
  %v3812 = vadd.f32 0.0, %v3811
  %3813 = vdwg.mxu0
  %v3814 = vadd.f32 %v3668, %v3739
  %v3815 = vadd.f32 %v3669, %v3741
  %v3816 = vadd.f32 %v3670, %v3810
  %v3817 = vadd.f32 %v3671, %v3812
  %v3818 = vxor.u32 %v3814, 2147483648
  %v3819 = vmul.f32 %v3818, 1.442695
  %v3820 = vpow.pop %v3819
  %v3821 = vadd.f32 %v3820, 1.0
  %v3822 = vrcp.pop %v3821
  %v3823 = vmul.f32 1.0, %v3822
  %v3824 = vxor.u32 %v3815, 2147483648
  %v3825 = vmul.f32 %v3824, 1.442695
  %v3826 = vpow.pop %v3825
  %v3827 = vadd.f32 %v3826, 1.0
  %v3828 = vrcp.pop %v3827
  %v3829 = vmul.f32 1.0, %v3828
  %v3830 = vtanh.pop %v3816
  %v3831 = vxor.u32 %v3817, 2147483648
  %v3832 = vmul.f32 %v3831, 1.442695
  %v3833 = vpow.pop %v3832
  %v3834 = vadd.f32 %v3833, 1.0
  %v3835 = vrcp.pop %v3834
  %v3836 = vmul.f32 1.0, %v3835
  %v3837 = vmul.f32 %v3829, %v3350
  %v3838 = vmul.f32 %v3823, %v3830
  %v3839 = vadd.f32 %v3837, %v3838
  %v3840 = vtanh.pop %v3839
  %v3841 = vmul.f32 %v3836, %v3840
  %3842 = vmatprep.subr.mxu0 %v157
  %3843 = vmatpush1.msra.mxu0 %v156
  %3844 = vmatprep.subr.mxu0 %v161
  %3845 = vmatpush1.msra.mxu0 %v160
  %3846 = vmatprep.subr.mxu0 %v165
  %3847 = vmatpush1.msra.mxu0 %v164
  %3848 = vmatprep.subr.mxu0 %v169
  %3849 = vmatpush1.msra.mxu0 %v168
  %3850 = vmatprep.subr.mxu0 %v173
  %3851 = vmatpush1.msra.mxu0 %v172
  %3852 = vmatprep.subr.mxu0 %v177
  %3853 = vmatpush1.msra.mxu0 %v176
  %3854 = vmatprep.subr.mxu0 %v181
  %3855 = vmatpush1.msra.mxu0 %v180
  %3856 = vmatprep.subr.mxu0 %v185
  %3857 = vmatpush1.msra.mxu0 %v184
  %3858 = vmatprep.subr.mxu0 %v189
  %3859 = vmatpush1.msra.mxu0 %v188
  %3860 = vmatprep.subr.mxu0 %v193
  %3861 = vmatpush1.msra.mxu0 %v192
  %3862 = vmatprep.subr.mxu0 %v197
  %3863 = vmatpush1.msra.mxu0 %v196
  %3864 = vmatprep.subr.mxu0 %v201
  %3865 = vmatpush1.msra.mxu0 %v200
  %3866 = vmatprep.subr.mxu0 %v205
  %3867 = vmatpush1.msra.mxu0 %v204
  %3868 = vmatprep.subr.mxu0 %v209
  %3869 = vmatpush1.msra.mxu0 %v208
  %3870 = vmatprep.subr.mxu0 %v213
  %3871 = vmatpush1.msra.mxu0 %v212
  %3872 = vmatprep.subr.mxu0 %v217
  %3873 = vmatpush1.msra.mxu0 %v216
  %3874 = vmatprep.subr.mxu0 0.0
  %3875 = vmatpush1.msra.mxu0 0.0
  %3876 = vmatprep.subr.mxu0 0.0
  %3877 = vmatpush1.msra.mxu0 0.0
  %3878 = vmatprep.subr.mxu0 0.0
  %3879 = vmatpush1.msra.mxu0 0.0
  %3880 = vmatprep.subr.mxu0 0.0
  %3881 = vmatpush1.msra.mxu0 0.0
  %3882 = vmatprep.subr.mxu0 0.0
  %3883 = vmatpush1.msra.mxu0 0.0
  %3884 = vmatprep.subr.mxu0 0.0
  %3885 = vmatpush1.msra.mxu0 0.0
  %3886 = vmatprep.subr.mxu0 0.0
  %3887 = vmatpush1.msra.mxu0 0.0
  %3888 = vmatprep.subr.mxu0 0.0
  %3889 = vmatpush1.msra.mxu0 0.0
  %3890 = vmatprep.subr.mxu0 0.0
  %3891 = vmatpush1.msra.mxu0 0.0
  %3892 = vmatprep.subr.mxu0 0.0
  %3893 = vmatpush1.msra.mxu0 0.0
  %3894 = vmatprep.subr.mxu0 0.0
  %3895 = vmatpush1.msra.mxu0 0.0
  %3896 = vmatprep.subr.mxu0 0.0
  %3897 = vmatpush1.msra.mxu0 0.0
  %3898 = vmatprep.subr.mxu0 0.0
  %3899 = vmatpush1.msra.mxu0 0.0
  %3900 = vmatprep.subr.mxu0 0.0
  %3901 = vmatpush1.msra.mxu0 0.0
  %3902 = vmatprep.subr.mxu0 0.0
  %3903 = vmatpush1.msra.mxu0 0.0
  %3904 = vmatprep.subr.mxu0 0.0
  %3905 = vmatpush1.msra.mxu0 0.0
  %3906 = vmatprep.mubr.f32.mxu0 0.0
  %3907 = vmatmul.mubr.f32.gmra.mrb[0].mxu0 %v3664
  %v3908 = vpop.f32.mrb[0].mxu0
  %v3909 = vadd.f32 0.0, %v3908
  %v3910 = vpop.f32.mrb[0].mxu0
  %v3911 = vadd.f32 0.0, %v3910
  %3912 = vdwg.mxu0
  %3913 = vmatprep.subr.mxu0 %v159
  %3914 = vmatpush1.msra.mxu0 %v158
  %3915 = vmatprep.subr.mxu0 %v163
  %3916 = vmatpush1.msra.mxu0 %v162
  %3917 = vmatprep.subr.mxu0 %v167
  %3918 = vmatpush1.msra.mxu0 %v166
  %3919 = vmatprep.subr.mxu0 %v171
  %3920 = vmatpush1.msra.mxu0 %v170
  %3921 = vmatprep.subr.mxu0 %v175
  %3922 = vmatpush1.msra.mxu0 %v174
  %3923 = vmatprep.subr.mxu0 %v179
  %3924 = vmatpush1.msra.mxu0 %v178
  %3925 = vmatprep.subr.mxu0 %v183
  %3926 = vmatpush1.msra.mxu0 %v182
  %3927 = vmatprep.subr.mxu0 %v187
  %3928 = vmatpush1.msra.mxu0 %v186
  %3929 = vmatprep.subr.mxu0 %v191
  %3930 = vmatpush1.msra.mxu0 %v190
  %3931 = vmatprep.subr.mxu0 %v195
  %3932 = vmatpush1.msra.mxu0 %v194
  %3933 = vmatprep.subr.mxu0 %v199
  %3934 = vmatpush1.msra.mxu0 %v198
  %3935 = vmatprep.subr.mxu0 %v203
  %3936 = vmatpush1.msra.mxu0 %v202
  %3937 = vmatprep.subr.mxu0 %v207
  %3938 = vmatpush1.msra.mxu0 %v206
  %3939 = vmatprep.subr.mxu0 %v211
  %3940 = vmatpush1.msra.mxu0 %v210
  %3941 = vmatprep.subr.mxu0 %v215
  %3942 = vmatpush1.msra.mxu0 %v214
  %3943 = vmatprep.subr.mxu0 %v219
  %3944 = vmatpush1.msra.mxu0 %v218
  %3945 = vmatprep.subr.mxu0 0.0
  %3946 = vmatpush1.msra.mxu0 0.0
  %3947 = vmatprep.subr.mxu0 0.0
  %3948 = vmatpush1.msra.mxu0 0.0
  %3949 = vmatprep.subr.mxu0 0.0
  %3950 = vmatpush1.msra.mxu0 0.0
  %3951 = vmatprep.subr.mxu0 0.0
  %3952 = vmatpush1.msra.mxu0 0.0
  %3953 = vmatprep.subr.mxu0 0.0
  %3954 = vmatpush1.msra.mxu0 0.0
  %3955 = vmatprep.subr.mxu0 0.0
  %3956 = vmatpush1.msra.mxu0 0.0
  %3957 = vmatprep.subr.mxu0 0.0
  %3958 = vmatpush1.msra.mxu0 0.0
  %3959 = vmatprep.subr.mxu0 0.0
  %3960 = vmatpush1.msra.mxu0 0.0
  %3961 = vmatprep.subr.mxu0 0.0
  %3962 = vmatpush1.msra.mxu0 0.0
  %3963 = vmatprep.subr.mxu0 0.0
  %3964 = vmatpush1.msra.mxu0 0.0
  %3965 = vmatprep.subr.mxu0 0.0
  %3966 = vmatpush1.msra.mxu0 0.0
  %3967 = vmatprep.subr.mxu0 0.0
  %3968 = vmatpush1.msra.mxu0 0.0
  %3969 = vmatprep.subr.mxu0 0.0
  %3970 = vmatpush1.msra.mxu0 0.0
  %3971 = vmatprep.subr.mxu0 0.0
  %3972 = vmatpush1.msra.mxu0 0.0
  %3973 = vmatprep.subr.mxu0 0.0
  %3974 = vmatpush1.msra.mxu0 0.0
  %3975 = vmatprep.subr.mxu0 0.0
  %3976 = vmatpush1.msra.mxu0 0.0
  %3977 = vmatprep.mubr.f32.mxu0 0.0
  %3978 = vmatmul.mubr.f32.gmra.mrb[0].mxu0 %v3664
  %v3979 = vpop.f32.mrb[0].mxu0
  %v3980 = vadd.f32 0.0, %v3979
  %v3981 = vpop.f32.mrb[0].mxu0
  %v3982 = vadd.f32 0.0, %v3981
  %3983 = vdwg.mxu0
  %3984 = vmatprep.subr.mxu0 %v93
  %3985 = vmatpush1.msra.mxu0 %v92
  %3986 = vmatprep.subr.mxu0 %v97
  %3987 = vmatpush1.msra.mxu0 %v96
  %3988 = vmatprep.subr.mxu0 %v101
  %3989 = vmatpush1.msra.mxu0 %v100
  %3990 = vmatprep.subr.mxu0 %v105
  %3991 = vmatpush1.msra.mxu0 %v104
  %3992 = vmatprep.subr.mxu0 %v109
  %3993 = vmatpush1.msra.mxu0 %v108
  %3994 = vmatprep.subr.mxu0 %v113
  %3995 = vmatpush1.msra.mxu0 %v112
  %3996 = vmatprep.subr.mxu0 %v117
  %3997 = vmatpush1.msra.mxu0 %v116
  %3998 = vmatprep.subr.mxu0 %v121
  %3999 = vmatpush1.msra.mxu0 %v120
  %4000 = vmatprep.subr.mxu0 %v125
  %4001 = vmatpush1.msra.mxu0 %v124
  %4002 = vmatprep.subr.mxu0 %v129
  %4003 = vmatpush1.msra.mxu0 %v128
  %4004 = vmatprep.subr.mxu0 %v133
  %4005 = vmatpush1.msra.mxu0 %v132
  %4006 = vmatprep.subr.mxu0 %v137
  %4007 = vmatpush1.msra.mxu0 %v136
  %4008 = vmatprep.subr.mxu0 %v141
  %4009 = vmatpush1.msra.mxu0 %v140
  %4010 = vmatprep.subr.mxu0 %v145
  %4011 = vmatpush1.msra.mxu0 %v144
  %4012 = vmatprep.subr.mxu0 %v149
  %4013 = vmatpush1.msra.mxu0 %v148
  %4014 = vmatprep.subr.mxu0 %v153
  %4015 = vmatpush1.msra.mxu0 %v152
  %4016 = vmatprep.subr.mxu0 0.0
  %4017 = vmatpush1.msra.mxu0 0.0
  %4018 = vmatprep.subr.mxu0 0.0
  %4019 = vmatpush1.msra.mxu0 0.0
  %4020 = vmatprep.subr.mxu0 0.0
  %4021 = vmatpush1.msra.mxu0 0.0
  %4022 = vmatprep.subr.mxu0 0.0
  %4023 = vmatpush1.msra.mxu0 0.0
  %4024 = vmatprep.subr.mxu0 0.0
  %4025 = vmatpush1.msra.mxu0 0.0
  %4026 = vmatprep.subr.mxu0 0.0
  %4027 = vmatpush1.msra.mxu0 0.0
  %4028 = vmatprep.subr.mxu0 0.0
  %4029 = vmatpush1.msra.mxu0 0.0
  %4030 = vmatprep.subr.mxu0 0.0
  %4031 = vmatpush1.msra.mxu0 0.0
  %4032 = vmatprep.subr.mxu0 0.0
  %4033 = vmatpush1.msra.mxu0 0.0
  %4034 = vmatprep.subr.mxu0 0.0
  %4035 = vmatpush1.msra.mxu0 0.0
  %4036 = vmatprep.subr.mxu0 0.0
  %4037 = vmatpush1.msra.mxu0 0.0
  %4038 = vmatprep.subr.mxu0 0.0
  %4039 = vmatpush1.msra.mxu0 0.0
  %4040 = vmatprep.subr.mxu0 0.0
  %4041 = vmatpush1.msra.mxu0 0.0
  %4042 = vmatprep.subr.mxu0 0.0
  %4043 = vmatpush1.msra.mxu0 0.0
  %4044 = vmatprep.subr.mxu0 0.0
  %4045 = vmatpush1.msra.mxu0 0.0
  %4046 = vmatprep.subr.mxu0 0.0
  %4047 = vmatpush1.msra.mxu0 0.0
  %4048 = vmatprep.mubr.f32.mxu0 0.0
  %4049 = vmatmul.mubr.f32.gmra.mrb[0].mxu0 %v3841
  %v4050 = vpop.f32.mrb[0].mxu0
  %v4051 = vadd.f32 %v3909, %v4050
  %v4052 = vpop.f32.mrb[0].mxu0
  %v4053 = vadd.f32 %v3911, %v4052
  %4054 = vdwg.mxu0
  %4055 = vmatprep.subr.mxu0 %v95
  %4056 = vmatpush1.msra.mxu0 %v94
  %4057 = vmatprep.subr.mxu0 %v99
  %4058 = vmatpush1.msra.mxu0 %v98
  %4059 = vmatprep.subr.mxu0 %v103
  %4060 = vmatpush1.msra.mxu0 %v102
  %4061 = vmatprep.subr.mxu0 %v107
  %4062 = vmatpush1.msra.mxu0 %v106
  %4063 = vmatprep.subr.mxu0 %v111
  %4064 = vmatpush1.msra.mxu0 %v110
  %4065 = vmatprep.subr.mxu0 %v115
  %4066 = vmatpush1.msra.mxu0 %v114
  %4067 = vmatprep.subr.mxu0 %v119
  %4068 = vmatpush1.msra.mxu0 %v118
  %4069 = vmatprep.subr.mxu0 %v123
  %4070 = vmatpush1.msra.mxu0 %v122
  %4071 = vmatprep.subr.mxu0 %v127
  %4072 = vmatpush1.msra.mxu0 %v126
  %4073 = vmatprep.subr.mxu0 %v131
  %4074 = vmatpush1.msra.mxu0 %v130
  %4075 = vmatprep.subr.mxu0 %v135
  %4076 = vmatpush1.msra.mxu0 %v134
  %4077 = vmatprep.subr.mxu0 %v139
  %4078 = vmatpush1.msra.mxu0 %v138
  %4079 = vmatprep.subr.mxu0 %v143
  %4080 = vmatpush1.msra.mxu0 %v142
  %4081 = vmatprep.subr.mxu0 %v147
  %4082 = vmatpush1.msra.mxu0 %v146
  %4083 = vmatprep.subr.mxu0 %v151
  %4084 = vmatpush1.msra.mxu0 %v150
  %4085 = vmatprep.subr.mxu0 %v155
  %4086 = vmatpush1.msra.mxu0 %v154
  %4087 = vmatprep.subr.mxu0 0.0
  %4088 = vmatpush1.msra.mxu0 0.0
  %4089 = vmatprep.subr.mxu0 0.0
  %4090 = vmatpush1.msra.mxu0 0.0
  %4091 = vmatprep.subr.mxu0 0.0
  %4092 = vmatpush1.msra.mxu0 0.0
  %4093 = vmatprep.subr.mxu0 0.0
  %4094 = vmatpush1.msra.mxu0 0.0
  %4095 = vmatprep.subr.mxu0 0.0
  %4096 = vmatpush1.msra.mxu0 0.0
  %4097 = vmatprep.subr.mxu0 0.0
  %4098 = vmatpush1.msra.mxu0 0.0
  %4099 = vmatprep.subr.mxu0 0.0
  %4100 = vmatpush1.msra.mxu0 0.0
  %4101 = vmatprep.subr.mxu0 0.0
  %4102 = vmatpush1.msra.mxu0 0.0
  %4103 = vmatprep.subr.mxu0 0.0
  %4104 = vmatpush1.msra.mxu0 0.0
  %4105 = vmatprep.subr.mxu0 0.0
  %4106 = vmatpush1.msra.mxu0 0.0
  %4107 = vmatprep.subr.mxu0 0.0
  %4108 = vmatpush1.msra.mxu0 0.0
  %4109 = vmatprep.subr.mxu0 0.0
  %4110 = vmatpush1.msra.mxu0 0.0
  %4111 = vmatprep.subr.mxu0 0.0
  %4112 = vmatpush1.msra.mxu0 0.0
  %4113 = vmatprep.subr.mxu0 0.0
  %4114 = vmatpush1.msra.mxu0 0.0
  %4115 = vmatprep.subr.mxu0 0.0
  %4116 = vmatpush1.msra.mxu0 0.0
  %4117 = vmatprep.subr.mxu0 0.0
  %4118 = vmatpush1.msra.mxu0 0.0
  %4119 = vmatprep.mubr.f32.mxu0 0.0
  %4120 = vmatmul.mubr.f32.gmra.mrb[0].mxu0 %v3841
  %v4121 = vpop.f32.mrb[0].mxu0
  %v4122 = vadd.f32 %v3980, %v4121
  %v4123 = vpop.f32.mrb[0].mxu0
  %v4124 = vadd.f32 %v3982, %v4123
  %4125 = vdwg.mxu0
  %v4126 = vadd.f32 %v4051, %v687
  %v4127 = vadd.f32 %v4053, %v691
  %v4128 = vadd.f32 %v4122, %v695
  %v4129 = vadd.f32 %v4124, %v699
  %v4130 = vxor.u32 %v4126, 2147483648
  %v4131 = vmul.f32 %v4130, 1.442695
  %v4132 = vpow.pop %v4131
  %v4133 = vadd.f32 %v4132, 1.0
  %v4134 = vrcp.pop %v4133
  %v4135 = vmul.f32 1.0, %v4134
  %v4136 = vxor.u32 %v4127, 2147483648
  %v4137 = vmul.f32 %v4136, 1.442695
  %v4138 = vpow.pop %v4137
  %v4139 = vadd.f32 %v4138, 1.0
  %v4140 = vrcp.pop %v4139
  %v4141 = vmul.f32 1.0, %v4140
  %v4142 = vtanh.pop %v4128
  %v4143 = vxor.u32 %v4129, 2147483648
  %v4144 = vmul.f32 %v4143, 1.442695
  %v4145 = vpow.pop %v4144
  %v4146 = vadd.f32 %v4145, 1.0
  %v4147 = vrcp.pop %v4146
  %v4148 = vmul.f32 1.0, %v4147
  %v4149 = vmul.f32 %v4141, %v3662
  %v4150 = vmul.f32 %v4135, %v4142
  %v4151 = vadd.f32 %v4149, %v4150
  %v4152 = vtanh.pop %v4151
  %v4153 = vmul.f32 %v4148, %v4152
  %s4154 = scalar_lea.vmem %s5, 56
  %4155 = vst [vmem:[%s4154] sm:$0xff] %v4153
  %4156 = vst [vmem:[#allocation2] sm:$0xff] %v3841
  %4157 = vst [vmem:[#allocation3] sm:$0xff] %v3839
  %4158 = vst [vmem:[#allocation4] sm:$0xff] %v4153
  %4159 = vst [vmem:[#allocation5] sm:$0xff] %v4151
  // Predicated region
  $region26: #{mann_forward.3} parent=0 // pred_check
    _
  $region27: #{mann_forward.3} parent=0 // pred_check_branch
    %4161 = sbr.rel (0) target = $region29
  $region28: #{mann_forward.3} parent=0 // pred_region
    _
  $region29: #{mann_forward.3} parent=0 // pred_fallthru
    _
  // Predicated region
  $region30: #{mann_forward.3} parent=0 // pred_check
    _
  $region31: #{mann_forward.3} parent=0 // pred_check_branch
    %4163 = sbr.rel (0) target = $region33
  $region32: #{mann_forward.3} parent=0 // pred_region
    _
  $region33: #{mann_forward.3} parent=0 // pred_fallthru
    _

</llo_original>
